<compile_context>
chip_gen: v7x
topology: tpu7x:2x2x1
jax: 0.10.0
libtpu: 0.0.40
codegen_flags: <defaults>
</compile_context>

<pallas_src>
import functools

import jax
import jax.numpy as jnp
from jax.experimental import pallas as pl
from jax.experimental.pallas import tpu as pltpu

# ----------------------- model dims (small but consistent) ------------------
B = 2              # batch
MAX_STATION = 4    # max_station   (25 in the real model)
PGA_TARGETS = 3    # pga_targets   (15 in the real model)
EMB_DIM = 32       # emb_dim       (150 in the real model)
DATA_LEN = 1024    # data_length   (6000 in the real model)
WAVE_CH = 3        # waveform channels
COORD = 3          # station/target metadata dims (lat, lon, elev)
CNN_HID = 16
FFN_HID = 64
N_HEADS = 4
MLP_HID = 32
MLP_OUT = 16
N_GAUSS = 5

MXU_DTYPE = jnp.bfloat16      # matmul operand dtype (f32 accumulation on the MXU)

CNN_TILE_N = 8                # stations per CNN grid step (N padded up to a multiple)
CNN_CHUNK_T = 512             # target time-chunk for the in-kernel pooled-sum loop
MDN_OUT_PAD = 128             # MDN output lane width (>= 3*N_GAUSS), unmasked stores

# packed layout of all small per-row vectors (biases + LayerNorm params)
_VEC_SPECS = (
    ("pos_b1", EMB_DIM), ("pos_b2", EMB_DIM),
    ("attn_bqkv", 3 * EMB_DIM), ("attn_bo", EMB_DIM),
    ("ln1_g", EMB_DIM), ("ln1_b", EMB_DIM),
    ("ffn_b1", FFN_HID), ("ffn_b2", EMB_DIM),
    ("ln2_g", EMB_DIM), ("ln2_b", EMB_DIM),
    ("mlp_b1", MLP_HID), ("mlp_b2", MLP_OUT),
    ("mdn_b", 3 * N_GAUSS),
)
_VEC_OFF = {}
_off = 0
for _name, _size in _VEC_SPECS:
    _VEC_OFF[_name] = (_off, _size)
    _off += _size
VEC_TOTAL = _off


# ----------------------------- small helpers ---------------------------------
def _w_spec(shape):
    """Full-array (weight) BlockSpec: same block at every grid step."""
    nd = len(shape)
    return pl.BlockSpec(shape, lambda *_args, _nd=nd: (0,) * _nd)


def _pick_tile(n, target):
    """Largest divisor of n that is <= target (so the grid/loop has no remainder)."""
    t = min(n, target)
    while n % t:
        t -= 1
    return t


# --------------------------------- kernel 1: CNN ------------------------------
def cnn_kernel(wav_ref, wc_ref, bc_ref, wl_ref, bl_ref, out_ref, *, chunk_t):
    """Conv1d(k=3,'same') with TIME on lanes, chunked pooled-sum, then Linear.

    wav_ref : (TILE_N, C, T)    f32  (time on the lane axis)
    wc_ref  : (3, CNN_HID, C)   bf16 (tap 0 -> x[t-1], 1 -> x[t], 2 -> x[t+1])
    bc_ref  : (1, CNN_HID, 1)   f32
    wl_ref  : (CNN_HID, EMB)    bf16
    bl_ref  : (1, EMB)          f32
    out_ref : (TILE_N, EMB)     f32
    """
    TN, C, T = wav_ref.shape
    O = wc_ref.shape[1]
    n_chunks = T // chunk_t

    # Broadcast the per-tap conv weights once (hoisted out of the chunk loop;
    # JAX does not CSE broadcast_in_dim).
    w = wc_ref[...]                                        # (3, O, C) bf16
    wb = [jnp.broadcast_to(w[k][None], (TN, O, C)) for k in range(3)]
    bias = bc_ref[...]                                     # (1, O, 1) f32

    def load(start, size):
        return wav_ref[:, :, pl.ds(start, size)].astype(MXU_DTYPE)

    zcol = jnp.zeros((TN, C, 1), MXU_DTYPE)
    pooled = jnp.zeros((TN, O), jnp.float32)

    # In-kernel T chunking: conv activations are only materialised per chunk,
    # never for the whole trace; halos come straight from the in-VMEM block.
    for c in range(n_chunks):
        s0 = c * chunk_t
        xc = load(s0, chunk_t)                             # (TN, C, Tc)
        if c == 0:                                         # left trace edge: zero pad
            x_prev = jnp.concatenate([zcol, load(0, chunk_t - 1)], axis=2)
        else:                                              # interior: plain offset load
            x_prev = load(s0 - 1, chunk_t)
        if c == n_chunks - 1:                              # right trace edge: zero pad
            x_next = jnp.concatenate([load(s0 + 1, chunk_t - 1), zcol], axis=2)
        else:
            x_next = load(s0 + 1, chunk_t)

        # three accumulated batched matmuls (K=C each); result lane-dense in T.
        y = (jnp.einsum("noc,nct->not", wb[0], x_prev,
                        preferred_element_type=jnp.float32)
             + jnp.einsum("noc,nct->not", wb[1], xc,
                          preferred_element_type=jnp.float32)
             + jnp.einsum("noc,nct->not", wb[2], x_next,
                          preferred_element_type=jnp.float32))    # (TN, O, Tc)
        y = jnp.maximum(y + bias, 0.0)
        pooled = pooled + jnp.sum(y, axis=2)               # (TN, O) f32 accumulation

    pooled = pooled * (1.0 / T)                            # global average pool
    emb = (jnp.dot(pooled.astype(MXU_DTYPE), wl_ref[...],
                   preferred_element_type=jnp.float32) + bl_ref[...])
    out_ref[...] = emb                                     # (TILE_N, EMB) lane-dense store


def cnn_forward(params, wav_nct):
    """wav_nct: (N, C, T) f32, time on the last (lane) axis."""
    N, C, T = wav_nct.shape
    n_pad = (-N) % CNN_TILE_N
    if n_pad:
        wav_nct = jnp.pad(wav_nct, ((0, n_pad), (0, 0), (0, 0)))
    Np = N + n_pad
    chunk_t = _pick_tile(T, CNN_CHUNK_T)

    # explicit VMEM ceiling derived from the tile working set (v7x-safe <= 48 MiB)
    block_bytes = CNN_TILE_N * C * T * 4
    chunk_bytes = CNN_TILE_N * (3 * C * 2 + CNN_HID * 4) * chunk_t
    vmem_limit = int(min(max(2 * block_bytes + 4 * chunk_bytes + (2 << 20),
                             8 << 20), 48 << 20))

    flops = 2 * Np * T * 3 * C * CNN_HID + 2 * Np * CNN_HID * EMB_DIM
    bytes_accessed = (wav_nct.size * wav_nct.dtype.itemsize
                      + Np * EMB_DIM * 4
                      + sum(params[k].size * params[k].dtype.itemsize
                            for k in ("cnn_w", "cnn_b", "cnn_wl", "cnn_bl")))

    out = pl.pallas_call(
        functools.partial(cnn_kernel, chunk_t=chunk_t),
        grid=(Np // CNN_TILE_N,),
        in_specs=[
            pl.BlockSpec((CNN_TILE_N, C, T), lambda i: (i, 0, 0)),
            _w_spec(params["cnn_w"].shape),
            _w_spec(params["cnn_b"].shape),
            _w_spec(params["cnn_wl"].shape),
            _w_spec(params["cnn_bl"].shape),
        ],
        out_specs=pl.BlockSpec((CNN_TILE_N, EMB_DIM), lambda i: (i, 0)),
        out_shape=jax.ShapeDtypeStruct((Np, EMB_DIM), jnp.float32),
        compiler_params=pltpu.CompilerParams(
            dimension_semantics=("parallel",),
            vmem_limit_bytes=vmem_limit),
        cost_estimate=pl.CostEstimate(flops=int(flops), transcendentals=0,
                                      bytes_accessed=int(bytes_accessed)),
    )(wav_nct, params["cnn_w"], params["cnn_b"], params["cnn_wl"], params["cnn_bl"])
    return out[:N]


# ------------------ kernel 2: position MLP + transformer + MLP + MDN ----------
_FUSED_MATS = ("pos_w1", "pos_w2", "attn_wqkv", "attn_wo",
               "ffn_w1", "ffn_w2", "mlp_w1", "mlp_w2", "mdn_w")


def fused_kernel(cnn_ref, st_ref, tg_ref, mask_ref, vec_ref,
                 pw1_ref, pw2_ref, wqkv_ref, wo_ref,
                 wf1_ref, wf2_ref, wm1_ref, wm2_ref, wmdn_ref,
                 out_ref, *, n_heads, n_gauss):
    cnn = cnn_ref[0]                                       # (S, E) f32
    st = st_ref[0]                                         # (S, 3) f32
    tg = tg_ref[0]                                         # (P, 3) f32
    S, E = cnn.shape
    P = tg.shape[0]
    G = n_gauss

    def vec(name):
        off, size = _VEC_OFF[name]
        return vec_ref[:, off:off + size]                  # (1, size) f32

    def dense(x, w_ref, bname):
        return (jnp.dot(x.astype(MXU_DTYPE), w_ref[...],
                        preferred_element_type=jnp.float32) + vec(bname))

    # ---- position MLP: stations and targets in one merged pass.
    # First layer kept in f32 (raw coordinates lose precision in bf16).
    coords = jnp.concatenate([st, tg], axis=0)             # (L, 3) f32
    h = (jnp.dot(coords, pw1_ref[...],
                 preferred_element_type=jnp.float32) + vec("pos_b1"))
    pos = dense(jnp.maximum(h, 0.0), pw2_ref, "pos_b2")    # (L, E)

    # ---- transformer input = [cnn + station_pos ; target_pos]
    cnn_full = jnp.concatenate([cnn, jnp.zeros((P, E), cnn.dtype)], axis=0)
    x = pos + cnn_full                                     # (L, E) f32
    L = x.shape[0]

    # Additive key-padding bias (targets always masked, as in PyTorch).
    # A fully-masked key row degrades to uniform attention instead of NaN.
    kbias = jnp.where(mask_ref[0] > 0.5, jnp.float32(-1e9), jnp.float32(0.0))  # (1, L)

    # ---- multi-head self-attention (post-norm encoder layer), heads unrolled.
    Dh = E // n_heads
    scale = 1.0 / float(Dh) ** 0.5
    qkv = dense(x, wqkv_ref, "attn_bqkv")                  # (L, 3E) fused QKV
    q16 = qkv[:, :E].astype(MXU_DTYPE)
    k16 = qkv[:, E:2 * E].astype(MXU_DTYPE)
    v16 = qkv[:, 2 * E:].astype(MXU_DTYPE)
    wo = wo_ref[...]                                       # (E, E) bf16
    attn = jnp.zeros((L, E), jnp.float32)
    for hd in range(n_heads):
        sl = slice(hd * Dh, (hd + 1) * Dh)
        sc = jax.lax.dot_general(q16[:, sl], k16[:, sl], (((1,), (1,)), ((), ())),
                                 preferred_element_type=jnp.float32)
        sc = sc * scale + kbias
        sc = sc - jnp.max(sc, axis=-1, keepdims=True)
        p = jnp.exp(sc)
        p = p * pl.reciprocal(jnp.sum(p, axis=-1, keepdims=True), approx=True)
        ctx = jnp.dot(p.astype(MXU_DTYPE), v16[:, sl],
                      preferred_element_type=jnp.float32)             # (L, Dh)
        attn = attn + jnp.dot(ctx.astype(MXU_DTYPE), wo[sl, :],
                              preferred_element_type=jnp.float32)     # accumulate W_o
    attn = attn + vec("attn_bo")

    def layernorm(z, gname, bname):
        mu = jnp.mean(z, axis=-1, keepdims=True)
        var = jnp.mean((z - mu) ** 2, axis=-1, keepdims=True)
        return (z - mu) * jax.lax.rsqrt(var + 1e-5) * vec(gname) + vec(bname)

    x1 = layernorm(x + attn, "ln1_g", "ln1_b")
    ff = jnp.maximum(dense(x1, wf1_ref, "ffn_b1"), 0.0)
    x2 = layernorm(x1 + dense(ff, wf2_ref, "ffn_b2"), "ln2_g", "ln2_b")

    # ---- MLP + MDN heads on the pga-target rows only (last P rows).
    tfeat = x2[S:, :]                                      # (P, E)
    h1 = jnp.maximum(dense(tfeat, wm1_ref, "mlp_b1"), 0.0)
    h2 = jnp.maximum(dense(h1, wm2_ref, "mlp_b2"), 0.0)
    raw = dense(h2, wmdn_ref, "mdn_b")                     # (P, 3G) = [pi | sigma | mu]

    logits = raw[:, :G]
    logits = logits - jnp.max(logits, axis=-1, keepdims=True)
    e = jnp.exp(logits)
    pi = e / jnp.sum(e, axis=-1, keepdims=True)            # exact: user-facing weights
    sigma = jnp.exp(raw[:, G:2 * G])
    mu = raw[:, 2 * G:]
    pad = jnp.zeros((P, out_ref.shape[2] - 3 * G), jnp.float32)
    out_ref[...] = jnp.concatenate([pi, sigma, mu, pad], axis=-1)[None]  # unmasked store


def fused_forward(params, cnn, station, target, pad_mask):
    Bb, S, E = cnn.shape
    P = target.shape[1]
    L = S + P
    mats = [params[k] for k in _FUSED_MATS]

    flops_b = (2 * L * COORD * E + 2 * L * E * E                 # position MLP
               + 2 * L * E * 3 * E + 2 * L * E * E               # QKV + out proj
               + N_HEADS * 4 * L * L * (E // N_HEADS)            # scores + context
               + 4 * L * E * FFN_HID                             # FFN
               + 2 * P * (E * MLP_HID + MLP_HID * MLP_OUT + MLP_OUT * 3 * N_GAUSS))
    transcendentals = Bb * (N_HEADS * L * L + 4 * L + 2 * P * N_GAUSS)
    bytes_accessed = (cnn.size * 4 + station.size * 4 + target.size * 4
                      + pad_mask.size * 4 + params["vec"].size * 4
                      + sum(m.size * m.dtype.itemsize for m in mats)
                      + Bb * P * MDN_OUT_PAD * 4)

    # Grid over the batch, "parallel" so both v7x TensorCores get work at B>=2.
    # (On single-TC v5e/v6e this is a short serial loop; folding B into the row
    # dimension would be the next optimization there.)
    out = pl.pallas_call(
        functools.partial(fused_kernel, n_heads=N_HEADS, n_gauss=N_GAUSS),
        grid=(Bb,),
        in_specs=[
            pl.BlockSpec((1, S, E), lambda i: (i, 0, 0)),
            pl.BlockSpec((1, S, COORD), lambda i: (i, 0, 0)),
            pl.BlockSpec((1, P, COORD), lambda i: (i, 0, 0)),
            pl.BlockSpec((1, 1, L), lambda i: (i, 0, 0)),
            _w_spec(params["vec"].shape),
        ] + [_w_spec(m.shape) for m in mats],
        out_specs=pl.BlockSpec((1, P, MDN_OUT_PAD), lambda i: (i, 0, 0)),
        out_shape=jax.ShapeDtypeStruct((Bb, P, MDN_OUT_PAD), jnp.float32),
        compiler_params=pltpu.CompilerParams(
            dimension_semantics=("parallel",),
            vmem_limit_bytes=16 << 20),
        cost_estimate=pl.CostEstimate(flops=int(Bb * flops_b),
                                      transcendentals=int(transcendentals),
                                      bytes_accessed=int(bytes_accessed)),
    )(cnn, station, target, pad_mask, params["vec"], *mats)
    G = N_GAUSS
    return out[..., :G], out[..., G:2 * G], out[..., 2 * G:3 * G]


# ------------------------------- FullModel.forward ----------------------------
def full_model_forward(params, waveform, station, target):
    Bb, S, T, Cw = waveform.shape
    P = target.shape[1]

    # model_CNN(data['waveform'].reshape(-1, data_length, 3)); (N, T, C) -> (N, C, T)
    # so that TIME sits on the 128-lane axis inside the kernel.
    wav = jnp.transpose(waveform.reshape(Bb * S, T, Cw), (0, 2, 1))
    cnn = cnn_forward(params, wav).reshape(Bb, S, EMB_DIM)

    # key-padding masks (True = masked key), exactly as in the PyTorch forward.
    station_pad_mask = jnp.all(station == 0, axis=2)               # (B, S)
    target_pad_mask = jnp.ones((Bb, P), dtype=bool)                # targets always masked
    pad_mask = jnp.concatenate([station_pad_mask, target_pad_mask], axis=1)
    pad_mask = pad_mask.astype(jnp.float32).reshape(Bb, 1, S + P)  # (B, 1, L)

    weight, sigma, mu = fused_forward(params, cnn, station.astype(jnp.float32),
                                      target.astype(jnp.float32), pad_mask)
    return weight, sigma, mu


# ------------------------- pure-JAX reference (for parity) --------------------
def full_model_forward_ref(params, waveform, station, target):
    f32, bf = jnp.float32, MXU_DTYPE
    Bb, S, T, Cw = waveform.shape
    P = target.shape[1]
    E, G = EMB_DIM, N_GAUSS

    def v(name):
        off, size = _VEC_OFF[name]
        return params["vec"][:, off:off + size]

    # CNN
    x = jnp.transpose(waveform.reshape(Bb * S, T, Cw), (0, 2, 1)).astype(f32)
    zcol = jnp.zeros((Bb * S, Cw, 1), f32)
    xp = jnp.concatenate([zcol, x[:, :, :-1]], axis=2)
    xn = jnp.concatenate([x[:, :, 1:], zcol], axis=2)
    w = params["cnn_w"]

    def cnv(wk, xs):
        return jnp.einsum("oc,nct->not", wk, xs.astype(bf),
                          preferred_element_type=f32)

    y = cnv(w[0], xp) + cnv(w[1], x) + cnv(w[2], xn)
    y = jnp.maximum(y + params["cnn_b"], 0.0)
    pooled = jnp.mean(y, axis=2)
    cnn = (jnp.dot(pooled.astype(bf), params["cnn_wl"],
                   preferred_element_type=f32) + params["cnn_bl"]).reshape(Bb, S, E)

    station_pad = jnp.all(station == 0, axis=2)
    pad = jnp.concatenate([station_pad, jnp.ones((Bb, P), bool)], axis=1)
    kbias = jnp.where(pad, f32(-1e9), f32(0.0))            # (B, L)

    def dense(xx, wname, bname):
        return (jnp.dot(xx.astype(bf), params[wname],
                        preferred_element_type=f32) + v(bname))

    def layernorm(z, gname, bname):
        m = jnp.mean(z, axis=-1, keepdims=True)
        var = jnp.mean((z - m) ** 2, axis=-1, keepdims=True)
        return (z - m) * jax.lax.rsqrt(var + 1e-5) * v(gname) + v(bname)

    outs = []
    Dh = E // N_HEADS
    for b in range(Bb):
        st, tg = station[b].astype(f32), target[b].astype(f32)
        coords = jnp.concatenate([st, tg], axis=0)
        h = jnp.dot(coords, params["pos_w1"], preferred_element_type=f32) + v("pos_b1")
        pos = dense(jnp.maximum(h, 0.0), "pos_w2", "pos_b2")
        xx = pos + jnp.concatenate([cnn[b], jnp.zeros((P, E), f32)], axis=0)
        qkv = dense(xx, "attn_wqkv", "attn_bqkv")
        q, k, vv = qkv[:, :E], qkv[:, E:2 * E], qkv[:, 2 * E:]
        attn = jnp.zeros_like(xx)
        for hd in range(N_HEADS):
            sl = slice(hd * Dh, (hd + 1) * Dh)
            sc = (jnp.dot(q[:, sl].astype(bf), k[:, sl].astype(bf).T,
                          preferred_element_type=f32) / float(Dh) ** 0.5
                  + kbias[b][None, :])
            sc = sc - jnp.max(sc, axis=-1, keepdims=True)
            pp = jnp.exp(sc)
            pp = pp / jnp.sum(pp, axis=-1, keepdims=True)
            ctx = jnp.dot(pp.astype(bf), vv[:, sl].astype(bf), preferred_element_type=f32)
            attn = attn + jnp.dot(ctx.astype(bf), params["attn_wo"][sl, :],
                                  preferred_element_type=f32)
        attn = attn + v("attn_bo")
        x1 = layernorm(xx + attn, "ln1_g", "ln1_b")
        ff = jnp.maximum(dense(x1, "ffn_w1", "ffn_b1"), 0.0)
        x2 = layernorm(x1 + dense(ff, "ffn_w2", "ffn_b2"), "ln2_g", "ln2_b")
        tfeat = x2[S:, :]
        h1 = jnp.maximum(dense(tfeat, "mlp_w1", "mlp_b1"), 0.0)
        h2 = jnp.maximum(dense(h1, "mlp_w2", "mlp_b2"), 0.0)
        raw = dense(h2, "mdn_w", "mdn_b")
        lg = raw[:, :G] - jnp.max(raw[:, :G], axis=-1, keepdims=True)
        ee = jnp.exp(lg)
        outs.append((ee / jnp.sum(ee, axis=-1, keepdims=True),
                     jnp.exp(raw[:, G:2 * G]), raw[:, 2 * G:]))
    return (jnp.stack([o[0] for o in outs]),
            jnp.stack([o[1] for o in outs]),
            jnp.stack([o[2] for o in outs]))


# ----------------------------------- params -----------------------------------
def init_params(key):
    def nrm(k, shape, scale=0.1):
        return scale * jax.random.normal(k, shape, jnp.float32)

    ks = iter(jax.random.split(key, 32))
    p = {}
    # CNN: tap 0 -> x[t-1], tap 1 -> x[t], tap 2 -> x[t+1]
    p["cnn_w"] = nrm(next(ks), (3, CNN_HID, WAVE_CH)).astype(MXU_DTYPE)
    p["cnn_b"] = nrm(next(ks), (1, CNN_HID, 1), 0.05)
    p["cnn_wl"] = nrm(next(ks), (CNN_HID, EMB_DIM)).astype(MXU_DTYPE)
    p["cnn_bl"] = nrm(next(ks), (1, EMB_DIM), 0.05)
    # position MLP (first layer kept in f32: raw coordinates)
    p["pos_w1"] = nrm(next(ks), (COORD, EMB_DIM))
    p["pos_w2"] = nrm(next(ks), (EMB_DIM, EMB_DIM)).astype(MXU_DTYPE)
    # transformer encoder layer (fused QKV projection)
    p["attn_wqkv"] = nrm(next(ks), (EMB_DIM, 3 * EMB_DIM)).astype(MXU_DTYPE)
    p["attn_wo"] = nrm(next(ks), (EMB_DIM, EMB_DIM)).astype(MXU_DTYPE)
    p["ffn_w1"] = nrm(next(ks), (EMB_DIM, FFN_HID)).astype(MXU_DTYPE)
    p["ffn_w2"] = nrm(next(ks), (FFN_HID, EMB_DIM)).astype(MXU_DTYPE)
    # MLP + MDN (heads packed along the lane axis: [pi | sigma | mu])
    p["mlp_w1"] = nrm(next(ks), (EMB_DIM, MLP_HID)).astype(MXU_DTYPE)
    p["mlp_w2"] = nrm(next(ks), (MLP_HID, MLP_OUT)).astype(MXU_DTYPE)
    p["mdn_w"] = nrm(next(ks), (MLP_OUT, 3 * N_GAUSS)).astype(MXU_DTYPE)
    # all small per-row vectors packed into ONE (1, VEC_TOTAL) f32 array
    vec_vals = {
        "pos_b1": nrm(next(ks), (1, EMB_DIM), 0.05),
        "pos_b2": nrm(next(ks), (1, EMB_DIM), 0.05),
        "attn_bqkv": nrm(next(ks), (1, 3 * EMB_DIM), 0.05),
        "attn_bo": nrm(next(ks), (1, EMB_DIM), 0.05),
        "ln1_g": jnp.ones((1, EMB_DIM), jnp.float32),
        "ln1_b": jnp.zeros((1, EMB_DIM), jnp.float32),
        "ffn_b1": nrm(next(ks), (1, FFN_HID), 0.05),
        "ffn_b2": nrm(next(ks), (1, EMB_DIM), 0.05),
        "ln2_g": jnp.ones((1, EMB_DIM), jnp.float32),
        "ln2_b": jnp.zeros((1, EMB_DIM), jnp.float32),
        "mlp_b1": nrm(next(ks), (1, MLP_HID), 0.05),
        "mlp_b2": nrm(next(ks), (1, MLP_OUT), 0.05),
        "mdn_b": nrm(next(ks), (1, 3 * N_GAUSS), 0.05),
    }
    p["vec"] = jnp.concatenate([vec_vals[n] for n, _ in _VEC_SPECS], axis=1)
    assert p["vec"].shape == (1, VEC_TOTAL)
    return p


# ------------------------------------ main -------------------------------------
if __name__ == "__main__":
    key = jax.random.PRNGKey(0)
    kp, kw, ksn, kt = jax.random.split(key, 4)
    params = init_params(kp)

    waveform = jax.random.normal(kw, (B, MAX_STATION, DATA_LEN, WAVE_CH), jnp.float32)
    station = jax.random.normal(ksn, (B, MAX_STATION, COORD), jnp.float32)
    station = station.at[1, -1, :].set(0.0)   # one all-zero station -> exercises pad mask
    target = jax.random.normal(kt, (B, PGA_TARGETS, COORD), jnp.float32)

    fwd = jax.jit(full_model_forward)
    weight, sigma, mu = fwd(params, waveform, station, target)
    jax.block_until_ready((weight, sigma, mu))

    # structural checks
    assert weight.shape == (B, PGA_TARGETS, N_GAUSS)
    assert sigma.shape == (B, PGA_TARGETS, N_GAUSS)
    assert mu.shape == (B, PGA_TARGETS, N_GAUSS)
    assert bool(jnp.all(jnp.isfinite(weight)))
    assert bool(jnp.all(jnp.isfinite(sigma)))
    assert bool(jnp.all(jnp.isfinite(mu)))
    assert bool(jnp.allclose(jnp.sum(weight, axis=-1), 1.0, atol=1e-5))
    assert bool(jnp.all(sigma > 0))

    # parity against the pure-JAX reference (same bf16 operand casts; the only
    # intended divergence is the approximate reciprocal in the attention softmax)
    w_ref, s_ref, m_ref = full_model_forward_ref(params, waveform, station, target)
    assert bool(jnp.allclose(weight, w_ref, atol=2e-2, rtol=2e-2))
    assert bool(jnp.allclose(sigma, s_ref, atol=2e-2, rtol=2e-2))
    assert bool(jnp.allclose(mu, m_ref, atol=2e-2, rtol=2e-2))

    print("KERNEL_OK")
</pallas_src>

<mosaic_0001>
module attributes {stable_mosaic.version = 11 : i64} {
  func.func @cnn_kernel(%arg0: i32, %arg1: memref<8x3x1024xf32, #tpu.memory_space<vmem>>, %arg2: memref<3x16x3xbf16, #tpu.memory_space<vmem>>, %arg3: memref<1x16x1xf32, #tpu.memory_space<vmem>>, %arg4: memref<16x32xbf16, #tpu.memory_space<vmem>>, %arg5: memref<1x32xf32, #tpu.memory_space<vmem>>, %arg6: memref<8x32xf32, #tpu.memory_space<vmem>>) attributes {dimension_semantics = [#tpu.dimension_semantics<parallel>], iteration_bounds = array<i64: 1>, scalar_prefetch = 0 : i64, scratch_operands = 0 : i64, tpu.core_type = #tpu.core_type<tc>, window_params = [{transform_indices = @transform_0, window_bounds = array<i64: 8, 3, 1024>}, {pipeline_mode = #tpu.pipeline_mode<synchronous>, transform_indices = @transform_1, window_bounds = array<i64: 3, 16, 3>}, {pipeline_mode = #tpu.pipeline_mode<synchronous>, transform_indices = @transform_2, window_bounds = array<i64: 1, 16, 1>}, {pipeline_mode = #tpu.pipeline_mode<synchronous>, transform_indices = @transform_3, window_bounds = array<i64: 16, 32>}, {pipeline_mode = #tpu.pipeline_mode<synchronous>, transform_indices = @transform_4, window_bounds = array<i64: 1, 32>}, {transform_indices = @transform_5, window_bounds = array<i64: 8, 32>}]} {
    %c0 = arith.constant 0 : index
    %c0_0 = arith.constant 0 : index
    %c0_1 = arith.constant 0 : index
    %0 = vector.load %arg2[%c0, %c0_0, %c0_1] : memref<3x16x3xbf16, #tpu.memory_space<vmem>>, vector<3x16x3xbf16>
    %1 = vector.extract_strided_slice %0 {offsets = [0, 0, 0], sizes = [1, 16, 3], strides = [1, 1, 1]} : vector<3x16x3xbf16> to vector<1x16x3xbf16>
    %2 = vector.shape_cast %1 : vector<1x16x3xbf16> to vector<16x3xbf16>
    %3 = vector.shape_cast %2 : vector<16x3xbf16> to vector<1x16x3xbf16>
    %4 = vector.shape_cast %3 : vector<1x16x3xbf16> to vector<1x16x3xbf16>
    %5 = vector.broadcast %4 : vector<1x16x3xbf16> to vector<8x16x3xbf16>
    %6 = vector.extract_strided_slice %0 {offsets = [1, 0, 0], sizes = [1, 16, 3], strides = [1, 1, 1]} : vector<3x16x3xbf16> to vector<1x16x3xbf16>
    %7 = vector.shape_cast %6 : vector<1x16x3xbf16> to vector<16x3xbf16>
    %8 = vector.shape_cast %7 : vector<16x3xbf16> to vector<1x16x3xbf16>
    %9 = vector.shape_cast %8 : vector<1x16x3xbf16> to vector<1x16x3xbf16>
    %10 = vector.broadcast %9 : vector<1x16x3xbf16> to vector<8x16x3xbf16>
    %11 = vector.extract_strided_slice %0 {offsets = [2, 0, 0], sizes = [1, 16, 3], strides = [1, 1, 1]} : vector<3x16x3xbf16> to vector<1x16x3xbf16>
    %12 = vector.shape_cast %11 : vector<1x16x3xbf16> to vector<16x3xbf16>
    %13 = vector.shape_cast %12 : vector<16x3xbf16> to vector<1x16x3xbf16>
    %14 = vector.shape_cast %13 : vector<1x16x3xbf16> to vector<1x16x3xbf16>
    %15 = vector.broadcast %14 : vector<1x16x3xbf16> to vector<8x16x3xbf16>
    %c0_2 = arith.constant 0 : index
    %c0_3 = arith.constant 0 : index
    %c0_4 = arith.constant 0 : index
    %16 = vector.load %arg3[%c0_2, %c0_3, %c0_4] : memref<1x16x1xf32, #tpu.memory_space<vmem>>, vector<1x16x1xf32>
    %cst = arith.constant 0.000000e+00 : bf16
    %17 = vector.broadcast %cst : bf16 to vector<8x3x1xbf16>
    %cst_5 = arith.constant 0.000000e+00 : f32
    %18 = vector.broadcast %cst_5 : f32 to vector<8x16xf32>
    %c0_6 = arith.constant 0 : index
    %c0_7 = arith.constant 0 : index
    %c0_8 = arith.constant 0 : index
    %19 = vector.load %arg1[%c0_6, %c0_7, %c0_8] : memref<8x3x1024xf32, #tpu.memory_space<vmem>>, vector<8x3x512xf32>
    %20 = arith.truncf %19 : vector<8x3x512xf32> to vector<8x3x512xbf16>
    %c0_9 = arith.constant 0 : index
    %c0_10 = arith.constant 0 : index
    %c0_11 = arith.constant 0 : index
    %21 = vector.load %arg1[%c0_9, %c0_10, %c0_11] : memref<8x3x1024xf32, #tpu.memory_space<vmem>>, vector<8x3x511xf32>
    %22 = arith.truncf %21 : vector<8x3x511xf32> to vector<8x3x511xbf16>
    %23 = tpu.concatenate %17, %22 in 2 : vector<8x3x1xbf16>, vector<8x3x511xbf16> -> vector<8x3x512xbf16>
    %c0_12 = arith.constant 0 : index
    %c0_13 = arith.constant 0 : index
    %c1 = arith.constant 1 : index
    %24 = vector.load %arg1[%c0_12, %c0_13, %c1] : memref<8x3x1024xf32, #tpu.memory_space<vmem>>, vector<8x3x512xf32>
    %25 = arith.truncf %24 : vector<8x3x512xf32> to vector<8x3x512xbf16>
    "tpu.trace_start"() <{level = 10 : i32, message = "noc,nct->not"}> : () -> ()
    %cst_14 = arith.constant dense<0.000000e+00> : vector<8x16x512xf32>
    %26 = tpu.matmul %5, %23, %cst_14 {dimension_numbers = #tpu.dot_dimension_numbers<[2], [1], [1], [2], [0, 0, 0, 1, 1, 2], [0], [0]>} : vector<8x16x3xbf16>, vector<8x3x512xbf16>, vector<8x16x512xf32> -> vector<8x16x512xf32>
    %cst_15 = arith.constant dense<0.000000e+00> : vector<8x16x512xf32>
    %27 = tpu.matmul %10, %20, %cst_15 {dimension_numbers = #tpu.dot_dimension_numbers<[2], [1], [1], [2], [0, 0, 0, 1, 1, 2], [0], [0]>} : vector<8x16x3xbf16>, vector<8x3x512xbf16>, vector<8x16x512xf32> -> vector<8x16x512xf32>
    "tpu.trace_stop"() : () -> ()
    %28 = arith.addf %26, %27 : vector<8x16x512xf32>
    "tpu.trace_start"() <{level = 10 : i32, message = "noc,nct->not"}> : () -> ()
    %cst_16 = arith.constant dense<0.000000e+00> : vector<8x16x512xf32>
    %29 = tpu.matmul %15, %25, %cst_16 {dimension_numbers = #tpu.dot_dimension_numbers<[2], [1], [1], [2], [0, 0, 0, 1, 1, 2], [0], [0]>} : vector<8x16x3xbf16>, vector<8x3x512xbf16>, vector<8x16x512xf32> -> vector<8x16x512xf32>
    "tpu.trace_stop"() : () -> ()
    %30 = arith.addf %28, %29 : vector<8x16x512xf32>
    %31 = vector.broadcast %16 : vector<1x16x1xf32> to vector<8x16x512xf32>
    %32 = arith.addf %30, %31 : vector<8x16x512xf32>
    %cst_17 = arith.constant 0.000000e+00 : f32
    %33 = vector.broadcast %cst_17 : f32 to vector<8x16x512xf32>
    %34 = arith.maximumf %32, %33 : vector<8x16x512xf32>
    %cst_18 = arith.constant dense<0.000000e+00> : vector<8x16xf32>
    %35 = vector.multi_reduction <add>, %34, %cst_18 [2] : vector<8x16x512xf32> to vector<8x16xf32>
    %36 = arith.addf %18, %35 : vector<8x16xf32>
    %c0_19 = arith.constant 0 : index
    %c0_20 = arith.constant 0 : index
    %c512 = arith.constant 512 : index
    %37 = vector.load %arg1[%c0_19, %c0_20, %c512] : memref<8x3x1024xf32, #tpu.memory_space<vmem>>, vector<8x3x512xf32>
    %38 = arith.truncf %37 : vector<8x3x512xf32> to vector<8x3x512xbf16>
    %c0_21 = arith.constant 0 : index
    %c0_22 = arith.constant 0 : index
    %c511 = arith.constant 511 : index
    %39 = vector.load %arg1[%c0_21, %c0_22, %c511] : memref<8x3x1024xf32, #tpu.memory_space<vmem>>, vector<8x3x512xf32>
    %40 = arith.truncf %39 : vector<8x3x512xf32> to vector<8x3x512xbf16>
    %c0_23 = arith.constant 0 : index
    %c0_24 = arith.constant 0 : index
    %c513 = arith.constant 513 : index
    %41 = vector.load %arg1[%c0_23, %c0_24, %c513] : memref<8x3x1024xf32, #tpu.memory_space<vmem>>, vector<8x3x511xf32>
    %42 = arith.truncf %41 : vector<8x3x511xf32> to vector<8x3x511xbf16>
    %43 = tpu.concatenate %42, %17 in 2 : vector<8x3x511xbf16>, vector<8x3x1xbf16> -> vector<8x3x512xbf16>
    "tpu.trace_start"() <{level = 10 : i32, message = "noc,nct->not"}> : () -> ()
    %cst_25 = arith.constant dense<0.000000e+00> : vector<8x16x512xf32>
    %44 = tpu.matmul %5, %40, %cst_25 {dimension_numbers = #tpu.dot_dimension_numbers<[2], [1], [1], [2], [0, 0, 0, 1, 1, 2], [0], [0]>} : vector<8x16x3xbf16>, vector<8x3x512xbf16>, vector<8x16x512xf32> -> vector<8x16x512xf32>
    %cst_26 = arith.constant dense<0.000000e+00> : vector<8x16x512xf32>
    %45 = tpu.matmul %10, %38, %cst_26 {dimension_numbers = #tpu.dot_dimension_numbers<[2], [1], [1], [2], [0, 0, 0, 1, 1, 2], [0], [0]>} : vector<8x16x3xbf16>, vector<8x3x512xbf16>, vector<8x16x512xf32> -> vector<8x16x512xf32>
    "tpu.trace_stop"() : () -> ()
    %46 = arith.addf %44, %45 : vector<8x16x512xf32>
    "tpu.trace_start"() <{level = 10 : i32, message = "noc,nct->not"}> : () -> ()
    %cst_27 = arith.constant dense<0.000000e+00> : vector<8x16x512xf32>
    %47 = tpu.matmul %15, %43, %cst_27 {dimension_numbers = #tpu.dot_dimension_numbers<[2], [1], [1], [2], [0, 0, 0, 1, 1, 2], [0], [0]>} : vector<8x16x3xbf16>, vector<8x3x512xbf16>, vector<8x16x512xf32> -> vector<8x16x512xf32>
    "tpu.trace_stop"() : () -> ()
    %48 = arith.addf %46, %47 : vector<8x16x512xf32>
    %49 = vector.broadcast %16 : vector<1x16x1xf32> to vector<8x16x512xf32>
    %50 = arith.addf %48, %49 : vector<8x16x512xf32>
    %cst_28 = arith.constant 0.000000e+00 : f32
    %51 = vector.broadcast %cst_28 : f32 to vector<8x16x512xf32>
    %52 = arith.maximumf %50, %51 : vector<8x16x512xf32>
    %cst_29 = arith.constant dense<0.000000e+00> : vector<8x16xf32>
    %53 = vector.multi_reduction <add>, %52, %cst_29 [2] : vector<8x16x512xf32> to vector<8x16xf32>
    %54 = arith.addf %36, %53 : vector<8x16xf32>
    %cst_30 = arith.constant 9.765625E-4 : f32
    %55 = vector.broadcast %cst_30 : f32 to vector<8x16xf32>
    %56 = arith.mulf %54, %55 : vector<8x16xf32>
    %57 = arith.truncf %56 : vector<8x16xf32> to vector<8x16xbf16>
    %c0_31 = arith.constant 0 : index
    %c0_32 = arith.constant 0 : index
    %58 = vector.load %arg4[%c0_31, %c0_32] : memref<16x32xbf16, #tpu.memory_space<vmem>>, vector<16x32xbf16>
    %cst_33 = arith.constant dense<0.000000e+00> : vector<8x32xf32>
    %59 = tpu.matmul %57, %58, %cst_33 {dimension_numbers = #tpu.dot_dimension_numbers<[1], [0], [0], [1], [0, 0, 1, 1], [], []>} : vector<8x16xbf16>, vector<16x32xbf16>, vector<8x32xf32> -> vector<8x32xf32>
    %c0_34 = arith.constant 0 : index
    %c0_35 = arith.constant 0 : index
    %60 = vector.load %arg5[%c0_34, %c0_35] : memref<1x32xf32, #tpu.memory_space<vmem>>, vector<1x32xf32>
    %61 = vector.broadcast %60 : vector<1x32xf32> to vector<8x32xf32>
    %62 = arith.addf %59, %61 : vector<8x32xf32>
    %c0_36 = arith.constant 0 : index
    %c0_37 = arith.constant 0 : index
    %63 = vector.load %arg6[%c0_36, %c0_37] : memref<8x32xf32, #tpu.memory_space<vmem>>, vector<8x32xf32>
    tpu.vector_store %arg6[%c0_36, %c0_37], %62 {strides = array<i32>} : memref<8x32xf32, #tpu.memory_space<vmem>>, vector<8x32xf32>,
    return
  }
  func.func @transform_0(%arg0: i32) -> (i32, i32, i32) {
    %c0_i32 = arith.constant 0 : i32
    %c0_i32_0 = arith.constant 0 : i32
    %c0_i32_1 = arith.constant 0 : i32
    return %arg0, %c0_i32, %c0_i32_0 : i32, i32, i32
  }
  func.func @transform_1(%arg0: i32) -> (i32, i32, i32) {
    %c0_i32 = arith.constant 0 : i32
    %c0_i32_0 = arith.constant 0 : i32
    %c0_i32_1 = arith.constant 0 : i32
    %c0_i32_2 = arith.constant 0 : i32
    return %c0_i32, %c0_i32_0, %c0_i32_1 : i32, i32, i32
  }
  func.func @transform_2(%arg0: i32) -> (i32, i32, i32) {
    %c0_i32 = arith.constant 0 : i32
    %c0_i32_0 = arith.constant 0 : i32
    %c0_i32_1 = arith.constant 0 : i32
    %c0_i32_2 = arith.constant 0 : i32
    return %c0_i32, %c0_i32_0, %c0_i32_1 : i32, i32, i32
  }
  func.func @transform_3(%arg0: i32) -> (i32, i32) {
    %c0_i32 = arith.constant 0 : i32
    %c0_i32_0 = arith.constant 0 : i32
    %c0_i32_1 = arith.constant 0 : i32
    return %c0_i32, %c0_i32_0 : i32, i32
  }
  func.func @transform_4(%arg0: i32) -> (i32, i32) {
    %c0_i32 = arith.constant 0 : i32
    %c0_i32_0 = arith.constant 0 : i32
    %c0_i32_1 = arith.constant 0 : i32
    return %c0_i32, %c0_i32_0 : i32, i32
  }
  func.func @transform_5(%arg0: i32) -> (i32, i32) {
    %c0_i32 = arith.constant 0 : i32
    %c0_i32_0 = arith.constant 0 : i32
    return %arg0, %c0_i32 : i32, i32
  }
}

module attributes {stable_mosaic.version = 11 : i64} {
  func.func @fused_kernel(%arg0: i32, %arg1: memref<1x4x32xf32, #tpu.memory_space<vmem>>, %arg2: memref<1x4x3xf32, #tpu.memory_space<vmem>>, %arg3: memref<1x3x3xf32, #tpu.memory_space<vmem>>, %arg4: memref<1x1x7xf32, #tpu.memory_space<vmem>>, %arg5: memref<1x479xf32, #tpu.memory_space<vmem>>, %arg6: memref<3x32xf32, #tpu.memory_space<vmem>>, %arg7: memref<32x32xbf16, #tpu.memory_space<vmem>>, %arg8: memref<32x96xbf16, #tpu.memory_space<vmem>>, %arg9: memref<32x32xbf16, #tpu.memory_space<vmem>>, %arg10: memref<32x64xbf16, #tpu.memory_space<vmem>>, %arg11: memref<64x32xbf16, #tpu.memory_space<vmem>>, %arg12: memref<32x32xbf16, #tpu.memory_space<vmem>>, %arg13: memref<32x16xbf16, #tpu.memory_space<vmem>>, %arg14: memref<16x15xbf16, #tpu.memory_space<vmem>>, %arg15: memref<1x3x128xf32, #tpu.memory_space<vmem>>) attributes {dimension_semantics = [#tpu.dimension_semantics<parallel>], iteration_bounds = array<i64: 2>, scalar_prefetch = 0 : i64, scratch_operands = 0 : i64, tpu.core_type = #tpu.core_type<tc>, window_params = [{transform_indices = @transform_0, window_bounds = array<i64: 1, 4, 32>}, {transform_indices = @transform_1, window_bounds = array<i64: 1, 4, 3>}, {transform_indices = @transform_2, window_bounds = array<i64: 1, 3, 3>}, {transform_indices = @transform_3, window_bounds = array<i64: 1, 1, 7>}, {pipeline_mode = #tpu.pipeline_mode<synchronous>, transform_indices = @transform_4, window_bounds = array<i64: 1, 479>}, {pipeline_mode = #tpu.pipeline_mode<synchronous>, transform_indices = @transform_5, window_bounds = array<i64: 3, 32>}, {pipeline_mode = #tpu.pipeline_mode<synchronous>, transform_indices = @transform_6, window_bounds = array<i64: 32, 32>}, {pipeline_mode = #tpu.pipeline_mode<synchronous>, transform_indices = @transform_7, window_bounds = array<i64: 32, 96>}, {pipeline_mode = #tpu.pipeline_mode<synchronous>, transform_indices = @transform_8, window_bounds = array<i64: 32, 32>}, {pipeline_mode = #tpu.pipeline_mode<synchronous>, transform_indices = @transform_9, window_bounds = array<i64: 32, 64>}, {pipeline_mode = #tpu.pipeline_mode<synchronous>, transform_indices = @transform_10, window_bounds = array<i64: 64, 32>}, {pipeline_mode = #tpu.pipeline_mode<synchronous>, transform_indices = @transform_11, window_bounds = array<i64: 32, 32>}, {pipeline_mode = #tpu.pipeline_mode<synchronous>, transform_indices = @transform_12, window_bounds = array<i64: 32, 16>}, {pipeline_mode = #tpu.pipeline_mode<synchronous>, transform_indices = @transform_13, window_bounds = array<i64: 16, 15>}, {transform_indices = @transform_14, window_bounds = array<i64: 1, 3, 128>}]} {
    %c0 = arith.constant 0 : index
    %c0_0 = arith.constant 0 : index
    %c0_1 = arith.constant 0 : index
    %0 = vector.load %arg1[%c0, %c0_0, %c0_1] : memref<1x4x32xf32, #tpu.memory_space<vmem>>, vector<1x4x32xf32>
    %1 = vector.shape_cast %0 : vector<1x4x32xf32> to vector<4x32xf32>
    %c0_2 = arith.constant 0 : index
    %c0_3 = arith.constant 0 : index
    %c0_4 = arith.constant 0 : index
    %2 = vector.load %arg2[%c0_2, %c0_3, %c0_4] : memref<1x4x3xf32, #tpu.memory_space<vmem>>, vector<1x4x3xf32>
    %3 = vector.shape_cast %2 : vector<1x4x3xf32> to vector<4x3xf32>
    %c0_5 = arith.constant 0 : index
    %c0_6 = arith.constant 0 : index
    %c0_7 = arith.constant 0 : index
    %4 = vector.load %arg3[%c0_5, %c0_6, %c0_7] : memref<1x3x3xf32, #tpu.memory_space<vmem>>, vector<1x3x3xf32>
    %5 = vector.shape_cast %4 : vector<1x3x3xf32> to vector<3x3xf32>
    %6 = tpu.concatenate %3, %5 in 0 : vector<4x3xf32>, vector<3x3xf32> -> vector<7x3xf32>
    %c0_8 = arith.constant 0 : index
    %c0_9 = arith.constant 0 : index
    %7 = vector.load %arg6[%c0_8, %c0_9] : memref<3x32xf32, #tpu.memory_space<vmem>>, vector<3x32xf32>
    %cst = arith.constant dense<0.000000e+00> : vector<7x32xf32>
    %8 = tpu.matmul %6, %7, %cst {dimension_numbers = #tpu.dot_dimension_numbers<[1], [0], [0], [1], [0, 0, 1, 1], [], []>} : vector<7x3xf32>, vector<3x32xf32>, vector<7x32xf32> -> vector<7x32xf32>
    %c0_10 = arith.constant 0 : index
    %c0_11 = arith.constant 0 : index
    %9 = vector.load %arg5[%c0_10, %c0_11] : memref<1x479xf32, #tpu.memory_space<vmem>>, vector<1x32xf32>
    %10 = vector.broadcast %9 : vector<1x32xf32> to vector<7x32xf32>
    %11 = arith.addf %8, %10 : vector<7x32xf32>
    %cst_12 = arith.constant 0.000000e+00 : f32
    %12 = vector.broadcast %cst_12 : f32 to vector<7x32xf32>
    %13 = arith.maximumf %11, %12 : vector<7x32xf32>
    %14 = arith.truncf %13 : vector<7x32xf32> to vector<7x32xbf16>
    %c0_13 = arith.constant 0 : index
    %c0_14 = arith.constant 0 : index
    %15 = vector.load %arg7[%c0_13, %c0_14] : memref<32x32xbf16, #tpu.memory_space<vmem>>, vector<32x32xbf16>
    %cst_15 = arith.constant dense<0.000000e+00> : vector<7x32xf32>
    %16 = tpu.matmul %14, %15, %cst_15 {dimension_numbers = #tpu.dot_dimension_numbers<[1], [0], [0], [1], [0, 0, 1, 1], [], []>} : vector<7x32xbf16>, vector<32x32xbf16>, vector<7x32xf32> -> vector<7x32xf32>
    %c0_16 = arith.constant 0 : index
    %c32 = arith.constant 32 : index
    %17 = vector.load %arg5[%c0_16, %c32] : memref<1x479xf32, #tpu.memory_space<vmem>>, vector<1x32xf32>
    %18 = vector.broadcast %17 : vector<1x32xf32> to vector<7x32xf32>
    %19 = arith.addf %16, %18 : vector<7x32xf32>
    %cst_17 = arith.constant 0.000000e+00 : f32
    %20 = vector.broadcast %cst_17 : f32 to vector<3x32xf32>
    %21 = tpu.concatenate %1, %20 in 0 : vector<4x32xf32>, vector<3x32xf32> -> vector<7x32xf32>
    %22 = arith.addf %19, %21 : vector<7x32xf32>
    %c0_18 = arith.constant 0 : index
    %c0_19 = arith.constant 0 : index
    %c0_20 = arith.constant 0 : index
    %23 = vector.load %arg4[%c0_18, %c0_19, %c0_20] : memref<1x1x7xf32, #tpu.memory_space<vmem>>, vector<1x1x7xf32>
    %24 = vector.shape_cast %23 : vector<1x1x7xf32> to vector<1x7xf32>
    %cst_21 = arith.constant 5.000000e-01 : f32
    %25 = vector.broadcast %cst_21 : f32 to vector<1x7xf32>
    %26 = arith.cmpf ogt, %24, %25 : vector<1x7xf32>
    %cst_22 = arith.constant -1.000000e+09 : f32
    %cst_23 = arith.constant 0.000000e+00 : f32
    %27 = vector.broadcast %cst_22 : f32 to vector<1x7xf32>
    %28 = vector.broadcast %cst_23 : f32 to vector<1x7xf32>
    %29 = arith.select %26, %27, %28 : vector<1x7xi1>, vector<1x7xf32>
    %30 = arith.truncf %22 : vector<7x32xf32> to vector<7x32xbf16>
    %c0_24 = arith.constant 0 : index
    %c0_25 = arith.constant 0 : index
    %31 = vector.load %arg8[%c0_24, %c0_25] : memref<32x96xbf16, #tpu.memory_space<vmem>>, vector<32x96xbf16>
    %cst_26 = arith.constant dense<0.000000e+00> : vector<7x96xf32>
    %32 = tpu.matmul %30, %31, %cst_26 {dimension_numbers = #tpu.dot_dimension_numbers<[1], [0], [0], [1], [0, 0, 1, 1], [], []>} : vector<7x32xbf16>, vector<32x96xbf16>, vector<7x96xf32> -> vector<7x96xf32>
    %c0_27 = arith.constant 0 : index
    %c64 = arith.constant 64 : index
    %33 = vector.load %arg5[%c0_27, %c64] : memref<1x479xf32, #tpu.memory_space<vmem>>, vector<1x96xf32>
    %34 = vector.broadcast %33 : vector<1x96xf32> to vector<7x96xf32>
    %35 = arith.addf %32, %34 : vector<7x96xf32>
    %36 = vector.extract_strided_slice %35 {offsets = [0, 0], sizes = [7, 32], strides = [1, 1]} : vector<7x96xf32> to vector<7x32xf32>
    %37 = arith.truncf %36 : vector<7x32xf32> to vector<7x32xbf16>
    %38 = vector.extract_strided_slice %35 {offsets = [0, 32], sizes = [7, 32], strides = [1, 1]} : vector<7x96xf32> to vector<7x32xf32>
    %39 = arith.truncf %38 : vector<7x32xf32> to vector<7x32xbf16>
    %40 = vector.extract_strided_slice %35 {offsets = [0, 64], sizes = [7, 32], strides = [1, 1]} : vector<7x96xf32> to vector<7x32xf32>
    %41 = arith.truncf %40 : vector<7x32xf32> to vector<7x32xbf16>
    %c0_28 = arith.constant 0 : index
    %c0_29 = arith.constant 0 : index
    %42 = vector.load %arg9[%c0_28, %c0_29] : memref<32x32xbf16, #tpu.memory_space<vmem>>, vector<32x32xbf16>
    %cst_30 = arith.constant 0.000000e+00 : f32
    %43 = vector.broadcast %cst_30 : f32 to vector<7x32xf32>
    %44 = vector.extract_strided_slice %37 {offsets = [0, 0], sizes = [7, 8], strides = [1, 1]} : vector<7x32xbf16> to vector<7x8xbf16>
    %45 = vector.extract_strided_slice %39 {offsets = [0, 0], sizes = [7, 8], strides = [1, 1]} : vector<7x32xbf16> to vector<7x8xbf16>
    %cst_31 = arith.constant dense<0.000000e+00> : vector<7x7xf32>
    %46 = tpu.matmul %44, %45, %cst_31 {dimension_numbers = #tpu.dot_dimension_numbers<[1], [1], [0], [0], [0, 0, 1, 0], [], []>} : vector<7x8xbf16>, vector<7x8xbf16>, vector<7x7xf32> -> vector<7x7xf32>
    %cst_32 = arith.constant 0.353553385 : f32
    %47 = vector.broadcast %cst_32 : f32 to vector<7x7xf32>
    %48 = arith.mulf %46, %47 : vector<7x7xf32>
    %49 = vector.broadcast %29 : vector<1x7xf32> to vector<7x7xf32>
    %50 = arith.addf %48, %49 : vector<7x7xf32>
    %cst_33 = arith.constant dense<0xFF800000> : vector<7xf32>
    %51 = vector.multi_reduction <maximumf>, %50, %cst_33 [1] : vector<7x7xf32> to vector<7xf32>
    %52 = vector.shape_cast %51 : vector<7xf32> to vector<7x1xf32>
    %53 = vector.broadcast %52 : vector<7x1xf32> to vector<7x7xf32>
    %54 = arith.subf %50, %53 : vector<7x7xf32>
    %55 = math.exp %54 : vector<7x7xf32>
    %cst_34 = arith.constant dense<0.000000e+00> : vector<7xf32>
    %56 = vector.multi_reduction <add>, %55, %cst_34 [1] : vector<7x7xf32> to vector<7xf32>
    %57 = vector.shape_cast %56 : vector<7xf32> to vector<7x1xf32>
    %58 = tpu.reciprocal %57 {approx = true} : vector<7x1xf32> -> vector<7x1xf32>
    %59 = vector.broadcast %58 : vector<7x1xf32> to vector<7x7xf32>
    %60 = arith.mulf %55, %59 : vector<7x7xf32>
    %61 = arith.truncf %60 : vector<7x7xf32> to vector<7x7xbf16>
    %62 = vector.extract_strided_slice %41 {offsets = [0, 0], sizes = [7, 8], strides = [1, 1]} : vector<7x32xbf16> to vector<7x8xbf16>
    %cst_35 = arith.constant dense<0.000000e+00> : vector<7x8xf32>
    %63 = tpu.matmul %61, %62, %cst_35 {dimension_numbers = #tpu.dot_dimension_numbers<[1], [0], [0], [1], [0, 0, 1, 1], [], []>} : vector<7x7xbf16>, vector<7x8xbf16>, vector<7x8xf32> -> vector<7x8xf32>
    %64 = arith.truncf %63 : vector<7x8xf32> to vector<7x8xbf16>
    %65 = vector.extract_strided_slice %42 {offsets = [0, 0], sizes = [8, 32], strides = [1, 1]} : vector<32x32xbf16> to vector<8x32xbf16>
    %cst_36 = arith.constant dense<0.000000e+00> : vector<7x32xf32>
    %66 = tpu.matmul %64, %65, %cst_36 {dimension_numbers = #tpu.dot_dimension_numbers<[1], [0], [0], [1], [0, 0, 1, 1], [], []>} : vector<7x8xbf16>, vector<8x32xbf16>, vector<7x32xf32> -> vector<7x32xf32>
    %67 = arith.addf %43, %66 : vector<7x32xf32>
    %68 = vector.extract_strided_slice %37 {offsets = [0, 8], sizes = [7, 8], strides = [1, 1]} : vector<7x32xbf16> to vector<7x8xbf16>
    %69 = vector.extract_strided_slice %39 {offsets = [0, 8], sizes = [7, 8], strides = [1, 1]} : vector<7x32xbf16> to vector<7x8xbf16>
    %cst_37 = arith.constant dense<0.000000e+00> : vector<7x7xf32>
    %70 = tpu.matmul %68, %69, %cst_37 {dimension_numbers = #tpu.dot_dimension_numbers<[1], [1], [0], [0], [0, 0, 1, 0], [], []>} : vector<7x8xbf16>, vector<7x8xbf16>, vector<7x7xf32> -> vector<7x7xf32>
    %cst_38 = arith.constant 0.353553385 : f32
    %71 = vector.broadcast %cst_38 : f32 to vector<7x7xf32>
    %72 = arith.mulf %70, %71 : vector<7x7xf32>
    %73 = vector.broadcast %29 : vector<1x7xf32> to vector<7x7xf32>
    %74 = arith.addf %72, %73 : vector<7x7xf32>
    %cst_39 = arith.constant dense<0xFF800000> : vector<7xf32>
    %75 = vector.multi_reduction <maximumf>, %74, %cst_39 [1] : vector<7x7xf32> to vector<7xf32>
    %76 = vector.shape_cast %75 : vector<7xf32> to vector<7x1xf32>
    %77 = vector.broadcast %76 : vector<7x1xf32> to vector<7x7xf32>
    %78 = arith.subf %74, %77 : vector<7x7xf32>
    %79 = math.exp %78 : vector<7x7xf32>
    %cst_40 = arith.constant dense<0.000000e+00> : vector<7xf32>
    %80 = vector.multi_reduction <add>, %79, %cst_40 [1] : vector<7x7xf32> to vector<7xf32>
    %81 = vector.shape_cast %80 : vector<7xf32> to vector<7x1xf32>
    %82 = tpu.reciprocal %81 {approx = true} : vector<7x1xf32> -> vector<7x1xf32>
    %83 = vector.broadcast %82 : vector<7x1xf32> to vector<7x7xf32>
    %84 = arith.mulf %79, %83 : vector<7x7xf32>
    %85 = arith.truncf %84 : vector<7x7xf32> to vector<7x7xbf16>
    %86 = vector.extract_strided_slice %41 {offsets = [0, 8], sizes = [7, 8], strides = [1, 1]} : vector<7x32xbf16> to vector<7x8xbf16>
    %cst_41 = arith.constant dense<0.000000e+00> : vector<7x8xf32>
    %87 = tpu.matmul %85, %86, %cst_41 {dimension_numbers = #tpu.dot_dimension_numbers<[1], [0], [0], [1], [0, 0, 1, 1], [], []>} : vector<7x7xbf16>, vector<7x8xbf16>, vector<7x8xf32> -> vector<7x8xf32>
    %88 = arith.truncf %87 : vector<7x8xf32> to vector<7x8xbf16>
    %89 = vector.extract_strided_slice %42 {offsets = [8, 0], sizes = [8, 32], strides = [1, 1]} : vector<32x32xbf16> to vector<8x32xbf16>
    %cst_42 = arith.constant dense<0.000000e+00> : vector<7x32xf32>
    %90 = tpu.matmul %88, %89, %cst_42 {dimension_numbers = #tpu.dot_dimension_numbers<[1], [0], [0], [1], [0, 0, 1, 1], [], []>} : vector<7x8xbf16>, vector<8x32xbf16>, vector<7x32xf32> -> vector<7x32xf32>
    %91 = arith.addf %67, %90 : vector<7x32xf32>
    %92 = vector.extract_strided_slice %37 {offsets = [0, 16], sizes = [7, 8], strides = [1, 1]} : vector<7x32xbf16> to vector<7x8xbf16>
    %93 = vector.extract_strided_slice %39 {offsets = [0, 16], sizes = [7, 8], strides = [1, 1]} : vector<7x32xbf16> to vector<7x8xbf16>
    %cst_43 = arith.constant dense<0.000000e+00> : vector<7x7xf32>
    %94 = tpu.matmul %92, %93, %cst_43 {dimension_numbers = #tpu.dot_dimension_numbers<[1], [1], [0], [0], [0, 0, 1, 0], [], []>} : vector<7x8xbf16>, vector<7x8xbf16>, vector<7x7xf32> -> vector<7x7xf32>
    %cst_44 = arith.constant 0.353553385 : f32
    %95 = vector.broadcast %cst_44 : f32 to vector<7x7xf32>
    %96 = arith.mulf %94, %95 : vector<7x7xf32>
    %97 = vector.broadcast %29 : vector<1x7xf32> to vector<7x7xf32>
    %98 = arith.addf %96, %97 : vector<7x7xf32>
    %cst_45 = arith.constant dense<0xFF800000> : vector<7xf32>
    %99 = vector.multi_reduction <maximumf>, %98, %cst_45 [1] : vector<7x7xf32> to vector<7xf32>
    %100 = vector.shape_cast %99 : vector<7xf32> to vector<7x1xf32>
    %101 = vector.broadcast %100 : vector<7x1xf32> to vector<7x7xf32>
    %102 = arith.subf %98, %101 : vector<7x7xf32>
    %103 = math.exp %102 : vector<7x7xf32>
    %cst_46 = arith.constant dense<0.000000e+00> : vector<7xf32>
    %104 = vector.multi_reduction <add>, %103, %cst_46 [1] : vector<7x7xf32> to vector<7xf32>
    %105 = vector.shape_cast %104 : vector<7xf32> to vector<7x1xf32>
    %106 = tpu.reciprocal %105 {approx = true} : vector<7x1xf32> -> vector<7x1xf32>
    %107 = vector.broadcast %106 : vector<7x1xf32> to vector<7x7xf32>
    %108 = arith.mulf %103, %107 : vector<7x7xf32>
    %109 = arith.truncf %108 : vector<7x7xf32> to vector<7x7xbf16>
    %110 = vector.extract_strided_slice %41 {offsets = [0, 16], sizes = [7, 8], strides = [1, 1]} : vector<7x32xbf16> to vector<7x8xbf16>
    %cst_47 = arith.constant dense<0.000000e+00> : vector<7x8xf32>
    %111 = tpu.matmul %109, %110, %cst_47 {dimension_numbers = #tpu.dot_dimension_numbers<[1], [0], [0], [1], [0, 0, 1, 1], [], []>} : vector<7x7xbf16>, vector<7x8xbf16>, vector<7x8xf32> -> vector<7x8xf32>
    %112 = arith.truncf %111 : vector<7x8xf32> to vector<7x8xbf16>
    %113 = vector.extract_strided_slice %42 {offsets = [16, 0], sizes = [8, 32], strides = [1, 1]} : vector<32x32xbf16> to vector<8x32xbf16>
    %cst_48 = arith.constant dense<0.000000e+00> : vector<7x32xf32>
    %114 = tpu.matmul %112, %113, %cst_48 {dimension_numbers = #tpu.dot_dimension_numbers<[1], [0], [0], [1], [0, 0, 1, 1], [], []>} : vector<7x8xbf16>, vector<8x32xbf16>, vector<7x32xf32> -> vector<7x32xf32>
    %115 = arith.addf %91, %114 : vector<7x32xf32>
    %116 = vector.extract_strided_slice %37 {offsets = [0, 24], sizes = [7, 8], strides = [1, 1]} : vector<7x32xbf16> to vector<7x8xbf16>
    %117 = vector.extract_strided_slice %39 {offsets = [0, 24], sizes = [7, 8], strides = [1, 1]} : vector<7x32xbf16> to vector<7x8xbf16>
    %cst_49 = arith.constant dense<0.000000e+00> : vector<7x7xf32>
    %118 = tpu.matmul %116, %117, %cst_49 {dimension_numbers = #tpu.dot_dimension_numbers<[1], [1], [0], [0], [0, 0, 1, 0], [], []>} : vector<7x8xbf16>, vector<7x8xbf16>, vector<7x7xf32> -> vector<7x7xf32>
    %cst_50 = arith.constant 0.353553385 : f32
    %119 = vector.broadcast %cst_50 : f32 to vector<7x7xf32>
    %120 = arith.mulf %118, %119 : vector<7x7xf32>
    %121 = vector.broadcast %29 : vector<1x7xf32> to vector<7x7xf32>
    %122 = arith.addf %120, %121 : vector<7x7xf32>
    %cst_51 = arith.constant dense<0xFF800000> : vector<7xf32>
    %123 = vector.multi_reduction <maximumf>, %122, %cst_51 [1] : vector<7x7xf32> to vector<7xf32>
    %124 = vector.shape_cast %123 : vector<7xf32> to vector<7x1xf32>
    %125 = vector.broadcast %124 : vector<7x1xf32> to vector<7x7xf32>
    %126 = arith.subf %122, %125 : vector<7x7xf32>
    %127 = math.exp %126 : vector<7x7xf32>
    %cst_52 = arith.constant dense<0.000000e+00> : vector<7xf32>
    %128 = vector.multi_reduction <add>, %127, %cst_52 [1] : vector<7x7xf32> to vector<7xf32>
    %129 = vector.shape_cast %128 : vector<7xf32> to vector<7x1xf32>
    %130 = tpu.reciprocal %129 {approx = true} : vector<7x1xf32> -> vector<7x1xf32>
    %131 = vector.broadcast %130 : vector<7x1xf32> to vector<7x7xf32>
    %132 = arith.mulf %127, %131 : vector<7x7xf32>
    %133 = arith.truncf %132 : vector<7x7xf32> to vector<7x7xbf16>
    %134 = vector.extract_strided_slice %41 {offsets = [0, 24], sizes = [7, 8], strides = [1, 1]} : vector<7x32xbf16> to vector<7x8xbf16>
    %cst_53 = arith.constant dense<0.000000e+00> : vector<7x8xf32>
    %135 = tpu.matmul %133, %134, %cst_53 {dimension_numbers = #tpu.dot_dimension_numbers<[1], [0], [0], [1], [0, 0, 1, 1], [], []>} : vector<7x7xbf16>, vector<7x8xbf16>, vector<7x8xf32> -> vector<7x8xf32>
    %136 = arith.truncf %135 : vector<7x8xf32> to vector<7x8xbf16>
    %137 = vector.extract_strided_slice %42 {offsets = [24, 0], sizes = [8, 32], strides = [1, 1]} : vector<32x32xbf16> to vector<8x32xbf16>
    %cst_54 = arith.constant dense<0.000000e+00> : vector<7x32xf32>
    %138 = tpu.matmul %136, %137, %cst_54 {dimension_numbers = #tpu.dot_dimension_numbers<[1], [0], [0], [1], [0, 0, 1, 1], [], []>} : vector<7x8xbf16>, vector<8x32xbf16>, vector<7x32xf32> -> vector<7x32xf32>
    %139 = arith.addf %115, %138 : vector<7x32xf32>
    %c0_55 = arith.constant 0 : index
    %c160 = arith.constant 160 : index
    %140 = vector.load %arg5[%c0_55, %c160] : memref<1x479xf32, #tpu.memory_space<vmem>>, vector<1x32xf32>
    %141 = vector.broadcast %140 : vector<1x32xf32> to vector<7x32xf32>
    %142 = arith.addf %139, %141 : vector<7x32xf32>
    %143 = arith.addf %22, %142 : vector<7x32xf32>
    %cst_56 = arith.constant dense<0.000000e+00> : vector<7xf32>
    %144 = vector.multi_reduction <add>, %143, %cst_56 [1] : vector<7x32xf32> to vector<7xf32>
    %145 = vector.shape_cast %144 : vector<7xf32> to vector<7x1xf32>
    %cst_57 = arith.constant 3.200000e+01 : f32
    %146 = vector.broadcast %cst_57 : f32 to vector<7x1xf32>
    %147 = arith.divf %145, %146 : vector<7x1xf32>
    %148 = vector.broadcast %147 : vector<7x1xf32> to vector<7x32xf32>
    %149 = arith.subf %143, %148 : vector<7x32xf32>
    %150 = arith.mulf %149, %149 : vector<7x32xf32>
    %cst_58 = arith.constant dense<0.000000e+00> : vector<7xf32>
    %151 = vector.multi_reduction <add>, %150, %cst_58 [1] : vector<7x32xf32> to vector<7xf32>
    %152 = vector.shape_cast %151 : vector<7xf32> to vector<7x1xf32>
    %cst_59 = arith.constant 3.200000e+01 : f32
    %153 = vector.broadcast %cst_59 : f32 to vector<7x1xf32>
    %154 = arith.divf %152, %153 : vector<7x1xf32>
    %155 = vector.broadcast %147 : vector<7x1xf32> to vector<7x32xf32>
    %156 = arith.subf %143, %155 : vector<7x32xf32>
    %cst_60 = arith.constant 9.99999974E-6 : f32
    %157 = vector.broadcast %cst_60 : f32 to vector<7x1xf32>
    %158 = arith.addf %154, %157 : vector<7x1xf32>
    %159 = math.rsqrt %158 : vector<7x1xf32>
    %160 = vector.broadcast %159 : vector<7x1xf32> to vector<7x32xf32>
    %161 = arith.mulf %156, %160 : vector<7x32xf32>
    %c0_61 = arith.constant 0 : index
    %c192 = arith.constant 192 : index
    %162 = vector.load %arg5[%c0_61, %c192] : memref<1x479xf32, #tpu.memory_space<vmem>>, vector<1x32xf32>
    %163 = vector.broadcast %162 : vector<1x32xf32> to vector<7x32xf32>
    %164 = arith.mulf %161, %163 : vector<7x32xf32>
    %c0_62 = arith.constant 0 : index
    %c224 = arith.constant 224 : index
    %165 = vector.load %arg5[%c0_62, %c224] : memref<1x479xf32, #tpu.memory_space<vmem>>, vector<1x32xf32>
    %166 = vector.broadcast %165 : vector<1x32xf32> to vector<7x32xf32>
    %167 = arith.addf %164, %166 : vector<7x32xf32>
    %168 = arith.truncf %167 : vector<7x32xf32> to vector<7x32xbf16>
    %c0_63 = arith.constant 0 : index
    %c0_64 = arith.constant 0 : index
    %169 = vector.load %arg10[%c0_63, %c0_64] : memref<32x64xbf16, #tpu.memory_space<vmem>>, vector<32x64xbf16>
    %cst_65 = arith.constant dense<0.000000e+00> : vector<7x64xf32>
    %170 = tpu.matmul %168, %169, %cst_65 {dimension_numbers = #tpu.dot_dimension_numbers<[1], [0], [0], [1], [0, 0, 1, 1], [], []>} : vector<7x32xbf16>, vector<32x64xbf16>, vector<7x64xf32> -> vector<7x64xf32>
    %c0_66 = arith.constant 0 : index
    %c256 = arith.constant 256 : index
    %171 = vector.load %arg5[%c0_66, %c256] : memref<1x479xf32, #tpu.memory_space<vmem>>, vector<1x64xf32>
    %172 = vector.broadcast %171 : vector<1x64xf32> to vector<7x64xf32>
    %173 = arith.addf %170, %172 : vector<7x64xf32>
    %cst_67 = arith.constant 0.000000e+00 : f32
    %174 = vector.broadcast %cst_67 : f32 to vector<7x64xf32>
    %175 = arith.maximumf %173, %174 : vector<7x64xf32>
    %176 = arith.truncf %175 : vector<7x64xf32> to vector<7x64xbf16>
    %c0_68 = arith.constant 0 : index
    %c0_69 = arith.constant 0 : index
    %177 = vector.load %arg11[%c0_68, %c0_69] : memref<64x32xbf16, #tpu.memory_space<vmem>>, vector<64x32xbf16>
    %cst_70 = arith.constant dense<0.000000e+00> : vector<7x32xf32>
    %178 = tpu.matmul %176, %177, %cst_70 {dimension_numbers = #tpu.dot_dimension_numbers<[1], [0], [0], [1], [0, 0, 1, 1], [], []>} : vector<7x64xbf16>, vector<64x32xbf16>, vector<7x32xf32> -> vector<7x32xf32>
    %c0_71 = arith.constant 0 : index
    %c320 = arith.constant 320 : index
    %179 = vector.load %arg5[%c0_71, %c320] : memref<1x479xf32, #tpu.memory_space<vmem>>, vector<1x32xf32>
    %180 = vector.broadcast %179 : vector<1x32xf32> to vector<7x32xf32>
    %181 = arith.addf %178, %180 : vector<7x32xf32>
    %182 = arith.addf %167, %181 : vector<7x32xf32>
    %cst_72 = arith.constant dense<0.000000e+00> : vector<7xf32>
    %183 = vector.multi_reduction <add>, %182, %cst_72 [1] : vector<7x32xf32> to vector<7xf32>
    %184 = vector.shape_cast %183 : vector<7xf32> to vector<7x1xf32>
    %cst_73 = arith.constant 3.200000e+01 : f32
    %185 = vector.broadcast %cst_73 : f32 to vector<7x1xf32>
    %186 = arith.divf %184, %185 : vector<7x1xf32>
    %187 = vector.broadcast %186 : vector<7x1xf32> to vector<7x32xf32>
    %188 = arith.subf %182, %187 : vector<7x32xf32>
    %189 = arith.mulf %188, %188 : vector<7x32xf32>
    %cst_74 = arith.constant dense<0.000000e+00> : vector<7xf32>
    %190 = vector.multi_reduction <add>, %189, %cst_74 [1] : vector<7x32xf32> to vector<7xf32>
    %191 = vector.shape_cast %190 : vector<7xf32> to vector<7x1xf32>
    %cst_75 = arith.constant 3.200000e+01 : f32
    %192 = vector.broadcast %cst_75 : f32 to vector<7x1xf32>
    %193 = arith.divf %191, %192 : vector<7x1xf32>
    %194 = vector.broadcast %186 : vector<7x1xf32> to vector<7x32xf32>
    %195 = arith.subf %182, %194 : vector<7x32xf32>
    %cst_76 = arith.constant 9.99999974E-6 : f32
    %196 = vector.broadcast %cst_76 : f32 to vector<7x1xf32>
    %197 = arith.addf %193, %196 : vector<7x1xf32>
    %198 = math.rsqrt %197 : vector<7x1xf32>
    %199 = vector.broadcast %198 : vector<7x1xf32> to vector<7x32xf32>
    %200 = arith.mulf %195, %199 : vector<7x32xf32>
    %c0_77 = arith.constant 0 : index
    %c352 = arith.constant 352 : index
    %201 = vector.load %arg5[%c0_77, %c352] : memref<1x479xf32, #tpu.memory_space<vmem>>, vector<1x32xf32>
    %202 = vector.broadcast %201 : vector<1x32xf32> to vector<7x32xf32>
    %203 = arith.mulf %200, %202 : vector<7x32xf32>
    %c0_78 = arith.constant 0 : index
    %c384 = arith.constant 384 : index
    %204 = vector.load %arg5[%c0_78, %c384] : memref<1x479xf32, #tpu.memory_space<vmem>>, vector<1x32xf32>
    %205 = vector.broadcast %204 : vector<1x32xf32> to vector<7x32xf32>
    %206 = arith.addf %203, %205 : vector<7x32xf32>
    %207 = vector.extract_strided_slice %206 {offsets = [4, 0], sizes = [3, 32], strides = [1, 1]} : vector<7x32xf32> to vector<3x32xf32>
    %208 = arith.truncf %207 : vector<3x32xf32> to vector<3x32xbf16>
    %c0_79 = arith.constant 0 : index
    %c0_80 = arith.constant 0 : index
    %209 = vector.load %arg12[%c0_79, %c0_80] : memref<32x32xbf16, #tpu.memory_space<vmem>>, vector<32x32xbf16>
    %cst_81 = arith.constant dense<0.000000e+00> : vector<3x32xf32>
    %210 = tpu.matmul %208, %209, %cst_81 {dimension_numbers = #tpu.dot_dimension_numbers<[1], [0], [0], [1], [0, 0, 1, 1], [], []>} : vector<3x32xbf16>, vector<32x32xbf16>, vector<3x32xf32> -> vector<3x32xf32>
    %c0_82 = arith.constant 0 : index
    %c416 = arith.constant 416 : index
    %211 = vector.load %arg5[%c0_82, %c416] : memref<1x479xf32, #tpu.memory_space<vmem>>, vector<1x32xf32>
    %212 = vector.broadcast %211 : vector<1x32xf32> to vector<3x32xf32>
    %213 = arith.addf %210, %212 : vector<3x32xf32>
    %cst_83 = arith.constant 0.000000e+00 : f32
    %214 = vector.broadcast %cst_83 : f32 to vector<3x32xf32>
    %215 = arith.maximumf %213, %214 : vector<3x32xf32>
    %216 = arith.truncf %215 : vector<3x32xf32> to vector<3x32xbf16>
    %c0_84 = arith.constant 0 : index
    %c0_85 = arith.constant 0 : index
    %217 = vector.load %arg13[%c0_84, %c0_85] : memref<32x16xbf16, #tpu.memory_space<vmem>>, vector<32x16xbf16>
    %cst_86 = arith.constant dense<0.000000e+00> : vector<3x16xf32>
    %218 = tpu.matmul %216, %217, %cst_86 {dimension_numbers = #tpu.dot_dimension_numbers<[1], [0], [0], [1], [0, 0, 1, 1], [], []>} : vector<3x32xbf16>, vector<32x16xbf16>, vector<3x16xf32> -> vector<3x16xf32>
    %c0_87 = arith.constant 0 : index
    %c448 = arith.constant 448 : index
    %219 = vector.load %arg5[%c0_87, %c448] : memref<1x479xf32, #tpu.memory_space<vmem>>, vector<1x16xf32>
    %220 = vector.broadcast %219 : vector<1x16xf32> to vector<3x16xf32>
    %221 = arith.addf %218, %220 : vector<3x16xf32>
    %cst_88 = arith.constant 0.000000e+00 : f32
    %222 = vector.broadcast %cst_88 : f32 to vector<3x16xf32>
    %223 = arith.maximumf %221, %222 : vector<3x16xf32>
    %224 = arith.truncf %223 : vector<3x16xf32> to vector<3x16xbf16>
    %c0_89 = arith.constant 0 : index
    %c0_90 = arith.constant 0 : index
    %225 = vector.load %arg14[%c0_89, %c0_90] : memref<16x15xbf16, #tpu.memory_space<vmem>>, vector<16x15xbf16>
    %cst_91 = arith.constant dense<0.000000e+00> : vector<3x15xf32>
    %226 = tpu.matmul %224, %225, %cst_91 {dimension_numbers = #tpu.dot_dimension_numbers<[1], [0], [0], [1], [0, 0, 1, 1], [], []>} : vector<3x16xbf16>, vector<16x15xbf16>, vector<3x15xf32> -> vector<3x15xf32>
    %c0_92 = arith.constant 0 : index
    %c464 = arith.constant 464 : index
    %227 = vector.load %arg5[%c0_92, %c464] : memref<1x479xf32, #tpu.memory_space<vmem>>, vector<1x15xf32>
    %228 = vector.broadcast %227 : vector<1x15xf32> to vector<3x15xf32>
    %229 = arith.addf %226, %228 : vector<3x15xf32>
    %230 = vector.extract_strided_slice %229 {offsets = [0, 0], sizes = [3, 5], strides = [1, 1]} : vector<3x15xf32> to vector<3x5xf32>
    %cst_93 = arith.constant dense<0xFF800000> : vector<3xf32>
    %231 = vector.multi_reduction <maximumf>, %230, %cst_93 [1] : vector<3x5xf32> to vector<3xf32>
    %232 = vector.shape_cast %231 : vector<3xf32> to vector<3x1xf32>
    %233 = vector.broadcast %232 : vector<3x1xf32> to vector<3x5xf32>
    %234 = arith.subf %230, %233 : vector<3x5xf32>
    %235 = math.exp %234 : vector<3x5xf32>
    %cst_94 = arith.constant dense<0.000000e+00> : vector<3xf32>
    %236 = vector.multi_reduction <add>, %235, %cst_94 [1] : vector<3x5xf32> to vector<3xf32>
    %237 = vector.shape_cast %236 : vector<3xf32> to vector<3x1xf32>
    %238 = vector.broadcast %237 : vector<3x1xf32> to vector<3x5xf32>
    %239 = arith.divf %235, %238 : vector<3x5xf32>
    %240 = vector.extract_strided_slice %229 {offsets = [0, 5], sizes = [3, 5], strides = [1, 1]} : vector<3x15xf32> to vector<3x5xf32>
    %241 = math.exp %240 : vector<3x5xf32>
    %242 = vector.extract_strided_slice %229 {offsets = [0, 10], sizes = [3, 5], strides = [1, 1]} : vector<3x15xf32> to vector<3x5xf32>
    %cst_95 = arith.constant 0.000000e+00 : f32
    %243 = vector.broadcast %cst_95 : f32 to vector<3x113xf32>
    %244 = tpu.concatenate %239, %241, %242, %243 in 1 : vector<3x5xf32>, vector<3x5xf32>, vector<3x5xf32>, vector<3x113xf32> -> vector<3x128xf32>
    %245 = vector.shape_cast %244 : vector<3x128xf32> to vector<1x3x128xf32>
    %c0_96 = arith.constant 0 : index
    %c0_97 = arith.constant 0 : index
    %c0_98 = arith.constant 0 : index
    %246 = vector.load %arg15[%c0_96, %c0_97, %c0_98] : memref<1x3x128xf32, #tpu.memory_space<vmem>>, vector<1x3x128xf32>
    tpu.vector_store %arg15[%c0_96, %c0_97, %c0_98], %245 {strides = array<i32>} : memref<1x3x128xf32, #tpu.memory_space<vmem>>, vector<1x3x128xf32>,
    return
  }
  func.func @transform_0(%arg0: i32) -> (i32, i32, i32) {
    %c0_i32 = arith.constant 0 : i32
    %c0_i32_0 = arith.constant 0 : i32
    %c0_i32_1 = arith.constant 0 : i32
    return %arg0, %c0_i32, %c0_i32_0 : i32, i32, i32
  }
  func.func @transform_1(%arg0: i32) -> (i32, i32, i32) {
    %c0_i32 = arith.constant 0 : i32
    %c0_i32_0 = arith.constant 0 : i32
    %c0_i32_1 = arith.constant 0 : i32
    return %arg0, %c0_i32, %c0_i32_0 : i32, i32, i32
  }
  func.func @transform_2(%arg0: i32) -> (i32, i32, i32) {
    %c0_i32 = arith.constant 0 : i32
    %c0_i32_0 = arith.constant 0 : i32
    %c0_i32_1 = arith.constant 0 : i32
    return %arg0, %c0_i32, %c0_i32_0 : i32, i32, i32
  }
  func.func @transform_3(%arg0: i32) -> (i32, i32, i32) {
    %c0_i32 = arith.constant 0 : i32
    %c0_i32_0 = arith.constant 0 : i32
    %c0_i32_1 = arith.constant 0 : i32
    return %arg0, %c0_i32, %c0_i32_0 : i32, i32, i32
  }
  func.func @transform_4(%arg0: i32) -> (i32, i32) {
    %c0_i32 = arith.constant 0 : i32
    %c0_i32_0 = arith.constant 0 : i32
    %c0_i32_1 = arith.constant 0 : i32
    return %c0_i32, %c0_i32_0 : i32, i32
  }
  func.func @transform_5(%arg0: i32) -> (i32, i32) {
    %c0_i32 = arith.constant 0 : i32
    %c0_i32_0 = arith.constant 0 : i32
    %c0_i32_1 = arith.constant 0 : i32
    return %c0_i32, %c0_i32_0 : i32, i32
  }
  func.func @transform_6(%arg0: i32) -> (i32, i32) {
    %c0_i32 = arith.constant 0 : i32
    %c0_i32_0 = arith.constant 0 : i32
    %c0_i32_1 = arith.constant 0 : i32
    return %c0_i32, %c0_i32_0 : i32, i32
  }
  func.func @transform_7(%arg0: i32) -> (i32, i32) {
    %c0_i32 = arith.constant 0 : i32
    %c0_i32_0 = arith.constant 0 : i32
    %c0_i32_1 = arith.constant 0 : i32
    return %c0_i32, %c0_i32_0 : i32, i32
  }
  func.func @transform_8(%arg0: i32) -> (i32, i32) {
    %c0_i32 = arith.constant 0 : i32
    %c0_i32_0 = arith.constant 0 : i32
    %c0_i32_1 = arith.constant 0 : i32
    return %c0_i32, %c0_i32_0 : i32, i32
  }
  func.func @transform_9(%arg0: i32) -> (i32, i32) {
    %c0_i32 = arith.constant 0 : i32
    %c0_i32_0 = arith.constant 0 : i32
    %c0_i32_1 = arith.constant 0 : i32
    return %c0_i32, %c0_i32_0 : i32, i32
  }
  func.func @transform_10(%arg0: i32) -> (i32, i32) {
    %c0_i32 = arith.constant 0 : i32
    %c0_i32_0 = arith.constant 0 : i32
    %c0_i32_1 = arith.constant 0 : i32
    return %c0_i32, %c0_i32_0 : i32, i32
  }
  func.func @transform_11(%arg0: i32) -> (i32, i32) {
    %c0_i32 = arith.constant 0 : i32
    %c0_i32_0 = arith.constant 0 : i32
    %c0_i32_1 = arith.constant 0 : i32
    return %c0_i32, %c0_i32_0 : i32, i32
  }
  func.func @transform_12(%arg0: i32) -> (i32, i32) {
    %c0_i32 = arith.constant 0 : i32
    %c0_i32_0 = arith.constant 0 : i32
    %c0_i32_1 = arith.constant 0 : i32
    return %c0_i32, %c0_i32_0 : i32, i32
  }
  func.func @transform_13(%arg0: i32) -> (i32, i32) {
    %c0_i32 = arith.constant 0 : i32
    %c0_i32_0 = arith.constant 0 : i32
    %c0_i32_1 = arith.constant 0 : i32
    return %c0_i32, %c0_i32_0 : i32, i32
  }
  func.func @transform_14(%arg0: i32) -> (i32, i32, i32) {
    %c0_i32 = arith.constant 0 : i32
    %c0_i32_0 = arith.constant 0 : i32
    %c0_i32_1 = arith.constant 0 : i32
    return %arg0, %c0_i32, %c0_i32_0 : i32, i32, i32
  }
}

</mosaic_0001>

<llo_original>
// kernel: full_model_forward.3
$region0: #{full_model_forward.3}
  #allocation0 [shape = 'u32[]', space=smem, size = 0x4, offset = 0x4, fixed_abs, tag = 'smem constant byte address 0x4 - core index']
  #allocation1 [shape = 'u32[144,128]{1,0:T(1,128)}', space=vmem, size = 0x12000, scoped, tag = 'internal scratch']
  %s0 = inlined_call_operand.vmem [shape: f32[2,4,32], index: 0, kind: input, shape index: {}]
  %s1 = inlined_call_operand.vmem [shape: f32[2,4,3], index: 1, kind: input, shape index: {}]
  %s2 = inlined_call_operand.vmem [shape: f32[2,3,3], index: 2, kind: input, shape index: {}]
  %s3 = inlined_call_operand.vmem [shape: f32[2,1,7], index: 3, kind: input, shape index: {}]
  %s4 = inlined_call_operand.vmem [shape: f32[1,479], index: 4, kind: input, shape index: {}]
  %s5 = inlined_call_operand.vmem [shape: f32[3,32], index: 5, kind: input, shape index: {}]
  %s6 = inlined_call_operand.vmem [shape: bf16[32,32], index: 6, kind: input, shape index: {}]
  %s7 = inlined_call_operand.vmem [shape: bf16[32,96], index: 7, kind: input, shape index: {}]
  %s8 = inlined_call_operand.vmem [shape: bf16[32,32], index: 8, kind: input, shape index: {}]
  %s9 = inlined_call_operand.vmem [shape: bf16[32,64], index: 9, kind: input, shape index: {}]
  %s10 = inlined_call_operand.vmem [shape: bf16[64,32], index: 10, kind: input, shape index: {}]
  %s11 = inlined_call_operand.vmem [shape: bf16[32,32], index: 11, kind: input, shape index: {}]
  %s12 = inlined_call_operand.vmem [shape: bf16[32,16], index: 12, kind: input, shape index: {}]
  %s13 = inlined_call_operand.vmem [shape: bf16[16,15], index: 13, kind: input, shape index: {}]
  %s14 = inlined_call_operand.vmem [shape: f32[2,3,128], index: 14, kind: output, shape index: {}]
  %s15 = sld [smem:[#allocation0]]
  $region89: #{full_model_forward.3} parent=0
    _
  %s17 = ssub.s32 1, %s15
  %s18 = scalar_select 0, %s17, %s15
  loop: start=0, step=1, limit=4
  $region2: #{full_model_forward.3} parent=0 // loop_pre_header
    _
  $region3: #{full_model_forward.3} parent=0 // loop_header
    %s20 = sphi 0, %s24
    %p21 = scmp.ge.s32.totalorder %s20, 4
    %s30 = sphi 0, %s32
    %s33 = sphi 0, %s30
    %s34 = sphi 0, %s33
    %s50 = sphi 0, %s34
    %s56 = sphi 0, %s58
    %s59 = sphi 0, %s56
    %s60 = sphi 0, %s59
    %s76 = sphi 0, %s60
    %s82 = sphi 0, %s84
    %s85 = sphi 0, %s82
    %s86 = sphi 0, %s85
    %s102 = sphi 0, %s86
    %s108 = sphi 0, %s110
    %s111 = sphi 0, %s108
    %s112 = sphi 0, %s111
    %s128 = sphi 0, %s112
    %s132 = sphi 0, %s132
    %s134 = sphi 0, %s132
    %s135 = sphi 0, %s134
    %s149 = sphi 0, %s135
    %s153 = sphi 0, %s153
    %s155 = sphi 0, %s153
    %s156 = sphi 0, %s155
    %s170 = sphi 0, %s156
    %s174 = sphi 0, %s174
    %s176 = sphi 0, %s174
    %s177 = sphi 0, %s176
    %s191 = sphi 0, %s177
    %s195 = sphi 0, %s195
    %s197 = sphi 0, %s195
    %s198 = sphi 0, %s197
    %s212 = sphi 0, %s198
    %s216 = sphi 0, %s216
    %s218 = sphi 0, %s216
    %s219 = sphi 0, %s218
    %s233 = sphi 0, %s219
    %s237 = sphi 0, %s237
    %s239 = sphi 0, %s237
    %s240 = sphi 0, %s239
    %s254 = sphi 0, %s240
    %s258 = sphi 0, %s258
    %s260 = sphi 0, %s258
    %s261 = sphi 0, %s260
    %s275 = sphi 0, %s261
    %s279 = sphi 0, %s279
    %s281 = sphi 0, %s279
    %s282 = sphi 0, %s281
    %s296 = sphi 0, %s282
    %s300 = sphi 0, %s300
    %s302 = sphi 0, %s300
    %s303 = sphi 0, %s302
    %s317 = sphi 0, %s303
    %s321 = sphi 0, %s321
    %s323 = sphi 0, %s321
    %s324 = sphi 0, %s323
    %s338 = sphi 0, %s324
    %s344 = sphi 0, %s346
    %s347 = sphi 0, %s344
    %s348 = sphi 0, %s347
    %s364 = sphi 0, %s348
  $region4: #{full_model_forward.3} parent=0 // loop_header_branch
    %23 = sbr.rel (%p21) target = $region8
  $region5: #{full_model_forward.3} parent=0 // loop_body
    %s25 = ssub.s32 %s20, 1
    %s26 = ssub.s32 %s20, 2
    %s27 = sadd.s32 %s20, 1
    %s28 = ssub.s32 %s20, %s27
    %p29 = scmp.eq.s32.totalorder %s28, 0
    %s31 = sadd.s32 %s30, 1
    %s32 = scalar_select %p29, %s30, %s31
    %p35 = pneg %p29
    %p36 = scmp.eq.s32.totalorder %s20, 1
    %p37 = por %p35, %p36
    %p38 = scmp.ne.s32.totalorder %s30, %s33
    %p39 = scmp.eq.s32.totalorder %s20, 0
    %p40 = por %p38, %p39
    %p41 = scmp.ne.s32.totalorder %s30, %s33
    %p42 = scmp.eq.s32.totalorder %s25, 1
    %p43 = por %p41, %p42
    %p44 = scmp.ne.s32.totalorder %s33, %s34
    %p45 = scmp.eq.s32.totalorder %s25, 0
    %p46 = por %p44, %p45
    %p47 = scmp.ne.s32.totalorder %s33, %s34
    %p48 = scmp.eq.s32.totalorder %s26, 1
    %p49 = por %p47, %p48
    %p51 = scmp.ne.s32.totalorder %s34, %s50
    %p52 = scmp.eq.s32.totalorder %s26, 0
    %p53 = por %p51, %p52
    %s54 = ssub.s32 %s20, %s27
    %p55 = scmp.eq.s32.totalorder %s54, 0
    %s57 = sadd.s32 %s56, 1
    %s58 = scalar_select %p55, %s56, %s57
    %p61 = pneg %p55
    %p62 = scmp.eq.s32.totalorder %s20, 1
    %p63 = por %p61, %p62
    %p64 = scmp.ne.s32.totalorder %s56, %s59
    %p65 = scmp.eq.s32.totalorder %s20, 0
    %p66 = por %p64, %p65
    %p67 = scmp.ne.s32.totalorder %s56, %s59
    %p68 = scmp.eq.s32.totalorder %s25, 1
    %p69 = por %p67, %p68
    %p70 = scmp.ne.s32.totalorder %s59, %s60
    %p71 = scmp.eq.s32.totalorder %s25, 0
    %p72 = por %p70, %p71
    %p73 = scmp.ne.s32.totalorder %s59, %s60
    %p74 = scmp.eq.s32.totalorder %s26, 1
    %p75 = por %p73, %p74
    %p77 = scmp.ne.s32.totalorder %s60, %s76
    %p78 = scmp.eq.s32.totalorder %s26, 0
    %p79 = por %p77, %p78
    %s80 = ssub.s32 %s20, %s27
    %p81 = scmp.eq.s32.totalorder %s80, 0
    %s83 = sadd.s32 %s82, 1
    %s84 = scalar_select %p81, %s82, %s83
    %p87 = pneg %p81
    %p88 = scmp.eq.s32.totalorder %s20, 1
    %p89 = por %p87, %p88
    %p90 = scmp.ne.s32.totalorder %s82, %s85
    %p91 = scmp.eq.s32.totalorder %s20, 0
    %p92 = por %p90, %p91
    %p93 = scmp.ne.s32.totalorder %s82, %s85
    %p94 = scmp.eq.s32.totalorder %s25, 1
    %p95 = por %p93, %p94
    %p96 = scmp.ne.s32.totalorder %s85, %s86
    %p97 = scmp.eq.s32.totalorder %s25, 0
    %p98 = por %p96, %p97
    %p99 = scmp.ne.s32.totalorder %s85, %s86
    %p100 = scmp.eq.s32.totalorder %s26, 1
    %p101 = por %p99, %p100
    %p103 = scmp.ne.s32.totalorder %s86, %s102
    %p104 = scmp.eq.s32.totalorder %s26, 0
    %p105 = por %p103, %p104
    %s106 = ssub.s32 %s20, %s27
    %p107 = scmp.eq.s32.totalorder %s106, 0
    %s109 = sadd.s32 %s108, 1
    %s110 = scalar_select %p107, %s108, %s109
    %p113 = pneg %p107
    %p114 = scmp.eq.s32.totalorder %s20, 1
    %p115 = por %p113, %p114
    %p116 = scmp.ne.s32.totalorder %s108, %s111
    %p117 = scmp.eq.s32.totalorder %s20, 0
    %p118 = por %p116, %p117
    %p119 = scmp.ne.s32.totalorder %s108, %s111
    %p120 = scmp.eq.s32.totalorder %s25, 1
    %p121 = por %p119, %p120
    %p122 = scmp.ne.s32.totalorder %s111, %s112
    %p123 = scmp.eq.s32.totalorder %s25, 0
    %p124 = por %p122, %p123
    %p125 = scmp.ne.s32.totalorder %s111, %s112
    %p126 = scmp.eq.s32.totalorder %s26, 1
    %p127 = por %p125, %p126
    %p129 = scmp.ne.s32.totalorder %s112, %s128
    %p130 = scmp.eq.s32.totalorder %s26, 0
    %p131 = por %p129, %p130
    %s133 = sadd.s32 %s132, 1
    %p136 = scmp.eq.s32.totalorder %s20, 1
    %p137 = scmp.ne.s32.totalorder %s132, %s134
    %p138 = scmp.eq.s32.totalorder %s20, 0
    %p139 = por %p137, %p138
    %p140 = scmp.ne.s32.totalorder %s132, %s134
    %p141 = scmp.eq.s32.totalorder %s25, 1
    %p142 = por %p140, %p141
    %p143 = scmp.ne.s32.totalorder %s134, %s135
    %p144 = scmp.eq.s32.totalorder %s25, 0
    %p145 = por %p143, %p144
    %p146 = scmp.ne.s32.totalorder %s134, %s135
    %p147 = scmp.eq.s32.totalorder %s26, 1
    %p148 = por %p146, %p147
    %p150 = scmp.ne.s32.totalorder %s135, %s149
    %p151 = scmp.eq.s32.totalorder %s26, 0
    %p152 = por %p150, %p151
    %s154 = sadd.s32 %s153, 1
    %p157 = scmp.eq.s32.totalorder %s20, 1
    %p158 = scmp.ne.s32.totalorder %s153, %s155
    %p159 = scmp.eq.s32.totalorder %s20, 0
    %p160 = por %p158, %p159
    %p161 = scmp.ne.s32.totalorder %s153, %s155
    %p162 = scmp.eq.s32.totalorder %s25, 1
    %p163 = por %p161, %p162
    %p164 = scmp.ne.s32.totalorder %s155, %s156
    %p165 = scmp.eq.s32.totalorder %s25, 0
    %p166 = por %p164, %p165
    %p167 = scmp.ne.s32.totalorder %s155, %s156
    %p168 = scmp.eq.s32.totalorder %s26, 1
    %p169 = por %p167, %p168
    %p171 = scmp.ne.s32.totalorder %s156, %s170
    %p172 = scmp.eq.s32.totalorder %s26, 0
    %p173 = por %p171, %p172
    %s175 = sadd.s32 %s174, 1
    %p178 = scmp.eq.s32.totalorder %s20, 1
    %p179 = scmp.ne.s32.totalorder %s174, %s176
    %p180 = scmp.eq.s32.totalorder %s20, 0
    %p181 = por %p179, %p180
    %p182 = scmp.ne.s32.totalorder %s174, %s176
    %p183 = scmp.eq.s32.totalorder %s25, 1
    %p184 = por %p182, %p183
    %p185 = scmp.ne.s32.totalorder %s176, %s177
    %p186 = scmp.eq.s32.totalorder %s25, 0
    %p187 = por %p185, %p186
    %p188 = scmp.ne.s32.totalorder %s176, %s177
    %p189 = scmp.eq.s32.totalorder %s26, 1
    %p190 = por %p188, %p189
    %p192 = scmp.ne.s32.totalorder %s177, %s191
    %p193 = scmp.eq.s32.totalorder %s26, 0
    %p194 = por %p192, %p193
    %s196 = sadd.s32 %s195, 1
    %p199 = scmp.eq.s32.totalorder %s20, 1
    %p200 = scmp.ne.s32.totalorder %s195, %s197
    %p201 = scmp.eq.s32.totalorder %s20, 0
    %p202 = por %p200, %p201
    %p203 = scmp.ne.s32.totalorder %s195, %s197
    %p204 = scmp.eq.s32.totalorder %s25, 1
    %p205 = por %p203, %p204
    %p206 = scmp.ne.s32.totalorder %s197, %s198
    %p207 = scmp.eq.s32.totalorder %s25, 0
    %p208 = por %p206, %p207
    %p209 = scmp.ne.s32.totalorder %s197, %s198
    %p210 = scmp.eq.s32.totalorder %s26, 1
    %p211 = por %p209, %p210
    %p213 = scmp.ne.s32.totalorder %s198, %s212
    %p214 = scmp.eq.s32.totalorder %s26, 0
    %p215 = por %p213, %p214
    %s217 = sadd.s32 %s216, 1
    %p220 = scmp.eq.s32.totalorder %s20, 1
    %p221 = scmp.ne.s32.totalorder %s216, %s218
    %p222 = scmp.eq.s32.totalorder %s20, 0
    %p223 = por %p221, %p222
    %p224 = scmp.ne.s32.totalorder %s216, %s218
    %p225 = scmp.eq.s32.totalorder %s25, 1
    %p226 = por %p224, %p225
    %p227 = scmp.ne.s32.totalorder %s218, %s219
    %p228 = scmp.eq.s32.totalorder %s25, 0
    %p229 = por %p227, %p228
    %p230 = scmp.ne.s32.totalorder %s218, %s219
    %p231 = scmp.eq.s32.totalorder %s26, 1
    %p232 = por %p230, %p231
    %p234 = scmp.ne.s32.totalorder %s219, %s233
    %p235 = scmp.eq.s32.totalorder %s26, 0
    %p236 = por %p234, %p235
    %s238 = sadd.s32 %s237, 1
    %p241 = scmp.eq.s32.totalorder %s20, 1
    %p242 = scmp.ne.s32.totalorder %s237, %s239
    %p243 = scmp.eq.s32.totalorder %s20, 0
    %p244 = por %p242, %p243
    %p245 = scmp.ne.s32.totalorder %s237, %s239
    %p246 = scmp.eq.s32.totalorder %s25, 1
    %p247 = por %p245, %p246
    %p248 = scmp.ne.s32.totalorder %s239, %s240
    %p249 = scmp.eq.s32.totalorder %s25, 0
    %p250 = por %p248, %p249
    %p251 = scmp.ne.s32.totalorder %s239, %s240
    %p252 = scmp.eq.s32.totalorder %s26, 1
    %p253 = por %p251, %p252
    %p255 = scmp.ne.s32.totalorder %s240, %s254
    %p256 = scmp.eq.s32.totalorder %s26, 0
    %p257 = por %p255, %p256
    %s259 = sadd.s32 %s258, 1
    %p262 = scmp.eq.s32.totalorder %s20, 1
    %p263 = scmp.ne.s32.totalorder %s258, %s260
    %p264 = scmp.eq.s32.totalorder %s20, 0
    %p265 = por %p263, %p264
    %p266 = scmp.ne.s32.totalorder %s258, %s260
    %p267 = scmp.eq.s32.totalorder %s25, 1
    %p268 = por %p266, %p267
    %p269 = scmp.ne.s32.totalorder %s260, %s261
    %p270 = scmp.eq.s32.totalorder %s25, 0
    %p271 = por %p269, %p270
    %p272 = scmp.ne.s32.totalorder %s260, %s261
    %p273 = scmp.eq.s32.totalorder %s26, 1
    %p274 = por %p272, %p273
    %p276 = scmp.ne.s32.totalorder %s261, %s275
    %p277 = scmp.eq.s32.totalorder %s26, 0
    %p278 = por %p276, %p277
    %s280 = sadd.s32 %s279, 1
    %p283 = scmp.eq.s32.totalorder %s20, 1
    %p284 = scmp.ne.s32.totalorder %s279, %s281
    %p285 = scmp.eq.s32.totalorder %s20, 0
    %p286 = por %p284, %p285
    %p287 = scmp.ne.s32.totalorder %s279, %s281
    %p288 = scmp.eq.s32.totalorder %s25, 1
    %p289 = por %p287, %p288
    %p290 = scmp.ne.s32.totalorder %s281, %s282
    %p291 = scmp.eq.s32.totalorder %s25, 0
    %p292 = por %p290, %p291
    %p293 = scmp.ne.s32.totalorder %s281, %s282
    %p294 = scmp.eq.s32.totalorder %s26, 1
    %p295 = por %p293, %p294
    %p297 = scmp.ne.s32.totalorder %s282, %s296
    %p298 = scmp.eq.s32.totalorder %s26, 0
    %p299 = por %p297, %p298
    %s301 = sadd.s32 %s300, 1
    %p304 = scmp.eq.s32.totalorder %s20, 1
    %p305 = scmp.ne.s32.totalorder %s300, %s302
    %p306 = scmp.eq.s32.totalorder %s20, 0
    %p307 = por %p305, %p306
    %p308 = scmp.ne.s32.totalorder %s300, %s302
    %p309 = scmp.eq.s32.totalorder %s25, 1
    %p310 = por %p308, %p309
    %p311 = scmp.ne.s32.totalorder %s302, %s303
    %p312 = scmp.eq.s32.totalorder %s25, 0
    %p313 = por %p311, %p312
    %p314 = scmp.ne.s32.totalorder %s302, %s303
    %p315 = scmp.eq.s32.totalorder %s26, 1
    %p316 = por %p314, %p315
    %p318 = scmp.ne.s32.totalorder %s303, %s317
    %p319 = scmp.eq.s32.totalorder %s26, 0
    %p320 = por %p318, %p319
    %s322 = sadd.s32 %s321, 1
    %p325 = scmp.eq.s32.totalorder %s20, 1
    %p326 = scmp.ne.s32.totalorder %s321, %s323
    %p327 = scmp.eq.s32.totalorder %s20, 0
    %p328 = por %p326, %p327
    %p329 = scmp.ne.s32.totalorder %s321, %s323
    %p330 = scmp.eq.s32.totalorder %s25, 1
    %p331 = por %p329, %p330
    %p332 = scmp.ne.s32.totalorder %s323, %s324
    %p333 = scmp.eq.s32.totalorder %s25, 0
    %p334 = por %p332, %p333
    %p335 = scmp.ne.s32.totalorder %s323, %s324
    %p336 = scmp.eq.s32.totalorder %s26, 1
    %p337 = por %p335, %p336
    %p339 = scmp.ne.s32.totalorder %s324, %s338
    %p340 = scmp.eq.s32.totalorder %s26, 0
    %p341 = por %p339, %p340
    %s342 = ssub.s32 %s20, %s27
    %p343 = scmp.eq.s32.totalorder %s342, 0
    %s345 = sadd.s32 %s344, 1
    %s346 = scalar_select %p343, %s344, %s345
    %p349 = pneg %p343
    %p350 = scmp.eq.s32.totalorder %s20, 1
    %p351 = por %p349, %p350
    %p352 = scmp.ne.s32.totalorder %s344, %s347
    %p353 = scmp.eq.s32.totalorder %s20, 0
    %p354 = por %p352, %p353
    %p355 = scmp.ne.s32.totalorder %s344, %s347
    %p356 = scmp.eq.s32.totalorder %s25, 1
    %p357 = por %p355, %p356
    %p358 = scmp.ne.s32.totalorder %s347, %s348
    %p359 = scmp.eq.s32.totalorder %s25, 0
    %p360 = por %p358, %p359
    %p361 = scmp.ne.s32.totalorder %s347, %s348
    %p362 = scmp.eq.s32.totalorder %s26, 1
    %p363 = por %p361, %p362
    %p365 = scmp.ne.s32.totalorder %s348, %s364
    %p366 = scmp.eq.s32.totalorder %s26, 0
    %p367 = por %p365, %p366
    %p368 = scmp.le.s32.totalorder 1, %s20
    %p369 = scmp.lt.s32.totalorder %s20, 3
    %p370 = pnand %p368, %p369
    %p371 = pneg %p370
    // Predicated region
    $region9: #{full_model_forward.3} parent=5 // pred_check
      _
    $region10: #{full_model_forward.3} parent=5 // pred_check_branch
      %373 = sbr.rel (%p370) target = $region12
    $region11: #{full_model_forward.3} parent=5 // pred_region
      %s374 = ssub.s32 %s20, 1
      // Predicated region
      $region13: #{full_model_forward.3} parent=11 // pred_check
        %p375 = pneg %p145
      $region14: #{full_model_forward.3} parent=11 // pred_check_branch
        %377 = sbr.rel (%p375) target = $region16
      $region15: #{full_model_forward.3} parent=11 // pred_region
        _
      $region16: #{full_model_forward.3} parent=11 // pred_fallthru
        _
      // Predicated region
      $region17: #{full_model_forward.3} parent=11 // pred_check
        %p378 = pneg %p166
      $region18: #{full_model_forward.3} parent=11 // pred_check_branch
        %380 = sbr.rel (%p378) target = $region20
      $region19: #{full_model_forward.3} parent=11 // pred_region
        _
      $region20: #{full_model_forward.3} parent=11 // pred_fallthru
        _
      // Predicated region
      $region21: #{full_model_forward.3} parent=11 // pred_check
        %p381 = pneg %p187
      $region22: #{full_model_forward.3} parent=11 // pred_check_branch
        %383 = sbr.rel (%p381) target = $region24
      $region23: #{full_model_forward.3} parent=11 // pred_region
        _
      $region24: #{full_model_forward.3} parent=11 // pred_fallthru
        _
      // Predicated region
      $region25: #{full_model_forward.3} parent=11 // pred_check
        %p384 = pneg %p208
      $region26: #{full_model_forward.3} parent=11 // pred_check_branch
        %386 = sbr.rel (%p384) target = $region28
      $region27: #{full_model_forward.3} parent=11 // pred_region
        _
      $region28: #{full_model_forward.3} parent=11 // pred_fallthru
        _
      // Predicated region
      $region29: #{full_model_forward.3} parent=11 // pred_check
        %p387 = pneg %p229
      $region30: #{full_model_forward.3} parent=11 // pred_check_branch
        %389 = sbr.rel (%p387) target = $region32
      $region31: #{full_model_forward.3} parent=11 // pred_region
        _
      $region32: #{full_model_forward.3} parent=11 // pred_fallthru
        _
      // Predicated region
      $region33: #{full_model_forward.3} parent=11 // pred_check
        %p390 = pneg %p250
      $region34: #{full_model_forward.3} parent=11 // pred_check_branch
        %392 = sbr.rel (%p390) target = $region36
      $region35: #{full_model_forward.3} parent=11 // pred_region
        _
      $region36: #{full_model_forward.3} parent=11 // pred_fallthru
        _
      // Predicated region
      $region37: #{full_model_forward.3} parent=11 // pred_check
        %p393 = pneg %p271
      $region38: #{full_model_forward.3} parent=11 // pred_check_branch
        %395 = sbr.rel (%p393) target = $region40
      $region39: #{full_model_forward.3} parent=11 // pred_region
        _
      $region40: #{full_model_forward.3} parent=11 // pred_fallthru
        _
      // Predicated region
      $region41: #{full_model_forward.3} parent=11 // pred_check
        %p396 = pneg %p292
      $region42: #{full_model_forward.3} parent=11 // pred_check_branch
        %398 = sbr.rel (%p396) target = $region44
      $region43: #{full_model_forward.3} parent=11 // pred_region
        _
      $region44: #{full_model_forward.3} parent=11 // pred_fallthru
        _
      // Predicated region
      $region45: #{full_model_forward.3} parent=11 // pred_check
        %p399 = pneg %p313
      $region46: #{full_model_forward.3} parent=11 // pred_check_branch
        %401 = sbr.rel (%p399) target = $region48
      $region47: #{full_model_forward.3} parent=11 // pred_region
        _
      $region48: #{full_model_forward.3} parent=11 // pred_fallthru
        _
      // Predicated region
      $region49: #{full_model_forward.3} parent=11 // pred_check
        %p402 = pneg %p334
      $region50: #{full_model_forward.3} parent=11 // pred_check_branch
        %404 = sbr.rel (%p402) target = $region52
      $region51: #{full_model_forward.3} parent=11 // pred_region
        _
      $region52: #{full_model_forward.3} parent=11 // pred_fallthru
        _
    $region12: #{full_model_forward.3} parent=5 // pred_fallthru
      _
    %p405 = scmp.lt.s32.totalorder %s20, 2
    // Predicated region
    $region53: #{full_model_forward.3} parent=5 // pred_check
      %p406 = pneg %p405
    $region54: #{full_model_forward.3} parent=5 // pred_check_branch
      %408 = sbr.rel (%p406) target = $region56
    $region55: #{full_model_forward.3} parent=5 // pred_region
      // Predicated region
      $region57: #{full_model_forward.3} parent=55 // pred_check
        %p409 = pneg %p40
      $region58: #{full_model_forward.3} parent=55 // pred_check_branch
        %411 = sbr.rel (%p409) target = $region60
      $region59: #{full_model_forward.3} parent=55 // pred_region
        %p412 = scmp.lt.s32.totalorder %s20, 1
        %s413 = scalar_select %p412, %s20, 1
        %s414 = smul.addr %s413, 4
        %s415 = scalar_lea.vmem %s0, %s414
      $region60: #{full_model_forward.3} parent=55 // pred_fallthru
        _
      // Predicated region
      $region61: #{full_model_forward.3} parent=55 // pred_check
        %p416 = pneg %p66
      $region62: #{full_model_forward.3} parent=55 // pred_check_branch
        %418 = sbr.rel (%p416) target = $region64
      $region63: #{full_model_forward.3} parent=55 // pred_region
        %p419 = scmp.lt.s32.totalorder %s20, 1
        %s420 = scalar_select %p419, %s20, 1
        %s421 = smul.addr %s420, 4
        %s422 = scalar_lea.vmem %s1, %s421
      $region64: #{full_model_forward.3} parent=55 // pred_fallthru
        _
      // Predicated region
      $region65: #{full_model_forward.3} parent=55 // pred_check
        %p423 = pneg %p92
      $region66: #{full_model_forward.3} parent=55 // pred_check_branch
        %425 = sbr.rel (%p423) target = $region68
      $region67: #{full_model_forward.3} parent=55 // pred_region
        %p426 = scmp.lt.s32.totalorder %s20, 1
        %s427 = scalar_select %p426, %s20, 1
        %s428 = smul.addr %s427, 4
        %s429 = scalar_lea.vmem %s2, %s428
      $region68: #{full_model_forward.3} parent=55 // pred_fallthru
        _
      // Predicated region
      $region69: #{full_model_forward.3} parent=55 // pred_check
        %p430 = pneg %p118
      $region70: #{full_model_forward.3} parent=55 // pred_check_branch
        %432 = sbr.rel (%p430) target = $region72
      $region71: #{full_model_forward.3} parent=55 // pred_region
        %p433 = scmp.lt.s32.totalorder %s20, 1
        %s434 = scalar_select %p433, %s20, 1
        %s435 = scalar_lea.vmem %s3, %s434
      $region72: #{full_model_forward.3} parent=55 // pred_fallthru
        _
    $region56: #{full_model_forward.3} parent=5 // pred_fallthru
      _
    %p436 = scmp.le.s32.totalorder 1, %s20
    %p437 = scmp.lt.s32.totalorder %s20, 3
    %p438 = pnand %p436, %p437
    %p439 = pneg %p438
    // Predicated region
    $region73: #{full_model_forward.3} parent=5 // pred_check
      _
    $region74: #{full_model_forward.3} parent=5 // pred_check_branch
      %441 = sbr.rel (%p438) target = $region76
    $region75: #{full_model_forward.3} parent=5 // pred_region
      %s442 = ssub.s32 %s20, 1
      %p443 = scmp.lt.s32.totalorder %s25, 1
      %s444 = scalar_select %p443, %s25, 1
      %s445 = smul.addr %s444, 4
      %s446 = scalar_lea.vmem %s0, %s445
      %p447 = pneg %p46
      %p448 = pneg %p43
      %p449 = scmp.lt.s32.totalorder %s25, 1
      %s450 = scalar_select %p449, %s25, 1
      %s451 = smul.addr %s450, 4
      %s452 = scalar_lea.vmem %s1, %s451
      %p453 = pneg %p72
      %p454 = pneg %p69
      %p455 = scmp.lt.s32.totalorder %s25, 1
      %s456 = scalar_select %p455, %s25, 1
      %s457 = smul.addr %s456, 4
      %s458 = scalar_lea.vmem %s2, %s457
      %p459 = pneg %p98
      %p460 = pneg %p95
      %p461 = scmp.lt.s32.totalorder %s25, 1
      %s462 = scalar_select %p461, %s25, 1
      %s463 = scalar_lea.vmem %s3, %s462
      %p464 = pneg %p124
      %p465 = pneg %p121
      %p466 = pneg %p145
      %p467 = pneg %p142
      %p468 = pneg %p166
      %p469 = pneg %p163
      %p470 = pneg %p187
      %p471 = pneg %p184
      %p472 = pneg %p208
      %p473 = pneg %p205
      %p474 = pneg %p229
      %p475 = pneg %p226
      %p476 = pneg %p250
      %p477 = pneg %p247
      %p478 = pneg %p271
      %p479 = pneg %p268
      %p480 = pneg %p292
      %p481 = pneg %p289
      %p482 = pneg %p313
      %p483 = pneg %p310
      %p484 = pneg %p334
      %p485 = pneg %p331
      %p486 = pneg %p360
      %p487 = pneg %p357
      %p488 = scmp.lt.s32.totalorder %s25, 1
      %s489 = scalar_select %p488, %s25, 1
      %s490 = smul.addr %s489, 4
      %s491 = scalar_lea.vmem %s14, %s490
      %p492 = scmp.lt.s32.totalorder %s25, 1
      %s493 = scalar_select %p492, %s25, 1
      %s494 = smul.addr %s493, 4
      %s495 = scalar_lea.vmem %s0, %s494
      %p496 = scmp.lt.s32.totalorder %s25, 1
      %s497 = scalar_select %p496, %s25, 1
      %s498 = smul.addr %s497, 4
      %s499 = scalar_lea.vmem %s1, %s498
      %p500 = scmp.lt.s32.totalorder %s25, 1
      %s501 = scalar_select %p500, %s25, 1
      %s502 = smul.addr %s501, 4
      %s503 = scalar_lea.vmem %s2, %s502
      %p504 = scmp.lt.s32.totalorder %s25, 1
      %s505 = scalar_select %p504, %s25, 1
      %s506 = scalar_lea.vmem %s3, %s505
      %p507 = scmp.lt.s32.totalorder %s25, 1
      %s508 = scalar_select %p507, %s25, 1
      %s509 = smul.addr %s508, 4
      %s510 = scalar_lea.vmem %s14, %s509
      %v512 = vld [vmem:[%s495] sm:$0xf]
      %v513 = vld [vmem:[%s499] sm:$0xf]
      %v514 = vld [vmem:[%s503] sm:$0x7]
      %v516 = vrot.slane %v514, 4
      %vm518 = vcmask 1043456
      %v519 = vsel %vm518, %v513, %v516
      %v520 = vld [vmem:[%s5] sm:$0x7]
      %v521 = vld [vmem:[%s4] sm:$0x1]
      %v523 = vlaneseq
      %v524 = vshrl.u32 %v523, 7
      %v525 = vsub.s32 0, %v524
      %v526 = vrot.slane %v521, %v525
      %vm528 = vcmask 23552
      %v530 = vsel %vm528, %v519, 0
      %vm532 = vcmask 1042432
      %v534 = vsel %vm532, %v520, 0
      %536 = vmatprep.subr.mxu0 0.0
      %537 = vmatpush1.msra.mxu0 %v534
      %538 = vmatprep.subr.mxu0 0.0
      %539 = vmatpush1.msra.mxu0 0.0
      %540 = vmatprep.subr.mxu0 0.0
      %541 = vmatpush1.msra.mxu0 0.0
      %542 = vmatprep.subr.mxu0 0.0
      %543 = vmatpush1.msra.mxu0 0.0
      %544 = vmatprep.subr.mxu0 0.0
      %545 = vmatpush1.msra.mxu0 0.0
      %546 = vmatprep.subr.mxu0 0.0
      %547 = vmatpush1.msra.mxu0 0.0
      %548 = vmatprep.subr.mxu0 0.0
      %549 = vmatpush1.msra.mxu0 0.0
      %550 = vmatprep.subr.mxu0 0.0
      %551 = vmatpush1.msra.mxu0 0.0
      %552 = vmatprep.subr.mxu0 0.0
      %553 = vmatpush1.msra.mxu0 0.0
      %554 = vmatprep.subr.mxu0 0.0
      %555 = vmatpush1.msra.mxu0 0.0
      %556 = vmatprep.subr.mxu0 0.0
      %557 = vmatpush1.msra.mxu0 0.0
      %558 = vmatprep.subr.mxu0 0.0
      %559 = vmatpush1.msra.mxu0 0.0
      %560 = vmatprep.subr.mxu0 0.0
      %561 = vmatpush1.msra.mxu0 0.0
      %562 = vmatprep.subr.mxu0 0.0
      %563 = vmatpush1.msra.mxu0 0.0
      %564 = vmatprep.subr.mxu0 0.0
      %565 = vmatpush1.msra.mxu0 0.0
      %566 = vmatprep.subr.mxu0 0.0
      %567 = vmatpush1.msra.mxu0 0.0
      %568 = vmatprep.subr.mxu0 0.0
      %569 = vmatpush1.msra.mxu0 0.0
      %570 = vmatprep.subr.mxu0 0.0
      %571 = vmatpush1.msra.mxu0 0.0
      %572 = vmatprep.subr.mxu0 0.0
      %573 = vmatpush1.msra.mxu0 0.0
      %574 = vmatprep.subr.mxu0 0.0
      %575 = vmatpush1.msra.mxu0 0.0
      %576 = vmatprep.subr.mxu0 0.0
      %577 = vmatpush1.msra.mxu0 0.0
      %578 = vmatprep.subr.mxu0 0.0
      %579 = vmatpush1.msra.mxu0 0.0
      %580 = vmatprep.subr.mxu0 0.0
      %581 = vmatpush1.msra.mxu0 0.0
      %582 = vmatprep.subr.mxu0 0.0
      %583 = vmatpush1.msra.mxu0 0.0
      %584 = vmatprep.subr.mxu0 0.0
      %585 = vmatpush1.msra.mxu0 0.0
      %586 = vmatprep.subr.mxu0 0.0
      %587 = vmatpush1.msra.mxu0 0.0
      %588 = vmatprep.subr.mxu0 0.0
      %589 = vmatpush1.msra.mxu0 0.0
      %590 = vmatprep.subr.mxu0 0.0
      %591 = vmatpush1.msra.mxu0 0.0
      %592 = vmatprep.subr.mxu0 0.0
      %593 = vmatpush1.msra.mxu0 0.0
      %594 = vmatprep.subr.mxu0 0.0
      %595 = vmatpush1.msra.mxu0 0.0
      %596 = vmatprep.subr.mxu0 0.0
      %597 = vmatpush1.msra.mxu0 0.0
      %598 = vmatprep.subr.mxu0 0.0
      %599 = vmatpush1.msra.mxu0 0.0
      %600 = vmatprep.mubr.f32.mxu0 0.0
      %601 = vmatmul.mubr.f32.gmra.mrb[0].mxu0 %v530
      %v602 = vpop.f32.mrb[0].mxu0
      %v603 = vadd.f32 %v526, %v602
      %v604 = vpop.f32.mrb[0].mxu0
      %605 = vdwg.mxu0
      %v606 = vmax.f32 %v603, 0.0
      %v607 = vpack.c.bf16 %v606, %v606
      %v608 = vld [vmem:[%s6] sm:$0xf]
      %v609 = vld [vmem:[%s6 + $0x4] sm:$0xf]
      %v610 = vld [vmem:[%s6 + $0x8] sm:$0xf]
      %v611 = vld [vmem:[%s6 + $0xc] sm:$0xf]
      %v616 = vunpack.c.l.b16 %v608
      %v617 = vunpack.c.l.b16 %v609
      %v618 = vunpack.c.l.b16 %v610
      %v619 = vunpack.c.l.b16 %v611
      %v620 = vpack.c.b16 %v617, %v616
      %v621 = vpack.c.b16 %v619, %v618
      %624 = vrot.lane.b32.xlu0 %v526, 96
      %v625 = vpop.permute.xlu0 %624
      %vm627 = vcmask 261120
      %v629 = vsel %vm627, %v607, 0
      %631 = vmatprep.subr.bf16.mxu0 0
      %632 = vmatpush1.bf16.msra.mxu0 %v620
      %633 = vmatprep.subr.bf16.mxu0 0
      %634 = vmatpush1.bf16.msra.mxu0 %v621
      %635 = vmatprep.subr.bf16.mxu0 0
      %636 = vmatpush1.bf16.msra.mxu0 0
      %637 = vmatprep.subr.bf16.mxu0 0
      %638 = vmatpush1.bf16.msra.mxu0 0
      %639 = vmatprep.subr.bf16.mxu0 0
      %640 = vmatpush1.bf16.msra.mxu0 0
      %641 = vmatprep.subr.bf16.mxu0 0
      %642 = vmatpush1.bf16.msra.mxu0 0
      %643 = vmatprep.subr.bf16.mxu0 0
      %644 = vmatpush1.bf16.msra.mxu0 0
      %645 = vmatprep.subr.bf16.mxu0 0
      %646 = vmatpush1.bf16.msra.mxu0 0
      %647 = vmatprep.subr.bf16.mxu0 0
      %648 = vmatpush1.bf16.msra.mxu0 0
      %649 = vmatprep.subr.bf16.mxu0 0
      %650 = vmatpush1.bf16.msra.mxu0 0
      %651 = vmatprep.subr.bf16.mxu0 0
      %652 = vmatpush1.bf16.msra.mxu0 0
      %653 = vmatprep.subr.bf16.mxu0 0
      %654 = vmatpush1.bf16.msra.mxu0 0
      %655 = vmatprep.subr.bf16.mxu0 0
      %656 = vmatpush1.bf16.msra.mxu0 0
      %657 = vmatprep.subr.bf16.mxu0 0
      %658 = vmatpush1.bf16.msra.mxu0 0
      %659 = vmatprep.subr.bf16.mxu0 0
      %660 = vmatpush1.bf16.msra.mxu0 0
      %661 = vmatprep.subr.bf16.mxu0 0
      %662 = vmatpush1.bf16.msra.mxu0 0
      %663 = vmatprep.mubr.bf16.mxu0 0
      %664 = vmatmul.mubr.bf16.gmra.mrb[0].mxu0 %v629
      %v665 = vpop.f32.mrb[0].mxu0
      %v666 = vadd.f32 %v625, %v665
      %v667 = vpop.f32.mrb[0].mxu0
      %v668 = vpop.f32.mrb[0].mxu0
      %v669 = vpop.f32.mrb[0].mxu0
      %670 = vdwg.mxu0
      %v671 = vsel %vm518, %v512, 0.0
      %v672 = vadd.f32 %v666, %v671
      %v673 = vld [vmem:[%s506] sm:$0x1]
      %vm674 = vcmp.gt.f32.partialorder %v673, 0.5
      %v675 = vsel %vm674, -1e+09, 0.0
      %v676 = vpack.c.bf16 %v672, %v672
      %v677 = vld [vmem:[%s7] sm:$0xf]
      %v678 = vld [vmem:[%s7 + $0x4] sm:$0xf]
      %v679 = vld [vmem:[%s7 + $0x8] sm:$0xf]
      %v680 = vld [vmem:[%s7 + $0xc] sm:$0xf]
      %v681 = vld [vmem:[%s4] sm:$0x3]
      %v683 = vlaneseq
      %v684 = vshrl.u32 %v683, 7
      %v685 = vsub.s32 0, %v684
      %v686 = vrot.slane %v681, %v685
      %v687 = vlaneseq
      %v688 = vshrl.u32 %v687, 7
      %v689 = vsub.s32 1, %v688
      %v690 = vrot.slane %v681, %v689
      %v695 = vunpack.c.l.b16 %v677
      %v696 = vunpack.c.l.b16 %v678
      %v697 = vunpack.c.l.b16 %v679
      %v698 = vunpack.c.l.b16 %v680
      %v699 = vpack.c.b16 %v696, %v695
      %v700 = vpack.c.b16 %v698, %v697
      %703 = vrot.lane.b32.xlu0 %v686, 64
      %v704 = vpop.permute.xlu0 %703
      %705 = vrot.lane.b32.xlu0 %v690, 64
      %v706 = vpop.permute.xlu0 %705
      %vm707 = vcmask 523264
      %v708 = vsel %vm707, %v704, %v706
      %v711 = vsel %vm627, %v676, 0
      %713 = vmatprep.subr.bf16.mxu0 0
      %714 = vmatpush1.bf16.msra.mxu0 %v699
      %715 = vmatprep.subr.bf16.mxu0 0
      %716 = vmatpush1.bf16.msra.mxu0 %v700
      %717 = vmatprep.subr.bf16.mxu0 0
      %718 = vmatpush1.bf16.msra.mxu0 0
      %719 = vmatprep.subr.bf16.mxu0 0
      %720 = vmatpush1.bf16.msra.mxu0 0
      %721 = vmatprep.subr.bf16.mxu0 0
      %722 = vmatpush1.bf16.msra.mxu0 0
      %723 = vmatprep.subr.bf16.mxu0 0
      %724 = vmatpush1.bf16.msra.mxu0 0
      %725 = vmatprep.subr.bf16.mxu0 0
      %726 = vmatpush1.bf16.msra.mxu0 0
      %727 = vmatprep.subr.bf16.mxu0 0
      %728 = vmatpush1.bf16.msra.mxu0 0
      %729 = vmatprep.subr.bf16.mxu0 0
      %730 = vmatpush1.bf16.msra.mxu0 0
      %731 = vmatprep.subr.bf16.mxu0 0
      %732 = vmatpush1.bf16.msra.mxu0 0
      %733 = vmatprep.subr.bf16.mxu0 0
      %734 = vmatpush1.bf16.msra.mxu0 0
      %735 = vmatprep.subr.bf16.mxu0 0
      %736 = vmatpush1.bf16.msra.mxu0 0
      %737 = vmatprep.subr.bf16.mxu0 0
      %738 = vmatpush1.bf16.msra.mxu0 0
      %739 = vmatprep.subr.bf16.mxu0 0
      %740 = vmatpush1.bf16.msra.mxu0 0
      %741 = vmatprep.subr.bf16.mxu0 0
      %742 = vmatpush1.bf16.msra.mxu0 0
      %743 = vmatprep.subr.bf16.mxu0 0
      %744 = vmatpush1.bf16.msra.mxu0 0
      %745 = vmatprep.mubr.bf16.mxu0 0
      %746 = vmatmul.mubr.bf16.gmra.mrb[0].mxu0 %v711
      %v747 = vpop.f32.mrb[0].mxu0
      %v748 = vadd.f32 %v708, %v747
      %v749 = vpop.f32.mrb[0].mxu0
      %v750 = vpop.f32.mrb[0].mxu0
      %v751 = vpop.f32.mrb[0].mxu0
      %752 = vdwg.mxu0
      %v753 = vpack.c.bf16 %v748, %v748
      %v754 = vld [vmem:[%s8] sm:$0xf]
      %v755 = vld [vmem:[%s8 + $0x4] sm:$0xf]
      %v756 = vld [vmem:[%s8 + $0x8] sm:$0xf]
      %v757 = vld [vmem:[%s8 + $0xc] sm:$0xf]
      %759 = vrot.lane.b32.xlu0 %v753, 96
      %v760 = vpop.permute.xlu0 %759
      %vm761 = vcmask 64512
      %v763 = vsel %vm761, %v753, 0
      %v766 = vsel %vm761, %v760, 0
      %768 = vmatprep.subr.bf16.mxu0 0
      %769 = vmatpush1.bf16.xpose.msra.mxu0 %v766
      %770 = vmatprep.subr.bf16.mxu0 0
      %771 = vmatpush1.bf16.xpose.msra.mxu0 0
      %772 = vmatprep.subr.bf16.mxu0 0
      %773 = vmatpush1.bf16.xpose.msra.mxu0 0
      %774 = vmatprep.subr.bf16.mxu0 0
      %775 = vmatpush1.bf16.xpose.msra.mxu0 0
      %776 = vmatprep.subr.bf16.mxu0 0
      %777 = vmatpush1.bf16.xpose.msra.mxu0 0
      %778 = vmatprep.subr.bf16.mxu0 0
      %779 = vmatpush1.bf16.xpose.msra.mxu0 0
      %780 = vmatprep.subr.bf16.mxu0 0
      %781 = vmatpush1.bf16.xpose.msra.mxu0 0
      %782 = vmatprep.subr.bf16.mxu0 0
      %783 = vmatpush1.bf16.xpose.msra.mxu0 0
      %784 = vmatprep.subr.bf16.mxu0 0
      %785 = vmatpush1.bf16.xpose.msra.mxu0 0
      %786 = vmatprep.subr.bf16.mxu0 0
      %787 = vmatpush1.bf16.xpose.msra.mxu0 0
      %788 = vmatprep.subr.bf16.mxu0 0
      %789 = vmatpush1.bf16.xpose.msra.mxu0 0
      %790 = vmatprep.subr.bf16.mxu0 0
      %791 = vmatpush1.bf16.xpose.msra.mxu0 0
      %792 = vmatprep.subr.bf16.mxu0 0
      %793 = vmatpush1.bf16.xpose.msra.mxu0 0
      %794 = vmatprep.subr.bf16.mxu0 0
      %795 = vmatpush1.bf16.xpose.msra.mxu0 0
      %796 = vmatprep.subr.bf16.mxu0 0
      %797 = vmatpush1.bf16.xpose.msra.mxu0 0
      %798 = vmatprep.subr.bf16.mxu0 0
      %799 = vmatpush1.bf16.xpose.msra.mxu0 0
      %800 = vmatprep.mubr.bf16.mxu0 0
      %801 = vmatmul.mubr.bf16.gmra.mrb[0].mxu0 %v763
      %v802 = vpop.f32.mrb[0].mxu0
      %v803 = vadd.f32 0.0, %v802
      %v804 = vpop.f32.mrb[0].mxu0
      %v805 = vpop.f32.mrb[0].mxu0
      %v806 = vpop.f32.mrb[0].mxu0
      %807 = vdwg.mxu0
      %v808 = vmul.f32 %v803, 0.35355338
      %v810 = vlaneseq
      %v811 = vshrl.u32 %v810, 7
      %v812 = vsub.s32 0, %v811
      %v813 = vrot.slane %v675, %v812
      %v815 = vadd.f32 %v808, %v813
      %vm816 = vcmask 55296
      %v817 = vsel %vm816, %v815, -inf
      %818 = vmax.xlane.f32.xlu0 %v817
      %v819 = vpop.xlane.xlu0 %818
      %v820 = vsub.f32 %v815, %v819
      %v821 = vmul.f32 %v820, 1.442695
      %v822 = vpow.pop %v821
      %v823 = vsel %vm816, %v822, 0.0
      %824 = vadd.xlane.f32.xlu0 %v823
      %v825 = vpop.xlane.xlu0 %824
      %v826 = vrcp.pop %v825
      %v827 = vmul.f32 %v822, %v826
      %v828 = vpack.c.bf16 %v827, %v827
      %829 = vrot.lane.b32.xlu0 %v753, 64
      %v830 = vpop.permute.xlu0 %829
      %vm831 = vcmask 56320
      %v833 = vsel %vm831, %v828, 0
      %v835 = vsel %vm532, 4294967295, 65535
      %v836 = vsel %vm518, %v835, 0
      %v838 = vand.u32 %v830, %v836
      %840 = vmatprep.subr.bf16.mxu0 0
      %841 = vmatpush1.bf16.msra.mxu0 %v838
      %842 = vmatprep.subr.bf16.mxu0 0
      %843 = vmatpush1.bf16.msra.mxu0 0
      %844 = vmatprep.subr.bf16.mxu0 0
      %845 = vmatpush1.bf16.msra.mxu0 0
      %846 = vmatprep.subr.bf16.mxu0 0
      %847 = vmatpush1.bf16.msra.mxu0 0
      %848 = vmatprep.subr.bf16.mxu0 0
      %849 = vmatpush1.bf16.msra.mxu0 0
      %850 = vmatprep.subr.bf16.mxu0 0
      %851 = vmatpush1.bf16.msra.mxu0 0
      %852 = vmatprep.subr.bf16.mxu0 0
      %853 = vmatpush1.bf16.msra.mxu0 0
      %854 = vmatprep.subr.bf16.mxu0 0
      %855 = vmatpush1.bf16.msra.mxu0 0
      %856 = vmatprep.subr.bf16.mxu0 0
      %857 = vmatpush1.bf16.msra.mxu0 0
      %858 = vmatprep.subr.bf16.mxu0 0
      %859 = vmatpush1.bf16.msra.mxu0 0
      %860 = vmatprep.subr.bf16.mxu0 0
      %861 = vmatpush1.bf16.msra.mxu0 0
      %862 = vmatprep.subr.bf16.mxu0 0
      %863 = vmatpush1.bf16.msra.mxu0 0
      %864 = vmatprep.subr.bf16.mxu0 0
      %865 = vmatpush1.bf16.msra.mxu0 0
      %866 = vmatprep.subr.bf16.mxu0 0
      %867 = vmatpush1.bf16.msra.mxu0 0
      %868 = vmatprep.subr.bf16.mxu0 0
      %869 = vmatpush1.bf16.msra.mxu0 0
      %870 = vmatprep.subr.bf16.mxu0 0
      %871 = vmatpush1.bf16.msra.mxu0 0
      %872 = vmatprep.mubr.bf16.mxu0 0
      %873 = vmatmul.mubr.bf16.gmra.mrb[0].mxu0 %v833
      %v874 = vpop.f32.mrb[0].mxu0
      %v875 = vadd.f32 0.0, %v874
      %v876 = vpop.f32.mrb[0].mxu0
      %v877 = vpop.f32.mrb[0].mxu0
      %v878 = vpop.f32.mrb[0].mxu0
      %879 = vdwg.mxu0
      %v880 = vpack.c.bf16 %v875, %v875
      %881 = vrot.lane.b32.xlu0 %v753, 120
      %v882 = vpop.permute.xlu0 %881
      %883 = vrot.lane.b32.xlu0 %v753, 88
      %v884 = vpop.permute.xlu0 %883
      %v886 = vsel %vm761, %v882, 0
      %v889 = vsel %vm761, %v884, 0
      %891 = vmatprep.subr.bf16.mxu0 0
      %892 = vmatpush1.bf16.xpose.msra.mxu0 %v889
      %893 = vmatprep.subr.bf16.mxu0 0
      %894 = vmatpush1.bf16.xpose.msra.mxu0 0
      %895 = vmatprep.subr.bf16.mxu0 0
      %896 = vmatpush1.bf16.xpose.msra.mxu0 0
      %897 = vmatprep.subr.bf16.mxu0 0
      %898 = vmatpush1.bf16.xpose.msra.mxu0 0
      %899 = vmatprep.subr.bf16.mxu0 0
      %900 = vmatpush1.bf16.xpose.msra.mxu0 0
      %901 = vmatprep.subr.bf16.mxu0 0
      %902 = vmatpush1.bf16.xpose.msra.mxu0 0
      %903 = vmatprep.subr.bf16.mxu0 0
      %904 = vmatpush1.bf16.xpose.msra.mxu0 0
      %905 = vmatprep.subr.bf16.mxu0 0
      %906 = vmatpush1.bf16.xpose.msra.mxu0 0
      %907 = vmatprep.subr.bf16.mxu0 0
      %908 = vmatpush1.bf16.xpose.msra.mxu0 0
      %909 = vmatprep.subr.bf16.mxu0 0
      %910 = vmatpush1.bf16.xpose.msra.mxu0 0
      %911 = vmatprep.subr.bf16.mxu0 0
      %912 = vmatpush1.bf16.xpose.msra.mxu0 0
      %913 = vmatprep.subr.bf16.mxu0 0
      %914 = vmatpush1.bf16.xpose.msra.mxu0 0
      %915 = vmatprep.subr.bf16.mxu0 0
      %916 = vmatpush1.bf16.xpose.msra.mxu0 0
      %917 = vmatprep.subr.bf16.mxu0 0
      %918 = vmatpush1.bf16.xpose.msra.mxu0 0
      %919 = vmatprep.subr.bf16.mxu0 0
      %920 = vmatpush1.bf16.xpose.msra.mxu0 0
      %921 = vmatprep.subr.bf16.mxu0 0
      %922 = vmatpush1.bf16.xpose.msra.mxu0 0
      %923 = vmatprep.mubr.bf16.mxu0 0
      %924 = vmatmul.mubr.bf16.gmra.mrb[0].mxu0 %v886
      %v925 = vpop.f32.mrb[0].mxu0
      %v926 = vadd.f32 0.0, %v925
      %v927 = vpop.f32.mrb[0].mxu0
      %v928 = vpop.f32.mrb[0].mxu0
      %v929 = vpop.f32.mrb[0].mxu0
      %930 = vdwg.mxu0
      %v931 = vmul.f32 %v926, 0.35355338
      %v932 = vadd.f32 %v931, %v813
      %v933 = vsel %vm816, %v932, -inf
      %934 = vmax.xlane.f32.xlu0 %v933
      %v935 = vpop.xlane.xlu0 %934
      %v936 = vsub.f32 %v932, %v935
      %v937 = vmul.f32 %v936, 1.442695
      %v938 = vpow.pop %v937
      %v939 = vsel %vm816, %v938, 0.0
      %940 = vadd.xlane.f32.xlu0 %v939
      %v941 = vpop.xlane.xlu0 %940
      %v942 = vrcp.pop %v941
      %v943 = vmul.f32 %v938, %v942
      %v944 = vpack.c.bf16 %v943, %v943
      %945 = vrot.lane.b32.xlu0 %v753, 56
      %v946 = vpop.permute.xlu0 %945
      %v948 = vsel %vm831, %v944, 0
      %v951 = vand.u32 %v946, %v836
      %953 = vmatprep.subr.bf16.mxu0 0
      %954 = vmatpush1.bf16.msra.mxu0 %v951
      %955 = vmatprep.subr.bf16.mxu0 0
      %956 = vmatpush1.bf16.msra.mxu0 0
      %957 = vmatprep.subr.bf16.mxu0 0
      %958 = vmatpush1.bf16.msra.mxu0 0
      %959 = vmatprep.subr.bf16.mxu0 0
      %960 = vmatpush1.bf16.msra.mxu0 0
      %961 = vmatprep.subr.bf16.mxu0 0
      %962 = vmatpush1.bf16.msra.mxu0 0
      %963 = vmatprep.subr.bf16.mxu0 0
      %964 = vmatpush1.bf16.msra.mxu0 0
      %965 = vmatprep.subr.bf16.mxu0 0
      %966 = vmatpush1.bf16.msra.mxu0 0
      %967 = vmatprep.subr.bf16.mxu0 0
      %968 = vmatpush1.bf16.msra.mxu0 0
      %969 = vmatprep.subr.bf16.mxu0 0
      %970 = vmatpush1.bf16.msra.mxu0 0
      %971 = vmatprep.subr.bf16.mxu0 0
      %972 = vmatpush1.bf16.msra.mxu0 0
      %973 = vmatprep.subr.bf16.mxu0 0
      %974 = vmatpush1.bf16.msra.mxu0 0
      %975 = vmatprep.subr.bf16.mxu0 0
      %976 = vmatpush1.bf16.msra.mxu0 0
      %977 = vmatprep.subr.bf16.mxu0 0
      %978 = vmatpush1.bf16.msra.mxu0 0
      %979 = vmatprep.subr.bf16.mxu0 0
      %980 = vmatpush1.bf16.msra.mxu0 0
      %981 = vmatprep.subr.bf16.mxu0 0
      %982 = vmatpush1.bf16.msra.mxu0 0
      %983 = vmatprep.subr.bf16.mxu0 0
      %984 = vmatpush1.bf16.msra.mxu0 0
      %985 = vmatprep.mubr.bf16.mxu0 0
      %986 = vmatmul.mubr.bf16.gmra.mrb[0].mxu0 %v948
      %v987 = vpop.f32.mrb[0].mxu0
      %v988 = vadd.f32 0.0, %v987
      %v989 = vpop.f32.mrb[0].mxu0
      %v990 = vpop.f32.mrb[0].mxu0
      %v991 = vpop.f32.mrb[0].mxu0
      %992 = vdwg.mxu0
      %v993 = vpack.c.bf16 %v988, %v988
      %v995 = vsel %vm761, %v993, 0
      %v998 = vsel %vm518, %v755, 0
      %1000 = vmatprep.subr.bf16.mxu0 0
      %1001 = vmatpush1.bf16.msra.mxu0 %v998
      %1002 = vmatprep.subr.bf16.mxu0 0
      %1003 = vmatpush1.bf16.msra.mxu0 0
      %1004 = vmatprep.subr.bf16.mxu0 0
      %1005 = vmatpush1.bf16.msra.mxu0 0
      %1006 = vmatprep.subr.bf16.mxu0 0
      %1007 = vmatpush1.bf16.msra.mxu0 0
      %1008 = vmatprep.subr.bf16.mxu0 0
      %1009 = vmatpush1.bf16.msra.mxu0 0
      %1010 = vmatprep.subr.bf16.mxu0 0
      %1011 = vmatpush1.bf16.msra.mxu0 0
      %1012 = vmatprep.subr.bf16.mxu0 0
      %1013 = vmatpush1.bf16.msra.mxu0 0
      %1014 = vmatprep.subr.bf16.mxu0 0
      %1015 = vmatpush1.bf16.msra.mxu0 0
      %1016 = vmatprep.subr.bf16.mxu0 0
      %1017 = vmatpush1.bf16.msra.mxu0 0
      %1018 = vmatprep.subr.bf16.mxu0 0
      %1019 = vmatpush1.bf16.msra.mxu0 0
      %1020 = vmatprep.subr.bf16.mxu0 0
      %1021 = vmatpush1.bf16.msra.mxu0 0
      %1022 = vmatprep.subr.bf16.mxu0 0
      %1023 = vmatpush1.bf16.msra.mxu0 0
      %1024 = vmatprep.subr.bf16.mxu0 0
      %1025 = vmatpush1.bf16.msra.mxu0 0
      %1026 = vmatprep.subr.bf16.mxu0 0
      %1027 = vmatpush1.bf16.msra.mxu0 0
      %1028 = vmatprep.subr.bf16.mxu0 0
      %1029 = vmatpush1.bf16.msra.mxu0 0
      %1030 = vmatprep.subr.bf16.mxu0 0
      %1031 = vmatpush1.bf16.msra.mxu0 0
      %1032 = vmatprep.mubr.bf16.mxu0 0
      %1033 = vmatmul.mubr.bf16.gmra.mrb[0].mxu0 %v995
      %v1034 = vpop.f32.mrb[0].mxu0
      %v1035 = vadd.f32 0.0, %v1034
      %v1036 = vpop.f32.mrb[0].mxu0
      %v1037 = vpop.f32.mrb[0].mxu0
      %v1038 = vpop.f32.mrb[0].mxu0
      %1039 = vdwg.mxu0
      %v1041 = vsel %vm761, %v880, 0
      %v1044 = vsel %vm518, %v754, 0
      %1046 = vmatprep.subr.bf16.mxu0 0
      %1047 = vmatpush1.bf16.msra.mxu0 %v1044
      %1048 = vmatprep.subr.bf16.mxu0 0
      %1049 = vmatpush1.bf16.msra.mxu0 0
      %1050 = vmatprep.subr.bf16.mxu0 0
      %1051 = vmatpush1.bf16.msra.mxu0 0
      %1052 = vmatprep.subr.bf16.mxu0 0
      %1053 = vmatpush1.bf16.msra.mxu0 0
      %1054 = vmatprep.subr.bf16.mxu0 0
      %1055 = vmatpush1.bf16.msra.mxu0 0
      %1056 = vmatprep.subr.bf16.mxu0 0
      %1057 = vmatpush1.bf16.msra.mxu0 0
      %1058 = vmatprep.subr.bf16.mxu0 0
      %1059 = vmatpush1.bf16.msra.mxu0 0
      %1060 = vmatprep.subr.bf16.mxu0 0
      %1061 = vmatpush1.bf16.msra.mxu0 0
      %1062 = vmatprep.subr.bf16.mxu0 0
      %1063 = vmatpush1.bf16.msra.mxu0 0
      %1064 = vmatprep.subr.bf16.mxu0 0
      %1065 = vmatpush1.bf16.msra.mxu0 0
      %1066 = vmatprep.subr.bf16.mxu0 0
      %1067 = vmatpush1.bf16.msra.mxu0 0
      %1068 = vmatprep.subr.bf16.mxu0 0
      %1069 = vmatpush1.bf16.msra.mxu0 0
      %1070 = vmatprep.subr.bf16.mxu0 0
      %1071 = vmatpush1.bf16.msra.mxu0 0
      %1072 = vmatprep.subr.bf16.mxu0 0
      %1073 = vmatpush1.bf16.msra.mxu0 0
      %1074 = vmatprep.subr.bf16.mxu0 0
      %1075 = vmatpush1.bf16.msra.mxu0 0
      %1076 = vmatprep.subr.bf16.mxu0 0
      %1077 = vmatpush1.bf16.msra.mxu0 0
      %1078 = vmatprep.mubr.bf16.mxu0 0
      %1079 = vmatmul.mubr.bf16.gmra.mrb[0].mxu0 %v1041
      %v1080 = vpop.f32.mrb[0].mxu0
      %v1081 = vadd.f32 %v1035, %v1080
      %v1082 = vpop.f32.mrb[0].mxu0
      %v1083 = vpop.f32.mrb[0].mxu0
      %v1084 = vpop.f32.mrb[0].mxu0
      %1085 = vdwg.mxu0
      %1086 = vrot.lane.b32.xlu0 %v753, 112
      %v1087 = vpop.permute.xlu0 %1086
      %1088 = vrot.lane.b32.xlu0 %v753, 80
      %v1089 = vpop.permute.xlu0 %1088
      %v1091 = vsel %vm761, %v1087, 0
      %v1094 = vsel %vm761, %v1089, 0
      %1096 = vmatprep.subr.bf16.mxu0 0
      %1097 = vmatpush1.bf16.xpose.msra.mxu0 %v1094
      %1098 = vmatprep.subr.bf16.mxu0 0
      %1099 = vmatpush1.bf16.xpose.msra.mxu0 0
      %1100 = vmatprep.subr.bf16.mxu0 0
      %1101 = vmatpush1.bf16.xpose.msra.mxu0 0
      %1102 = vmatprep.subr.bf16.mxu0 0
      %1103 = vmatpush1.bf16.xpose.msra.mxu0 0
      %1104 = vmatprep.subr.bf16.mxu0 0
      %1105 = vmatpush1.bf16.xpose.msra.mxu0 0
      %1106 = vmatprep.subr.bf16.mxu0 0
      %1107 = vmatpush1.bf16.xpose.msra.mxu0 0
      %1108 = vmatprep.subr.bf16.mxu0 0
      %1109 = vmatpush1.bf16.xpose.msra.mxu0 0
      %1110 = vmatprep.subr.bf16.mxu0 0
      %1111 = vmatpush1.bf16.xpose.msra.mxu0 0
      %1112 = vmatprep.subr.bf16.mxu0 0
      %1113 = vmatpush1.bf16.xpose.msra.mxu0 0
      %1114 = vmatprep.subr.bf16.mxu0 0
      %1115 = vmatpush1.bf16.xpose.msra.mxu0 0
      %1116 = vmatprep.subr.bf16.mxu0 0
      %1117 = vmatpush1.bf16.xpose.msra.mxu0 0
      %1118 = vmatprep.subr.bf16.mxu0 0
      %1119 = vmatpush1.bf16.xpose.msra.mxu0 0
      %1120 = vmatprep.subr.bf16.mxu0 0
      %1121 = vmatpush1.bf16.xpose.msra.mxu0 0
      %1122 = vmatprep.subr.bf16.mxu0 0
      %1123 = vmatpush1.bf16.xpose.msra.mxu0 0
      %1124 = vmatprep.subr.bf16.mxu0 0
      %1125 = vmatpush1.bf16.xpose.msra.mxu0 0
      %1126 = vmatprep.subr.bf16.mxu0 0
      %1127 = vmatpush1.bf16.xpose.msra.mxu0 0
      %1128 = vmatprep.mubr.bf16.mxu0 0
      %1129 = vmatmul.mubr.bf16.gmra.mrb[0].mxu0 %v1091
      %v1130 = vpop.f32.mrb[0].mxu0
      %v1131 = vadd.f32 0.0, %v1130
      %v1132 = vpop.f32.mrb[0].mxu0
      %v1133 = vpop.f32.mrb[0].mxu0
      %v1134 = vpop.f32.mrb[0].mxu0
      %1135 = vdwg.mxu0
      %v1136 = vmul.f32 %v1131, 0.35355338
      %v1137 = vadd.f32 %v1136, %v813
      %v1138 = vsel %vm816, %v1137, -inf
      %1139 = vmax.xlane.f32.xlu0 %v1138
      %v1140 = vpop.xlane.xlu0 %1139
      %v1141 = vsub.f32 %v1137, %v1140
      %v1142 = vmul.f32 %v1141, 1.442695
      %v1143 = vpow.pop %v1142
      %v1144 = vsel %vm816, %v1143, 0.0
      %1145 = vadd.xlane.f32.xlu0 %v1144
      %v1146 = vpop.xlane.xlu0 %1145
      %v1147 = vrcp.pop %v1146
      %v1148 = vmul.f32 %v1143, %v1147
      %v1149 = vpack.c.bf16 %v1148, %v1148
      %1150 = vrot.lane.b32.xlu0 %v753, 48
      %v1151 = vpop.permute.xlu0 %1150
      %v1153 = vsel %vm831, %v1149, 0
      %v1156 = vand.u32 %v1151, %v836
      %1158 = vmatprep.subr.bf16.mxu0 0
      %1159 = vmatpush1.bf16.msra.mxu0 %v1156
      %1160 = vmatprep.subr.bf16.mxu0 0
      %1161 = vmatpush1.bf16.msra.mxu0 0
      %1162 = vmatprep.subr.bf16.mxu0 0
      %1163 = vmatpush1.bf16.msra.mxu0 0
      %1164 = vmatprep.subr.bf16.mxu0 0
      %1165 = vmatpush1.bf16.msra.mxu0 0
      %1166 = vmatprep.subr.bf16.mxu0 0
      %1167 = vmatpush1.bf16.msra.mxu0 0
      %1168 = vmatprep.subr.bf16.mxu0 0
      %1169 = vmatpush1.bf16.msra.mxu0 0
      %1170 = vmatprep.subr.bf16.mxu0 0
      %1171 = vmatpush1.bf16.msra.mxu0 0
      %1172 = vmatprep.subr.bf16.mxu0 0
      %1173 = vmatpush1.bf16.msra.mxu0 0
      %1174 = vmatprep.subr.bf16.mxu0 0
      %1175 = vmatpush1.bf16.msra.mxu0 0
      %1176 = vmatprep.subr.bf16.mxu0 0
      %1177 = vmatpush1.bf16.msra.mxu0 0
      %1178 = vmatprep.subr.bf16.mxu0 0
      %1179 = vmatpush1.bf16.msra.mxu0 0
      %1180 = vmatprep.subr.bf16.mxu0 0
      %1181 = vmatpush1.bf16.msra.mxu0 0
      %1182 = vmatprep.subr.bf16.mxu0 0
      %1183 = vmatpush1.bf16.msra.mxu0 0
      %1184 = vmatprep.subr.bf16.mxu0 0
      %1185 = vmatpush1.bf16.msra.mxu0 0
      %1186 = vmatprep.subr.bf16.mxu0 0
      %1187 = vmatpush1.bf16.msra.mxu0 0
      %1188 = vmatprep.subr.bf16.mxu0 0
      %1189 = vmatpush1.bf16.msra.mxu0 0
      %1190 = vmatprep.mubr.bf16.mxu0 0
      %1191 = vmatmul.mubr.bf16.gmra.mrb[0].mxu0 %v1153
      %v1192 = vpop.f32.mrb[0].mxu0
      %v1193 = vadd.f32 0.0, %v1192
      %v1194 = vpop.f32.mrb[0].mxu0
      %v1195 = vpop.f32.mrb[0].mxu0
      %v1196 = vpop.f32.mrb[0].mxu0
      %1197 = vdwg.mxu0
      %v1198 = vpack.c.bf16 %v1193, %v1193
      %v1200 = vsel %vm761, %v1198, 0
      %v1203 = vsel %vm518, %v756, 0
      %1205 = vmatprep.subr.bf16.mxu0 0
      %1206 = vmatpush1.bf16.msra.mxu0 %v1203
      %1207 = vmatprep.subr.bf16.mxu0 0
      %1208 = vmatpush1.bf16.msra.mxu0 0
      %1209 = vmatprep.subr.bf16.mxu0 0
      %1210 = vmatpush1.bf16.msra.mxu0 0
      %1211 = vmatprep.subr.bf16.mxu0 0
      %1212 = vmatpush1.bf16.msra.mxu0 0
      %1213 = vmatprep.subr.bf16.mxu0 0
      %1214 = vmatpush1.bf16.msra.mxu0 0
      %1215 = vmatprep.subr.bf16.mxu0 0
      %1216 = vmatpush1.bf16.msra.mxu0 0
      %1217 = vmatprep.subr.bf16.mxu0 0
      %1218 = vmatpush1.bf16.msra.mxu0 0
      %1219 = vmatprep.subr.bf16.mxu0 0
      %1220 = vmatpush1.bf16.msra.mxu0 0
      %1221 = vmatprep.subr.bf16.mxu0 0
      %1222 = vmatpush1.bf16.msra.mxu0 0
      %1223 = vmatprep.subr.bf16.mxu0 0
      %1224 = vmatpush1.bf16.msra.mxu0 0
      %1225 = vmatprep.subr.bf16.mxu0 0
      %1226 = vmatpush1.bf16.msra.mxu0 0
      %1227 = vmatprep.subr.bf16.mxu0 0
      %1228 = vmatpush1.bf16.msra.mxu0 0
      %1229 = vmatprep.subr.bf16.mxu0 0
      %1230 = vmatpush1.bf16.msra.mxu0 0
      %1231 = vmatprep.subr.bf16.mxu0 0
      %1232 = vmatpush1.bf16.msra.mxu0 0
      %1233 = vmatprep.subr.bf16.mxu0 0
      %1234 = vmatpush1.bf16.msra.mxu0 0
      %1235 = vmatprep.subr.bf16.mxu0 0
      %1236 = vmatpush1.bf16.msra.mxu0 0
      %1237 = vmatprep.mubr.bf16.mxu0 0
      %1238 = vmatmul.mubr.bf16.gmra.mrb[0].mxu0 %v1200
      %v1239 = vpop.f32.mrb[0].mxu0
      %v1240 = vadd.f32 0.0, %v1239
      %v1241 = vpop.f32.mrb[0].mxu0
      %v1242 = vpop.f32.mrb[0].mxu0
      %v1243 = vpop.f32.mrb[0].mxu0
      %1244 = vdwg.mxu0
      %v1245 = vadd.f32 %v1081, %v1240
      %1246 = vrot.lane.b32.xlu0 %v753, 104
      %v1247 = vpop.permute.xlu0 %1246
      %1248 = vrot.lane.b32.xlu0 %v753, 72
      %v1249 = vpop.permute.xlu0 %1248
      %v1251 = vsel %vm761, %v1247, 0
      %v1254 = vsel %vm761, %v1249, 0
      %1256 = vmatprep.subr.bf16.mxu0 0
      %1257 = vmatpush1.bf16.xpose.msra.mxu0 %v1254
      %1258 = vmatprep.subr.bf16.mxu0 0
      %1259 = vmatpush1.bf16.xpose.msra.mxu0 0
      %1260 = vmatprep.subr.bf16.mxu0 0
      %1261 = vmatpush1.bf16.xpose.msra.mxu0 0
      %1262 = vmatprep.subr.bf16.mxu0 0
      %1263 = vmatpush1.bf16.xpose.msra.mxu0 0
      %1264 = vmatprep.subr.bf16.mxu0 0
      %1265 = vmatpush1.bf16.xpose.msra.mxu0 0
      %1266 = vmatprep.subr.bf16.mxu0 0
      %1267 = vmatpush1.bf16.xpose.msra.mxu0 0
      %1268 = vmatprep.subr.bf16.mxu0 0
      %1269 = vmatpush1.bf16.xpose.msra.mxu0 0
      %1270 = vmatprep.subr.bf16.mxu0 0
      %1271 = vmatpush1.bf16.xpose.msra.mxu0 0
      %1272 = vmatprep.subr.bf16.mxu0 0
      %1273 = vmatpush1.bf16.xpose.msra.mxu0 0
      %1274 = vmatprep.subr.bf16.mxu0 0
      %1275 = vmatpush1.bf16.xpose.msra.mxu0 0
      %1276 = vmatprep.subr.bf16.mxu0 0
      %1277 = vmatpush1.bf16.xpose.msra.mxu0 0
      %1278 = vmatprep.subr.bf16.mxu0 0
      %1279 = vmatpush1.bf16.xpose.msra.mxu0 0
      %1280 = vmatprep.subr.bf16.mxu0 0
      %1281 = vmatpush1.bf16.xpose.msra.mxu0 0
      %1282 = vmatprep.subr.bf16.mxu0 0
      %1283 = vmatpush1.bf16.xpose.msra.mxu0 0
      %1284 = vmatprep.subr.bf16.mxu0 0
      %1285 = vmatpush1.bf16.xpose.msra.mxu0 0
      %1286 = vmatprep.subr.bf16.mxu0 0
      %1287 = vmatpush1.bf16.xpose.msra.mxu0 0
      %1288 = vmatprep.mubr.bf16.mxu0 0
      %1289 = vmatmul.mubr.bf16.gmra.mrb[0].mxu0 %v1251
      %v1290 = vpop.f32.mrb[0].mxu0
      %v1291 = vadd.f32 0.0, %v1290
      %v1292 = vpop.f32.mrb[0].mxu0
      %v1293 = vpop.f32.mrb[0].mxu0
      %v1294 = vpop.f32.mrb[0].mxu0
      %1295 = vdwg.mxu0
      %v1296 = vmul.f32 %v1291, 0.35355338
      %v1297 = vadd.f32 %v1296, %v813
      %v1298 = vsel %vm816, %v1297, -inf
      %1299 = vmax.xlane.f32.xlu0 %v1298
      %v1300 = vpop.xlane.xlu0 %1299
      %v1301 = vsub.f32 %v1297, %v1300
      %v1302 = vmul.f32 %v1301, 1.442695
      %v1303 = vpow.pop %v1302
      %v1304 = vsel %vm816, %v1303, 0.0
      %1305 = vadd.xlane.f32.xlu0 %v1304
      %v1306 = vpop.xlane.xlu0 %1305
      %v1307 = vrcp.pop %v1306
      %v1308 = vmul.f32 %v1303, %v1307
      %v1309 = vpack.c.bf16 %v1308, %v1308
      %1310 = vrot.lane.b32.xlu0 %v753, 40
      %v1311 = vpop.permute.xlu0 %1310
      %v1313 = vsel %vm831, %v1309, 0
      %v1316 = vand.u32 %v1311, %v836
      %1318 = vmatprep.subr.bf16.mxu0 0
      %1319 = vmatpush1.bf16.msra.mxu0 %v1316
      %1320 = vmatprep.subr.bf16.mxu0 0
      %1321 = vmatpush1.bf16.msra.mxu0 0
      %1322 = vmatprep.subr.bf16.mxu0 0
      %1323 = vmatpush1.bf16.msra.mxu0 0
      %1324 = vmatprep.subr.bf16.mxu0 0
      %1325 = vmatpush1.bf16.msra.mxu0 0
      %1326 = vmatprep.subr.bf16.mxu0 0
      %1327 = vmatpush1.bf16.msra.mxu0 0
      %1328 = vmatprep.subr.bf16.mxu0 0
      %1329 = vmatpush1.bf16.msra.mxu0 0
      %1330 = vmatprep.subr.bf16.mxu0 0
      %1331 = vmatpush1.bf16.msra.mxu0 0
      %1332 = vmatprep.subr.bf16.mxu0 0
      %1333 = vmatpush1.bf16.msra.mxu0 0
      %1334 = vmatprep.subr.bf16.mxu0 0
      %1335 = vmatpush1.bf16.msra.mxu0 0
      %1336 = vmatprep.subr.bf16.mxu0 0
      %1337 = vmatpush1.bf16.msra.mxu0 0
      %1338 = vmatprep.subr.bf16.mxu0 0
      %1339 = vmatpush1.bf16.msra.mxu0 0
      %1340 = vmatprep.subr.bf16.mxu0 0
      %1341 = vmatpush1.bf16.msra.mxu0 0
      %1342 = vmatprep.subr.bf16.mxu0 0
      %1343 = vmatpush1.bf16.msra.mxu0 0
      %1344 = vmatprep.subr.bf16.mxu0 0
      %1345 = vmatpush1.bf16.msra.mxu0 0
      %1346 = vmatprep.subr.bf16.mxu0 0
      %1347 = vmatpush1.bf16.msra.mxu0 0
      %1348 = vmatprep.subr.bf16.mxu0 0
      %1349 = vmatpush1.bf16.msra.mxu0 0
      %1350 = vmatprep.mubr.bf16.mxu0 0
      %1351 = vmatmul.mubr.bf16.gmra.mrb[0].mxu0 %v1313
      %v1352 = vpop.f32.mrb[0].mxu0
      %v1353 = vadd.f32 0.0, %v1352
      %v1354 = vpop.f32.mrb[0].mxu0
      %v1355 = vpop.f32.mrb[0].mxu0
      %v1356 = vpop.f32.mrb[0].mxu0
      %1357 = vdwg.mxu0
      %v1358 = vpack.c.bf16 %v1353, %v1353
      %v1360 = vsel %vm761, %v1358, 0
      %v1363 = vsel %vm518, %v757, 0
      %1365 = vmatprep.subr.bf16.mxu0 0
      %1366 = vmatpush1.bf16.msra.mxu0 %v1363
      %1367 = vmatprep.subr.bf16.mxu0 0
      %1368 = vmatpush1.bf16.msra.mxu0 0
      %1369 = vmatprep.subr.bf16.mxu0 0
      %1370 = vmatpush1.bf16.msra.mxu0 0
      %1371 = vmatprep.subr.bf16.mxu0 0
      %1372 = vmatpush1.bf16.msra.mxu0 0
      %1373 = vmatprep.subr.bf16.mxu0 0
      %1374 = vmatpush1.bf16.msra.mxu0 0
      %1375 = vmatprep.subr.bf16.mxu0 0
      %1376 = vmatpush1.bf16.msra.mxu0 0
      %1377 = vmatprep.subr.bf16.mxu0 0
      %1378 = vmatpush1.bf16.msra.mxu0 0
      %1379 = vmatprep.subr.bf16.mxu0 0
      %1380 = vmatpush1.bf16.msra.mxu0 0
      %1381 = vmatprep.subr.bf16.mxu0 0
      %1382 = vmatpush1.bf16.msra.mxu0 0
      %1383 = vmatprep.subr.bf16.mxu0 0
      %1384 = vmatpush1.bf16.msra.mxu0 0
      %1385 = vmatprep.subr.bf16.mxu0 0
      %1386 = vmatpush1.bf16.msra.mxu0 0
      %1387 = vmatprep.subr.bf16.mxu0 0
      %1388 = vmatpush1.bf16.msra.mxu0 0
      %1389 = vmatprep.subr.bf16.mxu0 0
      %1390 = vmatpush1.bf16.msra.mxu0 0
      %1391 = vmatprep.subr.bf16.mxu0 0
      %1392 = vmatpush1.bf16.msra.mxu0 0
      %1393 = vmatprep.subr.bf16.mxu0 0
      %1394 = vmatpush1.bf16.msra.mxu0 0
      %1395 = vmatprep.subr.bf16.mxu0 0
      %1396 = vmatpush1.bf16.msra.mxu0 0
      %1397 = vmatprep.mubr.bf16.mxu0 0
      %1398 = vmatmul.mubr.bf16.gmra.mrb[0].mxu0 %v1360
      %v1399 = vpop.f32.mrb[0].mxu0
      %v1400 = vadd.f32 0.0, %v1399
      %v1401 = vpop.f32.mrb[0].mxu0
      %v1402 = vpop.f32.mrb[0].mxu0
      %v1403 = vpop.f32.mrb[0].mxu0
      %1404 = vdwg.mxu0
      %v1405 = vadd.f32 %v1245, %v1400
      %v1406 = vld [vmem:[%s4 + $0x1] sm:$0x1]
      %v1408 = vlaneseq
      %v1409 = vshrl.u32 %v1408, 7
      %v1410 = vsub.s32 0, %v1409
      %v1411 = vrot.slane %v1406, %v1410
      %1412 = vrot.lane.b32.xlu0 %v1411, 96
      %v1413 = vpop.permute.xlu0 %1412
      %v1415 = vadd.f32 %v1405, %v1413
      %v1416 = vadd.f32 %v672, %v1415
      %vm1417 = vcmask 260096
      %v1418 = vsel %vm1417, %v1416, 0.0
      %1419 = vadd.xlane.f32.xlu0 %v1418
      %v1420 = vpop.xlane.xlu0 %1419
      %v1421 = vrcp.pop 32.0
      %v1422 = vmul.f32 %v1420, %v1421
      %v1423 = vsub.f32 %v1416, %v1422
      %v1424 = vmul.f32 %v1423, %v1423
      %v1425 = vsel %vm1417, %v1424, 0.0
      %1426 = vadd.xlane.f32.xlu0 %v1425
      %v1427 = vpop.xlane.xlu0 %1426
      %v1428 = vmul.f32 %v1427, %v1421
      %v1429 = vadd.f32 %v1428, 1e-05
      %v1430 = vrsqrt.pop %v1429
      %v1431 = vmul.f32 %v1423, %v1430
      %1432 = vrot.lane.b32.xlu0 %v1411, 64
      %v1433 = vpop.permute.xlu0 %1432
      %v1435 = vmul.f32 %v1431, %v1433
      %1436 = vrot.lane.b32.xlu0 %v1411, 32
      %v1437 = vpop.permute.xlu0 %1436
      %v1439 = vadd.f32 %v1435, %v1437
      %v1440 = vpack.c.bf16 %v1439, %v1439
      %v1441 = vld [vmem:[%s9] sm:$0xf]
      %v1442 = vld [vmem:[%s9 + $0x4] sm:$0xf]
      %v1443 = vld [vmem:[%s9 + $0x8] sm:$0xf]
      %v1444 = vld [vmem:[%s9 + $0xc] sm:$0xf]
      %v1445 = vld [vmem:[%s4 + $0x2] sm:$0x1]
      %v1447 = vlaneseq
      %v1448 = vshrl.u32 %v1447, 7
      %v1449 = vsub.s32 0, %v1448
      %v1450 = vrot.slane %v1445, %v1449
      %v1456 = vunpack.c.l.b16 %v1441
      %v1457 = vunpack.c.l.b16 %v1442
      %v1458 = vunpack.c.l.b16 %v1443
      %v1459 = vunpack.c.l.b16 %v1444
      %v1460 = vpack.c.b16 %v1457, %v1456
      %v1461 = vpack.c.b16 %v1459, %v1458
      %v1465 = vsel %vm627, %v1440, 0
      %1467 = vmatprep.subr.bf16.mxu0 0
      %1468 = vmatpush1.bf16.msra.mxu0 %v1460
      %1469 = vmatprep.subr.bf16.mxu0 0
      %1470 = vmatpush1.bf16.msra.mxu0 %v1461
      %1471 = vmatprep.subr.bf16.mxu0 0
      %1472 = vmatpush1.bf16.msra.mxu0 0
      %1473 = vmatprep.subr.bf16.mxu0 0
      %1474 = vmatpush1.bf16.msra.mxu0 0
      %1475 = vmatprep.subr.bf16.mxu0 0
      %1476 = vmatpush1.bf16.msra.mxu0 0
      %1477 = vmatprep.subr.bf16.mxu0 0
      %1478 = vmatpush1.bf16.msra.mxu0 0
      %1479 = vmatprep.subr.bf16.mxu0 0
      %1480 = vmatpush1.bf16.msra.mxu0 0
      %1481 = vmatprep.subr.bf16.mxu0 0
      %1482 = vmatpush1.bf16.msra.mxu0 0
      %1483 = vmatprep.subr.bf16.mxu0 0
      %1484 = vmatpush1.bf16.msra.mxu0 0
      %1485 = vmatprep.subr.bf16.mxu0 0
      %1486 = vmatpush1.bf16.msra.mxu0 0
      %1487 = vmatprep.subr.bf16.mxu0 0
      %1488 = vmatpush1.bf16.msra.mxu0 0
      %1489 = vmatprep.subr.bf16.mxu0 0
      %1490 = vmatpush1.bf16.msra.mxu0 0
      %1491 = vmatprep.subr.bf16.mxu0 0
      %1492 = vmatpush1.bf16.msra.mxu0 0
      %1493 = vmatprep.subr.bf16.mxu0 0
      %1494 = vmatpush1.bf16.msra.mxu0 0
      %1495 = vmatprep.subr.bf16.mxu0 0
      %1496 = vmatpush1.bf16.msra.mxu0 0
      %1497 = vmatprep.subr.bf16.mxu0 0
      %1498 = vmatpush1.bf16.msra.mxu0 0
      %1499 = vmatprep.mubr.bf16.mxu0 0
      %1500 = vmatmul.mubr.bf16.gmra.mrb[0].mxu0 %v1465
      %v1501 = vpop.f32.mrb[0].mxu0
      %v1502 = vadd.f32 %v1450, %v1501
      %v1503 = vpop.f32.mrb[0].mxu0
      %v1504 = vpop.f32.mrb[0].mxu0
      %v1505 = vpop.f32.mrb[0].mxu0
      %1506 = vdwg.mxu0
      %v1507 = vmax.f32 %v1502, 0.0
      %v1508 = vpack.c.bf16 %v1507, %v1507
      %v1509 = vld [vmem:[%s10] sm:$0xf]
      %v1510 = vld [vmem:[%s10 + $0x4] sm:$0xf]
      %v1511 = vld [vmem:[%s10 + $0x8] sm:$0xf]
      %v1512 = vld [vmem:[%s10 + $0xc] sm:$0xf]
      %v1513 = vld [vmem:[%s10 + $0x10] sm:$0xf]
      %v1514 = vld [vmem:[%s10 + $0x14] sm:$0xf]
      %v1515 = vld [vmem:[%s10 + $0x18] sm:$0xf]
      %v1516 = vld [vmem:[%s10 + $0x1c] sm:$0xf]
      %v1525 = vunpack.c.l.b16 %v1509
      %v1526 = vunpack.c.l.b16 %v1510
      %v1527 = vunpack.c.l.b16 %v1511
      %v1528 = vunpack.c.l.b16 %v1512
      %v1529 = vunpack.c.l.b16 %v1513
      %v1530 = vunpack.c.l.b16 %v1514
      %v1531 = vunpack.c.l.b16 %v1515
      %v1532 = vunpack.c.l.b16 %v1516
      %v1533 = vpack.c.b16 %v1526, %v1525
      %v1534 = vpack.c.b16 %v1528, %v1527
      %v1535 = vpack.c.b16 %v1530, %v1529
      %v1536 = vpack.c.b16 %v1532, %v1531
      %1541 = vrot.lane.b32.xlu0 %v1450, 64
      %v1542 = vpop.permute.xlu0 %1541
      %v1545 = vsel %vm707, %v1508, 0
      %1547 = vmatprep.subr.bf16.mxu0 0
      %1548 = vmatpush1.bf16.msra.mxu0 %v1533
      %1549 = vmatprep.subr.bf16.mxu0 0
      %1550 = vmatpush1.bf16.msra.mxu0 %v1534
      %1551 = vmatprep.subr.bf16.mxu0 0
      %1552 = vmatpush1.bf16.msra.mxu0 %v1535
      %1553 = vmatprep.subr.bf16.mxu0 0
      %1554 = vmatpush1.bf16.msra.mxu0 %v1536
      %1555 = vmatprep.subr.bf16.mxu0 0
      %1556 = vmatpush1.bf16.msra.mxu0 0
      %1557 = vmatprep.subr.bf16.mxu0 0
      %1558 = vmatpush1.bf16.msra.mxu0 0
      %1559 = vmatprep.subr.bf16.mxu0 0
      %1560 = vmatpush1.bf16.msra.mxu0 0
      %1561 = vmatprep.subr.bf16.mxu0 0
      %1562 = vmatpush1.bf16.msra.mxu0 0
      %1563 = vmatprep.subr.bf16.mxu0 0
      %1564 = vmatpush1.bf16.msra.mxu0 0
      %1565 = vmatprep.subr.bf16.mxu0 0
      %1566 = vmatpush1.bf16.msra.mxu0 0
      %1567 = vmatprep.subr.bf16.mxu0 0
      %1568 = vmatpush1.bf16.msra.mxu0 0
      %1569 = vmatprep.subr.bf16.mxu0 0
      %1570 = vmatpush1.bf16.msra.mxu0 0
      %1571 = vmatprep.subr.bf16.mxu0 0
      %1572 = vmatpush1.bf16.msra.mxu0 0
      %1573 = vmatprep.subr.bf16.mxu0 0
      %1574 = vmatpush1.bf16.msra.mxu0 0
      %1575 = vmatprep.subr.bf16.mxu0 0
      %1576 = vmatpush1.bf16.msra.mxu0 0
      %1577 = vmatprep.subr.bf16.mxu0 0
      %1578 = vmatpush1.bf16.msra.mxu0 0
      %1579 = vmatprep.mubr.bf16.mxu0 0
      %1580 = vmatmul.mubr.bf16.gmra.mrb[0].mxu0 %v1545
      %v1581 = vpop.f32.mrb[0].mxu0
      %v1582 = vadd.f32 %v1542, %v1581
      %v1583 = vpop.f32.mrb[0].mxu0
      %v1584 = vpop.f32.mrb[0].mxu0
      %v1585 = vpop.f32.mrb[0].mxu0
      %1586 = vdwg.mxu0
      %v1587 = vadd.f32 %v1439, %v1582
      %v1588 = vsel %vm1417, %v1587, 0.0
      %1589 = vadd.xlane.f32.xlu0 %v1588
      %v1590 = vpop.xlane.xlu0 %1589
      %v1591 = vmul.f32 %v1590, %v1421
      %v1592 = vsub.f32 %v1587, %v1591
      %v1593 = vmul.f32 %v1592, %v1592
      %v1594 = vsel %vm1417, %v1593, 0.0
      %1595 = vadd.xlane.f32.xlu0 %v1594
      %v1596 = vpop.xlane.xlu0 %1595
      %v1597 = vmul.f32 %v1596, %v1421
      %v1598 = vadd.f32 %v1597, 1e-05
      %v1599 = vrsqrt.pop %v1598
      %v1600 = vmul.f32 %v1592, %v1599
      %1601 = vrot.lane.b32.xlu0 %v1450, 32
      %v1602 = vpop.permute.xlu0 %1601
      %v1604 = vmul.f32 %v1600, %v1602
      %v1605 = vld [vmem:[%s4 + $0x3] sm:$0x1]
      %v1607 = vlaneseq
      %v1608 = vshrl.u32 %v1607, 7
      %v1609 = vsub.s32 0, %v1608
      %v1610 = vrot.slane %v1605, %v1609
      %v1612 = vadd.f32 %v1604, %v1610
      %v1613 = vpack.c.bf16 %v1612, %v1612
      %v1614 = vld [vmem:[%s11] sm:$0xf]
      %v1615 = vld [vmem:[%s11 + $0x4] sm:$0xf]
      %v1616 = vld [vmem:[%s11 + $0x8] sm:$0xf]
      %v1617 = vld [vmem:[%s11 + $0xc] sm:$0xf]
      %v1619 = vrot.slane %v1613, 2
      %v1624 = vunpack.c.l.b16 %v1614
      %v1625 = vunpack.c.l.b16 %v1615
      %v1626 = vunpack.c.l.b16 %v1616
      %v1627 = vunpack.c.l.b16 %v1617
      %v1628 = vpack.c.b16 %v1625, %v1624
      %v1629 = vpack.c.b16 %v1627, %v1626
      %1632 = vrot.lane.b32.xlu0 %v1610, 96
      %v1633 = vpop.permute.xlu0 %1632
      %v1636 = vsel %vm627, %v1619, 0
      %1638 = vmatprep.subr.bf16.mxu0 0
      %1639 = vmatpush1.bf16.msra.mxu0 %v1628
      %1640 = vmatprep.subr.bf16.mxu0 0
      %1641 = vmatpush1.bf16.msra.mxu0 %v1629
      %1642 = vmatprep.subr.bf16.mxu0 0
      %1643 = vmatpush1.bf16.msra.mxu0 0
      %1644 = vmatprep.subr.bf16.mxu0 0
      %1645 = vmatpush1.bf16.msra.mxu0 0
      %1646 = vmatprep.subr.bf16.mxu0 0
      %1647 = vmatpush1.bf16.msra.mxu0 0
      %1648 = vmatprep.subr.bf16.mxu0 0
      %1649 = vmatpush1.bf16.msra.mxu0 0
      %1650 = vmatprep.subr.bf16.mxu0 0
      %1651 = vmatpush1.bf16.msra.mxu0 0
      %1652 = vmatprep.subr.bf16.mxu0 0
      %1653 = vmatpush1.bf16.msra.mxu0 0
      %1654 = vmatprep.subr.bf16.mxu0 0
      %1655 = vmatpush1.bf16.msra.mxu0 0
      %1656 = vmatprep.subr.bf16.mxu0 0
      %1657 = vmatpush1.bf16.msra.mxu0 0
      %1658 = vmatprep.subr.bf16.mxu0 0
      %1659 = vmatpush1.bf16.msra.mxu0 0
      %1660 = vmatprep.subr.bf16.mxu0 0
      %1661 = vmatpush1.bf16.msra.mxu0 0
      %1662 = vmatprep.subr.bf16.mxu0 0
      %1663 = vmatpush1.bf16.msra.mxu0 0
      %1664 = vmatprep.subr.bf16.mxu0 0
      %1665 = vmatpush1.bf16.msra.mxu0 0
      %1666 = vmatprep.subr.bf16.mxu0 0
      %1667 = vmatpush1.bf16.msra.mxu0 0
      %1668 = vmatprep.subr.bf16.mxu0 0
      %1669 = vmatpush1.bf16.msra.mxu0 0
      %1670 = vmatprep.mubr.bf16.mxu0 0
      %1671 = vmatmul.mubr.bf16.gmra.mrb[0].mxu0 %v1636
      %v1672 = vpop.f32.mrb[0].mxu0
      %v1673 = vadd.f32 %v1633, %v1672
      %v1674 = vpop.f32.mrb[0].mxu0
      %v1675 = vpop.f32.mrb[0].mxu0
      %v1676 = vpop.f32.mrb[0].mxu0
      %1677 = vdwg.mxu0
      %v1678 = vmax.f32 %v1673, 0.0
      %v1679 = vpack.c.bf16 %v1678, %v1678
      %v1680 = vld [vmem:[%s12] sm:$0xf]
      %v1681 = vld [vmem:[%s12 + $0x4] sm:$0xf]
      %v1682 = vld [vmem:[%s12 + $0x8] sm:$0xf]
      %v1683 = vld [vmem:[%s12 + $0xc] sm:$0xf]
      %v1688 = vunpack.c.l.b16 %v1680
      %v1689 = vunpack.c.l.b16 %v1681
      %v1690 = vunpack.c.l.b16 %v1682
      %v1691 = vunpack.c.l.b16 %v1683
      %v1692 = vpack.c.b16 %v1689, %v1688
      %v1693 = vpack.c.b16 %v1691, %v1690
      %1696 = vrot.lane.b32.xlu0 %v1610, 64
      %v1697 = vpop.permute.xlu0 %1696
      %v1700 = vsel %vm627, %v1679, 0
      %1702 = vmatprep.subr.bf16.mxu0 0
      %1703 = vmatpush1.bf16.msra.mxu0 %v1692
      %1704 = vmatprep.subr.bf16.mxu0 0
      %1705 = vmatpush1.bf16.msra.mxu0 %v1693
      %1706 = vmatprep.subr.bf16.mxu0 0
      %1707 = vmatpush1.bf16.msra.mxu0 0
      %1708 = vmatprep.subr.bf16.mxu0 0
      %1709 = vmatpush1.bf16.msra.mxu0 0
      %1710 = vmatprep.subr.bf16.mxu0 0
      %1711 = vmatpush1.bf16.msra.mxu0 0
      %1712 = vmatprep.subr.bf16.mxu0 0
      %1713 = vmatpush1.bf16.msra.mxu0 0
      %1714 = vmatprep.subr.bf16.mxu0 0
      %1715 = vmatpush1.bf16.msra.mxu0 0
      %1716 = vmatprep.subr.bf16.mxu0 0
      %1717 = vmatpush1.bf16.msra.mxu0 0
      %1718 = vmatprep.subr.bf16.mxu0 0
      %1719 = vmatpush1.bf16.msra.mxu0 0
      %1720 = vmatprep.subr.bf16.mxu0 0
      %1721 = vmatpush1.bf16.msra.mxu0 0
      %1722 = vmatprep.subr.bf16.mxu0 0
      %1723 = vmatpush1.bf16.msra.mxu0 0
      %1724 = vmatprep.subr.bf16.mxu0 0
      %1725 = vmatpush1.bf16.msra.mxu0 0
      %1726 = vmatprep.subr.bf16.mxu0 0
      %1727 = vmatpush1.bf16.msra.mxu0 0
      %1728 = vmatprep.subr.bf16.mxu0 0
      %1729 = vmatpush1.bf16.msra.mxu0 0
      %1730 = vmatprep.subr.bf16.mxu0 0
      %1731 = vmatpush1.bf16.msra.mxu0 0
      %1732 = vmatprep.subr.bf16.mxu0 0
      %1733 = vmatpush1.bf16.msra.mxu0 0
      %1734 = vmatprep.mubr.bf16.mxu0 0
      %1735 = vmatmul.mubr.bf16.gmra.mrb[0].mxu0 %v1700
      %v1736 = vpop.f32.mrb[0].mxu0
      %v1737 = vadd.f32 %v1697, %v1736
      %v1738 = vpop.f32.mrb[0].mxu0
      %v1739 = vpop.f32.mrb[0].mxu0
      %v1740 = vpop.f32.mrb[0].mxu0
      %1741 = vdwg.mxu0
      %v1742 = vmax.f32 %v1737, 0.0
      %v1743 = vpack.c.bf16 %v1742, %v1742
      %v1744 = vld [vmem:[%s13] sm:$0xf]
      %v1745 = vld [vmem:[%s13 + $0x4] sm:$0xf]
      %v1748 = vunpack.c.l.b16 %v1744
      %v1749 = vunpack.c.l.b16 %v1745
      %v1750 = vpack.c.b16 %v1749, %v1748
      %1752 = vrot.lane.b32.xlu0 %v1610, 48
      %v1753 = vpop.permute.xlu0 %1752
      %vm1755 = vcmask 130048
      %v1757 = vsel %vm1755, %v1743, 0
      %1759 = vmatprep.subr.bf16.mxu0 0
      %1760 = vmatpush1.bf16.msra.mxu0 %v1750
      %1761 = vmatprep.subr.bf16.mxu0 0
      %1762 = vmatpush1.bf16.msra.mxu0 0
      %1763 = vmatprep.subr.bf16.mxu0 0
      %1764 = vmatpush1.bf16.msra.mxu0 0
      %1765 = vmatprep.subr.bf16.mxu0 0
      %1766 = vmatpush1.bf16.msra.mxu0 0
      %1767 = vmatprep.subr.bf16.mxu0 0
      %1768 = vmatpush1.bf16.msra.mxu0 0
      %1769 = vmatprep.subr.bf16.mxu0 0
      %1770 = vmatpush1.bf16.msra.mxu0 0
      %1771 = vmatprep.subr.bf16.mxu0 0
      %1772 = vmatpush1.bf16.msra.mxu0 0
      %1773 = vmatprep.subr.bf16.mxu0 0
      %1774 = vmatpush1.bf16.msra.mxu0 0
      %1775 = vmatprep.subr.bf16.mxu0 0
      %1776 = vmatpush1.bf16.msra.mxu0 0
      %1777 = vmatprep.subr.bf16.mxu0 0
      %1778 = vmatpush1.bf16.msra.mxu0 0
      %1779 = vmatprep.subr.bf16.mxu0 0
      %1780 = vmatpush1.bf16.msra.mxu0 0
      %1781 = vmatprep.subr.bf16.mxu0 0
      %1782 = vmatpush1.bf16.msra.mxu0 0
      %1783 = vmatprep.subr.bf16.mxu0 0
      %1784 = vmatpush1.bf16.msra.mxu0 0
      %1785 = vmatprep.subr.bf16.mxu0 0
      %1786 = vmatpush1.bf16.msra.mxu0 0
      %1787 = vmatprep.subr.bf16.mxu0 0
      %1788 = vmatpush1.bf16.msra.mxu0 0
      %1789 = vmatprep.subr.bf16.mxu0 0
      %1790 = vmatpush1.bf16.msra.mxu0 0
      %1791 = vmatprep.mubr.bf16.mxu0 0
      %1792 = vmatmul.mubr.bf16.gmra.mrb[0].mxu0 %v1757
      %v1793 = vpop.f32.mrb[0].mxu0
      %v1794 = vadd.f32 %v1753, %v1793
      %v1795 = vpop.f32.mrb[0].mxu0
      %v1796 = vpop.f32.mrb[0].mxu0
      %v1797 = vpop.f32.mrb[0].mxu0
      %1798 = vdwg.mxu0
      %vm1799 = vcmask 34816
      %v1800 = vsel %vm1799, %v1794, -inf
      %1801 = vmax.xlane.f32.xlu0 %v1800
      %v1802 = vpop.xlane.xlu0 %1801
      %v1803 = vsub.f32 %v1794, %v1802
      %v1804 = vmul.f32 %v1803, 1.442695
      %v1805 = vpow.pop %v1804
      %v1806 = vsel %vm1799, %v1805, 0.0
      %1807 = vadd.xlane.f32.xlu0 %v1806
      %v1808 = vpop.xlane.xlu0 %1807
      %v1809 = vrcp.pop %v1808
      %v1810 = vmul.f32 %v1805, %v1809
      %v1811 = vmul.f32 %v1794, 1.442695
      %v1812 = vpow.pop %v1811
      %vm1813 = vcmask 39936
      %v1814 = vsel %vm1813, %v1810, %v1812
      %vm1815 = vcmask 80896
      %v1816 = vsel %vm1815, %v1814, %v1794
      %vm1817 = vcmask 121856
      %v1818 = vsel %vm1817, %v1816, 0.0
      %1819 = vst [vmem:[%s510] sm:$0x7] %v1818
      %p1820 = scmp.lt.s32.totalorder %s25, 1
      %s1821 = scalar_select %p1820, %s25, 1
      %s1822 = smul.addr %s1821, 4
      %s1823 = scalar_lea.vmem %s14, %s1822
      // Predicated region
      $region77: #{full_model_forward.3} parent=75 // pred_check
        %p1824 = pneg %p357
      $region78: #{full_model_forward.3} parent=75 // pred_check_branch
        %1826 = sbr.rel (%p1824) target = $region80
      $region79: #{full_model_forward.3} parent=75 // pred_region
        _
      $region80: #{full_model_forward.3} parent=75 // pred_fallthru
        _
    $region76: #{full_model_forward.3} parent=5 // pred_fallthru
      _
    %p1827 = scmp.le.s32.totalorder 2, %s20
    // Predicated region
    $region81: #{full_model_forward.3} parent=5 // pred_check
      %p1828 = pneg %p1827
    $region82: #{full_model_forward.3} parent=5 // pred_check_branch
      %1830 = sbr.rel (%p1828) target = $region84
    $region83: #{full_model_forward.3} parent=5 // pred_region
      %s1831 = ssub.s32 %s20, 2
      // Predicated region
      $region85: #{full_model_forward.3} parent=83 // pred_check
        %p1832 = pneg %p363
      $region86: #{full_model_forward.3} parent=83 // pred_check_branch
        %1834 = sbr.rel (%p1832) target = $region88
      $region87: #{full_model_forward.3} parent=83 // pred_region
        %p1835 = scmp.lt.s32.totalorder %s26, 1
        %s1836 = scalar_select %p1835, %s26, 1
        %s1837 = smul.addr %s1836, 4
        %s1838 = scalar_lea.vmem %s14, %s1837
      $region88: #{full_model_forward.3} parent=83 // pred_fallthru
        _
    $region84: #{full_model_forward.3} parent=5 // pred_fallthru
      _
  $region6: #{full_model_forward.3} parent=0 // loop_footer
    %s24 = sadd.s32 1, %s20
  $region7: #{full_model_forward.3} parent=0 // loop_footer_branch
    %19 = sbr.rel target = $region3
  $region8: #{full_model_forward.3} parent=0 // loop_exit
    _

// kernel: full_model_forward.2
$region0: #{full_model_forward.2}
  #allocation0 [shape = 'u32[]', space=smem, size = 0x4, offset = 0x4, fixed_abs, tag = 'smem constant byte address 0x4 - core index']
  #allocation1 [shape = 'u32[144,128]{1,0:T(1,128)}', space=vmem, size = 0x12000, scoped, tag = 'internal scratch']
  %s0 = inlined_call_operand.vmem [shape: f32[8,3,1024], index: 0, kind: input, shape index: {}]
  %s1 = inlined_call_operand.vmem [shape: bf16[3,16,3], index: 1, kind: input, shape index: {}]
  %s2 = inlined_call_operand.vmem [shape: f32[1,16,1], index: 2, kind: input, shape index: {}]
  %s3 = inlined_call_operand.vmem [shape: bf16[16,32], index: 3, kind: input, shape index: {}]
  %s4 = inlined_call_operand.vmem [shape: f32[1,32], index: 4, kind: input, shape index: {}]
  %s5 = inlined_call_operand.vmem [shape: f32[8,32], index: 5, kind: output, shape index: {}]
  %s6 = sld [smem:[#allocation0]]
  $region30: #{full_model_forward.2} parent=0
    _
  %s8 = ssub.s32 1, %s6
  %s9 = scalar_select 0, %s8, %s6
  // Predicated region
  $region2: #{full_model_forward.2} parent=0 // pred_check
    _
  $region3: #{full_model_forward.2} parent=0 // pred_check_branch
    %11 = sbr.rel (0) target = $region5
  $region4: #{full_model_forward.2} parent=0 // pred_region
    _
  $region5: #{full_model_forward.2} parent=0 // pred_fallthru
    _
  // Predicated region
  $region6: #{full_model_forward.2} parent=0 // pred_check
    _
  $region7: #{full_model_forward.2} parent=0 // pred_check_branch
    %13 = sbr.rel (0) target = $region9
  $region8: #{full_model_forward.2} parent=0 // pred_region
    _
  $region9: #{full_model_forward.2} parent=0 // pred_fallthru
    _
  // Predicated region
  $region10: #{full_model_forward.2} parent=0 // pred_check
    _
  $region11: #{full_model_forward.2} parent=0 // pred_check_branch
    %15 = sbr.rel (0) target = $region13
  $region12: #{full_model_forward.2} parent=0 // pred_region
    _
  $region13: #{full_model_forward.2} parent=0 // pred_fallthru
    _
  // Predicated region
  $region14: #{full_model_forward.2} parent=0 // pred_check
    _
  $region15: #{full_model_forward.2} parent=0 // pred_check_branch
    %17 = sbr.rel (0) target = $region17
  $region16: #{full_model_forward.2} parent=0 // pred_region
    _
  $region17: #{full_model_forward.2} parent=0 // pred_fallthru
    _
  // Predicated region
  $region18: #{full_model_forward.2} parent=0 // pred_check
    _
  $region19: #{full_model_forward.2} parent=0 // pred_check_branch
    %19 = sbr.rel (0) target = $region21
  $region20: #{full_model_forward.2} parent=0 // pred_region
    _
  $region21: #{full_model_forward.2} parent=0 // pred_fallthru
    _
  %v21 = vld [vmem:[%s1] sm:$0xf]
  %v22 = vld [vmem:[%s1 + $0x4] sm:$0xf]
  %v23 = vld [vmem:[%s1 + $0x8] sm:$0xf]
  %v24 = vld [vmem:[%s1 + $0xc] sm:$0xf]
  %v25 = vld [vmem:[%s1 + $0x10] sm:$0xf]
  %v26 = vld [vmem:[%s1 + $0x14] sm:$0xf]
  %v27 = vld [vmem:[%s2] sm:$0xff]
  %v28 = vld [vmem:[%s2 + $0x8] sm:$0xff]
  %v29 = vld [vmem:[%s0] sm:$0x77]
  %v30 = vld [vmem:[%s0 + $0x8] sm:$0x77]
  %v31 = vld [vmem:[%s0 + $0x20] sm:$0x77]
  %v32 = vld [vmem:[%s0 + $0x28] sm:$0x77]
  %v33 = vld [vmem:[%s0 + $0x40] sm:$0x77]
  %v34 = vld [vmem:[%s0 + $0x48] sm:$0x77]
  %v35 = vld [vmem:[%s0 + $0x60] sm:$0x77]
  %v36 = vld [vmem:[%s0 + $0x68] sm:$0x77]
  %v37 = vld [vmem:[%s0 + $0x80] sm:$0x77]
  %v38 = vld [vmem:[%s0 + $0x88] sm:$0x77]
  %v39 = vld [vmem:[%s0 + $0xa0] sm:$0x77]
  %v40 = vld [vmem:[%s0 + $0xa8] sm:$0x77]
  %v41 = vld [vmem:[%s0 + $0xc0] sm:$0x77]
  %v42 = vld [vmem:[%s0 + $0xc8] sm:$0x77]
  %v43 = vld [vmem:[%s0 + $0xe0] sm:$0x77]
  %v44 = vld [vmem:[%s0 + $0xe8] sm:$0x77]
  %v61 = vcombine.high %v29, %v29
  %v62 = vcombine.high %v30, %v30
  %v63 = vcombine.high %v31, %v31
  %v64 = vcombine.high %v32, %v32
  %v65 = vcombine.high %v33, %v33
  %v66 = vcombine.high %v34, %v34
  %v67 = vcombine.high %v35, %v35
  %v68 = vcombine.high %v36, %v36
  %v69 = vcombine.high %v37, %v37
  %v70 = vcombine.high %v38, %v38
  %v71 = vcombine.high %v39, %v39
  %v72 = vcombine.high %v40, %v40
  %v73 = vcombine.high %v41, %v41
  %v74 = vcombine.high %v42, %v42
  %v75 = vcombine.high %v43, %v43
  %v76 = vcombine.high %v44, %v44
  %v93 = vpack.c.bf16 %v29, %v29
  %v94 = vpack.c.bf16 %v61, %v61
  %v95 = vpack.c.bf16 %v30, %v30
  %v96 = vpack.c.bf16 %v62, %v62
  %v97 = vpack.c.bf16 %v31, %v31
  %v98 = vpack.c.bf16 %v63, %v63
  %v99 = vpack.c.bf16 %v32, %v32
  %v100 = vpack.c.bf16 %v64, %v64
  %v101 = vpack.c.bf16 %v33, %v33
  %v102 = vpack.c.bf16 %v65, %v65
  %v103 = vpack.c.bf16 %v34, %v34
  %v104 = vpack.c.bf16 %v66, %v66
  %v105 = vpack.c.bf16 %v35, %v35
  %v106 = vpack.c.bf16 %v67, %v67
  %v107 = vpack.c.bf16 %v36, %v36
  %v108 = vpack.c.bf16 %v68, %v68
  %v109 = vpack.c.bf16 %v37, %v37
  %v110 = vpack.c.bf16 %v69, %v69
  %v111 = vpack.c.bf16 %v38, %v38
  %v112 = vpack.c.bf16 %v70, %v70
  %v113 = vpack.c.bf16 %v39, %v39
  %v114 = vpack.c.bf16 %v71, %v71
  %v115 = vpack.c.bf16 %v40, %v40
  %v116 = vpack.c.bf16 %v72, %v72
  %v117 = vpack.c.bf16 %v41, %v41
  %v118 = vpack.c.bf16 %v73, %v73
  %v119 = vpack.c.bf16 %v42, %v42
  %v120 = vpack.c.bf16 %v74, %v74
  %v121 = vpack.c.bf16 %v43, %v43
  %v122 = vpack.c.bf16 %v75, %v75
  %v123 = vpack.c.bf16 %v44, %v44
  %v124 = vpack.c.bf16 %v76, %v76
  %157 = vrot.lane.b32.xlu0 %v93, 1
  %v158 = vpop.permute.xlu0 %157
  %159 = vrot.lane.b32.xlu0 %v94, 1
  %v160 = vpop.permute.xlu0 %159
  %161 = vrot.lane.b32.xlu0 %v95, 1
  %v162 = vpop.permute.xlu0 %161
  %163 = vrot.lane.b32.xlu0 %v96, 1
  %v164 = vpop.permute.xlu0 %163
  %165 = vrot.lane.b32.xlu0 %v97, 1
  %v166 = vpop.permute.xlu0 %165
  %167 = vrot.lane.b32.xlu0 %v98, 1
  %v168 = vpop.permute.xlu0 %167
  %169 = vrot.lane.b32.xlu0 %v99, 1
  %v170 = vpop.permute.xlu0 %169
  %171 = vrot.lane.b32.xlu0 %v100, 1
  %v172 = vpop.permute.xlu0 %171
  %173 = vrot.lane.b32.xlu0 %v101, 1
  %v174 = vpop.permute.xlu0 %173
  %175 = vrot.lane.b32.xlu0 %v102, 1
  %v176 = vpop.permute.xlu0 %175
  %177 = vrot.lane.b32.xlu0 %v103, 1
  %v178 = vpop.permute.xlu0 %177
  %179 = vrot.lane.b32.xlu0 %v104, 1
  %v180 = vpop.permute.xlu0 %179
  %181 = vrot.lane.b32.xlu0 %v105, 1
  %v182 = vpop.permute.xlu0 %181
  %183 = vrot.lane.b32.xlu0 %v106, 1
  %v184 = vpop.permute.xlu0 %183
  %185 = vrot.lane.b32.xlu0 %v107, 1
  %v186 = vpop.permute.xlu0 %185
  %187 = vrot.lane.b32.xlu0 %v108, 1
  %v188 = vpop.permute.xlu0 %187
  %189 = vrot.lane.b32.xlu0 %v109, 1
  %v190 = vpop.permute.xlu0 %189
  %191 = vrot.lane.b32.xlu0 %v110, 1
  %v192 = vpop.permute.xlu0 %191
  %193 = vrot.lane.b32.xlu0 %v111, 1
  %v194 = vpop.permute.xlu0 %193
  %195 = vrot.lane.b32.xlu0 %v112, 1
  %v196 = vpop.permute.xlu0 %195
  %197 = vrot.lane.b32.xlu0 %v113, 1
  %v198 = vpop.permute.xlu0 %197
  %199 = vrot.lane.b32.xlu0 %v114, 1
  %v200 = vpop.permute.xlu0 %199
  %201 = vrot.lane.b32.xlu0 %v115, 1
  %v202 = vpop.permute.xlu0 %201
  %203 = vrot.lane.b32.xlu0 %v116, 1
  %v204 = vpop.permute.xlu0 %203
  %205 = vrot.lane.b32.xlu0 %v117, 1
  %v206 = vpop.permute.xlu0 %205
  %207 = vrot.lane.b32.xlu0 %v118, 1
  %v208 = vpop.permute.xlu0 %207
  %209 = vrot.lane.b32.xlu0 %v119, 1
  %v210 = vpop.permute.xlu0 %209
  %211 = vrot.lane.b32.xlu0 %v120, 1
  %v212 = vpop.permute.xlu0 %211
  %213 = vrot.lane.b32.xlu0 %v121, 1
  %v214 = vpop.permute.xlu0 %213
  %215 = vrot.lane.b32.xlu0 %v122, 1
  %v216 = vpop.permute.xlu0 %215
  %217 = vrot.lane.b32.xlu0 %v123, 1
  %v218 = vpop.permute.xlu0 %217
  %219 = vrot.lane.b32.xlu0 %v124, 1
  %v220 = vpop.permute.xlu0 %219
  %vm221 = vcmask 7168
  %v222 = vsel %vm221, %v158, %v160
  %v223 = vsel %vm221, %v160, %v162
  %v224 = vsel %vm221, %v162, %v164
  %v225 = vsel %vm221, %v166, %v168
  %v226 = vsel %vm221, %v168, %v170
  %v227 = vsel %vm221, %v170, %v172
  %v228 = vsel %vm221, %v174, %v176
  %v229 = vsel %vm221, %v176, %v178
  %v230 = vsel %vm221, %v178, %v180
  %v231 = vsel %vm221, %v182, %v184
  %v232 = vsel %vm221, %v184, %v186
  %v233 = vsel %vm221, %v186, %v188
  %v234 = vsel %vm221, %v190, %v192
  %v235 = vsel %vm221, %v192, %v194
  %v236 = vsel %vm221, %v194, %v196
  %v237 = vsel %vm221, %v198, %v200
  %v238 = vsel %vm221, %v200, %v202
  %v239 = vsel %vm221, %v202, %v204
  %v240 = vsel %vm221, %v206, %v208
  %v241 = vsel %vm221, %v208, %v210
  %v242 = vsel %vm221, %v210, %v212
  %v243 = vsel %vm221, %v214, %v216
  %v244 = vsel %vm221, %v216, %v218
  %v245 = vsel %vm221, %v218, %v220
  %vm246 = vcmask 7168
  %v249 = vsel %vm246, 0, %v158
  %v251 = vsel %vm246, 0, %v166
  %v253 = vsel %vm246, 0, %v174
  %v255 = vsel %vm246, 0, %v182
  %v257 = vsel %vm246, 0, %v190
  %v259 = vsel %vm246, 0, %v198
  %v261 = vsel %vm246, 0, %v206
  %v263 = vsel %vm246, 0, %v214
  %v264 = vld [vmem:[%s0 + $0x10] sm:$0x7]
  %v265 = vld [vmem:[%s0 + $0x30] sm:$0x7]
  %v266 = vld [vmem:[%s0 + $0x50] sm:$0x7]
  %v267 = vld [vmem:[%s0 + $0x70] sm:$0x7]
  %v268 = vld [vmem:[%s0 + $0x90] sm:$0x7]
  %v269 = vld [vmem:[%s0 + $0xb0] sm:$0x7]
  %v270 = vld [vmem:[%s0 + $0xd0] sm:$0x7]
  %v271 = vld [vmem:[%s0 + $0xf0] sm:$0x7]
  %v272 = vpack.c.bf16 %v264, %v264
  %v273 = vpack.c.bf16 %v265, %v265
  %v274 = vpack.c.bf16 %v266, %v266
  %v275 = vpack.c.bf16 %v267, %v267
  %v276 = vpack.c.bf16 %v268, %v268
  %v277 = vpack.c.bf16 %v269, %v269
  %v278 = vpack.c.bf16 %v270, %v270
  %v279 = vpack.c.bf16 %v271, %v271
  %v282 = vunpack.c.l.b16 %v23
  %v283 = vunpack.c.l.b16 %v24
  %v284 = vpack.c.b16 %v283, %v282
  %vm285 = vcmask 23552
  %v287 = vsel %vm285, %v284, 0
  %vm289 = vcmask 1040384
  %vm290 = vcmask 1041408
  %v291 = vsel %vm289, 4294967295, 65535
  %v292 = vsel %vm290, %v291, 0
  %v294 = vand.u32 %v93, %v292
  %v297 = vand.u32 %v94, %v292
  %v300 = vand.u32 %v95, %v292
  %v303 = vand.u32 %v96, %v292
  %305 = vmatprep.subr.bf16.mxu0 %v297
  %306 = vmatpush1.bf16.msra.mxu0 %v294
  %307 = vmatprep.subr.bf16.mxu0 0
  %308 = vmatpush1.bf16.msra.mxu0 0
  %309 = vmatprep.subr.bf16.mxu0 0
  %310 = vmatpush1.bf16.msra.mxu0 0
  %311 = vmatprep.subr.bf16.mxu0 0
  %312 = vmatpush1.bf16.msra.mxu0 0
  %313 = vmatprep.subr.bf16.mxu0 0
  %314 = vmatpush1.bf16.msra.mxu0 0
  %315 = vmatprep.subr.bf16.mxu0 0
  %316 = vmatpush1.bf16.msra.mxu0 0
  %317 = vmatprep.subr.bf16.mxu0 0
  %318 = vmatpush1.bf16.msra.mxu0 0
  %319 = vmatprep.subr.bf16.mxu0 0
  %320 = vmatpush1.bf16.msra.mxu0 0
  %321 = vmatprep.subr.bf16.mxu0 0
  %322 = vmatpush1.bf16.msra.mxu0 0
  %323 = vmatprep.subr.bf16.mxu0 0
  %324 = vmatpush1.bf16.msra.mxu0 0
  %325 = vmatprep.subr.bf16.mxu0 0
  %326 = vmatpush1.bf16.msra.mxu0 0
  %327 = vmatprep.subr.bf16.mxu0 0
  %328 = vmatpush1.bf16.msra.mxu0 0
  %329 = vmatprep.subr.bf16.mxu0 0
  %330 = vmatpush1.bf16.msra.mxu0 0
  %331 = vmatprep.subr.bf16.mxu0 0
  %332 = vmatpush1.bf16.msra.mxu0 0
  %333 = vmatprep.subr.bf16.mxu0 0
  %334 = vmatpush1.bf16.msra.mxu0 0
  %335 = vmatprep.subr.bf16.mxu0 0
  %336 = vmatpush1.bf16.msra.mxu0 0
  %337 = vmatprep.mubr.bf16.mxu0 0
  %338 = vmatmul.mubr.bf16.gmra.mrb[0].mxu0 %v287
  %v339 = vpop.f32.mrb[0].mxu0
  %v340 = vadd.f32 0.0, %v339
  %v341 = vpop.f32.mrb[0].mxu0
  %v342 = vadd.f32 0.0, %v341
  %v343 = vpop.f32.mrb[0].mxu0
  %v344 = vadd.f32 0.0, %v343
  %v345 = vpop.f32.mrb[0].mxu0
  %v346 = vadd.f32 0.0, %v345
  %347 = vdwg.mxu0
  %348 = vmatprep.subr.bf16.mxu0 %v303
  %349 = vmatpush1.bf16.msra.mxu0 %v300
  %350 = vmatprep.subr.bf16.mxu0 0
  %351 = vmatpush1.bf16.msra.mxu0 0
  %352 = vmatprep.subr.bf16.mxu0 0
  %353 = vmatpush1.bf16.msra.mxu0 0
  %354 = vmatprep.subr.bf16.mxu0 0
  %355 = vmatpush1.bf16.msra.mxu0 0
  %356 = vmatprep.subr.bf16.mxu0 0
  %357 = vmatpush1.bf16.msra.mxu0 0
  %358 = vmatprep.subr.bf16.mxu0 0
  %359 = vmatpush1.bf16.msra.mxu0 0
  %360 = vmatprep.subr.bf16.mxu0 0
  %361 = vmatpush1.bf16.msra.mxu0 0
  %362 = vmatprep.subr.bf16.mxu0 0
  %363 = vmatpush1.bf16.msra.mxu0 0
  %364 = vmatprep.subr.bf16.mxu0 0
  %365 = vmatpush1.bf16.msra.mxu0 0
  %366 = vmatprep.subr.bf16.mxu0 0
  %367 = vmatpush1.bf16.msra.mxu0 0
  %368 = vmatprep.subr.bf16.mxu0 0
  %369 = vmatpush1.bf16.msra.mxu0 0
  %370 = vmatprep.subr.bf16.mxu0 0
  %371 = vmatpush1.bf16.msra.mxu0 0
  %372 = vmatprep.subr.bf16.mxu0 0
  %373 = vmatpush1.bf16.msra.mxu0 0
  %374 = vmatprep.subr.bf16.mxu0 0
  %375 = vmatpush1.bf16.msra.mxu0 0
  %376 = vmatprep.subr.bf16.mxu0 0
  %377 = vmatpush1.bf16.msra.mxu0 0
  %378 = vmatprep.subr.bf16.mxu0 0
  %379 = vmatpush1.bf16.msra.mxu0 0
  %380 = vmatprep.mubr.bf16.mxu0 0
  %381 = vmatmul.mubr.bf16.gmra.mrb[0].mxu0 %v287
  %v382 = vpop.f32.mrb[0].mxu0
  %v383 = vadd.f32 0.0, %v382
  %v384 = vpop.f32.mrb[0].mxu0
  %v385 = vadd.f32 0.0, %v384
  %v386 = vpop.f32.mrb[0].mxu0
  %v387 = vadd.f32 0.0, %v386
  %v388 = vpop.f32.mrb[0].mxu0
  %v389 = vadd.f32 0.0, %v388
  %390 = vdwg.mxu0
  %v392 = vand.u32 %v97, %v292
  %v395 = vand.u32 %v98, %v292
  %v398 = vand.u32 %v99, %v292
  %v401 = vand.u32 %v100, %v292
  %403 = vmatprep.subr.bf16.mxu0 %v395
  %404 = vmatpush1.bf16.msra.mxu0 %v392
  %405 = vmatprep.subr.bf16.mxu0 0
  %406 = vmatpush1.bf16.msra.mxu0 0
  %407 = vmatprep.subr.bf16.mxu0 0
  %408 = vmatpush1.bf16.msra.mxu0 0
  %409 = vmatprep.subr.bf16.mxu0 0
  %410 = vmatpush1.bf16.msra.mxu0 0
  %411 = vmatprep.subr.bf16.mxu0 0
  %412 = vmatpush1.bf16.msra.mxu0 0
  %413 = vmatprep.subr.bf16.mxu0 0
  %414 = vmatpush1.bf16.msra.mxu0 0
  %415 = vmatprep.subr.bf16.mxu0 0
  %416 = vmatpush1.bf16.msra.mxu0 0
  %417 = vmatprep.subr.bf16.mxu0 0
  %418 = vmatpush1.bf16.msra.mxu0 0
  %419 = vmatprep.subr.bf16.mxu0 0
  %420 = vmatpush1.bf16.msra.mxu0 0
  %421 = vmatprep.subr.bf16.mxu0 0
  %422 = vmatpush1.bf16.msra.mxu0 0
  %423 = vmatprep.subr.bf16.mxu0 0
  %424 = vmatpush1.bf16.msra.mxu0 0
  %425 = vmatprep.subr.bf16.mxu0 0
  %426 = vmatpush1.bf16.msra.mxu0 0
  %427 = vmatprep.subr.bf16.mxu0 0
  %428 = vmatpush1.bf16.msra.mxu0 0
  %429 = vmatprep.subr.bf16.mxu0 0
  %430 = vmatpush1.bf16.msra.mxu0 0
  %431 = vmatprep.subr.bf16.mxu0 0
  %432 = vmatpush1.bf16.msra.mxu0 0
  %433 = vmatprep.subr.bf16.mxu0 0
  %434 = vmatpush1.bf16.msra.mxu0 0
  %435 = vmatprep.mubr.bf16.mxu0 0
  %436 = vmatmul.mubr.bf16.gmra.mrb[0].mxu0 %v287
  %v437 = vpop.f32.mrb[0].mxu0
  %v438 = vadd.f32 0.0, %v437
  %v439 = vpop.f32.mrb[0].mxu0
  %v440 = vadd.f32 0.0, %v439
  %v441 = vpop.f32.mrb[0].mxu0
  %v442 = vadd.f32 0.0, %v441
  %v443 = vpop.f32.mrb[0].mxu0
  %v444 = vadd.f32 0.0, %v443
  %445 = vdwg.mxu0
  %446 = vmatprep.subr.bf16.mxu0 %v401
  %447 = vmatpush1.bf16.msra.mxu0 %v398
  %448 = vmatprep.subr.bf16.mxu0 0
  %449 = vmatpush1.bf16.msra.mxu0 0
  %450 = vmatprep.subr.bf16.mxu0 0
  %451 = vmatpush1.bf16.msra.mxu0 0
  %452 = vmatprep.subr.bf16.mxu0 0
  %453 = vmatpush1.bf16.msra.mxu0 0
  %454 = vmatprep.subr.bf16.mxu0 0
  %455 = vmatpush1.bf16.msra.mxu0 0
  %456 = vmatprep.subr.bf16.mxu0 0
  %457 = vmatpush1.bf16.msra.mxu0 0
  %458 = vmatprep.subr.bf16.mxu0 0
  %459 = vmatpush1.bf16.msra.mxu0 0
  %460 = vmatprep.subr.bf16.mxu0 0
  %461 = vmatpush1.bf16.msra.mxu0 0
  %462 = vmatprep.subr.bf16.mxu0 0
  %463 = vmatpush1.bf16.msra.mxu0 0
  %464 = vmatprep.subr.bf16.mxu0 0
  %465 = vmatpush1.bf16.msra.mxu0 0
  %466 = vmatprep.subr.bf16.mxu0 0
  %467 = vmatpush1.bf16.msra.mxu0 0
  %468 = vmatprep.subr.bf16.mxu0 0
  %469 = vmatpush1.bf16.msra.mxu0 0
  %470 = vmatprep.subr.bf16.mxu0 0
  %471 = vmatpush1.bf16.msra.mxu0 0
  %472 = vmatprep.subr.bf16.mxu0 0
  %473 = vmatpush1.bf16.msra.mxu0 0
  %474 = vmatprep.subr.bf16.mxu0 0
  %475 = vmatpush1.bf16.msra.mxu0 0
  %476 = vmatprep.subr.bf16.mxu0 0
  %477 = vmatpush1.bf16.msra.mxu0 0
  %478 = vmatprep.mubr.bf16.mxu0 0
  %479 = vmatmul.mubr.bf16.gmra.mrb[0].mxu0 %v287
  %v480 = vpop.f32.mrb[0].mxu0
  %v481 = vadd.f32 0.0, %v480
  %v482 = vpop.f32.mrb[0].mxu0
  %v483 = vadd.f32 0.0, %v482
  %v484 = vpop.f32.mrb[0].mxu0
  %v485 = vadd.f32 0.0, %v484
  %v486 = vpop.f32.mrb[0].mxu0
  %v487 = vadd.f32 0.0, %v486
  %488 = vdwg.mxu0
  %v490 = vand.u32 %v101, %v292
  %v493 = vand.u32 %v102, %v292
  %v496 = vand.u32 %v103, %v292
  %v499 = vand.u32 %v104, %v292
  %501 = vmatprep.subr.bf16.mxu0 %v493
  %502 = vmatpush1.bf16.msra.mxu0 %v490
  %503 = vmatprep.subr.bf16.mxu0 0
  %504 = vmatpush1.bf16.msra.mxu0 0
  %505 = vmatprep.subr.bf16.mxu0 0
  %506 = vmatpush1.bf16.msra.mxu0 0
  %507 = vmatprep.subr.bf16.mxu0 0
  %508 = vmatpush1.bf16.msra.mxu0 0
  %509 = vmatprep.subr.bf16.mxu0 0
  %510 = vmatpush1.bf16.msra.mxu0 0
  %511 = vmatprep.subr.bf16.mxu0 0
  %512 = vmatpush1.bf16.msra.mxu0 0
  %513 = vmatprep.subr.bf16.mxu0 0
  %514 = vmatpush1.bf16.msra.mxu0 0
  %515 = vmatprep.subr.bf16.mxu0 0
  %516 = vmatpush1.bf16.msra.mxu0 0
  %517 = vmatprep.subr.bf16.mxu0 0
  %518 = vmatpush1.bf16.msra.mxu0 0
  %519 = vmatprep.subr.bf16.mxu0 0
  %520 = vmatpush1.bf16.msra.mxu0 0
  %521 = vmatprep.subr.bf16.mxu0 0
  %522 = vmatpush1.bf16.msra.mxu0 0
  %523 = vmatprep.subr.bf16.mxu0 0
  %524 = vmatpush1.bf16.msra.mxu0 0
  %525 = vmatprep.subr.bf16.mxu0 0
  %526 = vmatpush1.bf16.msra.mxu0 0
  %527 = vmatprep.subr.bf16.mxu0 0
  %528 = vmatpush1.bf16.msra.mxu0 0
  %529 = vmatprep.subr.bf16.mxu0 0
  %530 = vmatpush1.bf16.msra.mxu0 0
  %531 = vmatprep.subr.bf16.mxu0 0
  %532 = vmatpush1.bf16.msra.mxu0 0
  %533 = vmatprep.mubr.bf16.mxu0 0
  %534 = vmatmul.mubr.bf16.gmra.mrb[0].mxu0 %v287
  %v535 = vpop.f32.mrb[0].mxu0
  %v536 = vadd.f32 0.0, %v535
  %v537 = vpop.f32.mrb[0].mxu0
  %v538 = vadd.f32 0.0, %v537
  %v539 = vpop.f32.mrb[0].mxu0
  %v540 = vadd.f32 0.0, %v539
  %v541 = vpop.f32.mrb[0].mxu0
  %v542 = vadd.f32 0.0, %v541
  %543 = vdwg.mxu0
  %544 = vmatprep.subr.bf16.mxu0 %v499
  %545 = vmatpush1.bf16.msra.mxu0 %v496
  %546 = vmatprep.subr.bf16.mxu0 0
  %547 = vmatpush1.bf16.msra.mxu0 0
  %548 = vmatprep.subr.bf16.mxu0 0
  %549 = vmatpush1.bf16.msra.mxu0 0
  %550 = vmatprep.subr.bf16.mxu0 0
  %551 = vmatpush1.bf16.msra.mxu0 0
  %552 = vmatprep.subr.bf16.mxu0 0
  %553 = vmatpush1.bf16.msra.mxu0 0
  %554 = vmatprep.subr.bf16.mxu0 0
  %555 = vmatpush1.bf16.msra.mxu0 0
  %556 = vmatprep.subr.bf16.mxu0 0
  %557 = vmatpush1.bf16.msra.mxu0 0
  %558 = vmatprep.subr.bf16.mxu0 0
  %559 = vmatpush1.bf16.msra.mxu0 0
  %560 = vmatprep.subr.bf16.mxu0 0
  %561 = vmatpush1.bf16.msra.mxu0 0
  %562 = vmatprep.subr.bf16.mxu0 0
  %563 = vmatpush1.bf16.msra.mxu0 0
  %564 = vmatprep.subr.bf16.mxu0 0
  %565 = vmatpush1.bf16.msra.mxu0 0
  %566 = vmatprep.subr.bf16.mxu0 0
  %567 = vmatpush1.bf16.msra.mxu0 0
  %568 = vmatprep.subr.bf16.mxu0 0
  %569 = vmatpush1.bf16.msra.mxu0 0
  %570 = vmatprep.subr.bf16.mxu0 0
  %571 = vmatpush1.bf16.msra.mxu0 0
  %572 = vmatprep.subr.bf16.mxu0 0
  %573 = vmatpush1.bf16.msra.mxu0 0
  %574 = vmatprep.subr.bf16.mxu0 0
  %575 = vmatpush1.bf16.msra.mxu0 0
  %576 = vmatprep.mubr.bf16.mxu0 0
  %577 = vmatmul.mubr.bf16.gmra.mrb[0].mxu0 %v287
  %v578 = vpop.f32.mrb[0].mxu0
  %v579 = vadd.f32 0.0, %v578
  %v580 = vpop.f32.mrb[0].mxu0
  %v581 = vadd.f32 0.0, %v580
  %v582 = vpop.f32.mrb[0].mxu0
  %v583 = vadd.f32 0.0, %v582
  %v584 = vpop.f32.mrb[0].mxu0
  %v585 = vadd.f32 0.0, %v584
  %586 = vdwg.mxu0
  %v588 = vand.u32 %v105, %v292
  %v591 = vand.u32 %v106, %v292
  %v594 = vand.u32 %v107, %v292
  %v597 = vand.u32 %v108, %v292
  %599 = vmatprep.subr.bf16.mxu0 %v591
  %600 = vmatpush1.bf16.msra.mxu0 %v588
  %601 = vmatprep.subr.bf16.mxu0 0
  %602 = vmatpush1.bf16.msra.mxu0 0
  %603 = vmatprep.subr.bf16.mxu0 0
  %604 = vmatpush1.bf16.msra.mxu0 0
  %605 = vmatprep.subr.bf16.mxu0 0
  %606 = vmatpush1.bf16.msra.mxu0 0
  %607 = vmatprep.subr.bf16.mxu0 0
  %608 = vmatpush1.bf16.msra.mxu0 0
  %609 = vmatprep.subr.bf16.mxu0 0
  %610 = vmatpush1.bf16.msra.mxu0 0
  %611 = vmatprep.subr.bf16.mxu0 0
  %612 = vmatpush1.bf16.msra.mxu0 0
  %613 = vmatprep.subr.bf16.mxu0 0
  %614 = vmatpush1.bf16.msra.mxu0 0
  %615 = vmatprep.subr.bf16.mxu0 0
  %616 = vmatpush1.bf16.msra.mxu0 0
  %617 = vmatprep.subr.bf16.mxu0 0
  %618 = vmatpush1.bf16.msra.mxu0 0
  %619 = vmatprep.subr.bf16.mxu0 0
  %620 = vmatpush1.bf16.msra.mxu0 0
  %621 = vmatprep.subr.bf16.mxu0 0
  %622 = vmatpush1.bf16.msra.mxu0 0
  %623 = vmatprep.subr.bf16.mxu0 0
  %624 = vmatpush1.bf16.msra.mxu0 0
  %625 = vmatprep.subr.bf16.mxu0 0
  %626 = vmatpush1.bf16.msra.mxu0 0
  %627 = vmatprep.subr.bf16.mxu0 0
  %628 = vmatpush1.bf16.msra.mxu0 0
  %629 = vmatprep.subr.bf16.mxu0 0
  %630 = vmatpush1.bf16.msra.mxu0 0
  %631 = vmatprep.mubr.bf16.mxu0 0
  %632 = vmatmul.mubr.bf16.gmra.mrb[0].mxu0 %v287
  %v633 = vpop.f32.mrb[0].mxu0
  %v634 = vadd.f32 0.0, %v633
  %v635 = vpop.f32.mrb[0].mxu0
  %v636 = vadd.f32 0.0, %v635
  %v637 = vpop.f32.mrb[0].mxu0
  %v638 = vadd.f32 0.0, %v637
  %v639 = vpop.f32.mrb[0].mxu0
  %v640 = vadd.f32 0.0, %v639
  %641 = vdwg.mxu0
  %642 = vmatprep.subr.bf16.mxu0 %v597
  %643 = vmatpush1.bf16.msra.mxu0 %v594
  %644 = vmatprep.subr.bf16.mxu0 0
  %645 = vmatpush1.bf16.msra.mxu0 0
  %646 = vmatprep.subr.bf16.mxu0 0
  %647 = vmatpush1.bf16.msra.mxu0 0
  %648 = vmatprep.subr.bf16.mxu0 0
  %649 = vmatpush1.bf16.msra.mxu0 0
  %650 = vmatprep.subr.bf16.mxu0 0
  %651 = vmatpush1.bf16.msra.mxu0 0
  %652 = vmatprep.subr.bf16.mxu0 0
  %653 = vmatpush1.bf16.msra.mxu0 0
  %654 = vmatprep.subr.bf16.mxu0 0
  %655 = vmatpush1.bf16.msra.mxu0 0
  %656 = vmatprep.subr.bf16.mxu0 0
  %657 = vmatpush1.bf16.msra.mxu0 0
  %658 = vmatprep.subr.bf16.mxu0 0
  %659 = vmatpush1.bf16.msra.mxu0 0
  %660 = vmatprep.subr.bf16.mxu0 0
  %661 = vmatpush1.bf16.msra.mxu0 0
  %662 = vmatprep.subr.bf16.mxu0 0
  %663 = vmatpush1.bf16.msra.mxu0 0
  %664 = vmatprep.subr.bf16.mxu0 0
  %665 = vmatpush1.bf16.msra.mxu0 0
  %666 = vmatprep.subr.bf16.mxu0 0
  %667 = vmatpush1.bf16.msra.mxu0 0
  %668 = vmatprep.subr.bf16.mxu0 0
  %669 = vmatpush1.bf16.msra.mxu0 0
  %670 = vmatprep.subr.bf16.mxu0 0
  %671 = vmatpush1.bf16.msra.mxu0 0
  %672 = vmatprep.subr.bf16.mxu0 0
  %673 = vmatpush1.bf16.msra.mxu0 0
  %674 = vmatprep.mubr.bf16.mxu0 0
  %675 = vmatmul.mubr.bf16.gmra.mrb[0].mxu0 %v287
  %v676 = vpop.f32.mrb[0].mxu0
  %v677 = vadd.f32 0.0, %v676
  %v678 = vpop.f32.mrb[0].mxu0
  %v679 = vadd.f32 0.0, %v678
  %v680 = vpop.f32.mrb[0].mxu0
  %v681 = vadd.f32 0.0, %v680
  %v682 = vpop.f32.mrb[0].mxu0
  %v683 = vadd.f32 0.0, %v682
  %684 = vdwg.mxu0
  %v686 = vand.u32 %v109, %v292
  %v689 = vand.u32 %v110, %v292
  %v692 = vand.u32 %v111, %v292
  %v695 = vand.u32 %v112, %v292
  %697 = vmatprep.subr.bf16.mxu0 %v689
  %698 = vmatpush1.bf16.msra.mxu0 %v686
  %699 = vmatprep.subr.bf16.mxu0 0
  %700 = vmatpush1.bf16.msra.mxu0 0
  %701 = vmatprep.subr.bf16.mxu0 0
  %702 = vmatpush1.bf16.msra.mxu0 0
  %703 = vmatprep.subr.bf16.mxu0 0
  %704 = vmatpush1.bf16.msra.mxu0 0
  %705 = vmatprep.subr.bf16.mxu0 0
  %706 = vmatpush1.bf16.msra.mxu0 0
  %707 = vmatprep.subr.bf16.mxu0 0
  %708 = vmatpush1.bf16.msra.mxu0 0
  %709 = vmatprep.subr.bf16.mxu0 0
  %710 = vmatpush1.bf16.msra.mxu0 0
  %711 = vmatprep.subr.bf16.mxu0 0
  %712 = vmatpush1.bf16.msra.mxu0 0
  %713 = vmatprep.subr.bf16.mxu0 0
  %714 = vmatpush1.bf16.msra.mxu0 0
  %715 = vmatprep.subr.bf16.mxu0 0
  %716 = vmatpush1.bf16.msra.mxu0 0
  %717 = vmatprep.subr.bf16.mxu0 0
  %718 = vmatpush1.bf16.msra.mxu0 0
  %719 = vmatprep.subr.bf16.mxu0 0
  %720 = vmatpush1.bf16.msra.mxu0 0
  %721 = vmatprep.subr.bf16.mxu0 0
  %722 = vmatpush1.bf16.msra.mxu0 0
  %723 = vmatprep.subr.bf16.mxu0 0
  %724 = vmatpush1.bf16.msra.mxu0 0
  %725 = vmatprep.subr.bf16.mxu0 0
  %726 = vmatpush1.bf16.msra.mxu0 0
  %727 = vmatprep.subr.bf16.mxu0 0
  %728 = vmatpush1.bf16.msra.mxu0 0
  %729 = vmatprep.mubr.bf16.mxu0 0
  %730 = vmatmul.mubr.bf16.gmra.mrb[0].mxu0 %v287
  %v731 = vpop.f32.mrb[0].mxu0
  %v732 = vadd.f32 0.0, %v731
  %v733 = vpop.f32.mrb[0].mxu0
  %v734 = vadd.f32 0.0, %v733
  %v735 = vpop.f32.mrb[0].mxu0
  %v736 = vadd.f32 0.0, %v735
  %v737 = vpop.f32.mrb[0].mxu0
  %v738 = vadd.f32 0.0, %v737
  %739 = vdwg.mxu0
  %740 = vmatprep.subr.bf16.mxu0 %v695
  %741 = vmatpush1.bf16.msra.mxu0 %v692
  %742 = vmatprep.subr.bf16.mxu0 0
  %743 = vmatpush1.bf16.msra.mxu0 0
  %744 = vmatprep.subr.bf16.mxu0 0
  %745 = vmatpush1.bf16.msra.mxu0 0
  %746 = vmatprep.subr.bf16.mxu0 0
  %747 = vmatpush1.bf16.msra.mxu0 0
  %748 = vmatprep.subr.bf16.mxu0 0
  %749 = vmatpush1.bf16.msra.mxu0 0
  %750 = vmatprep.subr.bf16.mxu0 0
  %751 = vmatpush1.bf16.msra.mxu0 0
  %752 = vmatprep.subr.bf16.mxu0 0
  %753 = vmatpush1.bf16.msra.mxu0 0
  %754 = vmatprep.subr.bf16.mxu0 0
  %755 = vmatpush1.bf16.msra.mxu0 0
  %756 = vmatprep.subr.bf16.mxu0 0
  %757 = vmatpush1.bf16.msra.mxu0 0
  %758 = vmatprep.subr.bf16.mxu0 0
  %759 = vmatpush1.bf16.msra.mxu0 0
  %760 = vmatprep.subr.bf16.mxu0 0
  %761 = vmatpush1.bf16.msra.mxu0 0
  %762 = vmatprep.subr.bf16.mxu0 0
  %763 = vmatpush1.bf16.msra.mxu0 0
  %764 = vmatprep.subr.bf16.mxu0 0
  %765 = vmatpush1.bf16.msra.mxu0 0
  %766 = vmatprep.subr.bf16.mxu0 0
  %767 = vmatpush1.bf16.msra.mxu0 0
  %768 = vmatprep.subr.bf16.mxu0 0
  %769 = vmatpush1.bf16.msra.mxu0 0
  %770 = vmatprep.subr.bf16.mxu0 0
  %771 = vmatpush1.bf16.msra.mxu0 0
  %772 = vmatprep.mubr.bf16.mxu0 0
  %773 = vmatmul.mubr.bf16.gmra.mrb[0].mxu0 %v287
  %v774 = vpop.f32.mrb[0].mxu0
  %v775 = vadd.f32 0.0, %v774
  %v776 = vpop.f32.mrb[0].mxu0
  %v777 = vadd.f32 0.0, %v776
  %v778 = vpop.f32.mrb[0].mxu0
  %v779 = vadd.f32 0.0, %v778
  %v780 = vpop.f32.mrb[0].mxu0
  %v781 = vadd.f32 0.0, %v780
  %782 = vdwg.mxu0
  %v784 = vand.u32 %v113, %v292
  %v787 = vand.u32 %v114, %v292
  %v790 = vand.u32 %v115, %v292
  %v793 = vand.u32 %v116, %v292
  %795 = vmatprep.subr.bf16.mxu0 %v787
  %796 = vmatpush1.bf16.msra.mxu0 %v784
  %797 = vmatprep.subr.bf16.mxu0 0
  %798 = vmatpush1.bf16.msra.mxu0 0
  %799 = vmatprep.subr.bf16.mxu0 0
  %800 = vmatpush1.bf16.msra.mxu0 0
  %801 = vmatprep.subr.bf16.mxu0 0
  %802 = vmatpush1.bf16.msra.mxu0 0
  %803 = vmatprep.subr.bf16.mxu0 0
  %804 = vmatpush1.bf16.msra.mxu0 0
  %805 = vmatprep.subr.bf16.mxu0 0
  %806 = vmatpush1.bf16.msra.mxu0 0
  %807 = vmatprep.subr.bf16.mxu0 0
  %808 = vmatpush1.bf16.msra.mxu0 0
  %809 = vmatprep.subr.bf16.mxu0 0
  %810 = vmatpush1.bf16.msra.mxu0 0
  %811 = vmatprep.subr.bf16.mxu0 0
  %812 = vmatpush1.bf16.msra.mxu0 0
  %813 = vmatprep.subr.bf16.mxu0 0
  %814 = vmatpush1.bf16.msra.mxu0 0
  %815 = vmatprep.subr.bf16.mxu0 0
  %816 = vmatpush1.bf16.msra.mxu0 0
  %817 = vmatprep.subr.bf16.mxu0 0
  %818 = vmatpush1.bf16.msra.mxu0 0
  %819 = vmatprep.subr.bf16.mxu0 0
  %820 = vmatpush1.bf16.msra.mxu0 0
  %821 = vmatprep.subr.bf16.mxu0 0
  %822 = vmatpush1.bf16.msra.mxu0 0
  %823 = vmatprep.subr.bf16.mxu0 0
  %824 = vmatpush1.bf16.msra.mxu0 0
  %825 = vmatprep.subr.bf16.mxu0 0
  %826 = vmatpush1.bf16.msra.mxu0 0
  %827 = vmatprep.mubr.bf16.mxu0 0
  %828 = vmatmul.mubr.bf16.gmra.mrb[0].mxu0 %v287
  %v829 = vpop.f32.mrb[0].mxu0
  %v830 = vadd.f32 0.0, %v829
  %v831 = vpop.f32.mrb[0].mxu0
  %v832 = vadd.f32 0.0, %v831
  %v833 = vpop.f32.mrb[0].mxu0
  %v834 = vadd.f32 0.0, %v833
  %v835 = vpop.f32.mrb[0].mxu0
  %v836 = vadd.f32 0.0, %v835
  %837 = vdwg.mxu0
  %838 = vmatprep.subr.bf16.mxu0 %v793
  %839 = vmatpush1.bf16.msra.mxu0 %v790
  %840 = vmatprep.subr.bf16.mxu0 0
  %841 = vmatpush1.bf16.msra.mxu0 0
  %842 = vmatprep.subr.bf16.mxu0 0
  %843 = vmatpush1.bf16.msra.mxu0 0
  %844 = vmatprep.subr.bf16.mxu0 0
  %845 = vmatpush1.bf16.msra.mxu0 0
  %846 = vmatprep.subr.bf16.mxu0 0
  %847 = vmatpush1.bf16.msra.mxu0 0
  %848 = vmatprep.subr.bf16.mxu0 0
  %849 = vmatpush1.bf16.msra.mxu0 0
  %850 = vmatprep.subr.bf16.mxu0 0
  %851 = vmatpush1.bf16.msra.mxu0 0
  %852 = vmatprep.subr.bf16.mxu0 0
  %853 = vmatpush1.bf16.msra.mxu0 0
  %854 = vmatprep.subr.bf16.mxu0 0
  %855 = vmatpush1.bf16.msra.mxu0 0
  %856 = vmatprep.subr.bf16.mxu0 0
  %857 = vmatpush1.bf16.msra.mxu0 0
  %858 = vmatprep.subr.bf16.mxu0 0
  %859 = vmatpush1.bf16.msra.mxu0 0
  %860 = vmatprep.subr.bf16.mxu0 0
  %861 = vmatpush1.bf16.msra.mxu0 0
  %862 = vmatprep.subr.bf16.mxu0 0
  %863 = vmatpush1.bf16.msra.mxu0 0
  %864 = vmatprep.subr.bf16.mxu0 0
  %865 = vmatpush1.bf16.msra.mxu0 0
  %866 = vmatprep.subr.bf16.mxu0 0
  %867 = vmatpush1.bf16.msra.mxu0 0
  %868 = vmatprep.subr.bf16.mxu0 0
  %869 = vmatpush1.bf16.msra.mxu0 0
  %870 = vmatprep.mubr.bf16.mxu0 0
  %871 = vmatmul.mubr.bf16.gmra.mrb[0].mxu0 %v287
  %v872 = vpop.f32.mrb[0].mxu0
  %v873 = vadd.f32 0.0, %v872
  %v874 = vpop.f32.mrb[0].mxu0
  %v875 = vadd.f32 0.0, %v874
  %v876 = vpop.f32.mrb[0].mxu0
  %v877 = vadd.f32 0.0, %v876
  %v878 = vpop.f32.mrb[0].mxu0
  %v879 = vadd.f32 0.0, %v878
  %880 = vdwg.mxu0
  %v882 = vand.u32 %v117, %v292
  %v885 = vand.u32 %v118, %v292
  %v888 = vand.u32 %v119, %v292
  %v891 = vand.u32 %v120, %v292
  %893 = vmatprep.subr.bf16.mxu0 %v885
  %894 = vmatpush1.bf16.msra.mxu0 %v882
  %895 = vmatprep.subr.bf16.mxu0 0
  %896 = vmatpush1.bf16.msra.mxu0 0
  %897 = vmatprep.subr.bf16.mxu0 0
  %898 = vmatpush1.bf16.msra.mxu0 0
  %899 = vmatprep.subr.bf16.mxu0 0
  %900 = vmatpush1.bf16.msra.mxu0 0
  %901 = vmatprep.subr.bf16.mxu0 0
  %902 = vmatpush1.bf16.msra.mxu0 0
  %903 = vmatprep.subr.bf16.mxu0 0
  %904 = vmatpush1.bf16.msra.mxu0 0
  %905 = vmatprep.subr.bf16.mxu0 0
  %906 = vmatpush1.bf16.msra.mxu0 0
  %907 = vmatprep.subr.bf16.mxu0 0
  %908 = vmatpush1.bf16.msra.mxu0 0
  %909 = vmatprep.subr.bf16.mxu0 0
  %910 = vmatpush1.bf16.msra.mxu0 0
  %911 = vmatprep.subr.bf16.mxu0 0
  %912 = vmatpush1.bf16.msra.mxu0 0
  %913 = vmatprep.subr.bf16.mxu0 0
  %914 = vmatpush1.bf16.msra.mxu0 0
  %915 = vmatprep.subr.bf16.mxu0 0
  %916 = vmatpush1.bf16.msra.mxu0 0
  %917 = vmatprep.subr.bf16.mxu0 0
  %918 = vmatpush1.bf16.msra.mxu0 0
  %919 = vmatprep.subr.bf16.mxu0 0
  %920 = vmatpush1.bf16.msra.mxu0 0
  %921 = vmatprep.subr.bf16.mxu0 0
  %922 = vmatpush1.bf16.msra.mxu0 0
  %923 = vmatprep.subr.bf16.mxu0 0
  %924 = vmatpush1.bf16.msra.mxu0 0
  %925 = vmatprep.mubr.bf16.mxu0 0
  %926 = vmatmul.mubr.bf16.gmra.mrb[0].mxu0 %v287
  %v927 = vpop.f32.mrb[0].mxu0
  %v928 = vadd.f32 0.0, %v927
  %v929 = vpop.f32.mrb[0].mxu0
  %v930 = vadd.f32 0.0, %v929
  %v931 = vpop.f32.mrb[0].mxu0
  %v932 = vadd.f32 0.0, %v931
  %v933 = vpop.f32.mrb[0].mxu0
  %v934 = vadd.f32 0.0, %v933
  %935 = vdwg.mxu0
  %936 = vmatprep.subr.bf16.mxu0 %v891
  %937 = vmatpush1.bf16.msra.mxu0 %v888
  %938 = vmatprep.subr.bf16.mxu0 0
  %939 = vmatpush1.bf16.msra.mxu0 0
  %940 = vmatprep.subr.bf16.mxu0 0
  %941 = vmatpush1.bf16.msra.mxu0 0
  %942 = vmatprep.subr.bf16.mxu0 0
  %943 = vmatpush1.bf16.msra.mxu0 0
  %944 = vmatprep.subr.bf16.mxu0 0
  %945 = vmatpush1.bf16.msra.mxu0 0
  %946 = vmatprep.subr.bf16.mxu0 0
  %947 = vmatpush1.bf16.msra.mxu0 0
  %948 = vmatprep.subr.bf16.mxu0 0
  %949 = vmatpush1.bf16.msra.mxu0 0
  %950 = vmatprep.subr.bf16.mxu0 0
  %951 = vmatpush1.bf16.msra.mxu0 0
  %952 = vmatprep.subr.bf16.mxu0 0
  %953 = vmatpush1.bf16.msra.mxu0 0
  %954 = vmatprep.subr.bf16.mxu0 0
  %955 = vmatpush1.bf16.msra.mxu0 0
  %956 = vmatprep.subr.bf16.mxu0 0
  %957 = vmatpush1.bf16.msra.mxu0 0
  %958 = vmatprep.subr.bf16.mxu0 0
  %959 = vmatpush1.bf16.msra.mxu0 0
  %960 = vmatprep.subr.bf16.mxu0 0
  %961 = vmatpush1.bf16.msra.mxu0 0
  %962 = vmatprep.subr.bf16.mxu0 0
  %963 = vmatpush1.bf16.msra.mxu0 0
  %964 = vmatprep.subr.bf16.mxu0 0
  %965 = vmatpush1.bf16.msra.mxu0 0
  %966 = vmatprep.subr.bf16.mxu0 0
  %967 = vmatpush1.bf16.msra.mxu0 0
  %968 = vmatprep.mubr.bf16.mxu0 0
  %969 = vmatmul.mubr.bf16.gmra.mrb[0].mxu0 %v287
  %v970 = vpop.f32.mrb[0].mxu0
  %v971 = vadd.f32 0.0, %v970
  %v972 = vpop.f32.mrb[0].mxu0
  %v973 = vadd.f32 0.0, %v972
  %v974 = vpop.f32.mrb[0].mxu0
  %v975 = vadd.f32 0.0, %v974
  %v976 = vpop.f32.mrb[0].mxu0
  %v977 = vadd.f32 0.0, %v976
  %978 = vdwg.mxu0
  %v980 = vand.u32 %v121, %v292
  %v983 = vand.u32 %v122, %v292
  %v986 = vand.u32 %v123, %v292
  %v989 = vand.u32 %v124, %v292
  %991 = vmatprep.subr.bf16.mxu0 %v983
  %992 = vmatpush1.bf16.msra.mxu0 %v980
  %993 = vmatprep.subr.bf16.mxu0 0
  %994 = vmatpush1.bf16.msra.mxu0 0
  %995 = vmatprep.subr.bf16.mxu0 0
  %996 = vmatpush1.bf16.msra.mxu0 0
  %997 = vmatprep.subr.bf16.mxu0 0
  %998 = vmatpush1.bf16.msra.mxu0 0
  %999 = vmatprep.subr.bf16.mxu0 0
  %1000 = vmatpush1.bf16.msra.mxu0 0
  %1001 = vmatprep.subr.bf16.mxu0 0
  %1002 = vmatpush1.bf16.msra.mxu0 0
  %1003 = vmatprep.subr.bf16.mxu0 0
  %1004 = vmatpush1.bf16.msra.mxu0 0
  %1005 = vmatprep.subr.bf16.mxu0 0
  %1006 = vmatpush1.bf16.msra.mxu0 0
  %1007 = vmatprep.subr.bf16.mxu0 0
  %1008 = vmatpush1.bf16.msra.mxu0 0
  %1009 = vmatprep.subr.bf16.mxu0 0
  %1010 = vmatpush1.bf16.msra.mxu0 0
  %1011 = vmatprep.subr.bf16.mxu0 0
  %1012 = vmatpush1.bf16.msra.mxu0 0
  %1013 = vmatprep.subr.bf16.mxu0 0
  %1014 = vmatpush1.bf16.msra.mxu0 0
  %1015 = vmatprep.subr.bf16.mxu0 0
  %1016 = vmatpush1.bf16.msra.mxu0 0
  %1017 = vmatprep.subr.bf16.mxu0 0
  %1018 = vmatpush1.bf16.msra.mxu0 0
  %1019 = vmatprep.subr.bf16.mxu0 0
  %1020 = vmatpush1.bf16.msra.mxu0 0
  %1021 = vmatprep.subr.bf16.mxu0 0
  %1022 = vmatpush1.bf16.msra.mxu0 0
  %1023 = vmatprep.mubr.bf16.mxu0 0
  %1024 = vmatmul.mubr.bf16.gmra.mrb[0].mxu0 %v287
  %v1025 = vpop.f32.mrb[0].mxu0
  %v1026 = vadd.f32 0.0, %v1025
  %v1027 = vpop.f32.mrb[0].mxu0
  %v1028 = vadd.f32 0.0, %v1027
  %v1029 = vpop.f32.mrb[0].mxu0
  %v1030 = vadd.f32 0.0, %v1029
  %v1031 = vpop.f32.mrb[0].mxu0
  %v1032 = vadd.f32 0.0, %v1031
  %1033 = vdwg.mxu0
  %1034 = vmatprep.subr.bf16.mxu0 %v989
  %1035 = vmatpush1.bf16.msra.mxu0 %v986
  %1036 = vmatprep.subr.bf16.mxu0 0
  %1037 = vmatpush1.bf16.msra.mxu0 0
  %1038 = vmatprep.subr.bf16.mxu0 0
  %1039 = vmatpush1.bf16.msra.mxu0 0
  %1040 = vmatprep.subr.bf16.mxu0 0
  %1041 = vmatpush1.bf16.msra.mxu0 0
  %1042 = vmatprep.subr.bf16.mxu0 0
  %1043 = vmatpush1.bf16.msra.mxu0 0
  %1044 = vmatprep.subr.bf16.mxu0 0
  %1045 = vmatpush1.bf16.msra.mxu0 0
  %1046 = vmatprep.subr.bf16.mxu0 0
  %1047 = vmatpush1.bf16.msra.mxu0 0
  %1048 = vmatprep.subr.bf16.mxu0 0
  %1049 = vmatpush1.bf16.msra.mxu0 0
  %1050 = vmatprep.subr.bf16.mxu0 0
  %1051 = vmatpush1.bf16.msra.mxu0 0
  %1052 = vmatprep.subr.bf16.mxu0 0
  %1053 = vmatpush1.bf16.msra.mxu0 0
  %1054 = vmatprep.subr.bf16.mxu0 0
  %1055 = vmatpush1.bf16.msra.mxu0 0
  %1056 = vmatprep.subr.bf16.mxu0 0
  %1057 = vmatpush1.bf16.msra.mxu0 0
  %1058 = vmatprep.subr.bf16.mxu0 0
  %1059 = vmatpush1.bf16.msra.mxu0 0
  %1060 = vmatprep.subr.bf16.mxu0 0
  %1061 = vmatpush1.bf16.msra.mxu0 0
  %1062 = vmatprep.subr.bf16.mxu0 0
  %1063 = vmatpush1.bf16.msra.mxu0 0
  %1064 = vmatprep.subr.bf16.mxu0 0
  %1065 = vmatpush1.bf16.msra.mxu0 0
  %1066 = vmatprep.mubr.bf16.mxu0 0
  %1067 = vmatmul.mubr.bf16.gmra.mrb[0].mxu0 %v287
  %v1068 = vpop.f32.mrb[0].mxu0
  %v1069 = vadd.f32 0.0, %v1068
  %v1070 = vpop.f32.mrb[0].mxu0
  %v1071 = vadd.f32 0.0, %v1070
  %v1072 = vpop.f32.mrb[0].mxu0
  %v1073 = vadd.f32 0.0, %v1072
  %v1074 = vpop.f32.mrb[0].mxu0
  %v1075 = vadd.f32 0.0, %v1074
  %1076 = vdwg.mxu0
  %v1079 = vunpack.c.l.b16 %v21
  %v1080 = vunpack.c.l.b16 %v22
  %v1081 = vpack.c.b16 %v1080, %v1079
  %v1083 = vsel %vm285, %v1081, 0
  %v1085 = vand.u32 %v249, %v292
  %v1088 = vand.u32 %v222, %v292
  %v1091 = vand.u32 %v223, %v292
  %v1094 = vand.u32 %v224, %v292
  %1096 = vmatprep.subr.bf16.mxu0 %v1088
  %1097 = vmatpush1.bf16.msra.mxu0 %v1085
  %1098 = vmatprep.subr.bf16.mxu0 0
  %1099 = vmatpush1.bf16.msra.mxu0 0
  %1100 = vmatprep.subr.bf16.mxu0 0
  %1101 = vmatpush1.bf16.msra.mxu0 0
  %1102 = vmatprep.subr.bf16.mxu0 0
  %1103 = vmatpush1.bf16.msra.mxu0 0
  %1104 = vmatprep.subr.bf16.mxu0 0
  %1105 = vmatpush1.bf16.msra.mxu0 0
  %1106 = vmatprep.subr.bf16.mxu0 0
  %1107 = vmatpush1.bf16.msra.mxu0 0
  %1108 = vmatprep.subr.bf16.mxu0 0
  %1109 = vmatpush1.bf16.msra.mxu0 0
  %1110 = vmatprep.subr.bf16.mxu0 0
  %1111 = vmatpush1.bf16.msra.mxu0 0
  %1112 = vmatprep.subr.bf16.mxu0 0
  %1113 = vmatpush1.bf16.msra.mxu0 0
  %1114 = vmatprep.subr.bf16.mxu0 0
  %1115 = vmatpush1.bf16.msra.mxu0 0
  %1116 = vmatprep.subr.bf16.mxu0 0
  %1117 = vmatpush1.bf16.msra.mxu0 0
  %1118 = vmatprep.subr.bf16.mxu0 0
  %1119 = vmatpush1.bf16.msra.mxu0 0
  %1120 = vmatprep.subr.bf16.mxu0 0
  %1121 = vmatpush1.bf16.msra.mxu0 0
  %1122 = vmatprep.subr.bf16.mxu0 0
  %1123 = vmatpush1.bf16.msra.mxu0 0
  %1124 = vmatprep.subr.bf16.mxu0 0
  %1125 = vmatpush1.bf16.msra.mxu0 0
  %1126 = vmatprep.subr.bf16.mxu0 0
  %1127 = vmatpush1.bf16.msra.mxu0 0
  %1128 = vmatprep.mubr.bf16.mxu0 0
  %1129 = vmatmul.mubr.bf16.gmra.mrb[0].mxu0 %v1083
  %v1130 = vpop.f32.mrb[0].mxu0
  %v1131 = vadd.f32 %v340, %v1130
  %v1132 = vpop.f32.mrb[0].mxu0
  %v1133 = vadd.f32 %v342, %v1132
  %v1134 = vpop.f32.mrb[0].mxu0
  %v1135 = vadd.f32 %v344, %v1134
  %v1136 = vpop.f32.mrb[0].mxu0
  %v1137 = vadd.f32 %v346, %v1136
  %1138 = vdwg.mxu0
  %1139 = vmatprep.subr.bf16.mxu0 %v1094
  %1140 = vmatpush1.bf16.msra.mxu0 %v1091
  %1141 = vmatprep.subr.bf16.mxu0 0
  %1142 = vmatpush1.bf16.msra.mxu0 0
  %1143 = vmatprep.subr.bf16.mxu0 0
  %1144 = vmatpush1.bf16.msra.mxu0 0
  %1145 = vmatprep.subr.bf16.mxu0 0
  %1146 = vmatpush1.bf16.msra.mxu0 0
  %1147 = vmatprep.subr.bf16.mxu0 0
  %1148 = vmatpush1.bf16.msra.mxu0 0
  %1149 = vmatprep.subr.bf16.mxu0 0
  %1150 = vmatpush1.bf16.msra.mxu0 0
  %1151 = vmatprep.subr.bf16.mxu0 0
  %1152 = vmatpush1.bf16.msra.mxu0 0
  %1153 = vmatprep.subr.bf16.mxu0 0
  %1154 = vmatpush1.bf16.msra.mxu0 0
  %1155 = vmatprep.subr.bf16.mxu0 0
  %1156 = vmatpush1.bf16.msra.mxu0 0
  %1157 = vmatprep.subr.bf16.mxu0 0
  %1158 = vmatpush1.bf16.msra.mxu0 0
  %1159 = vmatprep.subr.bf16.mxu0 0
  %1160 = vmatpush1.bf16.msra.mxu0 0
  %1161 = vmatprep.subr.bf16.mxu0 0
  %1162 = vmatpush1.bf16.msra.mxu0 0
  %1163 = vmatprep.subr.bf16.mxu0 0
  %1164 = vmatpush1.bf16.msra.mxu0 0
  %1165 = vmatprep.subr.bf16.mxu0 0
  %1166 = vmatpush1.bf16.msra.mxu0 0
  %1167 = vmatprep.subr.bf16.mxu0 0
  %1168 = vmatpush1.bf16.msra.mxu0 0
  %1169 = vmatprep.subr.bf16.mxu0 0
  %1170 = vmatpush1.bf16.msra.mxu0 0
  %1171 = vmatprep.mubr.bf16.mxu0 0
  %1172 = vmatmul.mubr.bf16.gmra.mrb[0].mxu0 %v1083
  %v1173 = vpop.f32.mrb[0].mxu0
  %v1174 = vadd.f32 %v383, %v1173
  %v1175 = vpop.f32.mrb[0].mxu0
  %v1176 = vadd.f32 %v385, %v1175
  %v1177 = vpop.f32.mrb[0].mxu0
  %v1178 = vadd.f32 %v387, %v1177
  %v1179 = vpop.f32.mrb[0].mxu0
  %v1180 = vadd.f32 %v389, %v1179
  %1181 = vdwg.mxu0
  %v1182 = vand.u32 %v251, %v292
  %v1185 = vand.u32 %v225, %v292
  %v1188 = vand.u32 %v226, %v292
  %v1191 = vand.u32 %v227, %v292
  %1193 = vmatprep.subr.bf16.mxu0 %v1185
  %1194 = vmatpush1.bf16.msra.mxu0 %v1182
  %1195 = vmatprep.subr.bf16.mxu0 0
  %1196 = vmatpush1.bf16.msra.mxu0 0
  %1197 = vmatprep.subr.bf16.mxu0 0
  %1198 = vmatpush1.bf16.msra.mxu0 0
  %1199 = vmatprep.subr.bf16.mxu0 0
  %1200 = vmatpush1.bf16.msra.mxu0 0
  %1201 = vmatprep.subr.bf16.mxu0 0
  %1202 = vmatpush1.bf16.msra.mxu0 0
  %1203 = vmatprep.subr.bf16.mxu0 0
  %1204 = vmatpush1.bf16.msra.mxu0 0
  %1205 = vmatprep.subr.bf16.mxu0 0
  %1206 = vmatpush1.bf16.msra.mxu0 0
  %1207 = vmatprep.subr.bf16.mxu0 0
  %1208 = vmatpush1.bf16.msra.mxu0 0
  %1209 = vmatprep.subr.bf16.mxu0 0
  %1210 = vmatpush1.bf16.msra.mxu0 0
  %1211 = vmatprep.subr.bf16.mxu0 0
  %1212 = vmatpush1.bf16.msra.mxu0 0
  %1213 = vmatprep.subr.bf16.mxu0 0
  %1214 = vmatpush1.bf16.msra.mxu0 0
  %1215 = vmatprep.subr.bf16.mxu0 0
  %1216 = vmatpush1.bf16.msra.mxu0 0
  %1217 = vmatprep.subr.bf16.mxu0 0
  %1218 = vmatpush1.bf16.msra.mxu0 0
  %1219 = vmatprep.subr.bf16.mxu0 0
  %1220 = vmatpush1.bf16.msra.mxu0 0
  %1221 = vmatprep.subr.bf16.mxu0 0
  %1222 = vmatpush1.bf16.msra.mxu0 0
  %1223 = vmatprep.subr.bf16.mxu0 0
  %1224 = vmatpush1.bf16.msra.mxu0 0
  %1225 = vmatprep.mubr.bf16.mxu0 0
  %1226 = vmatmul.mubr.bf16.gmra.mrb[0].mxu0 %v1083
  %v1227 = vpop.f32.mrb[0].mxu0
  %v1228 = vadd.f32 %v438, %v1227
  %v1229 = vpop.f32.mrb[0].mxu0
  %v1230 = vadd.f32 %v440, %v1229
  %v1231 = vpop.f32.mrb[0].mxu0
  %v1232 = vadd.f32 %v442, %v1231
  %v1233 = vpop.f32.mrb[0].mxu0
  %v1234 = vadd.f32 %v444, %v1233
  %1235 = vdwg.mxu0
  %1236 = vmatprep.subr.bf16.mxu0 %v1191
  %1237 = vmatpush1.bf16.msra.mxu0 %v1188
  %1238 = vmatprep.subr.bf16.mxu0 0
  %1239 = vmatpush1.bf16.msra.mxu0 0
  %1240 = vmatprep.subr.bf16.mxu0 0
  %1241 = vmatpush1.bf16.msra.mxu0 0
  %1242 = vmatprep.subr.bf16.mxu0 0
  %1243 = vmatpush1.bf16.msra.mxu0 0
  %1244 = vmatprep.subr.bf16.mxu0 0
  %1245 = vmatpush1.bf16.msra.mxu0 0
  %1246 = vmatprep.subr.bf16.mxu0 0
  %1247 = vmatpush1.bf16.msra.mxu0 0
  %1248 = vmatprep.subr.bf16.mxu0 0
  %1249 = vmatpush1.bf16.msra.mxu0 0
  %1250 = vmatprep.subr.bf16.mxu0 0
  %1251 = vmatpush1.bf16.msra.mxu0 0
  %1252 = vmatprep.subr.bf16.mxu0 0
  %1253 = vmatpush1.bf16.msra.mxu0 0
  %1254 = vmatprep.subr.bf16.mxu0 0
  %1255 = vmatpush1.bf16.msra.mxu0 0
  %1256 = vmatprep.subr.bf16.mxu0 0
  %1257 = vmatpush1.bf16.msra.mxu0 0
  %1258 = vmatprep.subr.bf16.mxu0 0
  %1259 = vmatpush1.bf16.msra.mxu0 0
  %1260 = vmatprep.subr.bf16.mxu0 0
  %1261 = vmatpush1.bf16.msra.mxu0 0
  %1262 = vmatprep.subr.bf16.mxu0 0
  %1263 = vmatpush1.bf16.msra.mxu0 0
  %1264 = vmatprep.subr.bf16.mxu0 0
  %1265 = vmatpush1.bf16.msra.mxu0 0
  %1266 = vmatprep.subr.bf16.mxu0 0
  %1267 = vmatpush1.bf16.msra.mxu0 0
  %1268 = vmatprep.mubr.bf16.mxu0 0
  %1269 = vmatmul.mubr.bf16.gmra.mrb[0].mxu0 %v1083
  %v1270 = vpop.f32.mrb[0].mxu0
  %v1271 = vadd.f32 %v481, %v1270
  %v1272 = vpop.f32.mrb[0].mxu0
  %v1273 = vadd.f32 %v483, %v1272
  %v1274 = vpop.f32.mrb[0].mxu0
  %v1275 = vadd.f32 %v485, %v1274
  %v1276 = vpop.f32.mrb[0].mxu0
  %v1277 = vadd.f32 %v487, %v1276
  %1278 = vdwg.mxu0
  %v1279 = vand.u32 %v253, %v292
  %v1282 = vand.u32 %v228, %v292
  %v1285 = vand.u32 %v229, %v292
  %v1288 = vand.u32 %v230, %v292
  %1290 = vmatprep.subr.bf16.mxu0 %v1282
  %1291 = vmatpush1.bf16.msra.mxu0 %v1279
  %1292 = vmatprep.subr.bf16.mxu0 0
  %1293 = vmatpush1.bf16.msra.mxu0 0
  %1294 = vmatprep.subr.bf16.mxu0 0
  %1295 = vmatpush1.bf16.msra.mxu0 0
  %1296 = vmatprep.subr.bf16.mxu0 0
  %1297 = vmatpush1.bf16.msra.mxu0 0
  %1298 = vmatprep.subr.bf16.mxu0 0
  %1299 = vmatpush1.bf16.msra.mxu0 0
  %1300 = vmatprep.subr.bf16.mxu0 0
  %1301 = vmatpush1.bf16.msra.mxu0 0
  %1302 = vmatprep.subr.bf16.mxu0 0
  %1303 = vmatpush1.bf16.msra.mxu0 0
  %1304 = vmatprep.subr.bf16.mxu0 0
  %1305 = vmatpush1.bf16.msra.mxu0 0
  %1306 = vmatprep.subr.bf16.mxu0 0
  %1307 = vmatpush1.bf16.msra.mxu0 0
  %1308 = vmatprep.subr.bf16.mxu0 0
  %1309 = vmatpush1.bf16.msra.mxu0 0
  %1310 = vmatprep.subr.bf16.mxu0 0
  %1311 = vmatpush1.bf16.msra.mxu0 0
  %1312 = vmatprep.subr.bf16.mxu0 0
  %1313 = vmatpush1.bf16.msra.mxu0 0
  %1314 = vmatprep.subr.bf16.mxu0 0
  %1315 = vmatpush1.bf16.msra.mxu0 0
  %1316 = vmatprep.subr.bf16.mxu0 0
  %1317 = vmatpush1.bf16.msra.mxu0 0
  %1318 = vmatprep.subr.bf16.mxu0 0
  %1319 = vmatpush1.bf16.msra.mxu0 0
  %1320 = vmatprep.subr.bf16.mxu0 0
  %1321 = vmatpush1.bf16.msra.mxu0 0
  %1322 = vmatprep.mubr.bf16.mxu0 0
  %1323 = vmatmul.mubr.bf16.gmra.mrb[0].mxu0 %v1083
  %v1324 = vpop.f32.mrb[0].mxu0
  %v1325 = vadd.f32 %v536, %v1324
  %v1326 = vpop.f32.mrb[0].mxu0
  %v1327 = vadd.f32 %v538, %v1326
  %v1328 = vpop.f32.mrb[0].mxu0
  %v1329 = vadd.f32 %v540, %v1328
  %v1330 = vpop.f32.mrb[0].mxu0
  %v1331 = vadd.f32 %v542, %v1330
  %1332 = vdwg.mxu0
  %1333 = vmatprep.subr.bf16.mxu0 %v1288
  %1334 = vmatpush1.bf16.msra.mxu0 %v1285
  %1335 = vmatprep.subr.bf16.mxu0 0
  %1336 = vmatpush1.bf16.msra.mxu0 0
  %1337 = vmatprep.subr.bf16.mxu0 0
  %1338 = vmatpush1.bf16.msra.mxu0 0
  %1339 = vmatprep.subr.bf16.mxu0 0
  %1340 = vmatpush1.bf16.msra.mxu0 0
  %1341 = vmatprep.subr.bf16.mxu0 0
  %1342 = vmatpush1.bf16.msra.mxu0 0
  %1343 = vmatprep.subr.bf16.mxu0 0
  %1344 = vmatpush1.bf16.msra.mxu0 0
  %1345 = vmatprep.subr.bf16.mxu0 0
  %1346 = vmatpush1.bf16.msra.mxu0 0
  %1347 = vmatprep.subr.bf16.mxu0 0
  %1348 = vmatpush1.bf16.msra.mxu0 0
  %1349 = vmatprep.subr.bf16.mxu0 0
  %1350 = vmatpush1.bf16.msra.mxu0 0
  %1351 = vmatprep.subr.bf16.mxu0 0
  %1352 = vmatpush1.bf16.msra.mxu0 0
  %1353 = vmatprep.subr.bf16.mxu0 0
  %1354 = vmatpush1.bf16.msra.mxu0 0
  %1355 = vmatprep.subr.bf16.mxu0 0
  %1356 = vmatpush1.bf16.msra.mxu0 0
  %1357 = vmatprep.subr.bf16.mxu0 0
  %1358 = vmatpush1.bf16.msra.mxu0 0
  %1359 = vmatprep.subr.bf16.mxu0 0
  %1360 = vmatpush1.bf16.msra.mxu0 0
  %1361 = vmatprep.subr.bf16.mxu0 0
  %1362 = vmatpush1.bf16.msra.mxu0 0
  %1363 = vmatprep.subr.bf16.mxu0 0
  %1364 = vmatpush1.bf16.msra.mxu0 0
  %1365 = vmatprep.mubr.bf16.mxu0 0
  %1366 = vmatmul.mubr.bf16.gmra.mrb[0].mxu0 %v1083
  %v1367 = vpop.f32.mrb[0].mxu0
  %v1368 = vadd.f32 %v579, %v1367
  %v1369 = vpop.f32.mrb[0].mxu0
  %v1370 = vadd.f32 %v581, %v1369
  %v1371 = vpop.f32.mrb[0].mxu0
  %v1372 = vadd.f32 %v583, %v1371
  %v1373 = vpop.f32.mrb[0].mxu0
  %v1374 = vadd.f32 %v585, %v1373
  %1375 = vdwg.mxu0
  %v1376 = vand.u32 %v255, %v292
  %v1379 = vand.u32 %v231, %v292
  %v1382 = vand.u32 %v232, %v292
  %v1385 = vand.u32 %v233, %v292
  %1387 = vmatprep.subr.bf16.mxu0 %v1379
  %1388 = vmatpush1.bf16.msra.mxu0 %v1376
  %1389 = vmatprep.subr.bf16.mxu0 0
  %1390 = vmatpush1.bf16.msra.mxu0 0
  %1391 = vmatprep.subr.bf16.mxu0 0
  %1392 = vmatpush1.bf16.msra.mxu0 0
  %1393 = vmatprep.subr.bf16.mxu0 0
  %1394 = vmatpush1.bf16.msra.mxu0 0
  %1395 = vmatprep.subr.bf16.mxu0 0
  %1396 = vmatpush1.bf16.msra.mxu0 0
  %1397 = vmatprep.subr.bf16.mxu0 0
  %1398 = vmatpush1.bf16.msra.mxu0 0
  %1399 = vmatprep.subr.bf16.mxu0 0
  %1400 = vmatpush1.bf16.msra.mxu0 0
  %1401 = vmatprep.subr.bf16.mxu0 0
  %1402 = vmatpush1.bf16.msra.mxu0 0
  %1403 = vmatprep.subr.bf16.mxu0 0
  %1404 = vmatpush1.bf16.msra.mxu0 0
  %1405 = vmatprep.subr.bf16.mxu0 0
  %1406 = vmatpush1.bf16.msra.mxu0 0
  %1407 = vmatprep.subr.bf16.mxu0 0
  %1408 = vmatpush1.bf16.msra.mxu0 0
  %1409 = vmatprep.subr.bf16.mxu0 0
  %1410 = vmatpush1.bf16.msra.mxu0 0
  %1411 = vmatprep.subr.bf16.mxu0 0
  %1412 = vmatpush1.bf16.msra.mxu0 0
  %1413 = vmatprep.subr.bf16.mxu0 0
  %1414 = vmatpush1.bf16.msra.mxu0 0
  %1415 = vmatprep.subr.bf16.mxu0 0
  %1416 = vmatpush1.bf16.msra.mxu0 0
  %1417 = vmatprep.subr.bf16.mxu0 0
  %1418 = vmatpush1.bf16.msra.mxu0 0
  %1419 = vmatprep.mubr.bf16.mxu0 0
  %1420 = vmatmul.mubr.bf16.gmra.mrb[0].mxu0 %v1083
  %v1421 = vpop.f32.mrb[0].mxu0
  %v1422 = vadd.f32 %v634, %v1421
  %v1423 = vpop.f32.mrb[0].mxu0
  %v1424 = vadd.f32 %v636, %v1423
  %v1425 = vpop.f32.mrb[0].mxu0
  %v1426 = vadd.f32 %v638, %v1425
  %v1427 = vpop.f32.mrb[0].mxu0
  %v1428 = vadd.f32 %v640, %v1427
  %1429 = vdwg.mxu0
  %1430 = vmatprep.subr.bf16.mxu0 %v1385
  %1431 = vmatpush1.bf16.msra.mxu0 %v1382
  %1432 = vmatprep.subr.bf16.mxu0 0
  %1433 = vmatpush1.bf16.msra.mxu0 0
  %1434 = vmatprep.subr.bf16.mxu0 0
  %1435 = vmatpush1.bf16.msra.mxu0 0
  %1436 = vmatprep.subr.bf16.mxu0 0
  %1437 = vmatpush1.bf16.msra.mxu0 0
  %1438 = vmatprep.subr.bf16.mxu0 0
  %1439 = vmatpush1.bf16.msra.mxu0 0
  %1440 = vmatprep.subr.bf16.mxu0 0
  %1441 = vmatpush1.bf16.msra.mxu0 0
  %1442 = vmatprep.subr.bf16.mxu0 0
  %1443 = vmatpush1.bf16.msra.mxu0 0
  %1444 = vmatprep.subr.bf16.mxu0 0
  %1445 = vmatpush1.bf16.msra.mxu0 0
  %1446 = vmatprep.subr.bf16.mxu0 0
  %1447 = vmatpush1.bf16.msra.mxu0 0
  %1448 = vmatprep.subr.bf16.mxu0 0
  %1449 = vmatpush1.bf16.msra.mxu0 0
  %1450 = vmatprep.subr.bf16.mxu0 0
  %1451 = vmatpush1.bf16.msra.mxu0 0
  %1452 = vmatprep.subr.bf16.mxu0 0
  %1453 = vmatpush1.bf16.msra.mxu0 0
  %1454 = vmatprep.subr.bf16.mxu0 0
  %1455 = vmatpush1.bf16.msra.mxu0 0
  %1456 = vmatprep.subr.bf16.mxu0 0
  %1457 = vmatpush1.bf16.msra.mxu0 0
  %1458 = vmatprep.subr.bf16.mxu0 0
  %1459 = vmatpush1.bf16.msra.mxu0 0
  %1460 = vmatprep.subr.bf16.mxu0 0
  %1461 = vmatpush1.bf16.msra.mxu0 0
  %1462 = vmatprep.mubr.bf16.mxu0 0
  %1463 = vmatmul.mubr.bf16.gmra.mrb[0].mxu0 %v1083
  %v1464 = vpop.f32.mrb[0].mxu0
  %v1465 = vadd.f32 %v677, %v1464
  %v1466 = vpop.f32.mrb[0].mxu0
  %v1467 = vadd.f32 %v679, %v1466
  %v1468 = vpop.f32.mrb[0].mxu0
  %v1469 = vadd.f32 %v681, %v1468
  %v1470 = vpop.f32.mrb[0].mxu0
  %v1471 = vadd.f32 %v683, %v1470
  %1472 = vdwg.mxu0
  %v1473 = vand.u32 %v257, %v292
  %v1476 = vand.u32 %v234, %v292
  %v1479 = vand.u32 %v235, %v292
  %v1482 = vand.u32 %v236, %v292
  %1484 = vmatprep.subr.bf16.mxu0 %v1476
  %1485 = vmatpush1.bf16.msra.mxu0 %v1473
  %1486 = vmatprep.subr.bf16.mxu0 0
  %1487 = vmatpush1.bf16.msra.mxu0 0
  %1488 = vmatprep.subr.bf16.mxu0 0
  %1489 = vmatpush1.bf16.msra.mxu0 0
  %1490 = vmatprep.subr.bf16.mxu0 0
  %1491 = vmatpush1.bf16.msra.mxu0 0
  %1492 = vmatprep.subr.bf16.mxu0 0
  %1493 = vmatpush1.bf16.msra.mxu0 0
  %1494 = vmatprep.subr.bf16.mxu0 0
  %1495 = vmatpush1.bf16.msra.mxu0 0
  %1496 = vmatprep.subr.bf16.mxu0 0
  %1497 = vmatpush1.bf16.msra.mxu0 0
  %1498 = vmatprep.subr.bf16.mxu0 0
  %1499 = vmatpush1.bf16.msra.mxu0 0
  %1500 = vmatprep.subr.bf16.mxu0 0
  %1501 = vmatpush1.bf16.msra.mxu0 0
  %1502 = vmatprep.subr.bf16.mxu0 0
  %1503 = vmatpush1.bf16.msra.mxu0 0
  %1504 = vmatprep.subr.bf16.mxu0 0
  %1505 = vmatpush1.bf16.msra.mxu0 0
  %1506 = vmatprep.subr.bf16.mxu0 0
  %1507 = vmatpush1.bf16.msra.mxu0 0
  %1508 = vmatprep.subr.bf16.mxu0 0
  %1509 = vmatpush1.bf16.msra.mxu0 0
  %1510 = vmatprep.subr.bf16.mxu0 0
  %1511 = vmatpush1.bf16.msra.mxu0 0
  %1512 = vmatprep.subr.bf16.mxu0 0
  %1513 = vmatpush1.bf16.msra.mxu0 0
  %1514 = vmatprep.subr.bf16.mxu0 0
  %1515 = vmatpush1.bf16.msra.mxu0 0
  %1516 = vmatprep.mubr.bf16.mxu0 0
  %1517 = vmatmul.mubr.bf16.gmra.mrb[0].mxu0 %v1083
  %v1518 = vpop.f32.mrb[0].mxu0
  %v1519 = vadd.f32 %v732, %v1518
  %v1520 = vpop.f32.mrb[0].mxu0
  %v1521 = vadd.f32 %v734, %v1520
  %v1522 = vpop.f32.mrb[0].mxu0
  %v1523 = vadd.f32 %v736, %v1522
  %v1524 = vpop.f32.mrb[0].mxu0
  %v1525 = vadd.f32 %v738, %v1524
  %1526 = vdwg.mxu0
  %1527 = vmatprep.subr.bf16.mxu0 %v1482
  %1528 = vmatpush1.bf16.msra.mxu0 %v1479
  %1529 = vmatprep.subr.bf16.mxu0 0
  %1530 = vmatpush1.bf16.msra.mxu0 0
  %1531 = vmatprep.subr.bf16.mxu0 0
  %1532 = vmatpush1.bf16.msra.mxu0 0
  %1533 = vmatprep.subr.bf16.mxu0 0
  %1534 = vmatpush1.bf16.msra.mxu0 0
  %1535 = vmatprep.subr.bf16.mxu0 0
  %1536 = vmatpush1.bf16.msra.mxu0 0
  %1537 = vmatprep.subr.bf16.mxu0 0
  %1538 = vmatpush1.bf16.msra.mxu0 0
  %1539 = vmatprep.subr.bf16.mxu0 0
  %1540 = vmatpush1.bf16.msra.mxu0 0
  %1541 = vmatprep.subr.bf16.mxu0 0
  %1542 = vmatpush1.bf16.msra.mxu0 0
  %1543 = vmatprep.subr.bf16.mxu0 0
  %1544 = vmatpush1.bf16.msra.mxu0 0
  %1545 = vmatprep.subr.bf16.mxu0 0
  %1546 = vmatpush1.bf16.msra.mxu0 0
  %1547 = vmatprep.subr.bf16.mxu0 0
  %1548 = vmatpush1.bf16.msra.mxu0 0
  %1549 = vmatprep.subr.bf16.mxu0 0
  %1550 = vmatpush1.bf16.msra.mxu0 0
  %1551 = vmatprep.subr.bf16.mxu0 0
  %1552 = vmatpush1.bf16.msra.mxu0 0
  %1553 = vmatprep.subr.bf16.mxu0 0
  %1554 = vmatpush1.bf16.msra.mxu0 0
  %1555 = vmatprep.subr.bf16.mxu0 0
  %1556 = vmatpush1.bf16.msra.mxu0 0
  %1557 = vmatprep.subr.bf16.mxu0 0
  %1558 = vmatpush1.bf16.msra.mxu0 0
  %1559 = vmatprep.mubr.bf16.mxu0 0
  %1560 = vmatmul.mubr.bf16.gmra.mrb[0].mxu0 %v1083
  %v1561 = vpop.f32.mrb[0].mxu0
  %v1562 = vadd.f32 %v775, %v1561
  %v1563 = vpop.f32.mrb[0].mxu0
  %v1564 = vadd.f32 %v777, %v1563
  %v1565 = vpop.f32.mrb[0].mxu0
  %v1566 = vadd.f32 %v779, %v1565
  %v1567 = vpop.f32.mrb[0].mxu0
  %v1568 = vadd.f32 %v781, %v1567
  %1569 = vdwg.mxu0
  %v1570 = vand.u32 %v259, %v292
  %v1573 = vand.u32 %v237, %v292
  %v1576 = vand.u32 %v238, %v292
  %v1579 = vand.u32 %v239, %v292
  %1581 = vmatprep.subr.bf16.mxu0 %v1573
  %1582 = vmatpush1.bf16.msra.mxu0 %v1570
  %1583 = vmatprep.subr.bf16.mxu0 0
  %1584 = vmatpush1.bf16.msra.mxu0 0
  %1585 = vmatprep.subr.bf16.mxu0 0
  %1586 = vmatpush1.bf16.msra.mxu0 0
  %1587 = vmatprep.subr.bf16.mxu0 0
  %1588 = vmatpush1.bf16.msra.mxu0 0
  %1589 = vmatprep.subr.bf16.mxu0 0
  %1590 = vmatpush1.bf16.msra.mxu0 0
  %1591 = vmatprep.subr.bf16.mxu0 0
  %1592 = vmatpush1.bf16.msra.mxu0 0
  %1593 = vmatprep.subr.bf16.mxu0 0
  %1594 = vmatpush1.bf16.msra.mxu0 0
  %1595 = vmatprep.subr.bf16.mxu0 0
  %1596 = vmatpush1.bf16.msra.mxu0 0
  %1597 = vmatprep.subr.bf16.mxu0 0
  %1598 = vmatpush1.bf16.msra.mxu0 0
  %1599 = vmatprep.subr.bf16.mxu0 0
  %1600 = vmatpush1.bf16.msra.mxu0 0
  %1601 = vmatprep.subr.bf16.mxu0 0
  %1602 = vmatpush1.bf16.msra.mxu0 0
  %1603 = vmatprep.subr.bf16.mxu0 0
  %1604 = vmatpush1.bf16.msra.mxu0 0
  %1605 = vmatprep.subr.bf16.mxu0 0
  %1606 = vmatpush1.bf16.msra.mxu0 0
  %1607 = vmatprep.subr.bf16.mxu0 0
  %1608 = vmatpush1.bf16.msra.mxu0 0
  %1609 = vmatprep.subr.bf16.mxu0 0
  %1610 = vmatpush1.bf16.msra.mxu0 0
  %1611 = vmatprep.subr.bf16.mxu0 0
  %1612 = vmatpush1.bf16.msra.mxu0 0
  %1613 = vmatprep.mubr.bf16.mxu0 0
  %1614 = vmatmul.mubr.bf16.gmra.mrb[0].mxu0 %v1083
  %v1615 = vpop.f32.mrb[0].mxu0
  %v1616 = vadd.f32 %v830, %v1615
  %v1617 = vpop.f32.mrb[0].mxu0
  %v1618 = vadd.f32 %v832, %v1617
  %v1619 = vpop.f32.mrb[0].mxu0
  %v1620 = vadd.f32 %v834, %v1619
  %v1621 = vpop.f32.mrb[0].mxu0
  %v1622 = vadd.f32 %v836, %v1621
  %1623 = vdwg.mxu0
  %1624 = vmatprep.subr.bf16.mxu0 %v1579
  %1625 = vmatpush1.bf16.msra.mxu0 %v1576
  %1626 = vmatprep.subr.bf16.mxu0 0
  %1627 = vmatpush1.bf16.msra.mxu0 0
  %1628 = vmatprep.subr.bf16.mxu0 0
  %1629 = vmatpush1.bf16.msra.mxu0 0
  %1630 = vmatprep.subr.bf16.mxu0 0
  %1631 = vmatpush1.bf16.msra.mxu0 0
  %1632 = vmatprep.subr.bf16.mxu0 0
  %1633 = vmatpush1.bf16.msra.mxu0 0
  %1634 = vmatprep.subr.bf16.mxu0 0
  %1635 = vmatpush1.bf16.msra.mxu0 0
  %1636 = vmatprep.subr.bf16.mxu0 0
  %1637 = vmatpush1.bf16.msra.mxu0 0
  %1638 = vmatprep.subr.bf16.mxu0 0
  %1639 = vmatpush1.bf16.msra.mxu0 0
  %1640 = vmatprep.subr.bf16.mxu0 0
  %1641 = vmatpush1.bf16.msra.mxu0 0
  %1642 = vmatprep.subr.bf16.mxu0 0
  %1643 = vmatpush1.bf16.msra.mxu0 0
  %1644 = vmatprep.subr.bf16.mxu0 0
  %1645 = vmatpush1.bf16.msra.mxu0 0
  %1646 = vmatprep.subr.bf16.mxu0 0
  %1647 = vmatpush1.bf16.msra.mxu0 0
  %1648 = vmatprep.subr.bf16.mxu0 0
  %1649 = vmatpush1.bf16.msra.mxu0 0
  %1650 = vmatprep.subr.bf16.mxu0 0
  %1651 = vmatpush1.bf16.msra.mxu0 0
  %1652 = vmatprep.subr.bf16.mxu0 0
  %1653 = vmatpush1.bf16.msra.mxu0 0
  %1654 = vmatprep.subr.bf16.mxu0 0
  %1655 = vmatpush1.bf16.msra.mxu0 0
  %1656 = vmatprep.mubr.bf16.mxu0 0
  %1657 = vmatmul.mubr.bf16.gmra.mrb[0].mxu0 %v1083
  %v1658 = vpop.f32.mrb[0].mxu0
  %v1659 = vadd.f32 %v873, %v1658
  %v1660 = vpop.f32.mrb[0].mxu0
  %v1661 = vadd.f32 %v875, %v1660
  %v1662 = vpop.f32.mrb[0].mxu0
  %v1663 = vadd.f32 %v877, %v1662
  %v1664 = vpop.f32.mrb[0].mxu0
  %v1665 = vadd.f32 %v879, %v1664
  %1666 = vdwg.mxu0
  %v1667 = vand.u32 %v261, %v292
  %v1670 = vand.u32 %v240, %v292
  %v1673 = vand.u32 %v241, %v292
  %v1676 = vand.u32 %v242, %v292
  %1678 = vmatprep.subr.bf16.mxu0 %v1670
  %1679 = vmatpush1.bf16.msra.mxu0 %v1667
  %1680 = vmatprep.subr.bf16.mxu0 0
  %1681 = vmatpush1.bf16.msra.mxu0 0
  %1682 = vmatprep.subr.bf16.mxu0 0
  %1683 = vmatpush1.bf16.msra.mxu0 0
  %1684 = vmatprep.subr.bf16.mxu0 0
  %1685 = vmatpush1.bf16.msra.mxu0 0
  %1686 = vmatprep.subr.bf16.mxu0 0
  %1687 = vmatpush1.bf16.msra.mxu0 0
  %1688 = vmatprep.subr.bf16.mxu0 0
  %1689 = vmatpush1.bf16.msra.mxu0 0
  %1690 = vmatprep.subr.bf16.mxu0 0
  %1691 = vmatpush1.bf16.msra.mxu0 0
  %1692 = vmatprep.subr.bf16.mxu0 0
  %1693 = vmatpush1.bf16.msra.mxu0 0
  %1694 = vmatprep.subr.bf16.mxu0 0
  %1695 = vmatpush1.bf16.msra.mxu0 0
  %1696 = vmatprep.subr.bf16.mxu0 0
  %1697 = vmatpush1.bf16.msra.mxu0 0
  %1698 = vmatprep.subr.bf16.mxu0 0
  %1699 = vmatpush1.bf16.msra.mxu0 0
  %1700 = vmatprep.subr.bf16.mxu0 0
  %1701 = vmatpush1.bf16.msra.mxu0 0
  %1702 = vmatprep.subr.bf16.mxu0 0
  %1703 = vmatpush1.bf16.msra.mxu0 0
  %1704 = vmatprep.subr.bf16.mxu0 0
  %1705 = vmatpush1.bf16.msra.mxu0 0
  %1706 = vmatprep.subr.bf16.mxu0 0
  %1707 = vmatpush1.bf16.msra.mxu0 0
  %1708 = vmatprep.subr.bf16.mxu0 0
  %1709 = vmatpush1.bf16.msra.mxu0 0
  %1710 = vmatprep.mubr.bf16.mxu0 0
  %1711 = vmatmul.mubr.bf16.gmra.mrb[0].mxu0 %v1083
  %v1712 = vpop.f32.mrb[0].mxu0
  %v1713 = vadd.f32 %v928, %v1712
  %v1714 = vpop.f32.mrb[0].mxu0
  %v1715 = vadd.f32 %v930, %v1714
  %v1716 = vpop.f32.mrb[0].mxu0
  %v1717 = vadd.f32 %v932, %v1716
  %v1718 = vpop.f32.mrb[0].mxu0
  %v1719 = vadd.f32 %v934, %v1718
  %1720 = vdwg.mxu0
  %1721 = vmatprep.subr.bf16.mxu0 %v1676
  %1722 = vmatpush1.bf16.msra.mxu0 %v1673
  %1723 = vmatprep.subr.bf16.mxu0 0
  %1724 = vmatpush1.bf16.msra.mxu0 0
  %1725 = vmatprep.subr.bf16.mxu0 0
  %1726 = vmatpush1.bf16.msra.mxu0 0
  %1727 = vmatprep.subr.bf16.mxu0 0
  %1728 = vmatpush1.bf16.msra.mxu0 0
  %1729 = vmatprep.subr.bf16.mxu0 0
  %1730 = vmatpush1.bf16.msra.mxu0 0
  %1731 = vmatprep.subr.bf16.mxu0 0
  %1732 = vmatpush1.bf16.msra.mxu0 0
  %1733 = vmatprep.subr.bf16.mxu0 0
  %1734 = vmatpush1.bf16.msra.mxu0 0
  %1735 = vmatprep.subr.bf16.mxu0 0
  %1736 = vmatpush1.bf16.msra.mxu0 0
  %1737 = vmatprep.subr.bf16.mxu0 0
  %1738 = vmatpush1.bf16.msra.mxu0 0
  %1739 = vmatprep.subr.bf16.mxu0 0
  %1740 = vmatpush1.bf16.msra.mxu0 0
  %1741 = vmatprep.subr.bf16.mxu0 0
  %1742 = vmatpush1.bf16.msra.mxu0 0
  %1743 = vmatprep.subr.bf16.mxu0 0
  %1744 = vmatpush1.bf16.msra.mxu0 0
  %1745 = vmatprep.subr.bf16.mxu0 0
  %1746 = vmatpush1.bf16.msra.mxu0 0
  %1747 = vmatprep.subr.bf16.mxu0 0
  %1748 = vmatpush1.bf16.msra.mxu0 0
  %1749 = vmatprep.subr.bf16.mxu0 0
  %1750 = vmatpush1.bf16.msra.mxu0 0
  %1751 = vmatprep.subr.bf16.mxu0 0
  %1752 = vmatpush1.bf16.msra.mxu0 0
  %1753 = vmatprep.mubr.bf16.mxu0 0
  %1754 = vmatmul.mubr.bf16.gmra.mrb[0].mxu0 %v1083
  %v1755 = vpop.f32.mrb[0].mxu0
  %v1756 = vadd.f32 %v971, %v1755
  %v1757 = vpop.f32.mrb[0].mxu0
  %v1758 = vadd.f32 %v973, %v1757
  %v1759 = vpop.f32.mrb[0].mxu0
  %v1760 = vadd.f32 %v975, %v1759
  %v1761 = vpop.f32.mrb[0].mxu0
  %v1762 = vadd.f32 %v977, %v1761
  %1763 = vdwg.mxu0
  %v1764 = vand.u32 %v263, %v292
  %v1767 = vand.u32 %v243, %v292
  %v1770 = vand.u32 %v244, %v292
  %v1773 = vand.u32 %v245, %v292
  %1775 = vmatprep.subr.bf16.mxu0 %v1767
  %1776 = vmatpush1.bf16.msra.mxu0 %v1764
  %1777 = vmatprep.subr.bf16.mxu0 0
  %1778 = vmatpush1.bf16.msra.mxu0 0
  %1779 = vmatprep.subr.bf16.mxu0 0
  %1780 = vmatpush1.bf16.msra.mxu0 0
  %1781 = vmatprep.subr.bf16.mxu0 0
  %1782 = vmatpush1.bf16.msra.mxu0 0
  %1783 = vmatprep.subr.bf16.mxu0 0
  %1784 = vmatpush1.bf16.msra.mxu0 0
  %1785 = vmatprep.subr.bf16.mxu0 0
  %1786 = vmatpush1.bf16.msra.mxu0 0
  %1787 = vmatprep.subr.bf16.mxu0 0
  %1788 = vmatpush1.bf16.msra.mxu0 0
  %1789 = vmatprep.subr.bf16.mxu0 0
  %1790 = vmatpush1.bf16.msra.mxu0 0
  %1791 = vmatprep.subr.bf16.mxu0 0
  %1792 = vmatpush1.bf16.msra.mxu0 0
  %1793 = vmatprep.subr.bf16.mxu0 0
  %1794 = vmatpush1.bf16.msra.mxu0 0
  %1795 = vmatprep.subr.bf16.mxu0 0
  %1796 = vmatpush1.bf16.msra.mxu0 0
  %1797 = vmatprep.subr.bf16.mxu0 0
  %1798 = vmatpush1.bf16.msra.mxu0 0
  %1799 = vmatprep.subr.bf16.mxu0 0
  %1800 = vmatpush1.bf16.msra.mxu0 0
  %1801 = vmatprep.subr.bf16.mxu0 0
  %1802 = vmatpush1.bf16.msra.mxu0 0
  %1803 = vmatprep.subr.bf16.mxu0 0
  %1804 = vmatpush1.bf16.msra.mxu0 0
  %1805 = vmatprep.subr.bf16.mxu0 0
  %1806 = vmatpush1.bf16.msra.mxu0 0
  %1807 = vmatprep.mubr.bf16.mxu0 0
  %1808 = vmatmul.mubr.bf16.gmra.mrb[0].mxu0 %v1083
  %v1809 = vpop.f32.mrb[0].mxu0
  %v1810 = vadd.f32 %v1026, %v1809
  %v1811 = vpop.f32.mrb[0].mxu0
  %v1812 = vadd.f32 %v1028, %v1811
  %v1813 = vpop.f32.mrb[0].mxu0
  %v1814 = vadd.f32 %v1030, %v1813
  %v1815 = vpop.f32.mrb[0].mxu0
  %v1816 = vadd.f32 %v1032, %v1815
  %1817 = vdwg.mxu0
  %1818 = vmatprep.subr.bf16.mxu0 %v1773
  %1819 = vmatpush1.bf16.msra.mxu0 %v1770
  %1820 = vmatprep.subr.bf16.mxu0 0
  %1821 = vmatpush1.bf16.msra.mxu0 0
  %1822 = vmatprep.subr.bf16.mxu0 0
  %1823 = vmatpush1.bf16.msra.mxu0 0
  %1824 = vmatprep.subr.bf16.mxu0 0
  %1825 = vmatpush1.bf16.msra.mxu0 0
  %1826 = vmatprep.subr.bf16.mxu0 0
  %1827 = vmatpush1.bf16.msra.mxu0 0
  %1828 = vmatprep.subr.bf16.mxu0 0
  %1829 = vmatpush1.bf16.msra.mxu0 0
  %1830 = vmatprep.subr.bf16.mxu0 0
  %1831 = vmatpush1.bf16.msra.mxu0 0
  %1832 = vmatprep.subr.bf16.mxu0 0
  %1833 = vmatpush1.bf16.msra.mxu0 0
  %1834 = vmatprep.subr.bf16.mxu0 0
  %1835 = vmatpush1.bf16.msra.mxu0 0
  %1836 = vmatprep.subr.bf16.mxu0 0
  %1837 = vmatpush1.bf16.msra.mxu0 0
  %1838 = vmatprep.subr.bf16.mxu0 0
  %1839 = vmatpush1.bf16.msra.mxu0 0
  %1840 = vmatprep.subr.bf16.mxu0 0
  %1841 = vmatpush1.bf16.msra.mxu0 0
  %1842 = vmatprep.subr.bf16.mxu0 0
  %1843 = vmatpush1.bf16.msra.mxu0 0
  %1844 = vmatprep.subr.bf16.mxu0 0
  %1845 = vmatpush1.bf16.msra.mxu0 0
  %1846 = vmatprep.subr.bf16.mxu0 0
  %1847 = vmatpush1.bf16.msra.mxu0 0
  %1848 = vmatprep.subr.bf16.mxu0 0
  %1849 = vmatpush1.bf16.msra.mxu0 0
  %1850 = vmatprep.mubr.bf16.mxu0 0
  %1851 = vmatmul.mubr.bf16.gmra.mrb[0].mxu0 %v1083
  %v1852 = vpop.f32.mrb[0].mxu0
  %v1853 = vadd.f32 %v1069, %v1852
  %v1854 = vpop.f32.mrb[0].mxu0
  %v1855 = vadd.f32 %v1071, %v1854
  %v1856 = vpop.f32.mrb[0].mxu0
  %v1857 = vadd.f32 %v1073, %v1856
  %v1858 = vpop.f32.mrb[0].mxu0
  %v1859 = vadd.f32 %v1075, %v1858
  %1860 = vdwg.mxu0
  %v1863 = vunpack.c.l.b16 %v25
  %v1864 = vunpack.c.l.b16 %v26
  %v1865 = vpack.c.b16 %v1864, %v1863
  %1867 = vrot.lane.b32.xlu0 %v93, 127
  %v1868 = vpop.permute.xlu0 %1867
  %1869 = vrot.lane.b32.xlu0 %v94, 127
  %v1870 = vpop.permute.xlu0 %1869
  %1871 = vrot.lane.b32.xlu0 %v95, 127
  %v1872 = vpop.permute.xlu0 %1871
  %1873 = vrot.lane.b32.xlu0 %v96, 127
  %v1874 = vpop.permute.xlu0 %1873
  %1875 = vrot.lane.b32.xlu0 %v272, 127
  %v1876 = vpop.permute.xlu0 %1875
  %vm1877 = vcmask 1039360
  %v1878 = vsel %vm1877, %v1868, %v1870
  %v1879 = vsel %vm1877, %v1870, %v1872
  %v1880 = vsel %vm1877, %v1872, %v1874
  %v1881 = vsel %vm1877, %v1874, %v1876
  %v1883 = vsel %vm285, %v1865, 0
  %v1886 = vand.u32 %v1878, %v292
  %v1889 = vand.u32 %v1879, %v292
  %v1892 = vand.u32 %v1880, %v292
  %v1895 = vand.u32 %v1881, %v292
  %1897 = vmatprep.subr.bf16.mxu0 %v1889
  %1898 = vmatpush1.bf16.msra.mxu0 %v1886
  %1899 = vmatprep.subr.bf16.mxu0 0
  %1900 = vmatpush1.bf16.msra.mxu0 0
  %1901 = vmatprep.subr.bf16.mxu0 0
  %1902 = vmatpush1.bf16.msra.mxu0 0
  %1903 = vmatprep.subr.bf16.mxu0 0
  %1904 = vmatpush1.bf16.msra.mxu0 0
  %1905 = vmatprep.subr.bf16.mxu0 0
  %1906 = vmatpush1.bf16.msra.mxu0 0
  %1907 = vmatprep.subr.bf16.mxu0 0
  %1908 = vmatpush1.bf16.msra.mxu0 0
  %1909 = vmatprep.subr.bf16.mxu0 0
  %1910 = vmatpush1.bf16.msra.mxu0 0
  %1911 = vmatprep.subr.bf16.mxu0 0
  %1912 = vmatpush1.bf16.msra.mxu0 0
  %1913 = vmatprep.subr.bf16.mxu0 0
  %1914 = vmatpush1.bf16.msra.mxu0 0
  %1915 = vmatprep.subr.bf16.mxu0 0
  %1916 = vmatpush1.bf16.msra.mxu0 0
  %1917 = vmatprep.subr.bf16.mxu0 0
  %1918 = vmatpush1.bf16.msra.mxu0 0
  %1919 = vmatprep.subr.bf16.mxu0 0
  %1920 = vmatpush1.bf16.msra.mxu0 0
  %1921 = vmatprep.subr.bf16.mxu0 0
  %1922 = vmatpush1.bf16.msra.mxu0 0
  %1923 = vmatprep.subr.bf16.mxu0 0
  %1924 = vmatpush1.bf16.msra.mxu0 0
  %1925 = vmatprep.subr.bf16.mxu0 0
  %1926 = vmatpush1.bf16.msra.mxu0 0
  %1927 = vmatprep.subr.bf16.mxu0 0
  %1928 = vmatpush1.bf16.msra.mxu0 0
  %1929 = vmatprep.mubr.bf16.mxu0 0
  %1930 = vmatmul.mubr.bf16.gmra.mrb[0].mxu0 %v1883
  %v1931 = vpop.f32.mrb[0].mxu0
  %v1932 = vadd.f32 0.0, %v1931
  %v1933 = vpop.f32.mrb[0].mxu0
  %v1934 = vadd.f32 0.0, %v1933
  %v1935 = vpop.f32.mrb[0].mxu0
  %v1936 = vadd.f32 0.0, %v1935
  %v1937 = vpop.f32.mrb[0].mxu0
  %v1938 = vadd.f32 0.0, %v1937
  %1939 = vdwg.mxu0
  %1940 = vmatprep.subr.bf16.mxu0 %v1895
  %1941 = vmatpush1.bf16.msra.mxu0 %v1892
  %1942 = vmatprep.subr.bf16.mxu0 0
  %1943 = vmatpush1.bf16.msra.mxu0 0
  %1944 = vmatprep.subr.bf16.mxu0 0
  %1945 = vmatpush1.bf16.msra.mxu0 0
  %1946 = vmatprep.subr.bf16.mxu0 0
  %1947 = vmatpush1.bf16.msra.mxu0 0
  %1948 = vmatprep.subr.bf16.mxu0 0
  %1949 = vmatpush1.bf16.msra.mxu0 0
  %1950 = vmatprep.subr.bf16.mxu0 0
  %1951 = vmatpush1.bf16.msra.mxu0 0
  %1952 = vmatprep.subr.bf16.mxu0 0
  %1953 = vmatpush1.bf16.msra.mxu0 0
  %1954 = vmatprep.subr.bf16.mxu0 0
  %1955 = vmatpush1.bf16.msra.mxu0 0
  %1956 = vmatprep.subr.bf16.mxu0 0
  %1957 = vmatpush1.bf16.msra.mxu0 0
  %1958 = vmatprep.subr.bf16.mxu0 0
  %1959 = vmatpush1.bf16.msra.mxu0 0
  %1960 = vmatprep.subr.bf16.mxu0 0
  %1961 = vmatpush1.bf16.msra.mxu0 0
  %1962 = vmatprep.subr.bf16.mxu0 0
  %1963 = vmatpush1.bf16.msra.mxu0 0
  %1964 = vmatprep.subr.bf16.mxu0 0
  %1965 = vmatpush1.bf16.msra.mxu0 0
  %1966 = vmatprep.subr.bf16.mxu0 0
  %1967 = vmatpush1.bf16.msra.mxu0 0
  %1968 = vmatprep.subr.bf16.mxu0 0
  %1969 = vmatpush1.bf16.msra.mxu0 0
  %1970 = vmatprep.subr.bf16.mxu0 0
  %1971 = vmatpush1.bf16.msra.mxu0 0
  %1972 = vmatprep.mubr.bf16.mxu0 0
  %1973 = vmatmul.mubr.bf16.gmra.mrb[0].mxu0 %v1883
  %v1974 = vpop.f32.mrb[0].mxu0
  %v1975 = vadd.f32 0.0, %v1974
  %v1976 = vpop.f32.mrb[0].mxu0
  %v1977 = vadd.f32 0.0, %v1976
  %v1978 = vpop.f32.mrb[0].mxu0
  %v1979 = vadd.f32 0.0, %v1978
  %v1980 = vpop.f32.mrb[0].mxu0
  %v1981 = vadd.f32 0.0, %v1980
  %1982 = vdwg.mxu0
  %1984 = vrot.lane.b32.xlu0 %v97, 127
  %v1985 = vpop.permute.xlu0 %1984
  %1986 = vrot.lane.b32.xlu0 %v98, 127
  %v1987 = vpop.permute.xlu0 %1986
  %1988 = vrot.lane.b32.xlu0 %v99, 127
  %v1989 = vpop.permute.xlu0 %1988
  %1990 = vrot.lane.b32.xlu0 %v100, 127
  %v1991 = vpop.permute.xlu0 %1990
  %1992 = vrot.lane.b32.xlu0 %v273, 127
  %v1993 = vpop.permute.xlu0 %1992
  %v1994 = vsel %vm1877, %v1985, %v1987
  %v1995 = vsel %vm1877, %v1987, %v1989
  %v1996 = vsel %vm1877, %v1989, %v1991
  %v1997 = vsel %vm1877, %v1991, %v1993
  %v1999 = vand.u32 %v1994, %v292
  %v2002 = vand.u32 %v1995, %v292
  %v2005 = vand.u32 %v1996, %v292
  %v2008 = vand.u32 %v1997, %v292
  %2010 = vmatprep.subr.bf16.mxu0 %v2002
  %2011 = vmatpush1.bf16.msra.mxu0 %v1999
  %2012 = vmatprep.subr.bf16.mxu0 0
  %2013 = vmatpush1.bf16.msra.mxu0 0
  %2014 = vmatprep.subr.bf16.mxu0 0
  %2015 = vmatpush1.bf16.msra.mxu0 0
  %2016 = vmatprep.subr.bf16.mxu0 0
  %2017 = vmatpush1.bf16.msra.mxu0 0
  %2018 = vmatprep.subr.bf16.mxu0 0
  %2019 = vmatpush1.bf16.msra.mxu0 0
  %2020 = vmatprep.subr.bf16.mxu0 0
  %2021 = vmatpush1.bf16.msra.mxu0 0
  %2022 = vmatprep.subr.bf16.mxu0 0
  %2023 = vmatpush1.bf16.msra.mxu0 0
  %2024 = vmatprep.subr.bf16.mxu0 0
  %2025 = vmatpush1.bf16.msra.mxu0 0
  %2026 = vmatprep.subr.bf16.mxu0 0
  %2027 = vmatpush1.bf16.msra.mxu0 0
  %2028 = vmatprep.subr.bf16.mxu0 0
  %2029 = vmatpush1.bf16.msra.mxu0 0
  %2030 = vmatprep.subr.bf16.mxu0 0
  %2031 = vmatpush1.bf16.msra.mxu0 0
  %2032 = vmatprep.subr.bf16.mxu0 0
  %2033 = vmatpush1.bf16.msra.mxu0 0
  %2034 = vmatprep.subr.bf16.mxu0 0
  %2035 = vmatpush1.bf16.msra.mxu0 0
  %2036 = vmatprep.subr.bf16.mxu0 0
  %2037 = vmatpush1.bf16.msra.mxu0 0
  %2038 = vmatprep.subr.bf16.mxu0 0
  %2039 = vmatpush1.bf16.msra.mxu0 0
  %2040 = vmatprep.subr.bf16.mxu0 0
  %2041 = vmatpush1.bf16.msra.mxu0 0
  %2042 = vmatprep.mubr.bf16.mxu0 0
  %2043 = vmatmul.mubr.bf16.gmra.mrb[0].mxu0 %v1883
  %v2044 = vpop.f32.mrb[0].mxu0
  %v2045 = vadd.f32 0.0, %v2044
  %v2046 = vpop.f32.mrb[0].mxu0
  %v2047 = vadd.f32 0.0, %v2046
  %v2048 = vpop.f32.mrb[0].mxu0
  %v2049 = vadd.f32 0.0, %v2048
  %v2050 = vpop.f32.mrb[0].mxu0
  %v2051 = vadd.f32 0.0, %v2050
  %2052 = vdwg.mxu0
  %2053 = vmatprep.subr.bf16.mxu0 %v2008
  %2054 = vmatpush1.bf16.msra.mxu0 %v2005
  %2055 = vmatprep.subr.bf16.mxu0 0
  %2056 = vmatpush1.bf16.msra.mxu0 0
  %2057 = vmatprep.subr.bf16.mxu0 0
  %2058 = vmatpush1.bf16.msra.mxu0 0
  %2059 = vmatprep.subr.bf16.mxu0 0
  %2060 = vmatpush1.bf16.msra.mxu0 0
  %2061 = vmatprep.subr.bf16.mxu0 0
  %2062 = vmatpush1.bf16.msra.mxu0 0
  %2063 = vmatprep.subr.bf16.mxu0 0
  %2064 = vmatpush1.bf16.msra.mxu0 0
  %2065 = vmatprep.subr.bf16.mxu0 0
  %2066 = vmatpush1.bf16.msra.mxu0 0
  %2067 = vmatprep.subr.bf16.mxu0 0
  %2068 = vmatpush1.bf16.msra.mxu0 0
  %2069 = vmatprep.subr.bf16.mxu0 0
  %2070 = vmatpush1.bf16.msra.mxu0 0
  %2071 = vmatprep.subr.bf16.mxu0 0
  %2072 = vmatpush1.bf16.msra.mxu0 0
  %2073 = vmatprep.subr.bf16.mxu0 0
  %2074 = vmatpush1.bf16.msra.mxu0 0
  %2075 = vmatprep.subr.bf16.mxu0 0
  %2076 = vmatpush1.bf16.msra.mxu0 0
  %2077 = vmatprep.subr.bf16.mxu0 0
  %2078 = vmatpush1.bf16.msra.mxu0 0
  %2079 = vmatprep.subr.bf16.mxu0 0
  %2080 = vmatpush1.bf16.msra.mxu0 0
  %2081 = vmatprep.subr.bf16.mxu0 0
  %2082 = vmatpush1.bf16.msra.mxu0 0
  %2083 = vmatprep.subr.bf16.mxu0 0
  %2084 = vmatpush1.bf16.msra.mxu0 0
  %2085 = vmatprep.mubr.bf16.mxu0 0
  %2086 = vmatmul.mubr.bf16.gmra.mrb[0].mxu0 %v1883
  %v2087 = vpop.f32.mrb[0].mxu0
  %v2088 = vadd.f32 0.0, %v2087
  %v2089 = vpop.f32.mrb[0].mxu0
  %v2090 = vadd.f32 0.0, %v2089
  %v2091 = vpop.f32.mrb[0].mxu0
  %v2092 = vadd.f32 0.0, %v2091
  %v2093 = vpop.f32.mrb[0].mxu0
  %v2094 = vadd.f32 0.0, %v2093
  %2095 = vdwg.mxu0
  %2097 = vrot.lane.b32.xlu0 %v101, 127
  %v2098 = vpop.permute.xlu0 %2097
  %2099 = vrot.lane.b32.xlu0 %v102, 127
  %v2100 = vpop.permute.xlu0 %2099
  %2101 = vrot.lane.b32.xlu0 %v103, 127
  %v2102 = vpop.permute.xlu0 %2101
  %2103 = vrot.lane.b32.xlu0 %v104, 127
  %v2104 = vpop.permute.xlu0 %2103
  %2105 = vrot.lane.b32.xlu0 %v274, 127
  %v2106 = vpop.permute.xlu0 %2105
  %v2107 = vsel %vm1877, %v2098, %v2100
  %v2108 = vsel %vm1877, %v2100, %v2102
  %v2109 = vsel %vm1877, %v2102, %v2104
  %v2110 = vsel %vm1877, %v2104, %v2106
  %v2112 = vand.u32 %v2107, %v292
  %v2115 = vand.u32 %v2108, %v292
  %v2118 = vand.u32 %v2109, %v292
  %v2121 = vand.u32 %v2110, %v292
  %2123 = vmatprep.subr.bf16.mxu0 %v2115
  %2124 = vmatpush1.bf16.msra.mxu0 %v2112
  %2125 = vmatprep.subr.bf16.mxu0 0
  %2126 = vmatpush1.bf16.msra.mxu0 0
  %2127 = vmatprep.subr.bf16.mxu0 0
  %2128 = vmatpush1.bf16.msra.mxu0 0
  %2129 = vmatprep.subr.bf16.mxu0 0
  %2130 = vmatpush1.bf16.msra.mxu0 0
  %2131 = vmatprep.subr.bf16.mxu0 0
  %2132 = vmatpush1.bf16.msra.mxu0 0
  %2133 = vmatprep.subr.bf16.mxu0 0
  %2134 = vmatpush1.bf16.msra.mxu0 0
  %2135 = vmatprep.subr.bf16.mxu0 0
  %2136 = vmatpush1.bf16.msra.mxu0 0
  %2137 = vmatprep.subr.bf16.mxu0 0
  %2138 = vmatpush1.bf16.msra.mxu0 0
  %2139 = vmatprep.subr.bf16.mxu0 0
  %2140 = vmatpush1.bf16.msra.mxu0 0
  %2141 = vmatprep.subr.bf16.mxu0 0
  %2142 = vmatpush1.bf16.msra.mxu0 0
  %2143 = vmatprep.subr.bf16.mxu0 0
  %2144 = vmatpush1.bf16.msra.mxu0 0
  %2145 = vmatprep.subr.bf16.mxu0 0
  %2146 = vmatpush1.bf16.msra.mxu0 0
  %2147 = vmatprep.subr.bf16.mxu0 0
  %2148 = vmatpush1.bf16.msra.mxu0 0
  %2149 = vmatprep.subr.bf16.mxu0 0
  %2150 = vmatpush1.bf16.msra.mxu0 0
  %2151 = vmatprep.subr.bf16.mxu0 0
  %2152 = vmatpush1.bf16.msra.mxu0 0
  %2153 = vmatprep.subr.bf16.mxu0 0
  %2154 = vmatpush1.bf16.msra.mxu0 0
  %2155 = vmatprep.mubr.bf16.mxu0 0
  %2156 = vmatmul.mubr.bf16.gmra.mrb[0].mxu0 %v1883
  %v2157 = vpop.f32.mrb[0].mxu0
  %v2158 = vadd.f32 0.0, %v2157
  %v2159 = vpop.f32.mrb[0].mxu0
  %v2160 = vadd.f32 0.0, %v2159
  %v2161 = vpop.f32.mrb[0].mxu0
  %v2162 = vadd.f32 0.0, %v2161
  %v2163 = vpop.f32.mrb[0].mxu0
  %v2164 = vadd.f32 0.0, %v2163
  %2165 = vdwg.mxu0
  %2166 = vmatprep.subr.bf16.mxu0 %v2121
  %2167 = vmatpush1.bf16.msra.mxu0 %v2118
  %2168 = vmatprep.subr.bf16.mxu0 0
  %2169 = vmatpush1.bf16.msra.mxu0 0
  %2170 = vmatprep.subr.bf16.mxu0 0
  %2171 = vmatpush1.bf16.msra.mxu0 0
  %2172 = vmatprep.subr.bf16.mxu0 0
  %2173 = vmatpush1.bf16.msra.mxu0 0
  %2174 = vmatprep.subr.bf16.mxu0 0
  %2175 = vmatpush1.bf16.msra.mxu0 0
  %2176 = vmatprep.subr.bf16.mxu0 0
  %2177 = vmatpush1.bf16.msra.mxu0 0
  %2178 = vmatprep.subr.bf16.mxu0 0
  %2179 = vmatpush1.bf16.msra.mxu0 0
  %2180 = vmatprep.subr.bf16.mxu0 0
  %2181 = vmatpush1.bf16.msra.mxu0 0
  %2182 = vmatprep.subr.bf16.mxu0 0
  %2183 = vmatpush1.bf16.msra.mxu0 0
  %2184 = vmatprep.subr.bf16.mxu0 0
  %2185 = vmatpush1.bf16.msra.mxu0 0
  %2186 = vmatprep.subr.bf16.mxu0 0
  %2187 = vmatpush1.bf16.msra.mxu0 0
  %2188 = vmatprep.subr.bf16.mxu0 0
  %2189 = vmatpush1.bf16.msra.mxu0 0
  %2190 = vmatprep.subr.bf16.mxu0 0
  %2191 = vmatpush1.bf16.msra.mxu0 0
  %2192 = vmatprep.subr.bf16.mxu0 0
  %2193 = vmatpush1.bf16.msra.mxu0 0
  %2194 = vmatprep.subr.bf16.mxu0 0
  %2195 = vmatpush1.bf16.msra.mxu0 0
  %2196 = vmatprep.subr.bf16.mxu0 0
  %2197 = vmatpush1.bf16.msra.mxu0 0
  %2198 = vmatprep.mubr.bf16.mxu0 0
  %2199 = vmatmul.mubr.bf16.gmra.mrb[0].mxu0 %v1883
  %v2200 = vpop.f32.mrb[0].mxu0
  %v2201 = vadd.f32 0.0, %v2200
  %v2202 = vpop.f32.mrb[0].mxu0
  %v2203 = vadd.f32 0.0, %v2202
  %v2204 = vpop.f32.mrb[0].mxu0
  %v2205 = vadd.f32 0.0, %v2204
  %v2206 = vpop.f32.mrb[0].mxu0
  %v2207 = vadd.f32 0.0, %v2206
  %2208 = vdwg.mxu0
  %2210 = vrot.lane.b32.xlu0 %v105, 127
  %v2211 = vpop.permute.xlu0 %2210
  %2212 = vrot.lane.b32.xlu0 %v106, 127
  %v2213 = vpop.permute.xlu0 %2212
  %2214 = vrot.lane.b32.xlu0 %v107, 127
  %v2215 = vpop.permute.xlu0 %2214
  %2216 = vrot.lane.b32.xlu0 %v108, 127
  %v2217 = vpop.permute.xlu0 %2216
  %2218 = vrot.lane.b32.xlu0 %v275, 127
  %v2219 = vpop.permute.xlu0 %2218
  %v2220 = vsel %vm1877, %v2211, %v2213
  %v2221 = vsel %vm1877, %v2213, %v2215
  %v2222 = vsel %vm1877, %v2215, %v2217
  %v2223 = vsel %vm1877, %v2217, %v2219
  %v2225 = vand.u32 %v2220, %v292
  %v2228 = vand.u32 %v2221, %v292
  %v2231 = vand.u32 %v2222, %v292
  %v2234 = vand.u32 %v2223, %v292
  %2236 = vmatprep.subr.bf16.mxu0 %v2228
  %2237 = vmatpush1.bf16.msra.mxu0 %v2225
  %2238 = vmatprep.subr.bf16.mxu0 0
  %2239 = vmatpush1.bf16.msra.mxu0 0
  %2240 = vmatprep.subr.bf16.mxu0 0
  %2241 = vmatpush1.bf16.msra.mxu0 0
  %2242 = vmatprep.subr.bf16.mxu0 0
  %2243 = vmatpush1.bf16.msra.mxu0 0
  %2244 = vmatprep.subr.bf16.mxu0 0
  %2245 = vmatpush1.bf16.msra.mxu0 0
  %2246 = vmatprep.subr.bf16.mxu0 0
  %2247 = vmatpush1.bf16.msra.mxu0 0
  %2248 = vmatprep.subr.bf16.mxu0 0
  %2249 = vmatpush1.bf16.msra.mxu0 0
  %2250 = vmatprep.subr.bf16.mxu0 0
  %2251 = vmatpush1.bf16.msra.mxu0 0
  %2252 = vmatprep.subr.bf16.mxu0 0
  %2253 = vmatpush1.bf16.msra.mxu0 0
  %2254 = vmatprep.subr.bf16.mxu0 0
  %2255 = vmatpush1.bf16.msra.mxu0 0
  %2256 = vmatprep.subr.bf16.mxu0 0
  %2257 = vmatpush1.bf16.msra.mxu0 0
  %2258 = vmatprep.subr.bf16.mxu0 0
  %2259 = vmatpush1.bf16.msra.mxu0 0
  %2260 = vmatprep.subr.bf16.mxu0 0
  %2261 = vmatpush1.bf16.msra.mxu0 0
  %2262 = vmatprep.subr.bf16.mxu0 0
  %2263 = vmatpush1.bf16.msra.mxu0 0
  %2264 = vmatprep.subr.bf16.mxu0 0
  %2265 = vmatpush1.bf16.msra.mxu0 0
  %2266 = vmatprep.subr.bf16.mxu0 0
  %2267 = vmatpush1.bf16.msra.mxu0 0
  %2268 = vmatprep.mubr.bf16.mxu0 0
  %2269 = vmatmul.mubr.bf16.gmra.mrb[0].mxu0 %v1883
  %v2270 = vpop.f32.mrb[0].mxu0
  %v2271 = vadd.f32 0.0, %v2270
  %v2272 = vpop.f32.mrb[0].mxu0
  %v2273 = vadd.f32 0.0, %v2272
  %v2274 = vpop.f32.mrb[0].mxu0
  %v2275 = vadd.f32 0.0, %v2274
  %v2276 = vpop.f32.mrb[0].mxu0
  %v2277 = vadd.f32 0.0, %v2276
  %2278 = vdwg.mxu0
  %2279 = vmatprep.subr.bf16.mxu0 %v2234
  %2280 = vmatpush1.bf16.msra.mxu0 %v2231
  %2281 = vmatprep.subr.bf16.mxu0 0
  %2282 = vmatpush1.bf16.msra.mxu0 0
  %2283 = vmatprep.subr.bf16.mxu0 0
  %2284 = vmatpush1.bf16.msra.mxu0 0
  %2285 = vmatprep.subr.bf16.mxu0 0
  %2286 = vmatpush1.bf16.msra.mxu0 0
  %2287 = vmatprep.subr.bf16.mxu0 0
  %2288 = vmatpush1.bf16.msra.mxu0 0
  %2289 = vmatprep.subr.bf16.mxu0 0
  %2290 = vmatpush1.bf16.msra.mxu0 0
  %2291 = vmatprep.subr.bf16.mxu0 0
  %2292 = vmatpush1.bf16.msra.mxu0 0
  %2293 = vmatprep.subr.bf16.mxu0 0
  %2294 = vmatpush1.bf16.msra.mxu0 0
  %2295 = vmatprep.subr.bf16.mxu0 0
  %2296 = vmatpush1.bf16.msra.mxu0 0
  %2297 = vmatprep.subr.bf16.mxu0 0
  %2298 = vmatpush1.bf16.msra.mxu0 0
  %2299 = vmatprep.subr.bf16.mxu0 0
  %2300 = vmatpush1.bf16.msra.mxu0 0
  %2301 = vmatprep.subr.bf16.mxu0 0
  %2302 = vmatpush1.bf16.msra.mxu0 0
  %2303 = vmatprep.subr.bf16.mxu0 0
  %2304 = vmatpush1.bf16.msra.mxu0 0
  %2305 = vmatprep.subr.bf16.mxu0 0
  %2306 = vmatpush1.bf16.msra.mxu0 0
  %2307 = vmatprep.subr.bf16.mxu0 0
  %2308 = vmatpush1.bf16.msra.mxu0 0
  %2309 = vmatprep.subr.bf16.mxu0 0
  %2310 = vmatpush1.bf16.msra.mxu0 0
  %2311 = vmatprep.mubr.bf16.mxu0 0
  %2312 = vmatmul.mubr.bf16.gmra.mrb[0].mxu0 %v1883
  %v2313 = vpop.f32.mrb[0].mxu0
  %v2314 = vadd.f32 0.0, %v2313
  %v2315 = vpop.f32.mrb[0].mxu0
  %v2316 = vadd.f32 0.0, %v2315
  %v2317 = vpop.f32.mrb[0].mxu0
  %v2318 = vadd.f32 0.0, %v2317
  %v2319 = vpop.f32.mrb[0].mxu0
  %v2320 = vadd.f32 0.0, %v2319
  %2321 = vdwg.mxu0
  %2323 = vrot.lane.b32.xlu0 %v109, 127
  %v2324 = vpop.permute.xlu0 %2323
  %2325 = vrot.lane.b32.xlu0 %v110, 127
  %v2326 = vpop.permute.xlu0 %2325
  %2327 = vrot.lane.b32.xlu0 %v111, 127
  %v2328 = vpop.permute.xlu0 %2327
  %2329 = vrot.lane.b32.xlu0 %v112, 127
  %v2330 = vpop.permute.xlu0 %2329
  %2331 = vrot.lane.b32.xlu0 %v276, 127
  %v2332 = vpop.permute.xlu0 %2331
  %v2333 = vsel %vm1877, %v2324, %v2326
  %v2334 = vsel %vm1877, %v2326, %v2328
  %v2335 = vsel %vm1877, %v2328, %v2330
  %v2336 = vsel %vm1877, %v2330, %v2332
  %v2338 = vand.u32 %v2333, %v292
  %v2341 = vand.u32 %v2334, %v292
  %v2344 = vand.u32 %v2335, %v292
  %v2347 = vand.u32 %v2336, %v292
  %2349 = vmatprep.subr.bf16.mxu0 %v2341
  %2350 = vmatpush1.bf16.msra.mxu0 %v2338
  %2351 = vmatprep.subr.bf16.mxu0 0
  %2352 = vmatpush1.bf16.msra.mxu0 0
  %2353 = vmatprep.subr.bf16.mxu0 0
  %2354 = vmatpush1.bf16.msra.mxu0 0
  %2355 = vmatprep.subr.bf16.mxu0 0
  %2356 = vmatpush1.bf16.msra.mxu0 0
  %2357 = vmatprep.subr.bf16.mxu0 0
  %2358 = vmatpush1.bf16.msra.mxu0 0
  %2359 = vmatprep.subr.bf16.mxu0 0
  %2360 = vmatpush1.bf16.msra.mxu0 0
  %2361 = vmatprep.subr.bf16.mxu0 0
  %2362 = vmatpush1.bf16.msra.mxu0 0
  %2363 = vmatprep.subr.bf16.mxu0 0
  %2364 = vmatpush1.bf16.msra.mxu0 0
  %2365 = vmatprep.subr.bf16.mxu0 0
  %2366 = vmatpush1.bf16.msra.mxu0 0
  %2367 = vmatprep.subr.bf16.mxu0 0
  %2368 = vmatpush1.bf16.msra.mxu0 0
  %2369 = vmatprep.subr.bf16.mxu0 0
  %2370 = vmatpush1.bf16.msra.mxu0 0
  %2371 = vmatprep.subr.bf16.mxu0 0
  %2372 = vmatpush1.bf16.msra.mxu0 0
  %2373 = vmatprep.subr.bf16.mxu0 0
  %2374 = vmatpush1.bf16.msra.mxu0 0
  %2375 = vmatprep.subr.bf16.mxu0 0
  %2376 = vmatpush1.bf16.msra.mxu0 0
  %2377 = vmatprep.subr.bf16.mxu0 0
  %2378 = vmatpush1.bf16.msra.mxu0 0
  %2379 = vmatprep.subr.bf16.mxu0 0
  %2380 = vmatpush1.bf16.msra.mxu0 0
  %2381 = vmatprep.mubr.bf16.mxu0 0
  %2382 = vmatmul.mubr.bf16.gmra.mrb[0].mxu0 %v1883
  %v2383 = vpop.f32.mrb[0].mxu0
  %v2384 = vadd.f32 0.0, %v2383
  %v2385 = vpop.f32.mrb[0].mxu0
  %v2386 = vadd.f32 0.0, %v2385
  %v2387 = vpop.f32.mrb[0].mxu0
  %v2388 = vadd.f32 0.0, %v2387
  %v2389 = vpop.f32.mrb[0].mxu0
  %v2390 = vadd.f32 0.0, %v2389
  %2391 = vdwg.mxu0
  %2392 = vmatprep.subr.bf16.mxu0 %v2347
  %2393 = vmatpush1.bf16.msra.mxu0 %v2344
  %2394 = vmatprep.subr.bf16.mxu0 0
  %2395 = vmatpush1.bf16.msra.mxu0 0
  %2396 = vmatprep.subr.bf16.mxu0 0
  %2397 = vmatpush1.bf16.msra.mxu0 0
  %2398 = vmatprep.subr.bf16.mxu0 0
  %2399 = vmatpush1.bf16.msra.mxu0 0
  %2400 = vmatprep.subr.bf16.mxu0 0
  %2401 = vmatpush1.bf16.msra.mxu0 0
  %2402 = vmatprep.subr.bf16.mxu0 0
  %2403 = vmatpush1.bf16.msra.mxu0 0
  %2404 = vmatprep.subr.bf16.mxu0 0
  %2405 = vmatpush1.bf16.msra.mxu0 0
  %2406 = vmatprep.subr.bf16.mxu0 0
  %2407 = vmatpush1.bf16.msra.mxu0 0
  %2408 = vmatprep.subr.bf16.mxu0 0
  %2409 = vmatpush1.bf16.msra.mxu0 0
  %2410 = vmatprep.subr.bf16.mxu0 0
  %2411 = vmatpush1.bf16.msra.mxu0 0
  %2412 = vmatprep.subr.bf16.mxu0 0
  %2413 = vmatpush1.bf16.msra.mxu0 0
  %2414 = vmatprep.subr.bf16.mxu0 0
  %2415 = vmatpush1.bf16.msra.mxu0 0
  %2416 = vmatprep.subr.bf16.mxu0 0
  %2417 = vmatpush1.bf16.msra.mxu0 0
  %2418 = vmatprep.subr.bf16.mxu0 0
  %2419 = vmatpush1.bf16.msra.mxu0 0
  %2420 = vmatprep.subr.bf16.mxu0 0
  %2421 = vmatpush1.bf16.msra.mxu0 0
  %2422 = vmatprep.subr.bf16.mxu0 0
  %2423 = vmatpush1.bf16.msra.mxu0 0
  %2424 = vmatprep.mubr.bf16.mxu0 0
  %2425 = vmatmul.mubr.bf16.gmra.mrb[0].mxu0 %v1883
  %v2426 = vpop.f32.mrb[0].mxu0
  %v2427 = vadd.f32 0.0, %v2426
  %v2428 = vpop.f32.mrb[0].mxu0
  %v2429 = vadd.f32 0.0, %v2428
  %v2430 = vpop.f32.mrb[0].mxu0
  %v2431 = vadd.f32 0.0, %v2430
  %v2432 = vpop.f32.mrb[0].mxu0
  %v2433 = vadd.f32 0.0, %v2432
  %2434 = vdwg.mxu0
  %2436 = vrot.lane.b32.xlu0 %v113, 127
  %v2437 = vpop.permute.xlu0 %2436
  %2438 = vrot.lane.b32.xlu0 %v114, 127
  %v2439 = vpop.permute.xlu0 %2438
  %2440 = vrot.lane.b32.xlu0 %v115, 127
  %v2441 = vpop.permute.xlu0 %2440
  %2442 = vrot.lane.b32.xlu0 %v116, 127
  %v2443 = vpop.permute.xlu0 %2442
  %2444 = vrot.lane.b32.xlu0 %v277, 127
  %v2445 = vpop.permute.xlu0 %2444
  %v2446 = vsel %vm1877, %v2437, %v2439
  %v2447 = vsel %vm1877, %v2439, %v2441
  %v2448 = vsel %vm1877, %v2441, %v2443
  %v2449 = vsel %vm1877, %v2443, %v2445
  %v2451 = vand.u32 %v2446, %v292
  %v2454 = vand.u32 %v2447, %v292
  %v2457 = vand.u32 %v2448, %v292
  %v2460 = vand.u32 %v2449, %v292
  %2462 = vmatprep.subr.bf16.mxu0 %v2454
  %2463 = vmatpush1.bf16.msra.mxu0 %v2451
  %2464 = vmatprep.subr.bf16.mxu0 0
  %2465 = vmatpush1.bf16.msra.mxu0 0
  %2466 = vmatprep.subr.bf16.mxu0 0
  %2467 = vmatpush1.bf16.msra.mxu0 0
  %2468 = vmatprep.subr.bf16.mxu0 0
  %2469 = vmatpush1.bf16.msra.mxu0 0
  %2470 = vmatprep.subr.bf16.mxu0 0
  %2471 = vmatpush1.bf16.msra.mxu0 0
  %2472 = vmatprep.subr.bf16.mxu0 0
  %2473 = vmatpush1.bf16.msra.mxu0 0
  %2474 = vmatprep.subr.bf16.mxu0 0
  %2475 = vmatpush1.bf16.msra.mxu0 0
  %2476 = vmatprep.subr.bf16.mxu0 0
  %2477 = vmatpush1.bf16.msra.mxu0 0
  %2478 = vmatprep.subr.bf16.mxu0 0
  %2479 = vmatpush1.bf16.msra.mxu0 0
  %2480 = vmatprep.subr.bf16.mxu0 0
  %2481 = vmatpush1.bf16.msra.mxu0 0
  %2482 = vmatprep.subr.bf16.mxu0 0
  %2483 = vmatpush1.bf16.msra.mxu0 0
  %2484 = vmatprep.subr.bf16.mxu0 0
  %2485 = vmatpush1.bf16.msra.mxu0 0
  %2486 = vmatprep.subr.bf16.mxu0 0
  %2487 = vmatpush1.bf16.msra.mxu0 0
  %2488 = vmatprep.subr.bf16.mxu0 0
  %2489 = vmatpush1.bf16.msra.mxu0 0
  %2490 = vmatprep.subr.bf16.mxu0 0
  %2491 = vmatpush1.bf16.msra.mxu0 0
  %2492 = vmatprep.subr.bf16.mxu0 0
  %2493 = vmatpush1.bf16.msra.mxu0 0
  %2494 = vmatprep.mubr.bf16.mxu0 0
  %2495 = vmatmul.mubr.bf16.gmra.mrb[0].mxu0 %v1883
  %v2496 = vpop.f32.mrb[0].mxu0
  %v2497 = vadd.f32 0.0, %v2496
  %v2498 = vpop.f32.mrb[0].mxu0
  %v2499 = vadd.f32 0.0, %v2498
  %v2500 = vpop.f32.mrb[0].mxu0
  %v2501 = vadd.f32 0.0, %v2500
  %v2502 = vpop.f32.mrb[0].mxu0
  %v2503 = vadd.f32 0.0, %v2502
  %2504 = vdwg.mxu0
  %2505 = vmatprep.subr.bf16.mxu0 %v2460
  %2506 = vmatpush1.bf16.msra.mxu0 %v2457
  %2507 = vmatprep.subr.bf16.mxu0 0
  %2508 = vmatpush1.bf16.msra.mxu0 0
  %2509 = vmatprep.subr.bf16.mxu0 0
  %2510 = vmatpush1.bf16.msra.mxu0 0
  %2511 = vmatprep.subr.bf16.mxu0 0
  %2512 = vmatpush1.bf16.msra.mxu0 0
  %2513 = vmatprep.subr.bf16.mxu0 0
  %2514 = vmatpush1.bf16.msra.mxu0 0
  %2515 = vmatprep.subr.bf16.mxu0 0
  %2516 = vmatpush1.bf16.msra.mxu0 0
  %2517 = vmatprep.subr.bf16.mxu0 0
  %2518 = vmatpush1.bf16.msra.mxu0 0
  %2519 = vmatprep.subr.bf16.mxu0 0
  %2520 = vmatpush1.bf16.msra.mxu0 0
  %2521 = vmatprep.subr.bf16.mxu0 0
  %2522 = vmatpush1.bf16.msra.mxu0 0
  %2523 = vmatprep.subr.bf16.mxu0 0
  %2524 = vmatpush1.bf16.msra.mxu0 0
  %2525 = vmatprep.subr.bf16.mxu0 0
  %2526 = vmatpush1.bf16.msra.mxu0 0
  %2527 = vmatprep.subr.bf16.mxu0 0
  %2528 = vmatpush1.bf16.msra.mxu0 0
  %2529 = vmatprep.subr.bf16.mxu0 0
  %2530 = vmatpush1.bf16.msra.mxu0 0
  %2531 = vmatprep.subr.bf16.mxu0 0
  %2532 = vmatpush1.bf16.msra.mxu0 0
  %2533 = vmatprep.subr.bf16.mxu0 0
  %2534 = vmatpush1.bf16.msra.mxu0 0
  %2535 = vmatprep.subr.bf16.mxu0 0
  %2536 = vmatpush1.bf16.msra.mxu0 0
  %2537 = vmatprep.mubr.bf16.mxu0 0
  %2538 = vmatmul.mubr.bf16.gmra.mrb[0].mxu0 %v1883
  %v2539 = vpop.f32.mrb[0].mxu0
  %v2540 = vadd.f32 0.0, %v2539
  %v2541 = vpop.f32.mrb[0].mxu0
  %v2542 = vadd.f32 0.0, %v2541
  %v2543 = vpop.f32.mrb[0].mxu0
  %v2544 = vadd.f32 0.0, %v2543
  %v2545 = vpop.f32.mrb[0].mxu0
  %v2546 = vadd.f32 0.0, %v2545
  %2547 = vdwg.mxu0
  %2549 = vrot.lane.b32.xlu0 %v117, 127
  %v2550 = vpop.permute.xlu0 %2549
  %2551 = vrot.lane.b32.xlu0 %v118, 127
  %v2552 = vpop.permute.xlu0 %2551
  %2553 = vrot.lane.b32.xlu0 %v119, 127
  %v2554 = vpop.permute.xlu0 %2553
  %2555 = vrot.lane.b32.xlu0 %v120, 127
  %v2556 = vpop.permute.xlu0 %2555
  %2557 = vrot.lane.b32.xlu0 %v278, 127
  %v2558 = vpop.permute.xlu0 %2557
  %v2559 = vsel %vm1877, %v2550, %v2552
  %v2560 = vsel %vm1877, %v2552, %v2554
  %v2561 = vsel %vm1877, %v2554, %v2556
  %v2562 = vsel %vm1877, %v2556, %v2558
  %v2564 = vand.u32 %v2559, %v292
  %v2567 = vand.u32 %v2560, %v292
  %v2570 = vand.u32 %v2561, %v292
  %v2573 = vand.u32 %v2562, %v292
  %2575 = vmatprep.subr.bf16.mxu0 %v2567
  %2576 = vmatpush1.bf16.msra.mxu0 %v2564
  %2577 = vmatprep.subr.bf16.mxu0 0
  %2578 = vmatpush1.bf16.msra.mxu0 0
  %2579 = vmatprep.subr.bf16.mxu0 0
  %2580 = vmatpush1.bf16.msra.mxu0 0
  %2581 = vmatprep.subr.bf16.mxu0 0
  %2582 = vmatpush1.bf16.msra.mxu0 0
  %2583 = vmatprep.subr.bf16.mxu0 0
  %2584 = vmatpush1.bf16.msra.mxu0 0
  %2585 = vmatprep.subr.bf16.mxu0 0
  %2586 = vmatpush1.bf16.msra.mxu0 0
  %2587 = vmatprep.subr.bf16.mxu0 0
  %2588 = vmatpush1.bf16.msra.mxu0 0
  %2589 = vmatprep.subr.bf16.mxu0 0
  %2590 = vmatpush1.bf16.msra.mxu0 0
  %2591 = vmatprep.subr.bf16.mxu0 0
  %2592 = vmatpush1.bf16.msra.mxu0 0
  %2593 = vmatprep.subr.bf16.mxu0 0
  %2594 = vmatpush1.bf16.msra.mxu0 0
  %2595 = vmatprep.subr.bf16.mxu0 0
  %2596 = vmatpush1.bf16.msra.mxu0 0
  %2597 = vmatprep.subr.bf16.mxu0 0
  %2598 = vmatpush1.bf16.msra.mxu0 0
  %2599 = vmatprep.subr.bf16.mxu0 0
  %2600 = vmatpush1.bf16.msra.mxu0 0
  %2601 = vmatprep.subr.bf16.mxu0 0
  %2602 = vmatpush1.bf16.msra.mxu0 0
  %2603 = vmatprep.subr.bf16.mxu0 0
  %2604 = vmatpush1.bf16.msra.mxu0 0
  %2605 = vmatprep.subr.bf16.mxu0 0
  %2606 = vmatpush1.bf16.msra.mxu0 0
  %2607 = vmatprep.mubr.bf16.mxu0 0
  %2608 = vmatmul.mubr.bf16.gmra.mrb[0].mxu0 %v1883
  %v2609 = vpop.f32.mrb[0].mxu0
  %v2610 = vadd.f32 0.0, %v2609
  %v2611 = vpop.f32.mrb[0].mxu0
  %v2612 = vadd.f32 0.0, %v2611
  %v2613 = vpop.f32.mrb[0].mxu0
  %v2614 = vadd.f32 0.0, %v2613
  %v2615 = vpop.f32.mrb[0].mxu0
  %v2616 = vadd.f32 0.0, %v2615
  %2617 = vdwg.mxu0
  %2618 = vmatprep.subr.bf16.mxu0 %v2573
  %2619 = vmatpush1.bf16.msra.mxu0 %v2570
  %2620 = vmatprep.subr.bf16.mxu0 0
  %2621 = vmatpush1.bf16.msra.mxu0 0
  %2622 = vmatprep.subr.bf16.mxu0 0
  %2623 = vmatpush1.bf16.msra.mxu0 0
  %2624 = vmatprep.subr.bf16.mxu0 0
  %2625 = vmatpush1.bf16.msra.mxu0 0
  %2626 = vmatprep.subr.bf16.mxu0 0
  %2627 = vmatpush1.bf16.msra.mxu0 0
  %2628 = vmatprep.subr.bf16.mxu0 0
  %2629 = vmatpush1.bf16.msra.mxu0 0
  %2630 = vmatprep.subr.bf16.mxu0 0
  %2631 = vmatpush1.bf16.msra.mxu0 0
  %2632 = vmatprep.subr.bf16.mxu0 0
  %2633 = vmatpush1.bf16.msra.mxu0 0
  %2634 = vmatprep.subr.bf16.mxu0 0
  %2635 = vmatpush1.bf16.msra.mxu0 0
  %2636 = vmatprep.subr.bf16.mxu0 0
  %2637 = vmatpush1.bf16.msra.mxu0 0
  %2638 = vmatprep.subr.bf16.mxu0 0
  %2639 = vmatpush1.bf16.msra.mxu0 0
  %2640 = vmatprep.subr.bf16.mxu0 0
  %2641 = vmatpush1.bf16.msra.mxu0 0
  %2642 = vmatprep.subr.bf16.mxu0 0
  %2643 = vmatpush1.bf16.msra.mxu0 0
  %2644 = vmatprep.subr.bf16.mxu0 0
  %2645 = vmatpush1.bf16.msra.mxu0 0
  %2646 = vmatprep.subr.bf16.mxu0 0
  %2647 = vmatpush1.bf16.msra.mxu0 0
  %2648 = vmatprep.subr.bf16.mxu0 0
  %2649 = vmatpush1.bf16.msra.mxu0 0
  %2650 = vmatprep.mubr.bf16.mxu0 0
  %2651 = vmatmul.mubr.bf16.gmra.mrb[0].mxu0 %v1883
  %v2652 = vpop.f32.mrb[0].mxu0
  %v2653 = vadd.f32 0.0, %v2652
  %v2654 = vpop.f32.mrb[0].mxu0
  %v2655 = vadd.f32 0.0, %v2654
  %v2656 = vpop.f32.mrb[0].mxu0
  %v2657 = vadd.f32 0.0, %v2656
  %v2658 = vpop.f32.mrb[0].mxu0
  %v2659 = vadd.f32 0.0, %v2658
  %2660 = vdwg.mxu0
  %2662 = vrot.lane.b32.xlu0 %v121, 127
  %v2663 = vpop.permute.xlu0 %2662
  %2664 = vrot.lane.b32.xlu0 %v122, 127
  %v2665 = vpop.permute.xlu0 %2664
  %2666 = vrot.lane.b32.xlu0 %v123, 127
  %v2667 = vpop.permute.xlu0 %2666
  %2668 = vrot.lane.b32.xlu0 %v124, 127
  %v2669 = vpop.permute.xlu0 %2668
  %2670 = vrot.lane.b32.xlu0 %v279, 127
  %v2671 = vpop.permute.xlu0 %2670
  %v2672 = vsel %vm1877, %v2663, %v2665
  %v2673 = vsel %vm1877, %v2665, %v2667
  %v2674 = vsel %vm1877, %v2667, %v2669
  %v2675 = vsel %vm1877, %v2669, %v2671
  %v2677 = vand.u32 %v2672, %v292
  %v2680 = vand.u32 %v2673, %v292
  %v2683 = vand.u32 %v2674, %v292
  %v2686 = vand.u32 %v2675, %v292
  %2688 = vmatprep.subr.bf16.mxu0 %v2680
  %2689 = vmatpush1.bf16.msra.mxu0 %v2677
  %2690 = vmatprep.subr.bf16.mxu0 0
  %2691 = vmatpush1.bf16.msra.mxu0 0
  %2692 = vmatprep.subr.bf16.mxu0 0
  %2693 = vmatpush1.bf16.msra.mxu0 0
  %2694 = vmatprep.subr.bf16.mxu0 0
  %2695 = vmatpush1.bf16.msra.mxu0 0
  %2696 = vmatprep.subr.bf16.mxu0 0
  %2697 = vmatpush1.bf16.msra.mxu0 0
  %2698 = vmatprep.subr.bf16.mxu0 0
  %2699 = vmatpush1.bf16.msra.mxu0 0
  %2700 = vmatprep.subr.bf16.mxu0 0
  %2701 = vmatpush1.bf16.msra.mxu0 0
  %2702 = vmatprep.subr.bf16.mxu0 0
  %2703 = vmatpush1.bf16.msra.mxu0 0
  %2704 = vmatprep.subr.bf16.mxu0 0
  %2705 = vmatpush1.bf16.msra.mxu0 0
  %2706 = vmatprep.subr.bf16.mxu0 0
  %2707 = vmatpush1.bf16.msra.mxu0 0
  %2708 = vmatprep.subr.bf16.mxu0 0
  %2709 = vmatpush1.bf16.msra.mxu0 0
  %2710 = vmatprep.subr.bf16.mxu0 0
  %2711 = vmatpush1.bf16.msra.mxu0 0
  %2712 = vmatprep.subr.bf16.mxu0 0
  %2713 = vmatpush1.bf16.msra.mxu0 0
  %2714 = vmatprep.subr.bf16.mxu0 0
  %2715 = vmatpush1.bf16.msra.mxu0 0
  %2716 = vmatprep.subr.bf16.mxu0 0
  %2717 = vmatpush1.bf16.msra.mxu0 0
  %2718 = vmatprep.subr.bf16.mxu0 0
  %2719 = vmatpush1.bf16.msra.mxu0 0
  %2720 = vmatprep.mubr.bf16.mxu0 0
  %2721 = vmatmul.mubr.bf16.gmra.mrb[0].mxu0 %v1883
  %v2722 = vpop.f32.mrb[0].mxu0
  %v2723 = vadd.f32 0.0, %v2722
  %v2724 = vpop.f32.mrb[0].mxu0
  %v2725 = vadd.f32 0.0, %v2724
  %v2726 = vpop.f32.mrb[0].mxu0
  %v2727 = vadd.f32 0.0, %v2726
  %v2728 = vpop.f32.mrb[0].mxu0
  %v2729 = vadd.f32 0.0, %v2728
  %2730 = vdwg.mxu0
  %2731 = vmatprep.subr.bf16.mxu0 %v2686
  %2732 = vmatpush1.bf16.msra.mxu0 %v2683
  %2733 = vmatprep.subr.bf16.mxu0 0
  %2734 = vmatpush1.bf16.msra.mxu0 0
  %2735 = vmatprep.subr.bf16.mxu0 0
  %2736 = vmatpush1.bf16.msra.mxu0 0
  %2737 = vmatprep.subr.bf16.mxu0 0
  %2738 = vmatpush1.bf16.msra.mxu0 0
  %2739 = vmatprep.subr.bf16.mxu0 0
  %2740 = vmatpush1.bf16.msra.mxu0 0
  %2741 = vmatprep.subr.bf16.mxu0 0
  %2742 = vmatpush1.bf16.msra.mxu0 0
  %2743 = vmatprep.subr.bf16.mxu0 0
  %2744 = vmatpush1.bf16.msra.mxu0 0
  %2745 = vmatprep.subr.bf16.mxu0 0
  %2746 = vmatpush1.bf16.msra.mxu0 0
  %2747 = vmatprep.subr.bf16.mxu0 0
  %2748 = vmatpush1.bf16.msra.mxu0 0
  %2749 = vmatprep.subr.bf16.mxu0 0
  %2750 = vmatpush1.bf16.msra.mxu0 0
  %2751 = vmatprep.subr.bf16.mxu0 0
  %2752 = vmatpush1.bf16.msra.mxu0 0
  %2753 = vmatprep.subr.bf16.mxu0 0
  %2754 = vmatpush1.bf16.msra.mxu0 0
  %2755 = vmatprep.subr.bf16.mxu0 0
  %2756 = vmatpush1.bf16.msra.mxu0 0
  %2757 = vmatprep.subr.bf16.mxu0 0
  %2758 = vmatpush1.bf16.msra.mxu0 0
  %2759 = vmatprep.subr.bf16.mxu0 0
  %2760 = vmatpush1.bf16.msra.mxu0 0
  %2761 = vmatprep.subr.bf16.mxu0 0
  %2762 = vmatpush1.bf16.msra.mxu0 0
  %2763 = vmatprep.mubr.bf16.mxu0 0
  %2764 = vmatmul.mubr.bf16.gmra.mrb[0].mxu0 %v1883
  %v2765 = vpop.f32.mrb[0].mxu0
  %v2766 = vadd.f32 0.0, %v2765
  %v2767 = vpop.f32.mrb[0].mxu0
  %v2768 = vadd.f32 0.0, %v2767
  %v2769 = vpop.f32.mrb[0].mxu0
  %v2770 = vadd.f32 0.0, %v2769
  %v2771 = vpop.f32.mrb[0].mxu0
  %v2772 = vadd.f32 0.0, %v2771
  %2773 = vdwg.mxu0
  %v2774 = vadd.f32 %v1131, %v1932
  %v2775 = vadd.f32 %v1133, %v1934
  %v2776 = vadd.f32 %v1174, %v1975
  %v2777 = vadd.f32 %v1176, %v1977
  %v2778 = vadd.f32 %v1135, %v1936
  %v2779 = vadd.f32 %v1137, %v1938
  %v2780 = vadd.f32 %v1178, %v1979
  %v2781 = vadd.f32 %v1180, %v1981
  %v2782 = vadd.f32 %v1228, %v2045
  %v2783 = vadd.f32 %v1230, %v2047
  %v2784 = vadd.f32 %v1271, %v2088
  %v2785 = vadd.f32 %v1273, %v2090
  %v2786 = vadd.f32 %v1232, %v2049
  %v2787 = vadd.f32 %v1234, %v2051
  %v2788 = vadd.f32 %v1275, %v2092
  %v2789 = vadd.f32 %v1277, %v2094
  %v2790 = vadd.f32 %v1325, %v2158
  %v2791 = vadd.f32 %v1327, %v2160
  %v2792 = vadd.f32 %v1368, %v2201
  %v2793 = vadd.f32 %v1370, %v2203
  %v2794 = vadd.f32 %v1329, %v2162
  %v2795 = vadd.f32 %v1331, %v2164
  %v2796 = vadd.f32 %v1372, %v2205
  %v2797 = vadd.f32 %v1374, %v2207
  %v2798 = vadd.f32 %v1422, %v2271
  %v2799 = vadd.f32 %v1424, %v2273
  %v2800 = vadd.f32 %v1465, %v2314
  %v2801 = vadd.f32 %v1467, %v2316
  %v2802 = vadd.f32 %v1426, %v2275
  %v2803 = vadd.f32 %v1428, %v2277
  %v2804 = vadd.f32 %v1469, %v2318
  %v2805 = vadd.f32 %v1471, %v2320
  %v2806 = vadd.f32 %v1519, %v2384
  %v2807 = vadd.f32 %v1521, %v2386
  %v2808 = vadd.f32 %v1562, %v2427
  %v2809 = vadd.f32 %v1564, %v2429
  %v2810 = vadd.f32 %v1523, %v2388
  %v2811 = vadd.f32 %v1525, %v2390
  %v2812 = vadd.f32 %v1566, %v2431
  %v2813 = vadd.f32 %v1568, %v2433
  %v2814 = vadd.f32 %v1616, %v2497
  %v2815 = vadd.f32 %v1618, %v2499
  %v2816 = vadd.f32 %v1659, %v2540
  %v2817 = vadd.f32 %v1661, %v2542
  %v2818 = vadd.f32 %v1620, %v2501
  %v2819 = vadd.f32 %v1622, %v2503
  %v2820 = vadd.f32 %v1663, %v2544
  %v2821 = vadd.f32 %v1665, %v2546
  %v2822 = vadd.f32 %v1713, %v2610
  %v2823 = vadd.f32 %v1715, %v2612
  %v2824 = vadd.f32 %v1756, %v2653
  %v2825 = vadd.f32 %v1758, %v2655
  %v2826 = vadd.f32 %v1717, %v2614
  %v2827 = vadd.f32 %v1719, %v2616
  %v2828 = vadd.f32 %v1760, %v2657
  %v2829 = vadd.f32 %v1762, %v2659
  %v2830 = vadd.f32 %v1810, %v2723
  %v2831 = vadd.f32 %v1812, %v2725
  %v2832 = vadd.f32 %v1853, %v2766
  %v2833 = vadd.f32 %v1855, %v2768
  %v2834 = vadd.f32 %v1814, %v2727
  %v2835 = vadd.f32 %v1816, %v2729
  %v2836 = vadd.f32 %v1857, %v2770
  %v2837 = vadd.f32 %v1859, %v2772
  %2839 = vset.pattern.permute.xlu0 0
  %2840 = vperm.xlu0 %2839, %v27
  %v2841 = vpop.permute.xlu0 %2840
  %2844 = vset.pattern.permute.xlu0 0
  %2845 = vperm.xlu0 %2844, %v28
  %v2846 = vpop.permute.xlu0 %2845
  %v2848 = vadd.f32 %v2774, %v2841
  %v2849 = vadd.f32 %v2775, %v2841
  %v2850 = vadd.f32 %v2776, %v2841
  %v2851 = vadd.f32 %v2777, %v2841
  %v2852 = vadd.f32 %v2778, %v2846
  %v2853 = vadd.f32 %v2779, %v2846
  %v2854 = vadd.f32 %v2780, %v2846
  %v2855 = vadd.f32 %v2781, %v2846
  %v2856 = vadd.f32 %v2782, %v2841
  %v2857 = vadd.f32 %v2783, %v2841
  %v2858 = vadd.f32 %v2784, %v2841
  %v2859 = vadd.f32 %v2785, %v2841
  %v2860 = vadd.f32 %v2786, %v2846
  %v2861 = vadd.f32 %v2787, %v2846
  %v2862 = vadd.f32 %v2788, %v2846
  %v2863 = vadd.f32 %v2789, %v2846
  %v2864 = vadd.f32 %v2790, %v2841
  %v2865 = vadd.f32 %v2791, %v2841
  %v2866 = vadd.f32 %v2792, %v2841
  %v2867 = vadd.f32 %v2793, %v2841
  %v2868 = vadd.f32 %v2794, %v2846
  %v2869 = vadd.f32 %v2795, %v2846
  %v2870 = vadd.f32 %v2796, %v2846
  %v2871 = vadd.f32 %v2797, %v2846
  %v2872 = vadd.f32 %v2798, %v2841
  %v2873 = vadd.f32 %v2799, %v2841
  %v2874 = vadd.f32 %v2800, %v2841
  %v2875 = vadd.f32 %v2801, %v2841
  %v2876 = vadd.f32 %v2802, %v2846
  %v2877 = vadd.f32 %v2803, %v2846
  %v2878 = vadd.f32 %v2804, %v2846
  %v2879 = vadd.f32 %v2805, %v2846
  %v2880 = vadd.f32 %v2806, %v2841
  %v2881 = vadd.f32 %v2807, %v2841
  %v2882 = vadd.f32 %v2808, %v2841
  %v2883 = vadd.f32 %v2809, %v2841
  %v2884 = vadd.f32 %v2810, %v2846
  %v2885 = vadd.f32 %v2811, %v2846
  %v2886 = vadd.f32 %v2812, %v2846
  %v2887 = vadd.f32 %v2813, %v2846
  %v2888 = vadd.f32 %v2814, %v2841
  %v2889 = vadd.f32 %v2815, %v2841
  %v2890 = vadd.f32 %v2816, %v2841
  %v2891 = vadd.f32 %v2817, %v2841
  %v2892 = vadd.f32 %v2818, %v2846
  %v2893 = vadd.f32 %v2819, %v2846
  %v2894 = vadd.f32 %v2820, %v2846
  %v2895 = vadd.f32 %v2821, %v2846
  %v2896 = vadd.f32 %v2822, %v2841
  %v2897 = vadd.f32 %v2823, %v2841
  %v2898 = vadd.f32 %v2824, %v2841
  %v2899 = vadd.f32 %v2825, %v2841
  %v2900 = vadd.f32 %v2826, %v2846
  %v2901 = vadd.f32 %v2827, %v2846
  %v2902 = vadd.f32 %v2828, %v2846
  %v2903 = vadd.f32 %v2829, %v2846
  %v2904 = vadd.f32 %v2830, %v2841
  %v2905 = vadd.f32 %v2831, %v2841
  %v2906 = vadd.f32 %v2832, %v2841
  %v2907 = vadd.f32 %v2833, %v2841
  %v2908 = vadd.f32 %v2834, %v2846
  %v2909 = vadd.f32 %v2835, %v2846
  %v2910 = vadd.f32 %v2836, %v2846
  %v2911 = vadd.f32 %v2837, %v2846
  %v2912 = vmax.f32 %v2848, 0.0
  %v2913 = vmax.f32 %v2849, 0.0
  %v2914 = vmax.f32 %v2850, 0.0
  %v2915 = vmax.f32 %v2851, 0.0
  %v2916 = vmax.f32 %v2852, 0.0
  %v2917 = vmax.f32 %v2853, 0.0
  %v2918 = vmax.f32 %v2854, 0.0
  %v2919 = vmax.f32 %v2855, 0.0
  %v2920 = vmax.f32 %v2856, 0.0
  %v2921 = vmax.f32 %v2857, 0.0
  %v2922 = vmax.f32 %v2858, 0.0
  %v2923 = vmax.f32 %v2859, 0.0
  %v2924 = vmax.f32 %v2860, 0.0
  %v2925 = vmax.f32 %v2861, 0.0
  %v2926 = vmax.f32 %v2862, 0.0
  %v2927 = vmax.f32 %v2863, 0.0
  %v2928 = vmax.f32 %v2864, 0.0
  %v2929 = vmax.f32 %v2865, 0.0
  %v2930 = vmax.f32 %v2866, 0.0
  %v2931 = vmax.f32 %v2867, 0.0
  %v2932 = vmax.f32 %v2868, 0.0
  %v2933 = vmax.f32 %v2869, 0.0
  %v2934 = vmax.f32 %v2870, 0.0
  %v2935 = vmax.f32 %v2871, 0.0
  %v2936 = vmax.f32 %v2872, 0.0
  %v2937 = vmax.f32 %v2873, 0.0
  %v2938 = vmax.f32 %v2874, 0.0
  %v2939 = vmax.f32 %v2875, 0.0
  %v2940 = vmax.f32 %v2876, 0.0
  %v2941 = vmax.f32 %v2877, 0.0
  %v2942 = vmax.f32 %v2878, 0.0
  %v2943 = vmax.f32 %v2879, 0.0
  %v2944 = vmax.f32 %v2880, 0.0
  %v2945 = vmax.f32 %v2881, 0.0
  %v2946 = vmax.f32 %v2882, 0.0
  %v2947 = vmax.f32 %v2883, 0.0
  %v2948 = vmax.f32 %v2884, 0.0
  %v2949 = vmax.f32 %v2885, 0.0
  %v2950 = vmax.f32 %v2886, 0.0
  %v2951 = vmax.f32 %v2887, 0.0
  %v2952 = vmax.f32 %v2888, 0.0
  %v2953 = vmax.f32 %v2889, 0.0
  %v2954 = vmax.f32 %v2890, 0.0
  %v2955 = vmax.f32 %v2891, 0.0
  %v2956 = vmax.f32 %v2892, 0.0
  %v2957 = vmax.f32 %v2893, 0.0
  %v2958 = vmax.f32 %v2894, 0.0
  %v2959 = vmax.f32 %v2895, 0.0
  %v2960 = vmax.f32 %v2896, 0.0
  %v2961 = vmax.f32 %v2897, 0.0
  %v2962 = vmax.f32 %v2898, 0.0
  %v2963 = vmax.f32 %v2899, 0.0
  %v2964 = vmax.f32 %v2900, 0.0
  %v2965 = vmax.f32 %v2901, 0.0
  %v2966 = vmax.f32 %v2902, 0.0
  %v2967 = vmax.f32 %v2903, 0.0
  %v2968 = vmax.f32 %v2904, 0.0
  %v2969 = vmax.f32 %v2905, 0.0
  %v2970 = vmax.f32 %v2906, 0.0
  %v2971 = vmax.f32 %v2907, 0.0
  %v2972 = vmax.f32 %v2908, 0.0
  %v2973 = vmax.f32 %v2909, 0.0
  %v2974 = vmax.f32 %v2910, 0.0
  %v2975 = vmax.f32 %v2911, 0.0
  %v2976 = vadd.f32 %v2912, %v2913
  %v2977 = vadd.f32 %v2976, %v2914
  %v2978 = vadd.f32 %v2977, %v2915
  %2979 = vadd.xlane.f32.xlu0 %v2978
  %v2980 = vpop.xlane.xlu0 %2979
  %v2981 = vadd.f32 %v2916, %v2917
  %v2982 = vadd.f32 %v2981, %v2918
  %v2983 = vadd.f32 %v2982, %v2919
  %2984 = vadd.xlane.f32.xlu0 %v2983
  %v2985 = vpop.xlane.xlu0 %2984
  %v2986 = vadd.f32 %v2920, %v2921
  %v2987 = vadd.f32 %v2986, %v2922
  %v2988 = vadd.f32 %v2987, %v2923
  %2989 = vadd.xlane.f32.xlu0 %v2988
  %v2990 = vpop.xlane.xlu0 %2989
  %v2991 = vadd.f32 %v2924, %v2925
  %v2992 = vadd.f32 %v2991, %v2926
  %v2993 = vadd.f32 %v2992, %v2927
  %2994 = vadd.xlane.f32.xlu0 %v2993
  %v2995 = vpop.xlane.xlu0 %2994
  %v2996 = vadd.f32 %v2928, %v2929
  %v2997 = vadd.f32 %v2996, %v2930
  %v2998 = vadd.f32 %v2997, %v2931
  %2999 = vadd.xlane.f32.xlu0 %v2998
  %v3000 = vpop.xlane.xlu0 %2999
  %v3001 = vadd.f32 %v2932, %v2933
  %v3002 = vadd.f32 %v3001, %v2934
  %v3003 = vadd.f32 %v3002, %v2935
  %3004 = vadd.xlane.f32.xlu0 %v3003
  %v3005 = vpop.xlane.xlu0 %3004
  %v3006 = vadd.f32 %v2936, %v2937
  %v3007 = vadd.f32 %v3006, %v2938
  %v3008 = vadd.f32 %v3007, %v2939
  %3009 = vadd.xlane.f32.xlu0 %v3008
  %v3010 = vpop.xlane.xlu0 %3009
  %v3011 = vadd.f32 %v2940, %v2941
  %v3012 = vadd.f32 %v3011, %v2942
  %v3013 = vadd.f32 %v3012, %v2943
  %3014 = vadd.xlane.f32.xlu0 %v3013
  %v3015 = vpop.xlane.xlu0 %3014
  %v3016 = vadd.f32 %v2944, %v2945
  %v3017 = vadd.f32 %v3016, %v2946
  %v3018 = vadd.f32 %v3017, %v2947
  %3019 = vadd.xlane.f32.xlu0 %v3018
  %v3020 = vpop.xlane.xlu0 %3019
  %v3021 = vadd.f32 %v2948, %v2949
  %v3022 = vadd.f32 %v3021, %v2950
  %v3023 = vadd.f32 %v3022, %v2951
  %3024 = vadd.xlane.f32.xlu0 %v3023
  %v3025 = vpop.xlane.xlu0 %3024
  %v3026 = vadd.f32 %v2952, %v2953
  %v3027 = vadd.f32 %v3026, %v2954
  %v3028 = vadd.f32 %v3027, %v2955
  %3029 = vadd.xlane.f32.xlu0 %v3028
  %v3030 = vpop.xlane.xlu0 %3029
  %v3031 = vadd.f32 %v2956, %v2957
  %v3032 = vadd.f32 %v3031, %v2958
  %v3033 = vadd.f32 %v3032, %v2959
  %3034 = vadd.xlane.f32.xlu0 %v3033
  %v3035 = vpop.xlane.xlu0 %3034
  %v3036 = vadd.f32 %v2960, %v2961
  %v3037 = vadd.f32 %v3036, %v2962
  %v3038 = vadd.f32 %v3037, %v2963
  %3039 = vadd.xlane.f32.xlu0 %v3038
  %v3040 = vpop.xlane.xlu0 %3039
  %v3041 = vadd.f32 %v2964, %v2965
  %v3042 = vadd.f32 %v3041, %v2966
  %v3043 = vadd.f32 %v3042, %v2967
  %3044 = vadd.xlane.f32.xlu0 %v3043
  %v3045 = vpop.xlane.xlu0 %3044
  %v3046 = vadd.f32 %v2968, %v2969
  %v3047 = vadd.f32 %v3046, %v2970
  %v3048 = vadd.f32 %v3047, %v2971
  %3049 = vadd.xlane.f32.xlu0 %v3048
  %v3050 = vpop.xlane.xlu0 %3049
  %v3051 = vadd.f32 %v2972, %v2973
  %v3052 = vadd.f32 %v3051, %v2974
  %v3053 = vadd.f32 %v3052, %v2975
  %3054 = vadd.xlane.f32.xlu0 %v3053
  %v3055 = vpop.xlane.xlu0 %3054
  %v3056 = vadd.f32 %v2980, 0.0
  %v3057 = vadd.f32 %v2985, 0.0
  %v3058 = vadd.f32 %v2990, 0.0
  %v3059 = vadd.f32 %v2995, 0.0
  %v3060 = vadd.f32 %v3000, 0.0
  %v3061 = vadd.f32 %v3005, 0.0
  %v3062 = vadd.f32 %v3010, 0.0
  %v3063 = vadd.f32 %v3015, 0.0
  %v3064 = vadd.f32 %v3020, 0.0
  %v3065 = vadd.f32 %v3025, 0.0
  %v3066 = vadd.f32 %v3030, 0.0
  %v3067 = vadd.f32 %v3035, 0.0
  %v3068 = vadd.f32 %v3040, 0.0
  %v3069 = vadd.f32 %v3045, 0.0
  %v3070 = vadd.f32 %v3050, 0.0
  %v3071 = vadd.f32 %v3055, 0.0
  %v3072 = vld [vmem:[%s0 + $0x10] sm:$0x77]
  %v3073 = vld [vmem:[%s0 + $0x18] sm:$0x77]
  %v3074 = vld [vmem:[%s0 + $0x30] sm:$0x77]
  %v3075 = vld [vmem:[%s0 + $0x38] sm:$0x77]
  %v3076 = vld [vmem:[%s0 + $0x50] sm:$0x77]
  %v3077 = vld [vmem:[%s0 + $0x58] sm:$0x77]
  %v3078 = vld [vmem:[%s0 + $0x70] sm:$0x77]
  %v3079 = vld [vmem:[%s0 + $0x78] sm:$0x77]
  %v3080 = vld [vmem:[%s0 + $0x90] sm:$0x77]
  %v3081 = vld [vmem:[%s0 + $0x98] sm:$0x77]
  %v3082 = vld [vmem:[%s0 + $0xb0] sm:$0x77]
  %v3083 = vld [vmem:[%s0 + $0xb8] sm:$0x77]
  %v3084 = vld [vmem:[%s0 + $0xd0] sm:$0x77]
  %v3085 = vld [vmem:[%s0 + $0xd8] sm:$0x77]
  %v3086 = vld [vmem:[%s0 + $0xf0] sm:$0x77]
  %v3087 = vld [vmem:[%s0 + $0xf8] sm:$0x77]
  %v3104 = vcombine.high %v3072, %v3072
  %v3105 = vcombine.high %v3073, %v3073
  %v3106 = vcombine.high %v3074, %v3074
  %v3107 = vcombine.high %v3075, %v3075
  %v3108 = vcombine.high %v3076, %v3076
  %v3109 = vcombine.high %v3077, %v3077
  %v3110 = vcombine.high %v3078, %v3078
  %v3111 = vcombine.high %v3079, %v3079
  %v3112 = vcombine.high %v3080, %v3080
  %v3113 = vcombine.high %v3081, %v3081
  %v3114 = vcombine.high %v3082, %v3082
  %v3115 = vcombine.high %v3083, %v3083
  %v3116 = vcombine.high %v3084, %v3084
  %v3117 = vcombine.high %v3085, %v3085
  %v3118 = vcombine.high %v3086, %v3086
  %v3119 = vcombine.high %v3087, %v3087
  %v3136 = vpack.c.bf16 %v3072, %v3072
  %v3137 = vpack.c.bf16 %v3104, %v3104
  %v3138 = vpack.c.bf16 %v3073, %v3073
  %v3139 = vpack.c.bf16 %v3105, %v3105
  %v3140 = vpack.c.bf16 %v3074, %v3074
  %v3141 = vpack.c.bf16 %v3106, %v3106
  %v3142 = vpack.c.bf16 %v3075, %v3075
  %v3143 = vpack.c.bf16 %v3107, %v3107
  %v3144 = vpack.c.bf16 %v3076, %v3076
  %v3145 = vpack.c.bf16 %v3108, %v3108
  %v3146 = vpack.c.bf16 %v3077, %v3077
  %v3147 = vpack.c.bf16 %v3109, %v3109
  %v3148 = vpack.c.bf16 %v3078, %v3078
  %v3149 = vpack.c.bf16 %v3110, %v3110
  %v3150 = vpack.c.bf16 %v3079, %v3079
  %v3151 = vpack.c.bf16 %v3111, %v3111
  %v3152 = vpack.c.bf16 %v3080, %v3080
  %v3153 = vpack.c.bf16 %v3112, %v3112
  %v3154 = vpack.c.bf16 %v3081, %v3081
  %v3155 = vpack.c.bf16 %v3113, %v3113
  %v3156 = vpack.c.bf16 %v3082, %v3082
  %v3157 = vpack.c.bf16 %v3114, %v3114
  %v3158 = vpack.c.bf16 %v3083, %v3083
  %v3159 = vpack.c.bf16 %v3115, %v3115
  %v3160 = vpack.c.bf16 %v3084, %v3084
  %v3161 = vpack.c.bf16 %v3116, %v3116
  %v3162 = vpack.c.bf16 %v3085, %v3085
  %v3163 = vpack.c.bf16 %v3117, %v3117
  %v3164 = vpack.c.bf16 %v3086, %v3086
  %v3165 = vpack.c.bf16 %v3118, %v3118
  %v3166 = vpack.c.bf16 %v3087, %v3087
  %v3167 = vpack.c.bf16 %v3119, %v3119
  %v3168 = vld [vmem:[%s0 + $0xc] sm:$0x77]
  %v3169 = vld [vmem:[%s0 + $0x14] sm:$0x77]
  %v3170 = vld [vmem:[%s0 + $0x1c] sm:$0x7]
  %v3171 = vld [vmem:[%s0 + $0x2c] sm:$0x77]
  %v3172 = vld [vmem:[%s0 + $0x34] sm:$0x77]
  %v3173 = vld [vmem:[%s0 + $0x3c] sm:$0x7]
  %v3174 = vld [vmem:[%s0 + $0x4c] sm:$0x77]
  %v3175 = vld [vmem:[%s0 + $0x54] sm:$0x77]
  %v3176 = vld [vmem:[%s0 + $0x5c] sm:$0x7]
  %v3177 = vld [vmem:[%s0 + $0x6c] sm:$0x77]
  %v3178 = vld [vmem:[%s0 + $0x74] sm:$0x77]
  %v3179 = vld [vmem:[%s0 + $0x7c] sm:$0x7]
  %v3180 = vld [vmem:[%s0 + $0x8c] sm:$0x77]
  %v3181 = vld [vmem:[%s0 + $0x94] sm:$0x77]
  %v3182 = vld [vmem:[%s0 + $0x9c] sm:$0x7]
  %v3183 = vld [vmem:[%s0 + $0xac] sm:$0x77]
  %v3184 = vld [vmem:[%s0 + $0xb4] sm:$0x77]
  %v3185 = vld [vmem:[%s0 + $0xbc] sm:$0x7]
  %v3186 = vld [vmem:[%s0 + $0xcc] sm:$0x77]
  %v3187 = vld [vmem:[%s0 + $0xd4] sm:$0x77]
  %v3188 = vld [vmem:[%s0 + $0xdc] sm:$0x7]
  %v3189 = vld [vmem:[%s0 + $0xec] sm:$0x77]
  %v3190 = vld [vmem:[%s0 + $0xf4] sm:$0x77]
  %v3191 = vld [vmem:[%s0 + $0xfc] sm:$0x7]
  %v3208 = vcombine.high %v3168, %v3168
  %v3209 = vcombine.high %v3169, %v3169
  %v3210 = vcombine.high %v3171, %v3171
  %v3211 = vcombine.high %v3172, %v3172
  %v3212 = vcombine.high %v3174, %v3174
  %v3213 = vcombine.high %v3175, %v3175
  %v3214 = vcombine.high %v3177, %v3177
  %v3215 = vcombine.high %v3178, %v3178
  %v3216 = vcombine.high %v3180, %v3180
  %v3217 = vcombine.high %v3181, %v3181
  %v3218 = vcombine.high %v3183, %v3183
  %v3219 = vcombine.high %v3184, %v3184
  %v3220 = vcombine.high %v3186, %v3186
  %v3221 = vcombine.high %v3187, %v3187
  %v3222 = vcombine.high %v3189, %v3189
  %v3223 = vcombine.high %v3190, %v3190
  %v3240 = vpack.c.bf16 %v3168, %v3168
  %v3241 = vpack.c.bf16 %v3208, %v3208
  %v3242 = vpack.c.bf16 %v3169, %v3169
  %v3243 = vpack.c.bf16 %v3209, %v3209
  %v3244 = vpack.c.bf16 %v3170, %v3170
  %v3245 = vpack.c.bf16 %v3171, %v3171
  %v3246 = vpack.c.bf16 %v3210, %v3210
  %v3247 = vpack.c.bf16 %v3172, %v3172
  %v3248 = vpack.c.bf16 %v3211, %v3211
  %v3249 = vpack.c.bf16 %v3173, %v3173
  %v3250 = vpack.c.bf16 %v3174, %v3174
  %v3251 = vpack.c.bf16 %v3212, %v3212
  %v3252 = vpack.c.bf16 %v3175, %v3175
  %v3253 = vpack.c.bf16 %v3213, %v3213
  %v3254 = vpack.c.bf16 %v3176, %v3176
  %v3255 = vpack.c.bf16 %v3177, %v3177
  %v3256 = vpack.c.bf16 %v3214, %v3214
  %v3257 = vpack.c.bf16 %v3178, %v3178
  %v3258 = vpack.c.bf16 %v3215, %v3215
  %v3259 = vpack.c.bf16 %v3179, %v3179
  %v3260 = vpack.c.bf16 %v3180, %v3180
  %v3261 = vpack.c.bf16 %v3216, %v3216
  %v3262 = vpack.c.bf16 %v3181, %v3181
  %v3263 = vpack.c.bf16 %v3217, %v3217
  %v3264 = vpack.c.bf16 %v3182, %v3182
  %v3265 = vpack.c.bf16 %v3183, %v3183
  %v3266 = vpack.c.bf16 %v3218, %v3218
  %v3267 = vpack.c.bf16 %v3184, %v3184
  %v3268 = vpack.c.bf16 %v3219, %v3219
  %v3269 = vpack.c.bf16 %v3185, %v3185
  %v3270 = vpack.c.bf16 %v3186, %v3186
  %v3271 = vpack.c.bf16 %v3220, %v3220
  %v3272 = vpack.c.bf16 %v3187, %v3187
  %v3273 = vpack.c.bf16 %v3221, %v3221
  %v3274 = vpack.c.bf16 %v3188, %v3188
  %v3275 = vpack.c.bf16 %v3189, %v3189
  %v3276 = vpack.c.bf16 %v3222, %v3222
  %v3277 = vpack.c.bf16 %v3190, %v3190
  %v3278 = vpack.c.bf16 %v3223, %v3223
  %v3279 = vpack.c.bf16 %v3191, %v3191
  %3312 = vrot.lane.b32.xlu0 %v3136, 127
  %v3313 = vpop.permute.xlu0 %3312
  %3314 = vrot.lane.b32.xlu0 %v3137, 127
  %v3315 = vpop.permute.xlu0 %3314
  %3316 = vrot.lane.b32.xlu0 %v3138, 127
  %v3317 = vpop.permute.xlu0 %3316
  %3318 = vrot.lane.b32.xlu0 %v3139, 127
  %v3319 = vpop.permute.xlu0 %3318
  %3320 = vrot.lane.b32.xlu0 %v3140, 127
  %v3321 = vpop.permute.xlu0 %3320
  %3322 = vrot.lane.b32.xlu0 %v3141, 127
  %v3323 = vpop.permute.xlu0 %3322
  %3324 = vrot.lane.b32.xlu0 %v3142, 127
  %v3325 = vpop.permute.xlu0 %3324
  %3326 = vrot.lane.b32.xlu0 %v3143, 127
  %v3327 = vpop.permute.xlu0 %3326
  %3328 = vrot.lane.b32.xlu0 %v3144, 127
  %v3329 = vpop.permute.xlu0 %3328
  %3330 = vrot.lane.b32.xlu0 %v3145, 127
  %v3331 = vpop.permute.xlu0 %3330
  %3332 = vrot.lane.b32.xlu0 %v3146, 127
  %v3333 = vpop.permute.xlu0 %3332
  %3334 = vrot.lane.b32.xlu0 %v3147, 127
  %v3335 = vpop.permute.xlu0 %3334
  %3336 = vrot.lane.b32.xlu0 %v3148, 127
  %v3337 = vpop.permute.xlu0 %3336
  %3338 = vrot.lane.b32.xlu0 %v3149, 127
  %v3339 = vpop.permute.xlu0 %3338
  %3340 = vrot.lane.b32.xlu0 %v3150, 127
  %v3341 = vpop.permute.xlu0 %3340
  %3342 = vrot.lane.b32.xlu0 %v3151, 127
  %v3343 = vpop.permute.xlu0 %3342
  %3344 = vrot.lane.b32.xlu0 %v3152, 127
  %v3345 = vpop.permute.xlu0 %3344
  %3346 = vrot.lane.b32.xlu0 %v3153, 127
  %v3347 = vpop.permute.xlu0 %3346
  %3348 = vrot.lane.b32.xlu0 %v3154, 127
  %v3349 = vpop.permute.xlu0 %3348
  %3350 = vrot.lane.b32.xlu0 %v3155, 127
  %v3351 = vpop.permute.xlu0 %3350
  %3352 = vrot.lane.b32.xlu0 %v3156, 127
  %v3353 = vpop.permute.xlu0 %3352
  %3354 = vrot.lane.b32.xlu0 %v3157, 127
  %v3355 = vpop.permute.xlu0 %3354
  %3356 = vrot.lane.b32.xlu0 %v3158, 127
  %v3357 = vpop.permute.xlu0 %3356
  %3358 = vrot.lane.b32.xlu0 %v3159, 127
  %v3359 = vpop.permute.xlu0 %3358
  %3360 = vrot.lane.b32.xlu0 %v3160, 127
  %v3361 = vpop.permute.xlu0 %3360
  %3362 = vrot.lane.b32.xlu0 %v3161, 127
  %v3363 = vpop.permute.xlu0 %3362
  %3364 = vrot.lane.b32.xlu0 %v3162, 127
  %v3365 = vpop.permute.xlu0 %3364
  %3366 = vrot.lane.b32.xlu0 %v3163, 127
  %v3367 = vpop.permute.xlu0 %3366
  %3368 = vrot.lane.b32.xlu0 %v3164, 127
  %v3369 = vpop.permute.xlu0 %3368
  %3370 = vrot.lane.b32.xlu0 %v3165, 127
  %v3371 = vpop.permute.xlu0 %3370
  %3372 = vrot.lane.b32.xlu0 %v3166, 127
  %v3373 = vpop.permute.xlu0 %3372
  %3374 = vrot.lane.b32.xlu0 %v3167, 127
  %v3375 = vpop.permute.xlu0 %3374
  %v3376 = vsel %vm1877, %v3313, %v3315
  %v3377 = vsel %vm1877, %v3315, %v3317
  %v3378 = vsel %vm1877, %v3317, %v3319
  %v3379 = vsel %vm1877, %v3321, %v3323
  %v3380 = vsel %vm1877, %v3323, %v3325
  %v3381 = vsel %vm1877, %v3325, %v3327
  %v3382 = vsel %vm1877, %v3329, %v3331
  %v3383 = vsel %vm1877, %v3331, %v3333
  %v3384 = vsel %vm1877, %v3333, %v3335
  %v3385 = vsel %vm1877, %v3337, %v3339
  %v3386 = vsel %vm1877, %v3339, %v3341
  %v3387 = vsel %vm1877, %v3341, %v3343
  %v3388 = vsel %vm1877, %v3345, %v3347
  %v3389 = vsel %vm1877, %v3347, %v3349
  %v3390 = vsel %vm1877, %v3349, %v3351
  %v3391 = vsel %vm1877, %v3353, %v3355
  %v3392 = vsel %vm1877, %v3355, %v3357
  %v3393 = vsel %vm1877, %v3357, %v3359
  %v3394 = vsel %vm1877, %v3361, %v3363
  %v3395 = vsel %vm1877, %v3363, %v3365
  %v3396 = vsel %vm1877, %v3365, %v3367
  %v3397 = vsel %vm1877, %v3369, %v3371
  %v3398 = vsel %vm1877, %v3371, %v3373
  %v3399 = vsel %vm1877, %v3373, %v3375
  %vm3400 = vcmask 1039360
  %v3402 = vsel %vm3400, %v3319, 0
  %v3404 = vsel %vm3400, %v3327, 0
  %v3406 = vsel %vm3400, %v3335, 0
  %v3408 = vsel %vm3400, %v3343, 0
  %v3410 = vsel %vm3400, %v3351, 0
  %v3412 = vsel %vm3400, %v3359, 0
  %v3414 = vsel %vm3400, %v3367, 0
  %v3416 = vsel %vm3400, %v3375, 0
  %v3418 = vand.u32 %v3136, %v292
  %v3421 = vand.u32 %v3137, %v292
  %v3424 = vand.u32 %v3138, %v292
  %v3427 = vand.u32 %v3139, %v292
  %3429 = vmatprep.subr.bf16.mxu0 %v3421
  %3430 = vmatpush1.bf16.msra.mxu0 %v3418
  %3431 = vmatprep.subr.bf16.mxu0 0
  %3432 = vmatpush1.bf16.msra.mxu0 0
  %3433 = vmatprep.subr.bf16.mxu0 0
  %3434 = vmatpush1.bf16.msra.mxu0 0
  %3435 = vmatprep.subr.bf16.mxu0 0
  %3436 = vmatpush1.bf16.msra.mxu0 0
  %3437 = vmatprep.subr.bf16.mxu0 0
  %3438 = vmatpush1.bf16.msra.mxu0 0
  %3439 = vmatprep.subr.bf16.mxu0 0
  %3440 = vmatpush1.bf16.msra.mxu0 0
  %3441 = vmatprep.subr.bf16.mxu0 0
  %3442 = vmatpush1.bf16.msra.mxu0 0
  %3443 = vmatprep.subr.bf16.mxu0 0
  %3444 = vmatpush1.bf16.msra.mxu0 0
  %3445 = vmatprep.subr.bf16.mxu0 0
  %3446 = vmatpush1.bf16.msra.mxu0 0
  %3447 = vmatprep.subr.bf16.mxu0 0
  %3448 = vmatpush1.bf16.msra.mxu0 0
  %3449 = vmatprep.subr.bf16.mxu0 0
  %3450 = vmatpush1.bf16.msra.mxu0 0
  %3451 = vmatprep.subr.bf16.mxu0 0
  %3452 = vmatpush1.bf16.msra.mxu0 0
  %3453 = vmatprep.subr.bf16.mxu0 0
  %3454 = vmatpush1.bf16.msra.mxu0 0
  %3455 = vmatprep.subr.bf16.mxu0 0
  %3456 = vmatpush1.bf16.msra.mxu0 0
  %3457 = vmatprep.subr.bf16.mxu0 0
  %3458 = vmatpush1.bf16.msra.mxu0 0
  %3459 = vmatprep.subr.bf16.mxu0 0
  %3460 = vmatpush1.bf16.msra.mxu0 0
  %3461 = vmatprep.mubr.bf16.mxu0 0
  %3462 = vmatmul.mubr.bf16.gmra.mrb[0].mxu0 %v287
  %v3463 = vpop.f32.mrb[0].mxu0
  %v3464 = vadd.f32 0.0, %v3463
  %v3465 = vpop.f32.mrb[0].mxu0
  %v3466 = vadd.f32 0.0, %v3465
  %v3467 = vpop.f32.mrb[0].mxu0
  %v3468 = vadd.f32 0.0, %v3467
  %v3469 = vpop.f32.mrb[0].mxu0
  %v3470 = vadd.f32 0.0, %v3469
  %3471 = vdwg.mxu0
  %3472 = vmatprep.subr.bf16.mxu0 %v3427
  %3473 = vmatpush1.bf16.msra.mxu0 %v3424
  %3474 = vmatprep.subr.bf16.mxu0 0
  %3475 = vmatpush1.bf16.msra.mxu0 0
  %3476 = vmatprep.subr.bf16.mxu0 0
  %3477 = vmatpush1.bf16.msra.mxu0 0
  %3478 = vmatprep.subr.bf16.mxu0 0
  %3479 = vmatpush1.bf16.msra.mxu0 0
  %3480 = vmatprep.subr.bf16.mxu0 0
  %3481 = vmatpush1.bf16.msra.mxu0 0
  %3482 = vmatprep.subr.bf16.mxu0 0
  %3483 = vmatpush1.bf16.msra.mxu0 0
  %3484 = vmatprep.subr.bf16.mxu0 0
  %3485 = vmatpush1.bf16.msra.mxu0 0
  %3486 = vmatprep.subr.bf16.mxu0 0
  %3487 = vmatpush1.bf16.msra.mxu0 0
  %3488 = vmatprep.subr.bf16.mxu0 0
  %3489 = vmatpush1.bf16.msra.mxu0 0
  %3490 = vmatprep.subr.bf16.mxu0 0
  %3491 = vmatpush1.bf16.msra.mxu0 0
  %3492 = vmatprep.subr.bf16.mxu0 0
  %3493 = vmatpush1.bf16.msra.mxu0 0
  %3494 = vmatprep.subr.bf16.mxu0 0
  %3495 = vmatpush1.bf16.msra.mxu0 0
  %3496 = vmatprep.subr.bf16.mxu0 0
  %3497 = vmatpush1.bf16.msra.mxu0 0
  %3498 = vmatprep.subr.bf16.mxu0 0
  %3499 = vmatpush1.bf16.msra.mxu0 0
  %3500 = vmatprep.subr.bf16.mxu0 0
  %3501 = vmatpush1.bf16.msra.mxu0 0
  %3502 = vmatprep.subr.bf16.mxu0 0
  %3503 = vmatpush1.bf16.msra.mxu0 0
  %3504 = vmatprep.mubr.bf16.mxu0 0
  %3505 = vmatmul.mubr.bf16.gmra.mrb[0].mxu0 %v287
  %v3506 = vpop.f32.mrb[0].mxu0
  %v3507 = vadd.f32 0.0, %v3506
  %v3508 = vpop.f32.mrb[0].mxu0
  %v3509 = vadd.f32 0.0, %v3508
  %v3510 = vpop.f32.mrb[0].mxu0
  %v3511 = vadd.f32 0.0, %v3510
  %v3512 = vpop.f32.mrb[0].mxu0
  %v3513 = vadd.f32 0.0, %v3512
  %3514 = vdwg.mxu0
  %v3516 = vand.u32 %v3140, %v292
  %v3519 = vand.u32 %v3141, %v292
  %v3522 = vand.u32 %v3142, %v292
  %v3525 = vand.u32 %v3143, %v292
  %3527 = vmatprep.subr.bf16.mxu0 %v3519
  %3528 = vmatpush1.bf16.msra.mxu0 %v3516
  %3529 = vmatprep.subr.bf16.mxu0 0
  %3530 = vmatpush1.bf16.msra.mxu0 0
  %3531 = vmatprep.subr.bf16.mxu0 0
  %3532 = vmatpush1.bf16.msra.mxu0 0
  %3533 = vmatprep.subr.bf16.mxu0 0
  %3534 = vmatpush1.bf16.msra.mxu0 0
  %3535 = vmatprep.subr.bf16.mxu0 0
  %3536 = vmatpush1.bf16.msra.mxu0 0
  %3537 = vmatprep.subr.bf16.mxu0 0
  %3538 = vmatpush1.bf16.msra.mxu0 0
  %3539 = vmatprep.subr.bf16.mxu0 0
  %3540 = vmatpush1.bf16.msra.mxu0 0
  %3541 = vmatprep.subr.bf16.mxu0 0
  %3542 = vmatpush1.bf16.msra.mxu0 0
  %3543 = vmatprep.subr.bf16.mxu0 0
  %3544 = vmatpush1.bf16.msra.mxu0 0
  %3545 = vmatprep.subr.bf16.mxu0 0
  %3546 = vmatpush1.bf16.msra.mxu0 0
  %3547 = vmatprep.subr.bf16.mxu0 0
  %3548 = vmatpush1.bf16.msra.mxu0 0
  %3549 = vmatprep.subr.bf16.mxu0 0
  %3550 = vmatpush1.bf16.msra.mxu0 0
  %3551 = vmatprep.subr.bf16.mxu0 0
  %3552 = vmatpush1.bf16.msra.mxu0 0
  %3553 = vmatprep.subr.bf16.mxu0 0
  %3554 = vmatpush1.bf16.msra.mxu0 0
  %3555 = vmatprep.subr.bf16.mxu0 0
  %3556 = vmatpush1.bf16.msra.mxu0 0
  %3557 = vmatprep.subr.bf16.mxu0 0
  %3558 = vmatpush1.bf16.msra.mxu0 0
  %3559 = vmatprep.mubr.bf16.mxu0 0
  %3560 = vmatmul.mubr.bf16.gmra.mrb[0].mxu0 %v287
  %v3561 = vpop.f32.mrb[0].mxu0
  %v3562 = vadd.f32 0.0, %v3561
  %v3563 = vpop.f32.mrb[0].mxu0
  %v3564 = vadd.f32 0.0, %v3563
  %v3565 = vpop.f32.mrb[0].mxu0
  %v3566 = vadd.f32 0.0, %v3565
  %v3567 = vpop.f32.mrb[0].mxu0
  %v3568 = vadd.f32 0.0, %v3567
  %3569 = vdwg.mxu0
  %3570 = vmatprep.subr.bf16.mxu0 %v3525
  %3571 = vmatpush1.bf16.msra.mxu0 %v3522
  %3572 = vmatprep.subr.bf16.mxu0 0
  %3573 = vmatpush1.bf16.msra.mxu0 0
  %3574 = vmatprep.subr.bf16.mxu0 0
  %3575 = vmatpush1.bf16.msra.mxu0 0
  %3576 = vmatprep.subr.bf16.mxu0 0
  %3577 = vmatpush1.bf16.msra.mxu0 0
  %3578 = vmatprep.subr.bf16.mxu0 0
  %3579 = vmatpush1.bf16.msra.mxu0 0
  %3580 = vmatprep.subr.bf16.mxu0 0
  %3581 = vmatpush1.bf16.msra.mxu0 0
  %3582 = vmatprep.subr.bf16.mxu0 0
  %3583 = vmatpush1.bf16.msra.mxu0 0
  %3584 = vmatprep.subr.bf16.mxu0 0
  %3585 = vmatpush1.bf16.msra.mxu0 0
  %3586 = vmatprep.subr.bf16.mxu0 0
  %3587 = vmatpush1.bf16.msra.mxu0 0
  %3588 = vmatprep.subr.bf16.mxu0 0
  %3589 = vmatpush1.bf16.msra.mxu0 0
  %3590 = vmatprep.subr.bf16.mxu0 0
  %3591 = vmatpush1.bf16.msra.mxu0 0
  %3592 = vmatprep.subr.bf16.mxu0 0
  %3593 = vmatpush1.bf16.msra.mxu0 0
  %3594 = vmatprep.subr.bf16.mxu0 0
  %3595 = vmatpush1.bf16.msra.mxu0 0
  %3596 = vmatprep.subr.bf16.mxu0 0
  %3597 = vmatpush1.bf16.msra.mxu0 0
  %3598 = vmatprep.subr.bf16.mxu0 0
  %3599 = vmatpush1.bf16.msra.mxu0 0
  %3600 = vmatprep.subr.bf16.mxu0 0
  %3601 = vmatpush1.bf16.msra.mxu0 0
  %3602 = vmatprep.mubr.bf16.mxu0 0
  %3603 = vmatmul.mubr.bf16.gmra.mrb[0].mxu0 %v287
  %v3604 = vpop.f32.mrb[0].mxu0
  %v3605 = vadd.f32 0.0, %v3604
  %v3606 = vpop.f32.mrb[0].mxu0
  %v3607 = vadd.f32 0.0, %v3606
  %v3608 = vpop.f32.mrb[0].mxu0
  %v3609 = vadd.f32 0.0, %v3608
  %v3610 = vpop.f32.mrb[0].mxu0
  %v3611 = vadd.f32 0.0, %v3610
  %3612 = vdwg.mxu0
  %v3614 = vand.u32 %v3144, %v292
  %v3617 = vand.u32 %v3145, %v292
  %v3620 = vand.u32 %v3146, %v292
  %v3623 = vand.u32 %v3147, %v292
  %3625 = vmatprep.subr.bf16.mxu0 %v3617
  %3626 = vmatpush1.bf16.msra.mxu0 %v3614
  %3627 = vmatprep.subr.bf16.mxu0 0
  %3628 = vmatpush1.bf16.msra.mxu0 0
  %3629 = vmatprep.subr.bf16.mxu0 0
  %3630 = vmatpush1.bf16.msra.mxu0 0
  %3631 = vmatprep.subr.bf16.mxu0 0
  %3632 = vmatpush1.bf16.msra.mxu0 0
  %3633 = vmatprep.subr.bf16.mxu0 0
  %3634 = vmatpush1.bf16.msra.mxu0 0
  %3635 = vmatprep.subr.bf16.mxu0 0
  %3636 = vmatpush1.bf16.msra.mxu0 0
  %3637 = vmatprep.subr.bf16.mxu0 0
  %3638 = vmatpush1.bf16.msra.mxu0 0
  %3639 = vmatprep.subr.bf16.mxu0 0
  %3640 = vmatpush1.bf16.msra.mxu0 0
  %3641 = vmatprep.subr.bf16.mxu0 0
  %3642 = vmatpush1.bf16.msra.mxu0 0
  %3643 = vmatprep.subr.bf16.mxu0 0
  %3644 = vmatpush1.bf16.msra.mxu0 0
  %3645 = vmatprep.subr.bf16.mxu0 0
  %3646 = vmatpush1.bf16.msra.mxu0 0
  %3647 = vmatprep.subr.bf16.mxu0 0
  %3648 = vmatpush1.bf16.msra.mxu0 0
  %3649 = vmatprep.subr.bf16.mxu0 0
  %3650 = vmatpush1.bf16.msra.mxu0 0
  %3651 = vmatprep.subr.bf16.mxu0 0
  %3652 = vmatpush1.bf16.msra.mxu0 0
  %3653 = vmatprep.subr.bf16.mxu0 0
  %3654 = vmatpush1.bf16.msra.mxu0 0
  %3655 = vmatprep.subr.bf16.mxu0 0
  %3656 = vmatpush1.bf16.msra.mxu0 0
  %3657 = vmatprep.mubr.bf16.mxu0 0
  %3658 = vmatmul.mubr.bf16.gmra.mrb[0].mxu0 %v287
  %v3659 = vpop.f32.mrb[0].mxu0
  %v3660 = vadd.f32 0.0, %v3659
  %v3661 = vpop.f32.mrb[0].mxu0
  %v3662 = vadd.f32 0.0, %v3661
  %v3663 = vpop.f32.mrb[0].mxu0
  %v3664 = vadd.f32 0.0, %v3663
  %v3665 = vpop.f32.mrb[0].mxu0
  %v3666 = vadd.f32 0.0, %v3665
  %3667 = vdwg.mxu0
  %3668 = vmatprep.subr.bf16.mxu0 %v3623
  %3669 = vmatpush1.bf16.msra.mxu0 %v3620
  %3670 = vmatprep.subr.bf16.mxu0 0
  %3671 = vmatpush1.bf16.msra.mxu0 0
  %3672 = vmatprep.subr.bf16.mxu0 0
  %3673 = vmatpush1.bf16.msra.mxu0 0
  %3674 = vmatprep.subr.bf16.mxu0 0
  %3675 = vmatpush1.bf16.msra.mxu0 0
  %3676 = vmatprep.subr.bf16.mxu0 0
  %3677 = vmatpush1.bf16.msra.mxu0 0
  %3678 = vmatprep.subr.bf16.mxu0 0
  %3679 = vmatpush1.bf16.msra.mxu0 0
  %3680 = vmatprep.subr.bf16.mxu0 0
  %3681 = vmatpush1.bf16.msra.mxu0 0
  %3682 = vmatprep.subr.bf16.mxu0 0
  %3683 = vmatpush1.bf16.msra.mxu0 0
  %3684 = vmatprep.subr.bf16.mxu0 0
  %3685 = vmatpush1.bf16.msra.mxu0 0
  %3686 = vmatprep.subr.bf16.mxu0 0
  %3687 = vmatpush1.bf16.msra.mxu0 0
  %3688 = vmatprep.subr.bf16.mxu0 0
  %3689 = vmatpush1.bf16.msra.mxu0 0
  %3690 = vmatprep.subr.bf16.mxu0 0
  %3691 = vmatpush1.bf16.msra.mxu0 0
  %3692 = vmatprep.subr.bf16.mxu0 0
  %3693 = vmatpush1.bf16.msra.mxu0 0
  %3694 = vmatprep.subr.bf16.mxu0 0
  %3695 = vmatpush1.bf16.msra.mxu0 0
  %3696 = vmatprep.subr.bf16.mxu0 0
  %3697 = vmatpush1.bf16.msra.mxu0 0
  %3698 = vmatprep.subr.bf16.mxu0 0
  %3699 = vmatpush1.bf16.msra.mxu0 0
  %3700 = vmatprep.mubr.bf16.mxu0 0
  %3701 = vmatmul.mubr.bf16.gmra.mrb[0].mxu0 %v287
  %v3702 = vpop.f32.mrb[0].mxu0
  %v3703 = vadd.f32 0.0, %v3702
  %v3704 = vpop.f32.mrb[0].mxu0
  %v3705 = vadd.f32 0.0, %v3704
  %v3706 = vpop.f32.mrb[0].mxu0
  %v3707 = vadd.f32 0.0, %v3706
  %v3708 = vpop.f32.mrb[0].mxu0
  %v3709 = vadd.f32 0.0, %v3708
  %3710 = vdwg.mxu0
  %v3712 = vand.u32 %v3148, %v292
  %v3715 = vand.u32 %v3149, %v292
  %v3718 = vand.u32 %v3150, %v292
  %v3721 = vand.u32 %v3151, %v292
  %3723 = vmatprep.subr.bf16.mxu0 %v3715
  %3724 = vmatpush1.bf16.msra.mxu0 %v3712
  %3725 = vmatprep.subr.bf16.mxu0 0
  %3726 = vmatpush1.bf16.msra.mxu0 0
  %3727 = vmatprep.subr.bf16.mxu0 0
  %3728 = vmatpush1.bf16.msra.mxu0 0
  %3729 = vmatprep.subr.bf16.mxu0 0
  %3730 = vmatpush1.bf16.msra.mxu0 0
  %3731 = vmatprep.subr.bf16.mxu0 0
  %3732 = vmatpush1.bf16.msra.mxu0 0
  %3733 = vmatprep.subr.bf16.mxu0 0
  %3734 = vmatpush1.bf16.msra.mxu0 0
  %3735 = vmatprep.subr.bf16.mxu0 0
  %3736 = vmatpush1.bf16.msra.mxu0 0
  %3737 = vmatprep.subr.bf16.mxu0 0
  %3738 = vmatpush1.bf16.msra.mxu0 0
  %3739 = vmatprep.subr.bf16.mxu0 0
  %3740 = vmatpush1.bf16.msra.mxu0 0
  %3741 = vmatprep.subr.bf16.mxu0 0
  %3742 = vmatpush1.bf16.msra.mxu0 0
  %3743 = vmatprep.subr.bf16.mxu0 0
  %3744 = vmatpush1.bf16.msra.mxu0 0
  %3745 = vmatprep.subr.bf16.mxu0 0
  %3746 = vmatpush1.bf16.msra.mxu0 0
  %3747 = vmatprep.subr.bf16.mxu0 0
  %3748 = vmatpush1.bf16.msra.mxu0 0
  %3749 = vmatprep.subr.bf16.mxu0 0
  %3750 = vmatpush1.bf16.msra.mxu0 0
  %3751 = vmatprep.subr.bf16.mxu0 0
  %3752 = vmatpush1.bf16.msra.mxu0 0
  %3753 = vmatprep.subr.bf16.mxu0 0
  %3754 = vmatpush1.bf16.msra.mxu0 0
  %3755 = vmatprep.mubr.bf16.mxu0 0
  %3756 = vmatmul.mubr.bf16.gmra.mrb[0].mxu0 %v287
  %v3757 = vpop.f32.mrb[0].mxu0
  %v3758 = vadd.f32 0.0, %v3757
  %v3759 = vpop.f32.mrb[0].mxu0
  %v3760 = vadd.f32 0.0, %v3759
  %v3761 = vpop.f32.mrb[0].mxu0
  %v3762 = vadd.f32 0.0, %v3761
  %v3763 = vpop.f32.mrb[0].mxu0
  %v3764 = vadd.f32 0.0, %v3763
  %3765 = vdwg.mxu0
  %3766 = vmatprep.subr.bf16.mxu0 %v3721
  %3767 = vmatpush1.bf16.msra.mxu0 %v3718
  %3768 = vmatprep.subr.bf16.mxu0 0
  %3769 = vmatpush1.bf16.msra.mxu0 0
  %3770 = vmatprep.subr.bf16.mxu0 0
  %3771 = vmatpush1.bf16.msra.mxu0 0
  %3772 = vmatprep.subr.bf16.mxu0 0
  %3773 = vmatpush1.bf16.msra.mxu0 0
  %3774 = vmatprep.subr.bf16.mxu0 0
  %3775 = vmatpush1.bf16.msra.mxu0 0
  %3776 = vmatprep.subr.bf16.mxu0 0
  %3777 = vmatpush1.bf16.msra.mxu0 0
  %3778 = vmatprep.subr.bf16.mxu0 0
  %3779 = vmatpush1.bf16.msra.mxu0 0
  %3780 = vmatprep.subr.bf16.mxu0 0
  %3781 = vmatpush1.bf16.msra.mxu0 0
  %3782 = vmatprep.subr.bf16.mxu0 0
  %3783 = vmatpush1.bf16.msra.mxu0 0
  %3784 = vmatprep.subr.bf16.mxu0 0
  %3785 = vmatpush1.bf16.msra.mxu0 0
  %3786 = vmatprep.subr.bf16.mxu0 0
  %3787 = vmatpush1.bf16.msra.mxu0 0
  %3788 = vmatprep.subr.bf16.mxu0 0
  %3789 = vmatpush1.bf16.msra.mxu0 0
  %3790 = vmatprep.subr.bf16.mxu0 0
  %3791 = vmatpush1.bf16.msra.mxu0 0
  %3792 = vmatprep.subr.bf16.mxu0 0
  %3793 = vmatpush1.bf16.msra.mxu0 0
  %3794 = vmatprep.subr.bf16.mxu0 0
  %3795 = vmatpush1.bf16.msra.mxu0 0
  %3796 = vmatprep.subr.bf16.mxu0 0
  %3797 = vmatpush1.bf16.msra.mxu0 0
  %3798 = vmatprep.mubr.bf16.mxu0 0
  %3799 = vmatmul.mubr.bf16.gmra.mrb[0].mxu0 %v287
  %v3800 = vpop.f32.mrb[0].mxu0
  %v3801 = vadd.f32 0.0, %v3800
  %v3802 = vpop.f32.mrb[0].mxu0
  %v3803 = vadd.f32 0.0, %v3802
  %v3804 = vpop.f32.mrb[0].mxu0
  %v3805 = vadd.f32 0.0, %v3804
  %v3806 = vpop.f32.mrb[0].mxu0
  %v3807 = vadd.f32 0.0, %v3806
  %3808 = vdwg.mxu0
  %v3810 = vand.u32 %v3152, %v292
  %v3813 = vand.u32 %v3153, %v292
  %v3816 = vand.u32 %v3154, %v292
  %v3819 = vand.u32 %v3155, %v292
  %3821 = vmatprep.subr.bf16.mxu0 %v3813
  %3822 = vmatpush1.bf16.msra.mxu0 %v3810
  %3823 = vmatprep.subr.bf16.mxu0 0
  %3824 = vmatpush1.bf16.msra.mxu0 0
  %3825 = vmatprep.subr.bf16.mxu0 0
  %3826 = vmatpush1.bf16.msra.mxu0 0
  %3827 = vmatprep.subr.bf16.mxu0 0
  %3828 = vmatpush1.bf16.msra.mxu0 0
  %3829 = vmatprep.subr.bf16.mxu0 0
  %3830 = vmatpush1.bf16.msra.mxu0 0
  %3831 = vmatprep.subr.bf16.mxu0 0
  %3832 = vmatpush1.bf16.msra.mxu0 0
  %3833 = vmatprep.subr.bf16.mxu0 0
  %3834 = vmatpush1.bf16.msra.mxu0 0
  %3835 = vmatprep.subr.bf16.mxu0 0
  %3836 = vmatpush1.bf16.msra.mxu0 0
  %3837 = vmatprep.subr.bf16.mxu0 0
  %3838 = vmatpush1.bf16.msra.mxu0 0
  %3839 = vmatprep.subr.bf16.mxu0 0
  %3840 = vmatpush1.bf16.msra.mxu0 0
  %3841 = vmatprep.subr.bf16.mxu0 0
  %3842 = vmatpush1.bf16.msra.mxu0 0
  %3843 = vmatprep.subr.bf16.mxu0 0
  %3844 = vmatpush1.bf16.msra.mxu0 0
  %3845 = vmatprep.subr.bf16.mxu0 0
  %3846 = vmatpush1.bf16.msra.mxu0 0
  %3847 = vmatprep.subr.bf16.mxu0 0
  %3848 = vmatpush1.bf16.msra.mxu0 0
  %3849 = vmatprep.subr.bf16.mxu0 0
  %3850 = vmatpush1.bf16.msra.mxu0 0
  %3851 = vmatprep.subr.bf16.mxu0 0
  %3852 = vmatpush1.bf16.msra.mxu0 0
  %3853 = vmatprep.mubr.bf16.mxu0 0
  %3854 = vmatmul.mubr.bf16.gmra.mrb[0].mxu0 %v287
  %v3855 = vpop.f32.mrb[0].mxu0
  %v3856 = vadd.f32 0.0, %v3855
  %v3857 = vpop.f32.mrb[0].mxu0
  %v3858 = vadd.f32 0.0, %v3857
  %v3859 = vpop.f32.mrb[0].mxu0
  %v3860 = vadd.f32 0.0, %v3859
  %v3861 = vpop.f32.mrb[0].mxu0
  %v3862 = vadd.f32 0.0, %v3861
  %3863 = vdwg.mxu0
  %3864 = vmatprep.subr.bf16.mxu0 %v3819
  %3865 = vmatpush1.bf16.msra.mxu0 %v3816
  %3866 = vmatprep.subr.bf16.mxu0 0
  %3867 = vmatpush1.bf16.msra.mxu0 0
  %3868 = vmatprep.subr.bf16.mxu0 0
  %3869 = vmatpush1.bf16.msra.mxu0 0
  %3870 = vmatprep.subr.bf16.mxu0 0
  %3871 = vmatpush1.bf16.msra.mxu0 0
  %3872 = vmatprep.subr.bf16.mxu0 0
  %3873 = vmatpush1.bf16.msra.mxu0 0
  %3874 = vmatprep.subr.bf16.mxu0 0
  %3875 = vmatpush1.bf16.msra.mxu0 0
  %3876 = vmatprep.subr.bf16.mxu0 0
  %3877 = vmatpush1.bf16.msra.mxu0 0
  %3878 = vmatprep.subr.bf16.mxu0 0
  %3879 = vmatpush1.bf16.msra.mxu0 0
  %3880 = vmatprep.subr.bf16.mxu0 0
  %3881 = vmatpush1.bf16.msra.mxu0 0
  %3882 = vmatprep.subr.bf16.mxu0 0
  %3883 = vmatpush1.bf16.msra.mxu0 0
  %3884 = vmatprep.subr.bf16.mxu0 0
  %3885 = vmatpush1.bf16.msra.mxu0 0
  %3886 = vmatprep.subr.bf16.mxu0 0
  %3887 = vmatpush1.bf16.msra.mxu0 0
  %3888 = vmatprep.subr.bf16.mxu0 0
  %3889 = vmatpush1.bf16.msra.mxu0 0
  %3890 = vmatprep.subr.bf16.mxu0 0
  %3891 = vmatpush1.bf16.msra.mxu0 0
  %3892 = vmatprep.subr.bf16.mxu0 0
  %3893 = vmatpush1.bf16.msra.mxu0 0
  %3894 = vmatprep.subr.bf16.mxu0 0
  %3895 = vmatpush1.bf16.msra.mxu0 0
  %3896 = vmatprep.mubr.bf16.mxu0 0
  %3897 = vmatmul.mubr.bf16.gmra.mrb[0].mxu0 %v287
  %v3898 = vpop.f32.mrb[0].mxu0
  %v3899 = vadd.f32 0.0, %v3898
  %v3900 = vpop.f32.mrb[0].mxu0
  %v3901 = vadd.f32 0.0, %v3900
  %v3902 = vpop.f32.mrb[0].mxu0
  %v3903 = vadd.f32 0.0, %v3902
  %v3904 = vpop.f32.mrb[0].mxu0
  %v3905 = vadd.f32 0.0, %v3904
  %3906 = vdwg.mxu0
  %v3908 = vand.u32 %v3156, %v292
  %v3911 = vand.u32 %v3157, %v292
  %v3914 = vand.u32 %v3158, %v292
  %v3917 = vand.u32 %v3159, %v292
  %3919 = vmatprep.subr.bf16.mxu0 %v3911
  %3920 = vmatpush1.bf16.msra.mxu0 %v3908
  %3921 = vmatprep.subr.bf16.mxu0 0
  %3922 = vmatpush1.bf16.msra.mxu0 0
  %3923 = vmatprep.subr.bf16.mxu0 0
  %3924 = vmatpush1.bf16.msra.mxu0 0
  %3925 = vmatprep.subr.bf16.mxu0 0
  %3926 = vmatpush1.bf16.msra.mxu0 0
  %3927 = vmatprep.subr.bf16.mxu0 0
  %3928 = vmatpush1.bf16.msra.mxu0 0
  %3929 = vmatprep.subr.bf16.mxu0 0
  %3930 = vmatpush1.bf16.msra.mxu0 0
  %3931 = vmatprep.subr.bf16.mxu0 0
  %3932 = vmatpush1.bf16.msra.mxu0 0
  %3933 = vmatprep.subr.bf16.mxu0 0
  %3934 = vmatpush1.bf16.msra.mxu0 0
  %3935 = vmatprep.subr.bf16.mxu0 0
  %3936 = vmatpush1.bf16.msra.mxu0 0
  %3937 = vmatprep.subr.bf16.mxu0 0
  %3938 = vmatpush1.bf16.msra.mxu0 0
  %3939 = vmatprep.subr.bf16.mxu0 0
  %3940 = vmatpush1.bf16.msra.mxu0 0
  %3941 = vmatprep.subr.bf16.mxu0 0
  %3942 = vmatpush1.bf16.msra.mxu0 0
  %3943 = vmatprep.subr.bf16.mxu0 0
  %3944 = vmatpush1.bf16.msra.mxu0 0
  %3945 = vmatprep.subr.bf16.mxu0 0
  %3946 = vmatpush1.bf16.msra.mxu0 0
  %3947 = vmatprep.subr.bf16.mxu0 0
  %3948 = vmatpush1.bf16.msra.mxu0 0
  %3949 = vmatprep.subr.bf16.mxu0 0
  %3950 = vmatpush1.bf16.msra.mxu0 0
  %3951 = vmatprep.mubr.bf16.mxu0 0
  %3952 = vmatmul.mubr.bf16.gmra.mrb[0].mxu0 %v287
  %v3953 = vpop.f32.mrb[0].mxu0
  %v3954 = vadd.f32 0.0, %v3953
  %v3955 = vpop.f32.mrb[0].mxu0
  %v3956 = vadd.f32 0.0, %v3955
  %v3957 = vpop.f32.mrb[0].mxu0
  %v3958 = vadd.f32 0.0, %v3957
  %v3959 = vpop.f32.mrb[0].mxu0
  %v3960 = vadd.f32 0.0, %v3959
  %3961 = vdwg.mxu0
  %3962 = vmatprep.subr.bf16.mxu0 %v3917
  %3963 = vmatpush1.bf16.msra.mxu0 %v3914
  %3964 = vmatprep.subr.bf16.mxu0 0
  %3965 = vmatpush1.bf16.msra.mxu0 0
  %3966 = vmatprep.subr.bf16.mxu0 0
  %3967 = vmatpush1.bf16.msra.mxu0 0
  %3968 = vmatprep.subr.bf16.mxu0 0
  %3969 = vmatpush1.bf16.msra.mxu0 0
  %3970 = vmatprep.subr.bf16.mxu0 0
  %3971 = vmatpush1.bf16.msra.mxu0 0
  %3972 = vmatprep.subr.bf16.mxu0 0
  %3973 = vmatpush1.bf16.msra.mxu0 0
  %3974 = vmatprep.subr.bf16.mxu0 0
  %3975 = vmatpush1.bf16.msra.mxu0 0
  %3976 = vmatprep.subr.bf16.mxu0 0
  %3977 = vmatpush1.bf16.msra.mxu0 0
  %3978 = vmatprep.subr.bf16.mxu0 0
  %3979 = vmatpush1.bf16.msra.mxu0 0
  %3980 = vmatprep.subr.bf16.mxu0 0
  %3981 = vmatpush1.bf16.msra.mxu0 0
  %3982 = vmatprep.subr.bf16.mxu0 0
  %3983 = vmatpush1.bf16.msra.mxu0 0
  %3984 = vmatprep.subr.bf16.mxu0 0
  %3985 = vmatpush1.bf16.msra.mxu0 0
  %3986 = vmatprep.subr.bf16.mxu0 0
  %3987 = vmatpush1.bf16.msra.mxu0 0
  %3988 = vmatprep.subr.bf16.mxu0 0
  %3989 = vmatpush1.bf16.msra.mxu0 0
  %3990 = vmatprep.subr.bf16.mxu0 0
  %3991 = vmatpush1.bf16.msra.mxu0 0
  %3992 = vmatprep.subr.bf16.mxu0 0
  %3993 = vmatpush1.bf16.msra.mxu0 0
  %3994 = vmatprep.mubr.bf16.mxu0 0
  %3995 = vmatmul.mubr.bf16.gmra.mrb[0].mxu0 %v287
  %v3996 = vpop.f32.mrb[0].mxu0
  %v3997 = vadd.f32 0.0, %v3996
  %v3998 = vpop.f32.mrb[0].mxu0
  %v3999 = vadd.f32 0.0, %v3998
  %v4000 = vpop.f32.mrb[0].mxu0
  %v4001 = vadd.f32 0.0, %v4000
  %v4002 = vpop.f32.mrb[0].mxu0
  %v4003 = vadd.f32 0.0, %v4002
  %4004 = vdwg.mxu0
  %v4006 = vand.u32 %v3160, %v292
  %v4009 = vand.u32 %v3161, %v292
  %v4012 = vand.u32 %v3162, %v292
  %v4015 = vand.u32 %v3163, %v292
  %4017 = vmatprep.subr.bf16.mxu0 %v4009
  %4018 = vmatpush1.bf16.msra.mxu0 %v4006
  %4019 = vmatprep.subr.bf16.mxu0 0
  %4020 = vmatpush1.bf16.msra.mxu0 0
  %4021 = vmatprep.subr.bf16.mxu0 0
  %4022 = vmatpush1.bf16.msra.mxu0 0
  %4023 = vmatprep.subr.bf16.mxu0 0
  %4024 = vmatpush1.bf16.msra.mxu0 0
  %4025 = vmatprep.subr.bf16.mxu0 0
  %4026 = vmatpush1.bf16.msra.mxu0 0
  %4027 = vmatprep.subr.bf16.mxu0 0
  %4028 = vmatpush1.bf16.msra.mxu0 0
  %4029 = vmatprep.subr.bf16.mxu0 0
  %4030 = vmatpush1.bf16.msra.mxu0 0
  %4031 = vmatprep.subr.bf16.mxu0 0
  %4032 = vmatpush1.bf16.msra.mxu0 0
  %4033 = vmatprep.subr.bf16.mxu0 0
  %4034 = vmatpush1.bf16.msra.mxu0 0
  %4035 = vmatprep.subr.bf16.mxu0 0
  %4036 = vmatpush1.bf16.msra.mxu0 0
  %4037 = vmatprep.subr.bf16.mxu0 0
  %4038 = vmatpush1.bf16.msra.mxu0 0
  %4039 = vmatprep.subr.bf16.mxu0 0
  %4040 = vmatpush1.bf16.msra.mxu0 0
  %4041 = vmatprep.subr.bf16.mxu0 0
  %4042 = vmatpush1.bf16.msra.mxu0 0
  %4043 = vmatprep.subr.bf16.mxu0 0
  %4044 = vmatpush1.bf16.msra.mxu0 0
  %4045 = vmatprep.subr.bf16.mxu0 0
  %4046 = vmatpush1.bf16.msra.mxu0 0
  %4047 = vmatprep.subr.bf16.mxu0 0
  %4048 = vmatpush1.bf16.msra.mxu0 0
  %4049 = vmatprep.mubr.bf16.mxu0 0
  %4050 = vmatmul.mubr.bf16.gmra.mrb[0].mxu0 %v287
  %v4051 = vpop.f32.mrb[0].mxu0
  %v4052 = vadd.f32 0.0, %v4051
  %v4053 = vpop.f32.mrb[0].mxu0
  %v4054 = vadd.f32 0.0, %v4053
  %v4055 = vpop.f32.mrb[0].mxu0
  %v4056 = vadd.f32 0.0, %v4055
  %v4057 = vpop.f32.mrb[0].mxu0
  %v4058 = vadd.f32 0.0, %v4057
  %4059 = vdwg.mxu0
  %4060 = vmatprep.subr.bf16.mxu0 %v4015
  %4061 = vmatpush1.bf16.msra.mxu0 %v4012
  %4062 = vmatprep.subr.bf16.mxu0 0
  %4063 = vmatpush1.bf16.msra.mxu0 0
  %4064 = vmatprep.subr.bf16.mxu0 0
  %4065 = vmatpush1.bf16.msra.mxu0 0
  %4066 = vmatprep.subr.bf16.mxu0 0
  %4067 = vmatpush1.bf16.msra.mxu0 0
  %4068 = vmatprep.subr.bf16.mxu0 0
  %4069 = vmatpush1.bf16.msra.mxu0 0
  %4070 = vmatprep.subr.bf16.mxu0 0
  %4071 = vmatpush1.bf16.msra.mxu0 0
  %4072 = vmatprep.subr.bf16.mxu0 0
  %4073 = vmatpush1.bf16.msra.mxu0 0
  %4074 = vmatprep.subr.bf16.mxu0 0
  %4075 = vmatpush1.bf16.msra.mxu0 0
  %4076 = vmatprep.subr.bf16.mxu0 0
  %4077 = vmatpush1.bf16.msra.mxu0 0
  %4078 = vmatprep.subr.bf16.mxu0 0
  %4079 = vmatpush1.bf16.msra.mxu0 0
  %4080 = vmatprep.subr.bf16.mxu0 0
  %4081 = vmatpush1.bf16.msra.mxu0 0
  %4082 = vmatprep.subr.bf16.mxu0 0
  %4083 = vmatpush1.bf16.msra.mxu0 0
  %4084 = vmatprep.subr.bf16.mxu0 0
  %4085 = vmatpush1.bf16.msra.mxu0 0
  %4086 = vmatprep.subr.bf16.mxu0 0
  %4087 = vmatpush1.bf16.msra.mxu0 0
  %4088 = vmatprep.subr.bf16.mxu0 0
  %4089 = vmatpush1.bf16.msra.mxu0 0
  %4090 = vmatprep.subr.bf16.mxu0 0
  %4091 = vmatpush1.bf16.msra.mxu0 0
  %4092 = vmatprep.mubr.bf16.mxu0 0
  %4093 = vmatmul.mubr.bf16.gmra.mrb[0].mxu0 %v287
  %v4094 = vpop.f32.mrb[0].mxu0
  %v4095 = vadd.f32 0.0, %v4094
  %v4096 = vpop.f32.mrb[0].mxu0
  %v4097 = vadd.f32 0.0, %v4096
  %v4098 = vpop.f32.mrb[0].mxu0
  %v4099 = vadd.f32 0.0, %v4098
  %v4100 = vpop.f32.mrb[0].mxu0
  %v4101 = vadd.f32 0.0, %v4100
  %4102 = vdwg.mxu0
  %v4104 = vand.u32 %v3164, %v292
  %v4107 = vand.u32 %v3165, %v292
  %v4110 = vand.u32 %v3166, %v292
  %v4113 = vand.u32 %v3167, %v292
  %4115 = vmatprep.subr.bf16.mxu0 %v4107
  %4116 = vmatpush1.bf16.msra.mxu0 %v4104
  %4117 = vmatprep.subr.bf16.mxu0 0
  %4118 = vmatpush1.bf16.msra.mxu0 0
  %4119 = vmatprep.subr.bf16.mxu0 0
  %4120 = vmatpush1.bf16.msra.mxu0 0
  %4121 = vmatprep.subr.bf16.mxu0 0
  %4122 = vmatpush1.bf16.msra.mxu0 0
  %4123 = vmatprep.subr.bf16.mxu0 0
  %4124 = vmatpush1.bf16.msra.mxu0 0
  %4125 = vmatprep.subr.bf16.mxu0 0
  %4126 = vmatpush1.bf16.msra.mxu0 0
  %4127 = vmatprep.subr.bf16.mxu0 0
  %4128 = vmatpush1.bf16.msra.mxu0 0
  %4129 = vmatprep.subr.bf16.mxu0 0
  %4130 = vmatpush1.bf16.msra.mxu0 0
  %4131 = vmatprep.subr.bf16.mxu0 0
  %4132 = vmatpush1.bf16.msra.mxu0 0
  %4133 = vmatprep.subr.bf16.mxu0 0
  %4134 = vmatpush1.bf16.msra.mxu0 0
  %4135 = vmatprep.subr.bf16.mxu0 0
  %4136 = vmatpush1.bf16.msra.mxu0 0
  %4137 = vmatprep.subr.bf16.mxu0 0
  %4138 = vmatpush1.bf16.msra.mxu0 0
  %4139 = vmatprep.subr.bf16.mxu0 0
  %4140 = vmatpush1.bf16.msra.mxu0 0
  %4141 = vmatprep.subr.bf16.mxu0 0
  %4142 = vmatpush1.bf16.msra.mxu0 0
  %4143 = vmatprep.subr.bf16.mxu0 0
  %4144 = vmatpush1.bf16.msra.mxu0 0
  %4145 = vmatprep.subr.bf16.mxu0 0
  %4146 = vmatpush1.bf16.msra.mxu0 0
  %4147 = vmatprep.mubr.bf16.mxu0 0
  %4148 = vmatmul.mubr.bf16.gmra.mrb[0].mxu0 %v287
  %v4149 = vpop.f32.mrb[0].mxu0
  %v4150 = vadd.f32 0.0, %v4149
  %v4151 = vpop.f32.mrb[0].mxu0
  %v4152 = vadd.f32 0.0, %v4151
  %v4153 = vpop.f32.mrb[0].mxu0
  %v4154 = vadd.f32 0.0, %v4153
  %v4155 = vpop.f32.mrb[0].mxu0
  %v4156 = vadd.f32 0.0, %v4155
  %4157 = vdwg.mxu0
  %4158 = vmatprep.subr.bf16.mxu0 %v4113
  %4159 = vmatpush1.bf16.msra.mxu0 %v4110
  %4160 = vmatprep.subr.bf16.mxu0 0
  %4161 = vmatpush1.bf16.msra.mxu0 0
  %4162 = vmatprep.subr.bf16.mxu0 0
  %4163 = vmatpush1.bf16.msra.mxu0 0
  %4164 = vmatprep.subr.bf16.mxu0 0
  %4165 = vmatpush1.bf16.msra.mxu0 0
  %4166 = vmatprep.subr.bf16.mxu0 0
  %4167 = vmatpush1.bf16.msra.mxu0 0
  %4168 = vmatprep.subr.bf16.mxu0 0
  %4169 = vmatpush1.bf16.msra.mxu0 0
  %4170 = vmatprep.subr.bf16.mxu0 0
  %4171 = vmatpush1.bf16.msra.mxu0 0
  %4172 = vmatprep.subr.bf16.mxu0 0
  %4173 = vmatpush1.bf16.msra.mxu0 0
  %4174 = vmatprep.subr.bf16.mxu0 0
  %4175 = vmatpush1.bf16.msra.mxu0 0
  %4176 = vmatprep.subr.bf16.mxu0 0
  %4177 = vmatpush1.bf16.msra.mxu0 0
  %4178 = vmatprep.subr.bf16.mxu0 0
  %4179 = vmatpush1.bf16.msra.mxu0 0
  %4180 = vmatprep.subr.bf16.mxu0 0
  %4181 = vmatpush1.bf16.msra.mxu0 0
  %4182 = vmatprep.subr.bf16.mxu0 0
  %4183 = vmatpush1.bf16.msra.mxu0 0
  %4184 = vmatprep.subr.bf16.mxu0 0
  %4185 = vmatpush1.bf16.msra.mxu0 0
  %4186 = vmatprep.subr.bf16.mxu0 0
  %4187 = vmatpush1.bf16.msra.mxu0 0
  %4188 = vmatprep.subr.bf16.mxu0 0
  %4189 = vmatpush1.bf16.msra.mxu0 0
  %4190 = vmatprep.mubr.bf16.mxu0 0
  %4191 = vmatmul.mubr.bf16.gmra.mrb[0].mxu0 %v287
  %v4192 = vpop.f32.mrb[0].mxu0
  %v4193 = vadd.f32 0.0, %v4192
  %v4194 = vpop.f32.mrb[0].mxu0
  %v4195 = vadd.f32 0.0, %v4194
  %v4196 = vpop.f32.mrb[0].mxu0
  %v4197 = vadd.f32 0.0, %v4196
  %v4198 = vpop.f32.mrb[0].mxu0
  %v4199 = vadd.f32 0.0, %v4198
  %4200 = vdwg.mxu0
  %4206 = vrot.lane.b32.xlu0 %v3240, 1
  %v4207 = vpop.permute.xlu0 %4206
  %4208 = vrot.lane.b32.xlu0 %v3241, 1
  %v4209 = vpop.permute.xlu0 %4208
  %4210 = vrot.lane.b32.xlu0 %v3242, 1
  %v4211 = vpop.permute.xlu0 %4210
  %4212 = vrot.lane.b32.xlu0 %v3243, 1
  %v4213 = vpop.permute.xlu0 %4212
  %4214 = vrot.lane.b32.xlu0 %v3244, 1
  %v4215 = vpop.permute.xlu0 %4214
  %v4216 = vsel %vm221, %v4207, %v4209
  %v4217 = vsel %vm221, %v4209, %v4211
  %v4218 = vsel %vm221, %v4211, %v4213
  %v4219 = vsel %vm221, %v4213, %v4215
  %v4221 = vand.u32 %v4216, %v292
  %v4224 = vand.u32 %v4217, %v292
  %v4227 = vand.u32 %v4218, %v292
  %v4230 = vand.u32 %v4219, %v292
  %4232 = vmatprep.subr.bf16.mxu0 %v4224
  %4233 = vmatpush1.bf16.msra.mxu0 %v4221
  %4234 = vmatprep.subr.bf16.mxu0 0
  %4235 = vmatpush1.bf16.msra.mxu0 0
  %4236 = vmatprep.subr.bf16.mxu0 0
  %4237 = vmatpush1.bf16.msra.mxu0 0
  %4238 = vmatprep.subr.bf16.mxu0 0
  %4239 = vmatpush1.bf16.msra.mxu0 0
  %4240 = vmatprep.subr.bf16.mxu0 0
  %4241 = vmatpush1.bf16.msra.mxu0 0
  %4242 = vmatprep.subr.bf16.mxu0 0
  %4243 = vmatpush1.bf16.msra.mxu0 0
  %4244 = vmatprep.subr.bf16.mxu0 0
  %4245 = vmatpush1.bf16.msra.mxu0 0
  %4246 = vmatprep.subr.bf16.mxu0 0
  %4247 = vmatpush1.bf16.msra.mxu0 0
  %4248 = vmatprep.subr.bf16.mxu0 0
  %4249 = vmatpush1.bf16.msra.mxu0 0
  %4250 = vmatprep.subr.bf16.mxu0 0
  %4251 = vmatpush1.bf16.msra.mxu0 0
  %4252 = vmatprep.subr.bf16.mxu0 0
  %4253 = vmatpush1.bf16.msra.mxu0 0
  %4254 = vmatprep.subr.bf16.mxu0 0
  %4255 = vmatpush1.bf16.msra.mxu0 0
  %4256 = vmatprep.subr.bf16.mxu0 0
  %4257 = vmatpush1.bf16.msra.mxu0 0
  %4258 = vmatprep.subr.bf16.mxu0 0
  %4259 = vmatpush1.bf16.msra.mxu0 0
  %4260 = vmatprep.subr.bf16.mxu0 0
  %4261 = vmatpush1.bf16.msra.mxu0 0
  %4262 = vmatprep.subr.bf16.mxu0 0
  %4263 = vmatpush1.bf16.msra.mxu0 0
  %4264 = vmatprep.mubr.bf16.mxu0 0
  %4265 = vmatmul.mubr.bf16.gmra.mrb[0].mxu0 %v1083
  %v4266 = vpop.f32.mrb[0].mxu0
  %v4267 = vadd.f32 %v3464, %v4266
  %v4268 = vpop.f32.mrb[0].mxu0
  %v4269 = vadd.f32 %v3466, %v4268
  %v4270 = vpop.f32.mrb[0].mxu0
  %v4271 = vadd.f32 %v3468, %v4270
  %v4272 = vpop.f32.mrb[0].mxu0
  %v4273 = vadd.f32 %v3470, %v4272
  %4274 = vdwg.mxu0
  %4275 = vmatprep.subr.bf16.mxu0 %v4230
  %4276 = vmatpush1.bf16.msra.mxu0 %v4227
  %4277 = vmatprep.subr.bf16.mxu0 0
  %4278 = vmatpush1.bf16.msra.mxu0 0
  %4279 = vmatprep.subr.bf16.mxu0 0
  %4280 = vmatpush1.bf16.msra.mxu0 0
  %4281 = vmatprep.subr.bf16.mxu0 0
  %4282 = vmatpush1.bf16.msra.mxu0 0
  %4283 = vmatprep.subr.bf16.mxu0 0
  %4284 = vmatpush1.bf16.msra.mxu0 0
  %4285 = vmatprep.subr.bf16.mxu0 0
  %4286 = vmatpush1.bf16.msra.mxu0 0
  %4287 = vmatprep.subr.bf16.mxu0 0
  %4288 = vmatpush1.bf16.msra.mxu0 0
  %4289 = vmatprep.subr.bf16.mxu0 0
  %4290 = vmatpush1.bf16.msra.mxu0 0
  %4291 = vmatprep.subr.bf16.mxu0 0
  %4292 = vmatpush1.bf16.msra.mxu0 0
  %4293 = vmatprep.subr.bf16.mxu0 0
  %4294 = vmatpush1.bf16.msra.mxu0 0
  %4295 = vmatprep.subr.bf16.mxu0 0
  %4296 = vmatpush1.bf16.msra.mxu0 0
  %4297 = vmatprep.subr.bf16.mxu0 0
  %4298 = vmatpush1.bf16.msra.mxu0 0
  %4299 = vmatprep.subr.bf16.mxu0 0
  %4300 = vmatpush1.bf16.msra.mxu0 0
  %4301 = vmatprep.subr.bf16.mxu0 0
  %4302 = vmatpush1.bf16.msra.mxu0 0
  %4303 = vmatprep.subr.bf16.mxu0 0
  %4304 = vmatpush1.bf16.msra.mxu0 0
  %4305 = vmatprep.subr.bf16.mxu0 0
  %4306 = vmatpush1.bf16.msra.mxu0 0
  %4307 = vmatprep.mubr.bf16.mxu0 0
  %4308 = vmatmul.mubr.bf16.gmra.mrb[0].mxu0 %v1083
  %v4309 = vpop.f32.mrb[0].mxu0
  %v4310 = vadd.f32 %v3507, %v4309
  %v4311 = vpop.f32.mrb[0].mxu0
  %v4312 = vadd.f32 %v3509, %v4311
  %v4313 = vpop.f32.mrb[0].mxu0
  %v4314 = vadd.f32 %v3511, %v4313
  %v4315 = vpop.f32.mrb[0].mxu0
  %v4316 = vadd.f32 %v3513, %v4315
  %4317 = vdwg.mxu0
  %4323 = vrot.lane.b32.xlu0 %v3245, 1
  %v4324 = vpop.permute.xlu0 %4323
  %4325 = vrot.lane.b32.xlu0 %v3246, 1
  %v4326 = vpop.permute.xlu0 %4325
  %4327 = vrot.lane.b32.xlu0 %v3247, 1
  %v4328 = vpop.permute.xlu0 %4327
  %4329 = vrot.lane.b32.xlu0 %v3248, 1
  %v4330 = vpop.permute.xlu0 %4329
  %4331 = vrot.lane.b32.xlu0 %v3249, 1
  %v4332 = vpop.permute.xlu0 %4331
  %v4333 = vsel %vm221, %v4324, %v4326
  %v4334 = vsel %vm221, %v4326, %v4328
  %v4335 = vsel %vm221, %v4328, %v4330
  %v4336 = vsel %vm221, %v4330, %v4332
  %v4338 = vand.u32 %v4333, %v292
  %v4341 = vand.u32 %v4334, %v292
  %v4344 = vand.u32 %v4335, %v292
  %v4347 = vand.u32 %v4336, %v292
  %4349 = vmatprep.subr.bf16.mxu0 %v4341
  %4350 = vmatpush1.bf16.msra.mxu0 %v4338
  %4351 = vmatprep.subr.bf16.mxu0 0
  %4352 = vmatpush1.bf16.msra.mxu0 0
  %4353 = vmatprep.subr.bf16.mxu0 0
  %4354 = vmatpush1.bf16.msra.mxu0 0
  %4355 = vmatprep.subr.bf16.mxu0 0
  %4356 = vmatpush1.bf16.msra.mxu0 0
  %4357 = vmatprep.subr.bf16.mxu0 0
  %4358 = vmatpush1.bf16.msra.mxu0 0
  %4359 = vmatprep.subr.bf16.mxu0 0
  %4360 = vmatpush1.bf16.msra.mxu0 0
  %4361 = vmatprep.subr.bf16.mxu0 0
  %4362 = vmatpush1.bf16.msra.mxu0 0
  %4363 = vmatprep.subr.bf16.mxu0 0
  %4364 = vmatpush1.bf16.msra.mxu0 0
  %4365 = vmatprep.subr.bf16.mxu0 0
  %4366 = vmatpush1.bf16.msra.mxu0 0
  %4367 = vmatprep.subr.bf16.mxu0 0
  %4368 = vmatpush1.bf16.msra.mxu0 0
  %4369 = vmatprep.subr.bf16.mxu0 0
  %4370 = vmatpush1.bf16.msra.mxu0 0
  %4371 = vmatprep.subr.bf16.mxu0 0
  %4372 = vmatpush1.bf16.msra.mxu0 0
  %4373 = vmatprep.subr.bf16.mxu0 0
  %4374 = vmatpush1.bf16.msra.mxu0 0
  %4375 = vmatprep.subr.bf16.mxu0 0
  %4376 = vmatpush1.bf16.msra.mxu0 0
  %4377 = vmatprep.subr.bf16.mxu0 0
  %4378 = vmatpush1.bf16.msra.mxu0 0
  %4379 = vmatprep.subr.bf16.mxu0 0
  %4380 = vmatpush1.bf16.msra.mxu0 0
  %4381 = vmatprep.mubr.bf16.mxu0 0
  %4382 = vmatmul.mubr.bf16.gmra.mrb[0].mxu0 %v1083
  %v4383 = vpop.f32.mrb[0].mxu0
  %v4384 = vadd.f32 %v3562, %v4383
  %v4385 = vpop.f32.mrb[0].mxu0
  %v4386 = vadd.f32 %v3564, %v4385
  %v4387 = vpop.f32.mrb[0].mxu0
  %v4388 = vadd.f32 %v3566, %v4387
  %v4389 = vpop.f32.mrb[0].mxu0
  %v4390 = vadd.f32 %v3568, %v4389
  %4391 = vdwg.mxu0
  %4392 = vmatprep.subr.bf16.mxu0 %v4347
  %4393 = vmatpush1.bf16.msra.mxu0 %v4344
  %4394 = vmatprep.subr.bf16.mxu0 0
  %4395 = vmatpush1.bf16.msra.mxu0 0
  %4396 = vmatprep.subr.bf16.mxu0 0
  %4397 = vmatpush1.bf16.msra.mxu0 0
  %4398 = vmatprep.subr.bf16.mxu0 0
  %4399 = vmatpush1.bf16.msra.mxu0 0
  %4400 = vmatprep.subr.bf16.mxu0 0
  %4401 = vmatpush1.bf16.msra.mxu0 0
  %4402 = vmatprep.subr.bf16.mxu0 0
  %4403 = vmatpush1.bf16.msra.mxu0 0
  %4404 = vmatprep.subr.bf16.mxu0 0
  %4405 = vmatpush1.bf16.msra.mxu0 0
  %4406 = vmatprep.subr.bf16.mxu0 0
  %4407 = vmatpush1.bf16.msra.mxu0 0
  %4408 = vmatprep.subr.bf16.mxu0 0
  %4409 = vmatpush1.bf16.msra.mxu0 0
  %4410 = vmatprep.subr.bf16.mxu0 0
  %4411 = vmatpush1.bf16.msra.mxu0 0
  %4412 = vmatprep.subr.bf16.mxu0 0
  %4413 = vmatpush1.bf16.msra.mxu0 0
  %4414 = vmatprep.subr.bf16.mxu0 0
  %4415 = vmatpush1.bf16.msra.mxu0 0
  %4416 = vmatprep.subr.bf16.mxu0 0
  %4417 = vmatpush1.bf16.msra.mxu0 0
  %4418 = vmatprep.subr.bf16.mxu0 0
  %4419 = vmatpush1.bf16.msra.mxu0 0
  %4420 = vmatprep.subr.bf16.mxu0 0
  %4421 = vmatpush1.bf16.msra.mxu0 0
  %4422 = vmatprep.subr.bf16.mxu0 0
  %4423 = vmatpush1.bf16.msra.mxu0 0
  %4424 = vmatprep.mubr.bf16.mxu0 0
  %4425 = vmatmul.mubr.bf16.gmra.mrb[0].mxu0 %v1083
  %v4426 = vpop.f32.mrb[0].mxu0
  %v4427 = vadd.f32 %v3605, %v4426
  %v4428 = vpop.f32.mrb[0].mxu0
  %v4429 = vadd.f32 %v3607, %v4428
  %v4430 = vpop.f32.mrb[0].mxu0
  %v4431 = vadd.f32 %v3609, %v4430
  %v4432 = vpop.f32.mrb[0].mxu0
  %v4433 = vadd.f32 %v3611, %v4432
  %4434 = vdwg.mxu0
  %4440 = vrot.lane.b32.xlu0 %v3250, 1
  %v4441 = vpop.permute.xlu0 %4440
  %4442 = vrot.lane.b32.xlu0 %v3251, 1
  %v4443 = vpop.permute.xlu0 %4442
  %4444 = vrot.lane.b32.xlu0 %v3252, 1
  %v4445 = vpop.permute.xlu0 %4444
  %4446 = vrot.lane.b32.xlu0 %v3253, 1
  %v4447 = vpop.permute.xlu0 %4446
  %4448 = vrot.lane.b32.xlu0 %v3254, 1
  %v4449 = vpop.permute.xlu0 %4448
  %v4450 = vsel %vm221, %v4441, %v4443
  %v4451 = vsel %vm221, %v4443, %v4445
  %v4452 = vsel %vm221, %v4445, %v4447
  %v4453 = vsel %vm221, %v4447, %v4449
  %v4455 = vand.u32 %v4450, %v292
  %v4458 = vand.u32 %v4451, %v292
  %v4461 = vand.u32 %v4452, %v292
  %v4464 = vand.u32 %v4453, %v292
  %4466 = vmatprep.subr.bf16.mxu0 %v4458
  %4467 = vmatpush1.bf16.msra.mxu0 %v4455
  %4468 = vmatprep.subr.bf16.mxu0 0
  %4469 = vmatpush1.bf16.msra.mxu0 0
  %4470 = vmatprep.subr.bf16.mxu0 0
  %4471 = vmatpush1.bf16.msra.mxu0 0
  %4472 = vmatprep.subr.bf16.mxu0 0
  %4473 = vmatpush1.bf16.msra.mxu0 0
  %4474 = vmatprep.subr.bf16.mxu0 0
  %4475 = vmatpush1.bf16.msra.mxu0 0
  %4476 = vmatprep.subr.bf16.mxu0 0
  %4477 = vmatpush1.bf16.msra.mxu0 0
  %4478 = vmatprep.subr.bf16.mxu0 0
  %4479 = vmatpush1.bf16.msra.mxu0 0
  %4480 = vmatprep.subr.bf16.mxu0 0
  %4481 = vmatpush1.bf16.msra.mxu0 0
  %4482 = vmatprep.subr.bf16.mxu0 0
  %4483 = vmatpush1.bf16.msra.mxu0 0
  %4484 = vmatprep.subr.bf16.mxu0 0
  %4485 = vmatpush1.bf16.msra.mxu0 0
  %4486 = vmatprep.subr.bf16.mxu0 0
  %4487 = vmatpush1.bf16.msra.mxu0 0
  %4488 = vmatprep.subr.bf16.mxu0 0
  %4489 = vmatpush1.bf16.msra.mxu0 0
  %4490 = vmatprep.subr.bf16.mxu0 0
  %4491 = vmatpush1.bf16.msra.mxu0 0
  %4492 = vmatprep.subr.bf16.mxu0 0
  %4493 = vmatpush1.bf16.msra.mxu0 0
  %4494 = vmatprep.subr.bf16.mxu0 0
  %4495 = vmatpush1.bf16.msra.mxu0 0
  %4496 = vmatprep.subr.bf16.mxu0 0
  %4497 = vmatpush1.bf16.msra.mxu0 0
  %4498 = vmatprep.mubr.bf16.mxu0 0
  %4499 = vmatmul.mubr.bf16.gmra.mrb[0].mxu0 %v1083
  %v4500 = vpop.f32.mrb[0].mxu0
  %v4501 = vadd.f32 %v3660, %v4500
  %v4502 = vpop.f32.mrb[0].mxu0
  %v4503 = vadd.f32 %v3662, %v4502
  %v4504 = vpop.f32.mrb[0].mxu0
  %v4505 = vadd.f32 %v3664, %v4504
  %v4506 = vpop.f32.mrb[0].mxu0
  %v4507 = vadd.f32 %v3666, %v4506
  %4508 = vdwg.mxu0
  %4509 = vmatprep.subr.bf16.mxu0 %v4464
  %4510 = vmatpush1.bf16.msra.mxu0 %v4461
  %4511 = vmatprep.subr.bf16.mxu0 0
  %4512 = vmatpush1.bf16.msra.mxu0 0
  %4513 = vmatprep.subr.bf16.mxu0 0
  %4514 = vmatpush1.bf16.msra.mxu0 0
  %4515 = vmatprep.subr.bf16.mxu0 0
  %4516 = vmatpush1.bf16.msra.mxu0 0
  %4517 = vmatprep.subr.bf16.mxu0 0
  %4518 = vmatpush1.bf16.msra.mxu0 0
  %4519 = vmatprep.subr.bf16.mxu0 0
  %4520 = vmatpush1.bf16.msra.mxu0 0
  %4521 = vmatprep.subr.bf16.mxu0 0
  %4522 = vmatpush1.bf16.msra.mxu0 0
  %4523 = vmatprep.subr.bf16.mxu0 0
  %4524 = vmatpush1.bf16.msra.mxu0 0
  %4525 = vmatprep.subr.bf16.mxu0 0
  %4526 = vmatpush1.bf16.msra.mxu0 0
  %4527 = vmatprep.subr.bf16.mxu0 0
  %4528 = vmatpush1.bf16.msra.mxu0 0
  %4529 = vmatprep.subr.bf16.mxu0 0
  %4530 = vmatpush1.bf16.msra.mxu0 0
  %4531 = vmatprep.subr.bf16.mxu0 0
  %4532 = vmatpush1.bf16.msra.mxu0 0
  %4533 = vmatprep.subr.bf16.mxu0 0
  %4534 = vmatpush1.bf16.msra.mxu0 0
  %4535 = vmatprep.subr.bf16.mxu0 0
  %4536 = vmatpush1.bf16.msra.mxu0 0
  %4537 = vmatprep.subr.bf16.mxu0 0
  %4538 = vmatpush1.bf16.msra.mxu0 0
  %4539 = vmatprep.subr.bf16.mxu0 0
  %4540 = vmatpush1.bf16.msra.mxu0 0
  %4541 = vmatprep.mubr.bf16.mxu0 0
  %4542 = vmatmul.mubr.bf16.gmra.mrb[0].mxu0 %v1083
  %v4543 = vpop.f32.mrb[0].mxu0
  %v4544 = vadd.f32 %v3703, %v4543
  %v4545 = vpop.f32.mrb[0].mxu0
  %v4546 = vadd.f32 %v3705, %v4545
  %v4547 = vpop.f32.mrb[0].mxu0
  %v4548 = vadd.f32 %v3707, %v4547
  %v4549 = vpop.f32.mrb[0].mxu0
  %v4550 = vadd.f32 %v3709, %v4549
  %4551 = vdwg.mxu0
  %4557 = vrot.lane.b32.xlu0 %v3255, 1
  %v4558 = vpop.permute.xlu0 %4557
  %4559 = vrot.lane.b32.xlu0 %v3256, 1
  %v4560 = vpop.permute.xlu0 %4559
  %4561 = vrot.lane.b32.xlu0 %v3257, 1
  %v4562 = vpop.permute.xlu0 %4561
  %4563 = vrot.lane.b32.xlu0 %v3258, 1
  %v4564 = vpop.permute.xlu0 %4563
  %4565 = vrot.lane.b32.xlu0 %v3259, 1
  %v4566 = vpop.permute.xlu0 %4565
  %v4567 = vsel %vm221, %v4558, %v4560
  %v4568 = vsel %vm221, %v4560, %v4562
  %v4569 = vsel %vm221, %v4562, %v4564
  %v4570 = vsel %vm221, %v4564, %v4566
  %v4572 = vand.u32 %v4567, %v292
  %v4575 = vand.u32 %v4568, %v292
  %v4578 = vand.u32 %v4569, %v292
  %v4581 = vand.u32 %v4570, %v292
  %4583 = vmatprep.subr.bf16.mxu0 %v4575
  %4584 = vmatpush1.bf16.msra.mxu0 %v4572
  %4585 = vmatprep.subr.bf16.mxu0 0
  %4586 = vmatpush1.bf16.msra.mxu0 0
  %4587 = vmatprep.subr.bf16.mxu0 0
  %4588 = vmatpush1.bf16.msra.mxu0 0
  %4589 = vmatprep.subr.bf16.mxu0 0
  %4590 = vmatpush1.bf16.msra.mxu0 0
  %4591 = vmatprep.subr.bf16.mxu0 0
  %4592 = vmatpush1.bf16.msra.mxu0 0
  %4593 = vmatprep.subr.bf16.mxu0 0
  %4594 = vmatpush1.bf16.msra.mxu0 0
  %4595 = vmatprep.subr.bf16.mxu0 0
  %4596 = vmatpush1.bf16.msra.mxu0 0
  %4597 = vmatprep.subr.bf16.mxu0 0
  %4598 = vmatpush1.bf16.msra.mxu0 0
  %4599 = vmatprep.subr.bf16.mxu0 0
  %4600 = vmatpush1.bf16.msra.mxu0 0
  %4601 = vmatprep.subr.bf16.mxu0 0
  %4602 = vmatpush1.bf16.msra.mxu0 0
  %4603 = vmatprep.subr.bf16.mxu0 0
  %4604 = vmatpush1.bf16.msra.mxu0 0
  %4605 = vmatprep.subr.bf16.mxu0 0
  %4606 = vmatpush1.bf16.msra.mxu0 0
  %4607 = vmatprep.subr.bf16.mxu0 0
  %4608 = vmatpush1.bf16.msra.mxu0 0
  %4609 = vmatprep.subr.bf16.mxu0 0
  %4610 = vmatpush1.bf16.msra.mxu0 0
  %4611 = vmatprep.subr.bf16.mxu0 0
  %4612 = vmatpush1.bf16.msra.mxu0 0
  %4613 = vmatprep.subr.bf16.mxu0 0
  %4614 = vmatpush1.bf16.msra.mxu0 0
  %4615 = vmatprep.mubr.bf16.mxu0 0
  %4616 = vmatmul.mubr.bf16.gmra.mrb[0].mxu0 %v1083
  %v4617 = vpop.f32.mrb[0].mxu0
  %v4618 = vadd.f32 %v3758, %v4617
  %v4619 = vpop.f32.mrb[0].mxu0
  %v4620 = vadd.f32 %v3760, %v4619
  %v4621 = vpop.f32.mrb[0].mxu0
  %v4622 = vadd.f32 %v3762, %v4621
  %v4623 = vpop.f32.mrb[0].mxu0
  %v4624 = vadd.f32 %v3764, %v4623
  %4625 = vdwg.mxu0
  %4626 = vmatprep.subr.bf16.mxu0 %v4581
  %4627 = vmatpush1.bf16.msra.mxu0 %v4578
  %4628 = vmatprep.subr.bf16.mxu0 0
  %4629 = vmatpush1.bf16.msra.mxu0 0
  %4630 = vmatprep.subr.bf16.mxu0 0
  %4631 = vmatpush1.bf16.msra.mxu0 0
  %4632 = vmatprep.subr.bf16.mxu0 0
  %4633 = vmatpush1.bf16.msra.mxu0 0
  %4634 = vmatprep.subr.bf16.mxu0 0
  %4635 = vmatpush1.bf16.msra.mxu0 0
  %4636 = vmatprep.subr.bf16.mxu0 0
  %4637 = vmatpush1.bf16.msra.mxu0 0
  %4638 = vmatprep.subr.bf16.mxu0 0
  %4639 = vmatpush1.bf16.msra.mxu0 0
  %4640 = vmatprep.subr.bf16.mxu0 0
  %4641 = vmatpush1.bf16.msra.mxu0 0
  %4642 = vmatprep.subr.bf16.mxu0 0
  %4643 = vmatpush1.bf16.msra.mxu0 0
  %4644 = vmatprep.subr.bf16.mxu0 0
  %4645 = vmatpush1.bf16.msra.mxu0 0
  %4646 = vmatprep.subr.bf16.mxu0 0
  %4647 = vmatpush1.bf16.msra.mxu0 0
  %4648 = vmatprep.subr.bf16.mxu0 0
  %4649 = vmatpush1.bf16.msra.mxu0 0
  %4650 = vmatprep.subr.bf16.mxu0 0
  %4651 = vmatpush1.bf16.msra.mxu0 0
  %4652 = vmatprep.subr.bf16.mxu0 0
  %4653 = vmatpush1.bf16.msra.mxu0 0
  %4654 = vmatprep.subr.bf16.mxu0 0
  %4655 = vmatpush1.bf16.msra.mxu0 0
  %4656 = vmatprep.subr.bf16.mxu0 0
  %4657 = vmatpush1.bf16.msra.mxu0 0
  %4658 = vmatprep.mubr.bf16.mxu0 0
  %4659 = vmatmul.mubr.bf16.gmra.mrb[0].mxu0 %v1083
  %v4660 = vpop.f32.mrb[0].mxu0
  %v4661 = vadd.f32 %v3801, %v4660
  %v4662 = vpop.f32.mrb[0].mxu0
  %v4663 = vadd.f32 %v3803, %v4662
  %v4664 = vpop.f32.mrb[0].mxu0
  %v4665 = vadd.f32 %v3805, %v4664
  %v4666 = vpop.f32.mrb[0].mxu0
  %v4667 = vadd.f32 %v3807, %v4666
  %4668 = vdwg.mxu0
  %4674 = vrot.lane.b32.xlu0 %v3260, 1
  %v4675 = vpop.permute.xlu0 %4674
  %4676 = vrot.lane.b32.xlu0 %v3261, 1
  %v4677 = vpop.permute.xlu0 %4676
  %4678 = vrot.lane.b32.xlu0 %v3262, 1
  %v4679 = vpop.permute.xlu0 %4678
  %4680 = vrot.lane.b32.xlu0 %v3263, 1
  %v4681 = vpop.permute.xlu0 %4680
  %4682 = vrot.lane.b32.xlu0 %v3264, 1
  %v4683 = vpop.permute.xlu0 %4682
  %v4684 = vsel %vm221, %v4675, %v4677
  %v4685 = vsel %vm221, %v4677, %v4679
  %v4686 = vsel %vm221, %v4679, %v4681
  %v4687 = vsel %vm221, %v4681, %v4683
  %v4689 = vand.u32 %v4684, %v292
  %v4692 = vand.u32 %v4685, %v292
  %v4695 = vand.u32 %v4686, %v292
  %v4698 = vand.u32 %v4687, %v292
  %4700 = vmatprep.subr.bf16.mxu0 %v4692
  %4701 = vmatpush1.bf16.msra.mxu0 %v4689
  %4702 = vmatprep.subr.bf16.mxu0 0
  %4703 = vmatpush1.bf16.msra.mxu0 0
  %4704 = vmatprep.subr.bf16.mxu0 0
  %4705 = vmatpush1.bf16.msra.mxu0 0
  %4706 = vmatprep.subr.bf16.mxu0 0
  %4707 = vmatpush1.bf16.msra.mxu0 0
  %4708 = vmatprep.subr.bf16.mxu0 0
  %4709 = vmatpush1.bf16.msra.mxu0 0
  %4710 = vmatprep.subr.bf16.mxu0 0
  %4711 = vmatpush1.bf16.msra.mxu0 0
  %4712 = vmatprep.subr.bf16.mxu0 0
  %4713 = vmatpush1.bf16.msra.mxu0 0
  %4714 = vmatprep.subr.bf16.mxu0 0
  %4715 = vmatpush1.bf16.msra.mxu0 0
  %4716 = vmatprep.subr.bf16.mxu0 0
  %4717 = vmatpush1.bf16.msra.mxu0 0
  %4718 = vmatprep.subr.bf16.mxu0 0
  %4719 = vmatpush1.bf16.msra.mxu0 0
  %4720 = vmatprep.subr.bf16.mxu0 0
  %4721 = vmatpush1.bf16.msra.mxu0 0
  %4722 = vmatprep.subr.bf16.mxu0 0
  %4723 = vmatpush1.bf16.msra.mxu0 0
  %4724 = vmatprep.subr.bf16.mxu0 0
  %4725 = vmatpush1.bf16.msra.mxu0 0
  %4726 = vmatprep.subr.bf16.mxu0 0
  %4727 = vmatpush1.bf16.msra.mxu0 0
  %4728 = vmatprep.subr.bf16.mxu0 0
  %4729 = vmatpush1.bf16.msra.mxu0 0
  %4730 = vmatprep.subr.bf16.mxu0 0
  %4731 = vmatpush1.bf16.msra.mxu0 0
  %4732 = vmatprep.mubr.bf16.mxu0 0
  %4733 = vmatmul.mubr.bf16.gmra.mrb[0].mxu0 %v1083
  %v4734 = vpop.f32.mrb[0].mxu0
  %v4735 = vadd.f32 %v3856, %v4734
  %v4736 = vpop.f32.mrb[0].mxu0
  %v4737 = vadd.f32 %v3858, %v4736
  %v4738 = vpop.f32.mrb[0].mxu0
  %v4739 = vadd.f32 %v3860, %v4738
  %v4740 = vpop.f32.mrb[0].mxu0
  %v4741 = vadd.f32 %v3862, %v4740
  %4742 = vdwg.mxu0
  %4743 = vmatprep.subr.bf16.mxu0 %v4698
  %4744 = vmatpush1.bf16.msra.mxu0 %v4695
  %4745 = vmatprep.subr.bf16.mxu0 0
  %4746 = vmatpush1.bf16.msra.mxu0 0
  %4747 = vmatprep.subr.bf16.mxu0 0
  %4748 = vmatpush1.bf16.msra.mxu0 0
  %4749 = vmatprep.subr.bf16.mxu0 0
  %4750 = vmatpush1.bf16.msra.mxu0 0
  %4751 = vmatprep.subr.bf16.mxu0 0
  %4752 = vmatpush1.bf16.msra.mxu0 0
  %4753 = vmatprep.subr.bf16.mxu0 0
  %4754 = vmatpush1.bf16.msra.mxu0 0
  %4755 = vmatprep.subr.bf16.mxu0 0
  %4756 = vmatpush1.bf16.msra.mxu0 0
  %4757 = vmatprep.subr.bf16.mxu0 0
  %4758 = vmatpush1.bf16.msra.mxu0 0
  %4759 = vmatprep.subr.bf16.mxu0 0
  %4760 = vmatpush1.bf16.msra.mxu0 0
  %4761 = vmatprep.subr.bf16.mxu0 0
  %4762 = vmatpush1.bf16.msra.mxu0 0
  %4763 = vmatprep.subr.bf16.mxu0 0
  %4764 = vmatpush1.bf16.msra.mxu0 0
  %4765 = vmatprep.subr.bf16.mxu0 0
  %4766 = vmatpush1.bf16.msra.mxu0 0
  %4767 = vmatprep.subr.bf16.mxu0 0
  %4768 = vmatpush1.bf16.msra.mxu0 0
  %4769 = vmatprep.subr.bf16.mxu0 0
  %4770 = vmatpush1.bf16.msra.mxu0 0
  %4771 = vmatprep.subr.bf16.mxu0 0
  %4772 = vmatpush1.bf16.msra.mxu0 0
  %4773 = vmatprep.subr.bf16.mxu0 0
  %4774 = vmatpush1.bf16.msra.mxu0 0
  %4775 = vmatprep.mubr.bf16.mxu0 0
  %4776 = vmatmul.mubr.bf16.gmra.mrb[0].mxu0 %v1083
  %v4777 = vpop.f32.mrb[0].mxu0
  %v4778 = vadd.f32 %v3899, %v4777
  %v4779 = vpop.f32.mrb[0].mxu0
  %v4780 = vadd.f32 %v3901, %v4779
  %v4781 = vpop.f32.mrb[0].mxu0
  %v4782 = vadd.f32 %v3903, %v4781
  %v4783 = vpop.f32.mrb[0].mxu0
  %v4784 = vadd.f32 %v3905, %v4783
  %4785 = vdwg.mxu0
  %4791 = vrot.lane.b32.xlu0 %v3265, 1
  %v4792 = vpop.permute.xlu0 %4791
  %4793 = vrot.lane.b32.xlu0 %v3266, 1
  %v4794 = vpop.permute.xlu0 %4793
  %4795 = vrot.lane.b32.xlu0 %v3267, 1
  %v4796 = vpop.permute.xlu0 %4795
  %4797 = vrot.lane.b32.xlu0 %v3268, 1
  %v4798 = vpop.permute.xlu0 %4797
  %4799 = vrot.lane.b32.xlu0 %v3269, 1
  %v4800 = vpop.permute.xlu0 %4799
  %v4801 = vsel %vm221, %v4792, %v4794
  %v4802 = vsel %vm221, %v4794, %v4796
  %v4803 = vsel %vm221, %v4796, %v4798
  %v4804 = vsel %vm221, %v4798, %v4800
  %v4806 = vand.u32 %v4801, %v292
  %v4809 = vand.u32 %v4802, %v292
  %v4812 = vand.u32 %v4803, %v292
  %v4815 = vand.u32 %v4804, %v292
  %4817 = vmatprep.subr.bf16.mxu0 %v4809
  %4818 = vmatpush1.bf16.msra.mxu0 %v4806
  %4819 = vmatprep.subr.bf16.mxu0 0
  %4820 = vmatpush1.bf16.msra.mxu0 0
  %4821 = vmatprep.subr.bf16.mxu0 0
  %4822 = vmatpush1.bf16.msra.mxu0 0
  %4823 = vmatprep.subr.bf16.mxu0 0
  %4824 = vmatpush1.bf16.msra.mxu0 0
  %4825 = vmatprep.subr.bf16.mxu0 0
  %4826 = vmatpush1.bf16.msra.mxu0 0
  %4827 = vmatprep.subr.bf16.mxu0 0
  %4828 = vmatpush1.bf16.msra.mxu0 0
  %4829 = vmatprep.subr.bf16.mxu0 0
  %4830 = vmatpush1.bf16.msra.mxu0 0
  %4831 = vmatprep.subr.bf16.mxu0 0
  %4832 = vmatpush1.bf16.msra.mxu0 0
  %4833 = vmatprep.subr.bf16.mxu0 0
  %4834 = vmatpush1.bf16.msra.mxu0 0
  %4835 = vmatprep.subr.bf16.mxu0 0
  %4836 = vmatpush1.bf16.msra.mxu0 0
  %4837 = vmatprep.subr.bf16.mxu0 0
  %4838 = vmatpush1.bf16.msra.mxu0 0
  %4839 = vmatprep.subr.bf16.mxu0 0
  %4840 = vmatpush1.bf16.msra.mxu0 0
  %4841 = vmatprep.subr.bf16.mxu0 0
  %4842 = vmatpush1.bf16.msra.mxu0 0
  %4843 = vmatprep.subr.bf16.mxu0 0
  %4844 = vmatpush1.bf16.msra.mxu0 0
  %4845 = vmatprep.subr.bf16.mxu0 0
  %4846 = vmatpush1.bf16.msra.mxu0 0
  %4847 = vmatprep.subr.bf16.mxu0 0
  %4848 = vmatpush1.bf16.msra.mxu0 0
  %4849 = vmatprep.mubr.bf16.mxu0 0
  %4850 = vmatmul.mubr.bf16.gmra.mrb[0].mxu0 %v1083
  %v4851 = vpop.f32.mrb[0].mxu0
  %v4852 = vadd.f32 %v3954, %v4851
  %v4853 = vpop.f32.mrb[0].mxu0
  %v4854 = vadd.f32 %v3956, %v4853
  %v4855 = vpop.f32.mrb[0].mxu0
  %v4856 = vadd.f32 %v3958, %v4855
  %v4857 = vpop.f32.mrb[0].mxu0
  %v4858 = vadd.f32 %v3960, %v4857
  %4859 = vdwg.mxu0
  %4860 = vmatprep.subr.bf16.mxu0 %v4815
  %4861 = vmatpush1.bf16.msra.mxu0 %v4812
  %4862 = vmatprep.subr.bf16.mxu0 0
  %4863 = vmatpush1.bf16.msra.mxu0 0
  %4864 = vmatprep.subr.bf16.mxu0 0
  %4865 = vmatpush1.bf16.msra.mxu0 0
  %4866 = vmatprep.subr.bf16.mxu0 0
  %4867 = vmatpush1.bf16.msra.mxu0 0
  %4868 = vmatprep.subr.bf16.mxu0 0
  %4869 = vmatpush1.bf16.msra.mxu0 0
  %4870 = vmatprep.subr.bf16.mxu0 0
  %4871 = vmatpush1.bf16.msra.mxu0 0
  %4872 = vmatprep.subr.bf16.mxu0 0
  %4873 = vmatpush1.bf16.msra.mxu0 0
  %4874 = vmatprep.subr.bf16.mxu0 0
  %4875 = vmatpush1.bf16.msra.mxu0 0
  %4876 = vmatprep.subr.bf16.mxu0 0
  %4877 = vmatpush1.bf16.msra.mxu0 0
  %4878 = vmatprep.subr.bf16.mxu0 0
  %4879 = vmatpush1.bf16.msra.mxu0 0
  %4880 = vmatprep.subr.bf16.mxu0 0
  %4881 = vmatpush1.bf16.msra.mxu0 0
  %4882 = vmatprep.subr.bf16.mxu0 0
  %4883 = vmatpush1.bf16.msra.mxu0 0
  %4884 = vmatprep.subr.bf16.mxu0 0
  %4885 = vmatpush1.bf16.msra.mxu0 0
  %4886 = vmatprep.subr.bf16.mxu0 0
  %4887 = vmatpush1.bf16.msra.mxu0 0
  %4888 = vmatprep.subr.bf16.mxu0 0
  %4889 = vmatpush1.bf16.msra.mxu0 0
  %4890 = vmatprep.subr.bf16.mxu0 0
  %4891 = vmatpush1.bf16.msra.mxu0 0
  %4892 = vmatprep.mubr.bf16.mxu0 0
  %4893 = vmatmul.mubr.bf16.gmra.mrb[0].mxu0 %v1083
  %v4894 = vpop.f32.mrb[0].mxu0
  %v4895 = vadd.f32 %v3997, %v4894
  %v4896 = vpop.f32.mrb[0].mxu0
  %v4897 = vadd.f32 %v3999, %v4896
  %v4898 = vpop.f32.mrb[0].mxu0
  %v4899 = vadd.f32 %v4001, %v4898
  %v4900 = vpop.f32.mrb[0].mxu0
  %v4901 = vadd.f32 %v4003, %v4900
  %4902 = vdwg.mxu0
  %4908 = vrot.lane.b32.xlu0 %v3270, 1
  %v4909 = vpop.permute.xlu0 %4908
  %4910 = vrot.lane.b32.xlu0 %v3271, 1
  %v4911 = vpop.permute.xlu0 %4910
  %4912 = vrot.lane.b32.xlu0 %v3272, 1
  %v4913 = vpop.permute.xlu0 %4912
  %4914 = vrot.lane.b32.xlu0 %v3273, 1
  %v4915 = vpop.permute.xlu0 %4914
  %4916 = vrot.lane.b32.xlu0 %v3274, 1
  %v4917 = vpop.permute.xlu0 %4916
  %v4918 = vsel %vm221, %v4909, %v4911
  %v4919 = vsel %vm221, %v4911, %v4913
  %v4920 = vsel %vm221, %v4913, %v4915
  %v4921 = vsel %vm221, %v4915, %v4917
  %v4923 = vand.u32 %v4918, %v292
  %v4926 = vand.u32 %v4919, %v292
  %v4929 = vand.u32 %v4920, %v292
  %v4932 = vand.u32 %v4921, %v292
  %4934 = vmatprep.subr.bf16.mxu0 %v4926
  %4935 = vmatpush1.bf16.msra.mxu0 %v4923
  %4936 = vmatprep.subr.bf16.mxu0 0
  %4937 = vmatpush1.bf16.msra.mxu0 0
  %4938 = vmatprep.subr.bf16.mxu0 0
  %4939 = vmatpush1.bf16.msra.mxu0 0
  %4940 = vmatprep.subr.bf16.mxu0 0
  %4941 = vmatpush1.bf16.msra.mxu0 0
  %4942 = vmatprep.subr.bf16.mxu0 0
  %4943 = vmatpush1.bf16.msra.mxu0 0
  %4944 = vmatprep.subr.bf16.mxu0 0
  %4945 = vmatpush1.bf16.msra.mxu0 0
  %4946 = vmatprep.subr.bf16.mxu0 0
  %4947 = vmatpush1.bf16.msra.mxu0 0
  %4948 = vmatprep.subr.bf16.mxu0 0
  %4949 = vmatpush1.bf16.msra.mxu0 0
  %4950 = vmatprep.subr.bf16.mxu0 0
  %4951 = vmatpush1.bf16.msra.mxu0 0
  %4952 = vmatprep.subr.bf16.mxu0 0
  %4953 = vmatpush1.bf16.msra.mxu0 0
  %4954 = vmatprep.subr.bf16.mxu0 0
  %4955 = vmatpush1.bf16.msra.mxu0 0
  %4956 = vmatprep.subr.bf16.mxu0 0
  %4957 = vmatpush1.bf16.msra.mxu0 0
  %4958 = vmatprep.subr.bf16.mxu0 0
  %4959 = vmatpush1.bf16.msra.mxu0 0
  %4960 = vmatprep.subr.bf16.mxu0 0
  %4961 = vmatpush1.bf16.msra.mxu0 0
  %4962 = vmatprep.subr.bf16.mxu0 0
  %4963 = vmatpush1.bf16.msra.mxu0 0
  %4964 = vmatprep.subr.bf16.mxu0 0
  %4965 = vmatpush1.bf16.msra.mxu0 0
  %4966 = vmatprep.mubr.bf16.mxu0 0
  %4967 = vmatmul.mubr.bf16.gmra.mrb[0].mxu0 %v1083
  %v4968 = vpop.f32.mrb[0].mxu0
  %v4969 = vadd.f32 %v4052, %v4968
  %v4970 = vpop.f32.mrb[0].mxu0
  %v4971 = vadd.f32 %v4054, %v4970
  %v4972 = vpop.f32.mrb[0].mxu0
  %v4973 = vadd.f32 %v4056, %v4972
  %v4974 = vpop.f32.mrb[0].mxu0
  %v4975 = vadd.f32 %v4058, %v4974
  %4976 = vdwg.mxu0
  %4977 = vmatprep.subr.bf16.mxu0 %v4932
  %4978 = vmatpush1.bf16.msra.mxu0 %v4929
  %4979 = vmatprep.subr.bf16.mxu0 0
  %4980 = vmatpush1.bf16.msra.mxu0 0
  %4981 = vmatprep.subr.bf16.mxu0 0
  %4982 = vmatpush1.bf16.msra.mxu0 0
  %4983 = vmatprep.subr.bf16.mxu0 0
  %4984 = vmatpush1.bf16.msra.mxu0 0
  %4985 = vmatprep.subr.bf16.mxu0 0
  %4986 = vmatpush1.bf16.msra.mxu0 0
  %4987 = vmatprep.subr.bf16.mxu0 0
  %4988 = vmatpush1.bf16.msra.mxu0 0
  %4989 = vmatprep.subr.bf16.mxu0 0
  %4990 = vmatpush1.bf16.msra.mxu0 0
  %4991 = vmatprep.subr.bf16.mxu0 0
  %4992 = vmatpush1.bf16.msra.mxu0 0
  %4993 = vmatprep.subr.bf16.mxu0 0
  %4994 = vmatpush1.bf16.msra.mxu0 0
  %4995 = vmatprep.subr.bf16.mxu0 0
  %4996 = vmatpush1.bf16.msra.mxu0 0
  %4997 = vmatprep.subr.bf16.mxu0 0
  %4998 = vmatpush1.bf16.msra.mxu0 0
  %4999 = vmatprep.subr.bf16.mxu0 0
  %5000 = vmatpush1.bf16.msra.mxu0 0
  %5001 = vmatprep.subr.bf16.mxu0 0
  %5002 = vmatpush1.bf16.msra.mxu0 0
  %5003 = vmatprep.subr.bf16.mxu0 0
  %5004 = vmatpush1.bf16.msra.mxu0 0
  %5005 = vmatprep.subr.bf16.mxu0 0
  %5006 = vmatpush1.bf16.msra.mxu0 0
  %5007 = vmatprep.subr.bf16.mxu0 0
  %5008 = vmatpush1.bf16.msra.mxu0 0
  %5009 = vmatprep.mubr.bf16.mxu0 0
  %5010 = vmatmul.mubr.bf16.gmra.mrb[0].mxu0 %v1083
  %v5011 = vpop.f32.mrb[0].mxu0
  %v5012 = vadd.f32 %v4095, %v5011
  %v5013 = vpop.f32.mrb[0].mxu0
  %v5014 = vadd.f32 %v4097, %v5013
  %v5015 = vpop.f32.mrb[0].mxu0
  %v5016 = vadd.f32 %v4099, %v5015
  %v5017 = vpop.f32.mrb[0].mxu0
  %v5018 = vadd.f32 %v4101, %v5017
  %5019 = vdwg.mxu0
  %5025 = vrot.lane.b32.xlu0 %v3275, 1
  %v5026 = vpop.permute.xlu0 %5025
  %5027 = vrot.lane.b32.xlu0 %v3276, 1
  %v5028 = vpop.permute.xlu0 %5027
  %5029 = vrot.lane.b32.xlu0 %v3277, 1
  %v5030 = vpop.permute.xlu0 %5029
  %5031 = vrot.lane.b32.xlu0 %v3278, 1
  %v5032 = vpop.permute.xlu0 %5031
  %5033 = vrot.lane.b32.xlu0 %v3279, 1
  %v5034 = vpop.permute.xlu0 %5033
  %v5035 = vsel %vm221, %v5026, %v5028
  %v5036 = vsel %vm221, %v5028, %v5030
  %v5037 = vsel %vm221, %v5030, %v5032
  %v5038 = vsel %vm221, %v5032, %v5034
  %v5040 = vand.u32 %v5035, %v292
  %v5043 = vand.u32 %v5036, %v292
  %v5046 = vand.u32 %v5037, %v292
  %v5049 = vand.u32 %v5038, %v292
  %5051 = vmatprep.subr.bf16.mxu0 %v5043
  %5052 = vmatpush1.bf16.msra.mxu0 %v5040
  %5053 = vmatprep.subr.bf16.mxu0 0
  %5054 = vmatpush1.bf16.msra.mxu0 0
  %5055 = vmatprep.subr.bf16.mxu0 0
  %5056 = vmatpush1.bf16.msra.mxu0 0
  %5057 = vmatprep.subr.bf16.mxu0 0
  %5058 = vmatpush1.bf16.msra.mxu0 0
  %5059 = vmatprep.subr.bf16.mxu0 0
  %5060 = vmatpush1.bf16.msra.mxu0 0
  %5061 = vmatprep.subr.bf16.mxu0 0
  %5062 = vmatpush1.bf16.msra.mxu0 0
  %5063 = vmatprep.subr.bf16.mxu0 0
  %5064 = vmatpush1.bf16.msra.mxu0 0
  %5065 = vmatprep.subr.bf16.mxu0 0
  %5066 = vmatpush1.bf16.msra.mxu0 0
  %5067 = vmatprep.subr.bf16.mxu0 0
  %5068 = vmatpush1.bf16.msra.mxu0 0
  %5069 = vmatprep.subr.bf16.mxu0 0
  %5070 = vmatpush1.bf16.msra.mxu0 0
  %5071 = vmatprep.subr.bf16.mxu0 0
  %5072 = vmatpush1.bf16.msra.mxu0 0
  %5073 = vmatprep.subr.bf16.mxu0 0
  %5074 = vmatpush1.bf16.msra.mxu0 0
  %5075 = vmatprep.subr.bf16.mxu0 0
  %5076 = vmatpush1.bf16.msra.mxu0 0
  %5077 = vmatprep.subr.bf16.mxu0 0
  %5078 = vmatpush1.bf16.msra.mxu0 0
  %5079 = vmatprep.subr.bf16.mxu0 0
  %5080 = vmatpush1.bf16.msra.mxu0 0
  %5081 = vmatprep.subr.bf16.mxu0 0
  %5082 = vmatpush1.bf16.msra.mxu0 0
  %5083 = vmatprep.mubr.bf16.mxu0 0
  %5084 = vmatmul.mubr.bf16.gmra.mrb[0].mxu0 %v1083
  %v5085 = vpop.f32.mrb[0].mxu0
  %v5086 = vadd.f32 %v4150, %v5085
  %v5087 = vpop.f32.mrb[0].mxu0
  %v5088 = vadd.f32 %v4152, %v5087
  %v5089 = vpop.f32.mrb[0].mxu0
  %v5090 = vadd.f32 %v4154, %v5089
  %v5091 = vpop.f32.mrb[0].mxu0
  %v5092 = vadd.f32 %v4156, %v5091
  %5093 = vdwg.mxu0
  %5094 = vmatprep.subr.bf16.mxu0 %v5049
  %5095 = vmatpush1.bf16.msra.mxu0 %v5046
  %5096 = vmatprep.subr.bf16.mxu0 0
  %5097 = vmatpush1.bf16.msra.mxu0 0
  %5098 = vmatprep.subr.bf16.mxu0 0
  %5099 = vmatpush1.bf16.msra.mxu0 0
  %5100 = vmatprep.subr.bf16.mxu0 0
  %5101 = vmatpush1.bf16.msra.mxu0 0
  %5102 = vmatprep.subr.bf16.mxu0 0
  %5103 = vmatpush1.bf16.msra.mxu0 0
  %5104 = vmatprep.subr.bf16.mxu0 0
  %5105 = vmatpush1.bf16.msra.mxu0 0
  %5106 = vmatprep.subr.bf16.mxu0 0
  %5107 = vmatpush1.bf16.msra.mxu0 0
  %5108 = vmatprep.subr.bf16.mxu0 0
  %5109 = vmatpush1.bf16.msra.mxu0 0
  %5110 = vmatprep.subr.bf16.mxu0 0
  %5111 = vmatpush1.bf16.msra.mxu0 0
  %5112 = vmatprep.subr.bf16.mxu0 0
  %5113 = vmatpush1.bf16.msra.mxu0 0
  %5114 = vmatprep.subr.bf16.mxu0 0
  %5115 = vmatpush1.bf16.msra.mxu0 0
  %5116 = vmatprep.subr.bf16.mxu0 0
  %5117 = vmatpush1.bf16.msra.mxu0 0
  %5118 = vmatprep.subr.bf16.mxu0 0
  %5119 = vmatpush1.bf16.msra.mxu0 0
  %5120 = vmatprep.subr.bf16.mxu0 0
  %5121 = vmatpush1.bf16.msra.mxu0 0
  %5122 = vmatprep.subr.bf16.mxu0 0
  %5123 = vmatpush1.bf16.msra.mxu0 0
  %5124 = vmatprep.subr.bf16.mxu0 0
  %5125 = vmatpush1.bf16.msra.mxu0 0
  %5126 = vmatprep.mubr.bf16.mxu0 0
  %5127 = vmatmul.mubr.bf16.gmra.mrb[0].mxu0 %v1083
  %v5128 = vpop.f32.mrb[0].mxu0
  %v5129 = vadd.f32 %v4193, %v5128
  %v5130 = vpop.f32.mrb[0].mxu0
  %v5131 = vadd.f32 %v4195, %v5130
  %v5132 = vpop.f32.mrb[0].mxu0
  %v5133 = vadd.f32 %v4197, %v5132
  %v5134 = vpop.f32.mrb[0].mxu0
  %v5135 = vadd.f32 %v4199, %v5134
  %5136 = vdwg.mxu0
  %v5138 = vand.u32 %v3376, %v292
  %v5141 = vand.u32 %v3377, %v292
  %v5144 = vand.u32 %v3378, %v292
  %v5146 = vand.u32 %v3402, %v292
  %5148 = vmatprep.subr.bf16.mxu0 %v5141
  %5149 = vmatpush1.bf16.msra.mxu0 %v5138
  %5150 = vmatprep.subr.bf16.mxu0 0
  %5151 = vmatpush1.bf16.msra.mxu0 0
  %5152 = vmatprep.subr.bf16.mxu0 0
  %5153 = vmatpush1.bf16.msra.mxu0 0
  %5154 = vmatprep.subr.bf16.mxu0 0
  %5155 = vmatpush1.bf16.msra.mxu0 0
  %5156 = vmatprep.subr.bf16.mxu0 0
  %5157 = vmatpush1.bf16.msra.mxu0 0
  %5158 = vmatprep.subr.bf16.mxu0 0
  %5159 = vmatpush1.bf16.msra.mxu0 0
  %5160 = vmatprep.subr.bf16.mxu0 0
  %5161 = vmatpush1.bf16.msra.mxu0 0
  %5162 = vmatprep.subr.bf16.mxu0 0
  %5163 = vmatpush1.bf16.msra.mxu0 0
  %5164 = vmatprep.subr.bf16.mxu0 0
  %5165 = vmatpush1.bf16.msra.mxu0 0
  %5166 = vmatprep.subr.bf16.mxu0 0
  %5167 = vmatpush1.bf16.msra.mxu0 0
  %5168 = vmatprep.subr.bf16.mxu0 0
  %5169 = vmatpush1.bf16.msra.mxu0 0
  %5170 = vmatprep.subr.bf16.mxu0 0
  %5171 = vmatpush1.bf16.msra.mxu0 0
  %5172 = vmatprep.subr.bf16.mxu0 0
  %5173 = vmatpush1.bf16.msra.mxu0 0
  %5174 = vmatprep.subr.bf16.mxu0 0
  %5175 = vmatpush1.bf16.msra.mxu0 0
  %5176 = vmatprep.subr.bf16.mxu0 0
  %5177 = vmatpush1.bf16.msra.mxu0 0
  %5178 = vmatprep.subr.bf16.mxu0 0
  %5179 = vmatpush1.bf16.msra.mxu0 0
  %5180 = vmatprep.mubr.bf16.mxu0 0
  %5181 = vmatmul.mubr.bf16.gmra.mrb[0].mxu0 %v1883
  %v5182 = vpop.f32.mrb[0].mxu0
  %v5183 = vadd.f32 0.0, %v5182
  %v5184 = vpop.f32.mrb[0].mxu0
  %v5185 = vadd.f32 0.0, %v5184
  %v5186 = vpop.f32.mrb[0].mxu0
  %v5187 = vadd.f32 0.0, %v5186
  %v5188 = vpop.f32.mrb[0].mxu0
  %v5189 = vadd.f32 0.0, %v5188
  %5190 = vdwg.mxu0
  %5191 = vmatprep.subr.bf16.mxu0 %v5146
  %5192 = vmatpush1.bf16.msra.mxu0 %v5144
  %5193 = vmatprep.subr.bf16.mxu0 0
  %5194 = vmatpush1.bf16.msra.mxu0 0
  %5195 = vmatprep.subr.bf16.mxu0 0
  %5196 = vmatpush1.bf16.msra.mxu0 0
  %5197 = vmatprep.subr.bf16.mxu0 0
  %5198 = vmatpush1.bf16.msra.mxu0 0
  %5199 = vmatprep.subr.bf16.mxu0 0
  %5200 = vmatpush1.bf16.msra.mxu0 0
  %5201 = vmatprep.subr.bf16.mxu0 0
  %5202 = vmatpush1.bf16.msra.mxu0 0
  %5203 = vmatprep.subr.bf16.mxu0 0
  %5204 = vmatpush1.bf16.msra.mxu0 0
  %5205 = vmatprep.subr.bf16.mxu0 0
  %5206 = vmatpush1.bf16.msra.mxu0 0
  %5207 = vmatprep.subr.bf16.mxu0 0
  %5208 = vmatpush1.bf16.msra.mxu0 0
  %5209 = vmatprep.subr.bf16.mxu0 0
  %5210 = vmatpush1.bf16.msra.mxu0 0
  %5211 = vmatprep.subr.bf16.mxu0 0
  %5212 = vmatpush1.bf16.msra.mxu0 0
  %5213 = vmatprep.subr.bf16.mxu0 0
  %5214 = vmatpush1.bf16.msra.mxu0 0
  %5215 = vmatprep.subr.bf16.mxu0 0
  %5216 = vmatpush1.bf16.msra.mxu0 0
  %5217 = vmatprep.subr.bf16.mxu0 0
  %5218 = vmatpush1.bf16.msra.mxu0 0
  %5219 = vmatprep.subr.bf16.mxu0 0
  %5220 = vmatpush1.bf16.msra.mxu0 0
  %5221 = vmatprep.subr.bf16.mxu0 0
  %5222 = vmatpush1.bf16.msra.mxu0 0
  %5223 = vmatprep.mubr.bf16.mxu0 0
  %5224 = vmatmul.mubr.bf16.gmra.mrb[0].mxu0 %v1883
  %v5225 = vpop.f32.mrb[0].mxu0
  %v5226 = vadd.f32 0.0, %v5225
  %v5227 = vpop.f32.mrb[0].mxu0
  %v5228 = vadd.f32 0.0, %v5227
  %v5229 = vpop.f32.mrb[0].mxu0
  %v5230 = vadd.f32 0.0, %v5229
  %v5231 = vpop.f32.mrb[0].mxu0
  %v5232 = vadd.f32 0.0, %v5231
  %5233 = vdwg.mxu0
  %v5235 = vand.u32 %v3379, %v292
  %v5238 = vand.u32 %v3380, %v292
  %v5241 = vand.u32 %v3381, %v292
  %v5243 = vand.u32 %v3404, %v292
  %5245 = vmatprep.subr.bf16.mxu0 %v5238
  %5246 = vmatpush1.bf16.msra.mxu0 %v5235
  %5247 = vmatprep.subr.bf16.mxu0 0
  %5248 = vmatpush1.bf16.msra.mxu0 0
  %5249 = vmatprep.subr.bf16.mxu0 0
  %5250 = vmatpush1.bf16.msra.mxu0 0
  %5251 = vmatprep.subr.bf16.mxu0 0
  %5252 = vmatpush1.bf16.msra.mxu0 0
  %5253 = vmatprep.subr.bf16.mxu0 0
  %5254 = vmatpush1.bf16.msra.mxu0 0
  %5255 = vmatprep.subr.bf16.mxu0 0
  %5256 = vmatpush1.bf16.msra.mxu0 0
  %5257 = vmatprep.subr.bf16.mxu0 0
  %5258 = vmatpush1.bf16.msra.mxu0 0
  %5259 = vmatprep.subr.bf16.mxu0 0
  %5260 = vmatpush1.bf16.msra.mxu0 0
  %5261 = vmatprep.subr.bf16.mxu0 0
  %5262 = vmatpush1.bf16.msra.mxu0 0
  %5263 = vmatprep.subr.bf16.mxu0 0
  %5264 = vmatpush1.bf16.msra.mxu0 0
  %5265 = vmatprep.subr.bf16.mxu0 0
  %5266 = vmatpush1.bf16.msra.mxu0 0
  %5267 = vmatprep.subr.bf16.mxu0 0
  %5268 = vmatpush1.bf16.msra.mxu0 0
  %5269 = vmatprep.subr.bf16.mxu0 0
  %5270 = vmatpush1.bf16.msra.mxu0 0
  %5271 = vmatprep.subr.bf16.mxu0 0
  %5272 = vmatpush1.bf16.msra.mxu0 0
  %5273 = vmatprep.subr.bf16.mxu0 0
  %5274 = vmatpush1.bf16.msra.mxu0 0
  %5275 = vmatprep.subr.bf16.mxu0 0
  %5276 = vmatpush1.bf16.msra.mxu0 0
  %5277 = vmatprep.mubr.bf16.mxu0 0
  %5278 = vmatmul.mubr.bf16.gmra.mrb[0].mxu0 %v1883
  %v5279 = vpop.f32.mrb[0].mxu0
  %v5280 = vadd.f32 0.0, %v5279
  %v5281 = vpop.f32.mrb[0].mxu0
  %v5282 = vadd.f32 0.0, %v5281
  %v5283 = vpop.f32.mrb[0].mxu0
  %v5284 = vadd.f32 0.0, %v5283
  %v5285 = vpop.f32.mrb[0].mxu0
  %v5286 = vadd.f32 0.0, %v5285
  %5287 = vdwg.mxu0
  %5288 = vmatprep.subr.bf16.mxu0 %v5243
  %5289 = vmatpush1.bf16.msra.mxu0 %v5241
  %5290 = vmatprep.subr.bf16.mxu0 0
  %5291 = vmatpush1.bf16.msra.mxu0 0
  %5292 = vmatprep.subr.bf16.mxu0 0
  %5293 = vmatpush1.bf16.msra.mxu0 0
  %5294 = vmatprep.subr.bf16.mxu0 0
  %5295 = vmatpush1.bf16.msra.mxu0 0
  %5296 = vmatprep.subr.bf16.mxu0 0
  %5297 = vmatpush1.bf16.msra.mxu0 0
  %5298 = vmatprep.subr.bf16.mxu0 0
  %5299 = vmatpush1.bf16.msra.mxu0 0
  %5300 = vmatprep.subr.bf16.mxu0 0
  %5301 = vmatpush1.bf16.msra.mxu0 0
  %5302 = vmatprep.subr.bf16.mxu0 0
  %5303 = vmatpush1.bf16.msra.mxu0 0
  %5304 = vmatprep.subr.bf16.mxu0 0
  %5305 = vmatpush1.bf16.msra.mxu0 0
  %5306 = vmatprep.subr.bf16.mxu0 0
  %5307 = vmatpush1.bf16.msra.mxu0 0
  %5308 = vmatprep.subr.bf16.mxu0 0
  %5309 = vmatpush1.bf16.msra.mxu0 0
  %5310 = vmatprep.subr.bf16.mxu0 0
  %5311 = vmatpush1.bf16.msra.mxu0 0
  %5312 = vmatprep.subr.bf16.mxu0 0
  %5313 = vmatpush1.bf16.msra.mxu0 0
  %5314 = vmatprep.subr.bf16.mxu0 0
  %5315 = vmatpush1.bf16.msra.mxu0 0
  %5316 = vmatprep.subr.bf16.mxu0 0
  %5317 = vmatpush1.bf16.msra.mxu0 0
  %5318 = vmatprep.subr.bf16.mxu0 0
  %5319 = vmatpush1.bf16.msra.mxu0 0
  %5320 = vmatprep.mubr.bf16.mxu0 0
  %5321 = vmatmul.mubr.bf16.gmra.mrb[0].mxu0 %v1883
  %v5322 = vpop.f32.mrb[0].mxu0
  %v5323 = vadd.f32 0.0, %v5322
  %v5324 = vpop.f32.mrb[0].mxu0
  %v5325 = vadd.f32 0.0, %v5324
  %v5326 = vpop.f32.mrb[0].mxu0
  %v5327 = vadd.f32 0.0, %v5326
  %v5328 = vpop.f32.mrb[0].mxu0
  %v5329 = vadd.f32 0.0, %v5328
  %5330 = vdwg.mxu0
  %v5332 = vand.u32 %v3382, %v292
  %v5335 = vand.u32 %v3383, %v292
  %v5338 = vand.u32 %v3384, %v292
  %v5340 = vand.u32 %v3406, %v292
  %5342 = vmatprep.subr.bf16.mxu0 %v5335
  %5343 = vmatpush1.bf16.msra.mxu0 %v5332
  %5344 = vmatprep.subr.bf16.mxu0 0
  %5345 = vmatpush1.bf16.msra.mxu0 0
  %5346 = vmatprep.subr.bf16.mxu0 0
  %5347 = vmatpush1.bf16.msra.mxu0 0
  %5348 = vmatprep.subr.bf16.mxu0 0
  %5349 = vmatpush1.bf16.msra.mxu0 0
  %5350 = vmatprep.subr.bf16.mxu0 0
  %5351 = vmatpush1.bf16.msra.mxu0 0
  %5352 = vmatprep.subr.bf16.mxu0 0
  %5353 = vmatpush1.bf16.msra.mxu0 0
  %5354 = vmatprep.subr.bf16.mxu0 0
  %5355 = vmatpush1.bf16.msra.mxu0 0
  %5356 = vmatprep.subr.bf16.mxu0 0
  %5357 = vmatpush1.bf16.msra.mxu0 0
  %5358 = vmatprep.subr.bf16.mxu0 0
  %5359 = vmatpush1.bf16.msra.mxu0 0
  %5360 = vmatprep.subr.bf16.mxu0 0
  %5361 = vmatpush1.bf16.msra.mxu0 0
  %5362 = vmatprep.subr.bf16.mxu0 0
  %5363 = vmatpush1.bf16.msra.mxu0 0
  %5364 = vmatprep.subr.bf16.mxu0 0
  %5365 = vmatpush1.bf16.msra.mxu0 0
  %5366 = vmatprep.subr.bf16.mxu0 0
  %5367 = vmatpush1.bf16.msra.mxu0 0
  %5368 = vmatprep.subr.bf16.mxu0 0
  %5369 = vmatpush1.bf16.msra.mxu0 0
  %5370 = vmatprep.subr.bf16.mxu0 0
  %5371 = vmatpush1.bf16.msra.mxu0 0
  %5372 = vmatprep.subr.bf16.mxu0 0
  %5373 = vmatpush1.bf16.msra.mxu0 0
  %5374 = vmatprep.mubr.bf16.mxu0 0
  %5375 = vmatmul.mubr.bf16.gmra.mrb[0].mxu0 %v1883
  %v5376 = vpop.f32.mrb[0].mxu0
  %v5377 = vadd.f32 0.0, %v5376
  %v5378 = vpop.f32.mrb[0].mxu0
  %v5379 = vadd.f32 0.0, %v5378
  %v5380 = vpop.f32.mrb[0].mxu0
  %v5381 = vadd.f32 0.0, %v5380
  %v5382 = vpop.f32.mrb[0].mxu0
  %v5383 = vadd.f32 0.0, %v5382
  %5384 = vdwg.mxu0
  %5385 = vmatprep.subr.bf16.mxu0 %v5340
  %5386 = vmatpush1.bf16.msra.mxu0 %v5338
  %5387 = vmatprep.subr.bf16.mxu0 0
  %5388 = vmatpush1.bf16.msra.mxu0 0
  %5389 = vmatprep.subr.bf16.mxu0 0
  %5390 = vmatpush1.bf16.msra.mxu0 0
  %5391 = vmatprep.subr.bf16.mxu0 0
  %5392 = vmatpush1.bf16.msra.mxu0 0
  %5393 = vmatprep.subr.bf16.mxu0 0
  %5394 = vmatpush1.bf16.msra.mxu0 0
  %5395 = vmatprep.subr.bf16.mxu0 0
  %5396 = vmatpush1.bf16.msra.mxu0 0
  %5397 = vmatprep.subr.bf16.mxu0 0
  %5398 = vmatpush1.bf16.msra.mxu0 0
  %5399 = vmatprep.subr.bf16.mxu0 0
  %5400 = vmatpush1.bf16.msra.mxu0 0
  %5401 = vmatprep.subr.bf16.mxu0 0
  %5402 = vmatpush1.bf16.msra.mxu0 0
  %5403 = vmatprep.subr.bf16.mxu0 0
  %5404 = vmatpush1.bf16.msra.mxu0 0
  %5405 = vmatprep.subr.bf16.mxu0 0
  %5406 = vmatpush1.bf16.msra.mxu0 0
  %5407 = vmatprep.subr.bf16.mxu0 0
  %5408 = vmatpush1.bf16.msra.mxu0 0
  %5409 = vmatprep.subr.bf16.mxu0 0
  %5410 = vmatpush1.bf16.msra.mxu0 0
  %5411 = vmatprep.subr.bf16.mxu0 0
  %5412 = vmatpush1.bf16.msra.mxu0 0
  %5413 = vmatprep.subr.bf16.mxu0 0
  %5414 = vmatpush1.bf16.msra.mxu0 0
  %5415 = vmatprep.subr.bf16.mxu0 0
  %5416 = vmatpush1.bf16.msra.mxu0 0
  %5417 = vmatprep.mubr.bf16.mxu0 0
  %5418 = vmatmul.mubr.bf16.gmra.mrb[0].mxu0 %v1883
  %v5419 = vpop.f32.mrb[0].mxu0
  %v5420 = vadd.f32 0.0, %v5419
  %v5421 = vpop.f32.mrb[0].mxu0
  %v5422 = vadd.f32 0.0, %v5421
  %v5423 = vpop.f32.mrb[0].mxu0
  %v5424 = vadd.f32 0.0, %v5423
  %v5425 = vpop.f32.mrb[0].mxu0
  %v5426 = vadd.f32 0.0, %v5425
  %5427 = vdwg.mxu0
  %v5429 = vand.u32 %v3385, %v292
  %v5432 = vand.u32 %v3386, %v292
  %v5435 = vand.u32 %v3387, %v292
  %v5437 = vand.u32 %v3408, %v292
  %5439 = vmatprep.subr.bf16.mxu0 %v5432
  %5440 = vmatpush1.bf16.msra.mxu0 %v5429
  %5441 = vmatprep.subr.bf16.mxu0 0
  %5442 = vmatpush1.bf16.msra.mxu0 0
  %5443 = vmatprep.subr.bf16.mxu0 0
  %5444 = vmatpush1.bf16.msra.mxu0 0
  %5445 = vmatprep.subr.bf16.mxu0 0
  %5446 = vmatpush1.bf16.msra.mxu0 0
  %5447 = vmatprep.subr.bf16.mxu0 0
  %5448 = vmatpush1.bf16.msra.mxu0 0
  %5449 = vmatprep.subr.bf16.mxu0 0
  %5450 = vmatpush1.bf16.msra.mxu0 0
  %5451 = vmatprep.subr.bf16.mxu0 0
  %5452 = vmatpush1.bf16.msra.mxu0 0
  %5453 = vmatprep.subr.bf16.mxu0 0
  %5454 = vmatpush1.bf16.msra.mxu0 0
  %5455 = vmatprep.subr.bf16.mxu0 0
  %5456 = vmatpush1.bf16.msra.mxu0 0
  %5457 = vmatprep.subr.bf16.mxu0 0
  %5458 = vmatpush1.bf16.msra.mxu0 0
  %5459 = vmatprep.subr.bf16.mxu0 0
  %5460 = vmatpush1.bf16.msra.mxu0 0
  %5461 = vmatprep.subr.bf16.mxu0 0
  %5462 = vmatpush1.bf16.msra.mxu0 0
  %5463 = vmatprep.subr.bf16.mxu0 0
  %5464 = vmatpush1.bf16.msra.mxu0 0
  %5465 = vmatprep.subr.bf16.mxu0 0
  %5466 = vmatpush1.bf16.msra.mxu0 0
  %5467 = vmatprep.subr.bf16.mxu0 0
  %5468 = vmatpush1.bf16.msra.mxu0 0
  %5469 = vmatprep.subr.bf16.mxu0 0
  %5470 = vmatpush1.bf16.msra.mxu0 0
  %5471 = vmatprep.mubr.bf16.mxu0 0
  %5472 = vmatmul.mubr.bf16.gmra.mrb[0].mxu0 %v1883
  %v5473 = vpop.f32.mrb[0].mxu0
  %v5474 = vadd.f32 0.0, %v5473
  %v5475 = vpop.f32.mrb[0].mxu0
  %v5476 = vadd.f32 0.0, %v5475
  %v5477 = vpop.f32.mrb[0].mxu0
  %v5478 = vadd.f32 0.0, %v5477
  %v5479 = vpop.f32.mrb[0].mxu0
  %v5480 = vadd.f32 0.0, %v5479
  %5481 = vdwg.mxu0
  %5482 = vmatprep.subr.bf16.mxu0 %v5437
  %5483 = vmatpush1.bf16.msra.mxu0 %v5435
  %5484 = vmatprep.subr.bf16.mxu0 0
  %5485 = vmatpush1.bf16.msra.mxu0 0
  %5486 = vmatprep.subr.bf16.mxu0 0
  %5487 = vmatpush1.bf16.msra.mxu0 0
  %5488 = vmatprep.subr.bf16.mxu0 0
  %5489 = vmatpush1.bf16.msra.mxu0 0
  %5490 = vmatprep.subr.bf16.mxu0 0
  %5491 = vmatpush1.bf16.msra.mxu0 0
  %5492 = vmatprep.subr.bf16.mxu0 0
  %5493 = vmatpush1.bf16.msra.mxu0 0
  %5494 = vmatprep.subr.bf16.mxu0 0
  %5495 = vmatpush1.bf16.msra.mxu0 0
  %5496 = vmatprep.subr.bf16.mxu0 0
  %5497 = vmatpush1.bf16.msra.mxu0 0
  %5498 = vmatprep.subr.bf16.mxu0 0
  %5499 = vmatpush1.bf16.msra.mxu0 0
  %5500 = vmatprep.subr.bf16.mxu0 0
  %5501 = vmatpush1.bf16.msra.mxu0 0
  %5502 = vmatprep.subr.bf16.mxu0 0
  %5503 = vmatpush1.bf16.msra.mxu0 0
  %5504 = vmatprep.subr.bf16.mxu0 0
  %5505 = vmatpush1.bf16.msra.mxu0 0
  %5506 = vmatprep.subr.bf16.mxu0 0
  %5507 = vmatpush1.bf16.msra.mxu0 0
  %5508 = vmatprep.subr.bf16.mxu0 0
  %5509 = vmatpush1.bf16.msra.mxu0 0
  %5510 = vmatprep.subr.bf16.mxu0 0
  %5511 = vmatpush1.bf16.msra.mxu0 0
  %5512 = vmatprep.subr.bf16.mxu0 0
  %5513 = vmatpush1.bf16.msra.mxu0 0
  %5514 = vmatprep.mubr.bf16.mxu0 0
  %5515 = vmatmul.mubr.bf16.gmra.mrb[0].mxu0 %v1883
  %v5516 = vpop.f32.mrb[0].mxu0
  %v5517 = vadd.f32 0.0, %v5516
  %v5518 = vpop.f32.mrb[0].mxu0
  %v5519 = vadd.f32 0.0, %v5518
  %v5520 = vpop.f32.mrb[0].mxu0
  %v5521 = vadd.f32 0.0, %v5520
  %v5522 = vpop.f32.mrb[0].mxu0
  %v5523 = vadd.f32 0.0, %v5522
  %5524 = vdwg.mxu0
  %v5526 = vand.u32 %v3388, %v292
  %v5529 = vand.u32 %v3389, %v292
  %v5532 = vand.u32 %v3390, %v292
  %v5534 = vand.u32 %v3410, %v292
  %5536 = vmatprep.subr.bf16.mxu0 %v5529
  %5537 = vmatpush1.bf16.msra.mxu0 %v5526
  %5538 = vmatprep.subr.bf16.mxu0 0
  %5539 = vmatpush1.bf16.msra.mxu0 0
  %5540 = vmatprep.subr.bf16.mxu0 0
  %5541 = vmatpush1.bf16.msra.mxu0 0
  %5542 = vmatprep.subr.bf16.mxu0 0
  %5543 = vmatpush1.bf16.msra.mxu0 0
  %5544 = vmatprep.subr.bf16.mxu0 0
  %5545 = vmatpush1.bf16.msra.mxu0 0
  %5546 = vmatprep.subr.bf16.mxu0 0
  %5547 = vmatpush1.bf16.msra.mxu0 0
  %5548 = vmatprep.subr.bf16.mxu0 0
  %5549 = vmatpush1.bf16.msra.mxu0 0
  %5550 = vmatprep.subr.bf16.mxu0 0
  %5551 = vmatpush1.bf16.msra.mxu0 0
  %5552 = vmatprep.subr.bf16.mxu0 0
  %5553 = vmatpush1.bf16.msra.mxu0 0
  %5554 = vmatprep.subr.bf16.mxu0 0
  %5555 = vmatpush1.bf16.msra.mxu0 0
  %5556 = vmatprep.subr.bf16.mxu0 0
  %5557 = vmatpush1.bf16.msra.mxu0 0
  %5558 = vmatprep.subr.bf16.mxu0 0
  %5559 = vmatpush1.bf16.msra.mxu0 0
  %5560 = vmatprep.subr.bf16.mxu0 0
  %5561 = vmatpush1.bf16.msra.mxu0 0
  %5562 = vmatprep.subr.bf16.mxu0 0
  %5563 = vmatpush1.bf16.msra.mxu0 0
  %5564 = vmatprep.subr.bf16.mxu0 0
  %5565 = vmatpush1.bf16.msra.mxu0 0
  %5566 = vmatprep.subr.bf16.mxu0 0
  %5567 = vmatpush1.bf16.msra.mxu0 0
  %5568 = vmatprep.mubr.bf16.mxu0 0
  %5569 = vmatmul.mubr.bf16.gmra.mrb[0].mxu0 %v1883
  %v5570 = vpop.f32.mrb[0].mxu0
  %v5571 = vadd.f32 0.0, %v5570
  %v5572 = vpop.f32.mrb[0].mxu0
  %v5573 = vadd.f32 0.0, %v5572
  %v5574 = vpop.f32.mrb[0].mxu0
  %v5575 = vadd.f32 0.0, %v5574
  %v5576 = vpop.f32.mrb[0].mxu0
  %v5577 = vadd.f32 0.0, %v5576
  %5578 = vdwg.mxu0
  %5579 = vmatprep.subr.bf16.mxu0 %v5534
  %5580 = vmatpush1.bf16.msra.mxu0 %v5532
  %5581 = vmatprep.subr.bf16.mxu0 0
  %5582 = vmatpush1.bf16.msra.mxu0 0
  %5583 = vmatprep.subr.bf16.mxu0 0
  %5584 = vmatpush1.bf16.msra.mxu0 0
  %5585 = vmatprep.subr.bf16.mxu0 0
  %5586 = vmatpush1.bf16.msra.mxu0 0
  %5587 = vmatprep.subr.bf16.mxu0 0
  %5588 = vmatpush1.bf16.msra.mxu0 0
  %5589 = vmatprep.subr.bf16.mxu0 0
  %5590 = vmatpush1.bf16.msra.mxu0 0
  %5591 = vmatprep.subr.bf16.mxu0 0
  %5592 = vmatpush1.bf16.msra.mxu0 0
  %5593 = vmatprep.subr.bf16.mxu0 0
  %5594 = vmatpush1.bf16.msra.mxu0 0
  %5595 = vmatprep.subr.bf16.mxu0 0
  %5596 = vmatpush1.bf16.msra.mxu0 0
  %5597 = vmatprep.subr.bf16.mxu0 0
  %5598 = vmatpush1.bf16.msra.mxu0 0
  %5599 = vmatprep.subr.bf16.mxu0 0
  %5600 = vmatpush1.bf16.msra.mxu0 0
  %5601 = vmatprep.subr.bf16.mxu0 0
  %5602 = vmatpush1.bf16.msra.mxu0 0
  %5603 = vmatprep.subr.bf16.mxu0 0
  %5604 = vmatpush1.bf16.msra.mxu0 0
  %5605 = vmatprep.subr.bf16.mxu0 0
  %5606 = vmatpush1.bf16.msra.mxu0 0
  %5607 = vmatprep.subr.bf16.mxu0 0
  %5608 = vmatpush1.bf16.msra.mxu0 0
  %5609 = vmatprep.subr.bf16.mxu0 0
  %5610 = vmatpush1.bf16.msra.mxu0 0
  %5611 = vmatprep.mubr.bf16.mxu0 0
  %5612 = vmatmul.mubr.bf16.gmra.mrb[0].mxu0 %v1883
  %v5613 = vpop.f32.mrb[0].mxu0
  %v5614 = vadd.f32 0.0, %v5613
  %v5615 = vpop.f32.mrb[0].mxu0
  %v5616 = vadd.f32 0.0, %v5615
  %v5617 = vpop.f32.mrb[0].mxu0
  %v5618 = vadd.f32 0.0, %v5617
  %v5619 = vpop.f32.mrb[0].mxu0
  %v5620 = vadd.f32 0.0, %v5619
  %5621 = vdwg.mxu0
  %v5623 = vand.u32 %v3391, %v292
  %v5626 = vand.u32 %v3392, %v292
  %v5629 = vand.u32 %v3393, %v292
  %v5631 = vand.u32 %v3412, %v292
  %5633 = vmatprep.subr.bf16.mxu0 %v5626
  %5634 = vmatpush1.bf16.msra.mxu0 %v5623
  %5635 = vmatprep.subr.bf16.mxu0 0
  %5636 = vmatpush1.bf16.msra.mxu0 0
  %5637 = vmatprep.subr.bf16.mxu0 0
  %5638 = vmatpush1.bf16.msra.mxu0 0
  %5639 = vmatprep.subr.bf16.mxu0 0
  %5640 = vmatpush1.bf16.msra.mxu0 0
  %5641 = vmatprep.subr.bf16.mxu0 0
  %5642 = vmatpush1.bf16.msra.mxu0 0
  %5643 = vmatprep.subr.bf16.mxu0 0
  %5644 = vmatpush1.bf16.msra.mxu0 0
  %5645 = vmatprep.subr.bf16.mxu0 0
  %5646 = vmatpush1.bf16.msra.mxu0 0
  %5647 = vmatprep.subr.bf16.mxu0 0
  %5648 = vmatpush1.bf16.msra.mxu0 0
  %5649 = vmatprep.subr.bf16.mxu0 0
  %5650 = vmatpush1.bf16.msra.mxu0 0
  %5651 = vmatprep.subr.bf16.mxu0 0
  %5652 = vmatpush1.bf16.msra.mxu0 0
  %5653 = vmatprep.subr.bf16.mxu0 0
  %5654 = vmatpush1.bf16.msra.mxu0 0
  %5655 = vmatprep.subr.bf16.mxu0 0
  %5656 = vmatpush1.bf16.msra.mxu0 0
  %5657 = vmatprep.subr.bf16.mxu0 0
  %5658 = vmatpush1.bf16.msra.mxu0 0
  %5659 = vmatprep.subr.bf16.mxu0 0
  %5660 = vmatpush1.bf16.msra.mxu0 0
  %5661 = vmatprep.subr.bf16.mxu0 0
  %5662 = vmatpush1.bf16.msra.mxu0 0
  %5663 = vmatprep.subr.bf16.mxu0 0
  %5664 = vmatpush1.bf16.msra.mxu0 0
  %5665 = vmatprep.mubr.bf16.mxu0 0
  %5666 = vmatmul.mubr.bf16.gmra.mrb[0].mxu0 %v1883
  %v5667 = vpop.f32.mrb[0].mxu0
  %v5668 = vadd.f32 0.0, %v5667
  %v5669 = vpop.f32.mrb[0].mxu0
  %v5670 = vadd.f32 0.0, %v5669
  %v5671 = vpop.f32.mrb[0].mxu0
  %v5672 = vadd.f32 0.0, %v5671
  %v5673 = vpop.f32.mrb[0].mxu0
  %v5674 = vadd.f32 0.0, %v5673
  %5675 = vdwg.mxu0
  %5676 = vmatprep.subr.bf16.mxu0 %v5631
  %5677 = vmatpush1.bf16.msra.mxu0 %v5629
  %5678 = vmatprep.subr.bf16.mxu0 0
  %5679 = vmatpush1.bf16.msra.mxu0 0
  %5680 = vmatprep.subr.bf16.mxu0 0
  %5681 = vmatpush1.bf16.msra.mxu0 0
  %5682 = vmatprep.subr.bf16.mxu0 0
  %5683 = vmatpush1.bf16.msra.mxu0 0
  %5684 = vmatprep.subr.bf16.mxu0 0
  %5685 = vmatpush1.bf16.msra.mxu0 0
  %5686 = vmatprep.subr.bf16.mxu0 0
  %5687 = vmatpush1.bf16.msra.mxu0 0
  %5688 = vmatprep.subr.bf16.mxu0 0
  %5689 = vmatpush1.bf16.msra.mxu0 0
  %5690 = vmatprep.subr.bf16.mxu0 0
  %5691 = vmatpush1.bf16.msra.mxu0 0
  %5692 = vmatprep.subr.bf16.mxu0 0
  %5693 = vmatpush1.bf16.msra.mxu0 0
  %5694 = vmatprep.subr.bf16.mxu0 0
  %5695 = vmatpush1.bf16.msra.mxu0 0
  %5696 = vmatprep.subr.bf16.mxu0 0
  %5697 = vmatpush1.bf16.msra.mxu0 0
  %5698 = vmatprep.subr.bf16.mxu0 0
  %5699 = vmatpush1.bf16.msra.mxu0 0
  %5700 = vmatprep.subr.bf16.mxu0 0
  %5701 = vmatpush1.bf16.msra.mxu0 0
  %5702 = vmatprep.subr.bf16.mxu0 0
  %5703 = vmatpush1.bf16.msra.mxu0 0
  %5704 = vmatprep.subr.bf16.mxu0 0
  %5705 = vmatpush1.bf16.msra.mxu0 0
  %5706 = vmatprep.subr.bf16.mxu0 0
  %5707 = vmatpush1.bf16.msra.mxu0 0
  %5708 = vmatprep.mubr.bf16.mxu0 0
  %5709 = vmatmul.mubr.bf16.gmra.mrb[0].mxu0 %v1883
  %v5710 = vpop.f32.mrb[0].mxu0
  %v5711 = vadd.f32 0.0, %v5710
  %v5712 = vpop.f32.mrb[0].mxu0
  %v5713 = vadd.f32 0.0, %v5712
  %v5714 = vpop.f32.mrb[0].mxu0
  %v5715 = vadd.f32 0.0, %v5714
  %v5716 = vpop.f32.mrb[0].mxu0
  %v5717 = vadd.f32 0.0, %v5716
  %5718 = vdwg.mxu0
  %v5720 = vand.u32 %v3394, %v292
  %v5723 = vand.u32 %v3395, %v292
  %v5726 = vand.u32 %v3396, %v292
  %v5728 = vand.u32 %v3414, %v292
  %5730 = vmatprep.subr.bf16.mxu0 %v5723
  %5731 = vmatpush1.bf16.msra.mxu0 %v5720
  %5732 = vmatprep.subr.bf16.mxu0 0
  %5733 = vmatpush1.bf16.msra.mxu0 0
  %5734 = vmatprep.subr.bf16.mxu0 0
  %5735 = vmatpush1.bf16.msra.mxu0 0
  %5736 = vmatprep.subr.bf16.mxu0 0
  %5737 = vmatpush1.bf16.msra.mxu0 0
  %5738 = vmatprep.subr.bf16.mxu0 0
  %5739 = vmatpush1.bf16.msra.mxu0 0
  %5740 = vmatprep.subr.bf16.mxu0 0
  %5741 = vmatpush1.bf16.msra.mxu0 0
  %5742 = vmatprep.subr.bf16.mxu0 0
  %5743 = vmatpush1.bf16.msra.mxu0 0
  %5744 = vmatprep.subr.bf16.mxu0 0
  %5745 = vmatpush1.bf16.msra.mxu0 0
  %5746 = vmatprep.subr.bf16.mxu0 0
  %5747 = vmatpush1.bf16.msra.mxu0 0
  %5748 = vmatprep.subr.bf16.mxu0 0
  %5749 = vmatpush1.bf16.msra.mxu0 0
  %5750 = vmatprep.subr.bf16.mxu0 0
  %5751 = vmatpush1.bf16.msra.mxu0 0
  %5752 = vmatprep.subr.bf16.mxu0 0
  %5753 = vmatpush1.bf16.msra.mxu0 0
  %5754 = vmatprep.subr.bf16.mxu0 0
  %5755 = vmatpush1.bf16.msra.mxu0 0
  %5756 = vmatprep.subr.bf16.mxu0 0
  %5757 = vmatpush1.bf16.msra.mxu0 0
  %5758 = vmatprep.subr.bf16.mxu0 0
  %5759 = vmatpush1.bf16.msra.mxu0 0
  %5760 = vmatprep.subr.bf16.mxu0 0
  %5761 = vmatpush1.bf16.msra.mxu0 0
  %5762 = vmatprep.mubr.bf16.mxu0 0
  %5763 = vmatmul.mubr.bf16.gmra.mrb[0].mxu0 %v1883
  %v5764 = vpop.f32.mrb[0].mxu0
  %v5765 = vadd.f32 0.0, %v5764
  %v5766 = vpop.f32.mrb[0].mxu0
  %v5767 = vadd.f32 0.0, %v5766
  %v5768 = vpop.f32.mrb[0].mxu0
  %v5769 = vadd.f32 0.0, %v5768
  %v5770 = vpop.f32.mrb[0].mxu0
  %v5771 = vadd.f32 0.0, %v5770
  %5772 = vdwg.mxu0
  %5773 = vmatprep.subr.bf16.mxu0 %v5728
  %5774 = vmatpush1.bf16.msra.mxu0 %v5726
  %5775 = vmatprep.subr.bf16.mxu0 0
  %5776 = vmatpush1.bf16.msra.mxu0 0
  %5777 = vmatprep.subr.bf16.mxu0 0
  %5778 = vmatpush1.bf16.msra.mxu0 0
  %5779 = vmatprep.subr.bf16.mxu0 0
  %5780 = vmatpush1.bf16.msra.mxu0 0
  %5781 = vmatprep.subr.bf16.mxu0 0
  %5782 = vmatpush1.bf16.msra.mxu0 0
  %5783 = vmatprep.subr.bf16.mxu0 0
  %5784 = vmatpush1.bf16.msra.mxu0 0
  %5785 = vmatprep.subr.bf16.mxu0 0
  %5786 = vmatpush1.bf16.msra.mxu0 0
  %5787 = vmatprep.subr.bf16.mxu0 0
  %5788 = vmatpush1.bf16.msra.mxu0 0
  %5789 = vmatprep.subr.bf16.mxu0 0
  %5790 = vmatpush1.bf16.msra.mxu0 0
  %5791 = vmatprep.subr.bf16.mxu0 0
  %5792 = vmatpush1.bf16.msra.mxu0 0
  %5793 = vmatprep.subr.bf16.mxu0 0
  %5794 = vmatpush1.bf16.msra.mxu0 0
  %5795 = vmatprep.subr.bf16.mxu0 0
  %5796 = vmatpush1.bf16.msra.mxu0 0
  %5797 = vmatprep.subr.bf16.mxu0 0
  %5798 = vmatpush1.bf16.msra.mxu0 0
  %5799 = vmatprep.subr.bf16.mxu0 0
  %5800 = vmatpush1.bf16.msra.mxu0 0
  %5801 = vmatprep.subr.bf16.mxu0 0
  %5802 = vmatpush1.bf16.msra.mxu0 0
  %5803 = vmatprep.subr.bf16.mxu0 0
  %5804 = vmatpush1.bf16.msra.mxu0 0
  %5805 = vmatprep.mubr.bf16.mxu0 0
  %5806 = vmatmul.mubr.bf16.gmra.mrb[0].mxu0 %v1883
  %v5807 = vpop.f32.mrb[0].mxu0
  %v5808 = vadd.f32 0.0, %v5807
  %v5809 = vpop.f32.mrb[0].mxu0
  %v5810 = vadd.f32 0.0, %v5809
  %v5811 = vpop.f32.mrb[0].mxu0
  %v5812 = vadd.f32 0.0, %v5811
  %v5813 = vpop.f32.mrb[0].mxu0
  %v5814 = vadd.f32 0.0, %v5813
  %5815 = vdwg.mxu0
  %v5817 = vand.u32 %v3397, %v292
  %v5820 = vand.u32 %v3398, %v292
  %v5823 = vand.u32 %v3399, %v292
  %v5825 = vand.u32 %v3416, %v292
  %5827 = vmatprep.subr.bf16.mxu0 %v5820
  %5828 = vmatpush1.bf16.msra.mxu0 %v5817
  %5829 = vmatprep.subr.bf16.mxu0 0
  %5830 = vmatpush1.bf16.msra.mxu0 0
  %5831 = vmatprep.subr.bf16.mxu0 0
  %5832 = vmatpush1.bf16.msra.mxu0 0
  %5833 = vmatprep.subr.bf16.mxu0 0
  %5834 = vmatpush1.bf16.msra.mxu0 0
  %5835 = vmatprep.subr.bf16.mxu0 0
  %5836 = vmatpush1.bf16.msra.mxu0 0
  %5837 = vmatprep.subr.bf16.mxu0 0
  %5838 = vmatpush1.bf16.msra.mxu0 0
  %5839 = vmatprep.subr.bf16.mxu0 0
  %5840 = vmatpush1.bf16.msra.mxu0 0
  %5841 = vmatprep.subr.bf16.mxu0 0
  %5842 = vmatpush1.bf16.msra.mxu0 0
  %5843 = vmatprep.subr.bf16.mxu0 0
  %5844 = vmatpush1.bf16.msra.mxu0 0
  %5845 = vmatprep.subr.bf16.mxu0 0
  %5846 = vmatpush1.bf16.msra.mxu0 0
  %5847 = vmatprep.subr.bf16.mxu0 0
  %5848 = vmatpush1.bf16.msra.mxu0 0
  %5849 = vmatprep.subr.bf16.mxu0 0
  %5850 = vmatpush1.bf16.msra.mxu0 0
  %5851 = vmatprep.subr.bf16.mxu0 0
  %5852 = vmatpush1.bf16.msra.mxu0 0
  %5853 = vmatprep.subr.bf16.mxu0 0
  %5854 = vmatpush1.bf16.msra.mxu0 0
  %5855 = vmatprep.subr.bf16.mxu0 0
  %5856 = vmatpush1.bf16.msra.mxu0 0
  %5857 = vmatprep.subr.bf16.mxu0 0
  %5858 = vmatpush1.bf16.msra.mxu0 0
  %5859 = vmatprep.mubr.bf16.mxu0 0
  %5860 = vmatmul.mubr.bf16.gmra.mrb[0].mxu0 %v1883
  %v5861 = vpop.f32.mrb[0].mxu0
  %v5862 = vadd.f32 0.0, %v5861
  %v5863 = vpop.f32.mrb[0].mxu0
  %v5864 = vadd.f32 0.0, %v5863
  %v5865 = vpop.f32.mrb[0].mxu0
  %v5866 = vadd.f32 0.0, %v5865
  %v5867 = vpop.f32.mrb[0].mxu0
  %v5868 = vadd.f32 0.0, %v5867
  %5869 = vdwg.mxu0
  %5870 = vmatprep.subr.bf16.mxu0 %v5825
  %5871 = vmatpush1.bf16.msra.mxu0 %v5823
  %5872 = vmatprep.subr.bf16.mxu0 0
  %5873 = vmatpush1.bf16.msra.mxu0 0
  %5874 = vmatprep.subr.bf16.mxu0 0
  %5875 = vmatpush1.bf16.msra.mxu0 0
  %5876 = vmatprep.subr.bf16.mxu0 0
  %5877 = vmatpush1.bf16.msra.mxu0 0
  %5878 = vmatprep.subr.bf16.mxu0 0
  %5879 = vmatpush1.bf16.msra.mxu0 0
  %5880 = vmatprep.subr.bf16.mxu0 0
  %5881 = vmatpush1.bf16.msra.mxu0 0
  %5882 = vmatprep.subr.bf16.mxu0 0
  %5883 = vmatpush1.bf16.msra.mxu0 0
  %5884 = vmatprep.subr.bf16.mxu0 0
  %5885 = vmatpush1.bf16.msra.mxu0 0
  %5886 = vmatprep.subr.bf16.mxu0 0
  %5887 = vmatpush1.bf16.msra.mxu0 0
  %5888 = vmatprep.subr.bf16.mxu0 0
  %5889 = vmatpush1.bf16.msra.mxu0 0
  %5890 = vmatprep.subr.bf16.mxu0 0
  %5891 = vmatpush1.bf16.msra.mxu0 0
  %5892 = vmatprep.subr.bf16.mxu0 0
  %5893 = vmatpush1.bf16.msra.mxu0 0
  %5894 = vmatprep.subr.bf16.mxu0 0
  %5895 = vmatpush1.bf16.msra.mxu0 0
  %5896 = vmatprep.subr.bf16.mxu0 0
  %5897 = vmatpush1.bf16.msra.mxu0 0
  %5898 = vmatprep.subr.bf16.mxu0 0
  %5899 = vmatpush1.bf16.msra.mxu0 0
  %5900 = vmatprep.subr.bf16.mxu0 0
  %5901 = vmatpush1.bf16.msra.mxu0 0
  %5902 = vmatprep.mubr.bf16.mxu0 0
  %5903 = vmatmul.mubr.bf16.gmra.mrb[0].mxu0 %v1883
  %v5904 = vpop.f32.mrb[0].mxu0
  %v5905 = vadd.f32 0.0, %v5904
  %v5906 = vpop.f32.mrb[0].mxu0
  %v5907 = vadd.f32 0.0, %v5906
  %v5908 = vpop.f32.mrb[0].mxu0
  %v5909 = vadd.f32 0.0, %v5908
  %v5910 = vpop.f32.mrb[0].mxu0
  %v5911 = vadd.f32 0.0, %v5910
  %5912 = vdwg.mxu0
  %v5913 = vadd.f32 %v4267, %v5183
  %v5914 = vadd.f32 %v4269, %v5185
  %v5915 = vadd.f32 %v4310, %v5226
  %v5916 = vadd.f32 %v4312, %v5228
  %v5917 = vadd.f32 %v4271, %v5187
  %v5918 = vadd.f32 %v4273, %v5189
  %v5919 = vadd.f32 %v4314, %v5230
  %v5920 = vadd.f32 %v4316, %v5232
  %v5921 = vadd.f32 %v4384, %v5280
  %v5922 = vadd.f32 %v4386, %v5282
  %v5923 = vadd.f32 %v4427, %v5323
  %v5924 = vadd.f32 %v4429, %v5325
  %v5925 = vadd.f32 %v4388, %v5284
  %v5926 = vadd.f32 %v4390, %v5286
  %v5927 = vadd.f32 %v4431, %v5327
  %v5928 = vadd.f32 %v4433, %v5329
  %v5929 = vadd.f32 %v4501, %v5377
  %v5930 = vadd.f32 %v4503, %v5379
  %v5931 = vadd.f32 %v4544, %v5420
  %v5932 = vadd.f32 %v4546, %v5422
  %v5933 = vadd.f32 %v4505, %v5381
  %v5934 = vadd.f32 %v4507, %v5383
  %v5935 = vadd.f32 %v4548, %v5424
  %v5936 = vadd.f32 %v4550, %v5426
  %v5937 = vadd.f32 %v4618, %v5474
  %v5938 = vadd.f32 %v4620, %v5476
  %v5939 = vadd.f32 %v4661, %v5517
  %v5940 = vadd.f32 %v4663, %v5519
  %v5941 = vadd.f32 %v4622, %v5478
  %v5942 = vadd.f32 %v4624, %v5480
  %v5943 = vadd.f32 %v4665, %v5521
  %v5944 = vadd.f32 %v4667, %v5523
  %v5945 = vadd.f32 %v4735, %v5571
  %v5946 = vadd.f32 %v4737, %v5573
  %v5947 = vadd.f32 %v4778, %v5614
  %v5948 = vadd.f32 %v4780, %v5616
  %v5949 = vadd.f32 %v4739, %v5575
  %v5950 = vadd.f32 %v4741, %v5577
  %v5951 = vadd.f32 %v4782, %v5618
  %v5952 = vadd.f32 %v4784, %v5620
  %v5953 = vadd.f32 %v4852, %v5668
  %v5954 = vadd.f32 %v4854, %v5670
  %v5955 = vadd.f32 %v4895, %v5711
  %v5956 = vadd.f32 %v4897, %v5713
  %v5957 = vadd.f32 %v4856, %v5672
  %v5958 = vadd.f32 %v4858, %v5674
  %v5959 = vadd.f32 %v4899, %v5715
  %v5960 = vadd.f32 %v4901, %v5717
  %v5961 = vadd.f32 %v4969, %v5765
  %v5962 = vadd.f32 %v4971, %v5767
  %v5963 = vadd.f32 %v5012, %v5808
  %v5964 = vadd.f32 %v5014, %v5810
  %v5965 = vadd.f32 %v4973, %v5769
  %v5966 = vadd.f32 %v4975, %v5771
  %v5967 = vadd.f32 %v5016, %v5812
  %v5968 = vadd.f32 %v5018, %v5814
  %v5969 = vadd.f32 %v5086, %v5862
  %v5970 = vadd.f32 %v5088, %v5864
  %v5971 = vadd.f32 %v5129, %v5905
  %v5972 = vadd.f32 %v5131, %v5907
  %v5973 = vadd.f32 %v5090, %v5866
  %v5974 = vadd.f32 %v5092, %v5868
  %v5975 = vadd.f32 %v5133, %v5909
  %v5976 = vadd.f32 %v5135, %v5911
  %v5977 = vadd.f32 %v5913, %v2841
  %v5978 = vadd.f32 %v5914, %v2841
  %v5979 = vadd.f32 %v5915, %v2841
  %v5980 = vadd.f32 %v5916, %v2841
  %v5981 = vadd.f32 %v5917, %v2846
  %v5982 = vadd.f32 %v5918, %v2846
  %v5983 = vadd.f32 %v5919, %v2846
  %v5984 = vadd.f32 %v5920, %v2846
  %v5985 = vadd.f32 %v5921, %v2841
  %v5986 = vadd.f32 %v5922, %v2841
  %v5987 = vadd.f32 %v5923, %v2841
  %v5988 = vadd.f32 %v5924, %v2841
  %v5989 = vadd.f32 %v5925, %v2846
  %v5990 = vadd.f32 %v5926, %v2846
  %v5991 = vadd.f32 %v5927, %v2846
  %v5992 = vadd.f32 %v5928, %v2846
  %v5993 = vadd.f32 %v5929, %v2841
  %v5994 = vadd.f32 %v5930, %v2841
  %v5995 = vadd.f32 %v5931, %v2841
  %v5996 = vadd.f32 %v5932, %v2841
  %v5997 = vadd.f32 %v5933, %v2846
  %v5998 = vadd.f32 %v5934, %v2846
  %v5999 = vadd.f32 %v5935, %v2846
  %v6000 = vadd.f32 %v5936, %v2846
  %v6001 = vadd.f32 %v5937, %v2841
  %v6002 = vadd.f32 %v5938, %v2841
  %v6003 = vadd.f32 %v5939, %v2841
  %v6004 = vadd.f32 %v5940, %v2841
  %v6005 = vadd.f32 %v5941, %v2846
  %v6006 = vadd.f32 %v5942, %v2846
  %v6007 = vadd.f32 %v5943, %v2846
  %v6008 = vadd.f32 %v5944, %v2846
  %v6009 = vadd.f32 %v5945, %v2841
  %v6010 = vadd.f32 %v5946, %v2841
  %v6011 = vadd.f32 %v5947, %v2841
  %v6012 = vadd.f32 %v5948, %v2841
  %v6013 = vadd.f32 %v5949, %v2846
  %v6014 = vadd.f32 %v5950, %v2846
  %v6015 = vadd.f32 %v5951, %v2846
  %v6016 = vadd.f32 %v5952, %v2846
  %v6017 = vadd.f32 %v5953, %v2841
  %v6018 = vadd.f32 %v5954, %v2841
  %v6019 = vadd.f32 %v5955, %v2841
  %v6020 = vadd.f32 %v5956, %v2841
  %v6021 = vadd.f32 %v5957, %v2846
  %v6022 = vadd.f32 %v5958, %v2846
  %v6023 = vadd.f32 %v5959, %v2846
  %v6024 = vadd.f32 %v5960, %v2846
  %v6025 = vadd.f32 %v5961, %v2841
  %v6026 = vadd.f32 %v5962, %v2841
  %v6027 = vadd.f32 %v5963, %v2841
  %v6028 = vadd.f32 %v5964, %v2841
  %v6029 = vadd.f32 %v5965, %v2846
  %v6030 = vadd.f32 %v5966, %v2846
  %v6031 = vadd.f32 %v5967, %v2846
  %v6032 = vadd.f32 %v5968, %v2846
  %v6033 = vadd.f32 %v5969, %v2841
  %v6034 = vadd.f32 %v5970, %v2841
  %v6035 = vadd.f32 %v5971, %v2841
  %v6036 = vadd.f32 %v5972, %v2841
  %v6037 = vadd.f32 %v5973, %v2846
  %v6038 = vadd.f32 %v5974, %v2846
  %v6039 = vadd.f32 %v5975, %v2846
  %v6040 = vadd.f32 %v5976, %v2846
  %v6041 = vmax.f32 %v5977, 0.0
  %v6042 = vmax.f32 %v5978, 0.0
  %v6043 = vmax.f32 %v5979, 0.0
  %v6044 = vmax.f32 %v5980, 0.0
  %v6045 = vmax.f32 %v5981, 0.0
  %v6046 = vmax.f32 %v5982, 0.0
  %v6047 = vmax.f32 %v5983, 0.0
  %v6048 = vmax.f32 %v5984, 0.0
  %v6049 = vmax.f32 %v5985, 0.0
  %v6050 = vmax.f32 %v5986, 0.0
  %v6051 = vmax.f32 %v5987, 0.0
  %v6052 = vmax.f32 %v5988, 0.0
  %v6053 = vmax.f32 %v5989, 0.0
  %v6054 = vmax.f32 %v5990, 0.0
  %v6055 = vmax.f32 %v5991, 0.0
  %v6056 = vmax.f32 %v5992, 0.0
  %v6057 = vmax.f32 %v5993, 0.0
  %v6058 = vmax.f32 %v5994, 0.0
  %v6059 = vmax.f32 %v5995, 0.0
  %v6060 = vmax.f32 %v5996, 0.0
  %v6061 = vmax.f32 %v5997, 0.0
  %v6062 = vmax.f32 %v5998, 0.0
  %v6063 = vmax.f32 %v5999, 0.0
  %v6064 = vmax.f32 %v6000, 0.0
  %v6065 = vmax.f32 %v6001, 0.0
  %v6066 = vmax.f32 %v6002, 0.0
  %v6067 = vmax.f32 %v6003, 0.0
  %v6068 = vmax.f32 %v6004, 0.0
  %v6069 = vmax.f32 %v6005, 0.0
  %v6070 = vmax.f32 %v6006, 0.0
  %v6071 = vmax.f32 %v6007, 0.0
  %v6072 = vmax.f32 %v6008, 0.0
  %v6073 = vmax.f32 %v6009, 0.0
  %v6074 = vmax.f32 %v6010, 0.0
  %v6075 = vmax.f32 %v6011, 0.0
  %v6076 = vmax.f32 %v6012, 0.0
  %v6077 = vmax.f32 %v6013, 0.0
  %v6078 = vmax.f32 %v6014, 0.0
  %v6079 = vmax.f32 %v6015, 0.0
  %v6080 = vmax.f32 %v6016, 0.0
  %v6081 = vmax.f32 %v6017, 0.0
  %v6082 = vmax.f32 %v6018, 0.0
  %v6083 = vmax.f32 %v6019, 0.0
  %v6084 = vmax.f32 %v6020, 0.0
  %v6085 = vmax.f32 %v6021, 0.0
  %v6086 = vmax.f32 %v6022, 0.0
  %v6087 = vmax.f32 %v6023, 0.0
  %v6088 = vmax.f32 %v6024, 0.0
  %v6089 = vmax.f32 %v6025, 0.0
  %v6090 = vmax.f32 %v6026, 0.0
  %v6091 = vmax.f32 %v6027, 0.0
  %v6092 = vmax.f32 %v6028, 0.0
  %v6093 = vmax.f32 %v6029, 0.0
  %v6094 = vmax.f32 %v6030, 0.0
  %v6095 = vmax.f32 %v6031, 0.0
  %v6096 = vmax.f32 %v6032, 0.0
  %v6097 = vmax.f32 %v6033, 0.0
  %v6098 = vmax.f32 %v6034, 0.0
  %v6099 = vmax.f32 %v6035, 0.0
  %v6100 = vmax.f32 %v6036, 0.0
  %v6101 = vmax.f32 %v6037, 0.0
  %v6102 = vmax.f32 %v6038, 0.0
  %v6103 = vmax.f32 %v6039, 0.0
  %v6104 = vmax.f32 %v6040, 0.0
  %v6105 = vadd.f32 %v6041, %v6042
  %v6106 = vadd.f32 %v6105, %v6043
  %v6107 = vadd.f32 %v6106, %v6044
  %6108 = vadd.xlane.f32.xlu0 %v6107
  %v6109 = vpop.xlane.xlu0 %6108
  %v6110 = vadd.f32 %v6045, %v6046
  %v6111 = vadd.f32 %v6110, %v6047
  %v6112 = vadd.f32 %v6111, %v6048
  %6113 = vadd.xlane.f32.xlu0 %v6112
  %v6114 = vpop.xlane.xlu0 %6113
  %v6115 = vadd.f32 %v6049, %v6050
  %v6116 = vadd.f32 %v6115, %v6051
  %v6117 = vadd.f32 %v6116, %v6052
  %6118 = vadd.xlane.f32.xlu0 %v6117
  %v6119 = vpop.xlane.xlu0 %6118
  %v6120 = vadd.f32 %v6053, %v6054
  %v6121 = vadd.f32 %v6120, %v6055
  %v6122 = vadd.f32 %v6121, %v6056
  %6123 = vadd.xlane.f32.xlu0 %v6122
  %v6124 = vpop.xlane.xlu0 %6123
  %v6125 = vadd.f32 %v6057, %v6058
  %v6126 = vadd.f32 %v6125, %v6059
  %v6127 = vadd.f32 %v6126, %v6060
  %6128 = vadd.xlane.f32.xlu0 %v6127
  %v6129 = vpop.xlane.xlu0 %6128
  %v6130 = vadd.f32 %v6061, %v6062
  %v6131 = vadd.f32 %v6130, %v6063
  %v6132 = vadd.f32 %v6131, %v6064
  %6133 = vadd.xlane.f32.xlu0 %v6132
  %v6134 = vpop.xlane.xlu0 %6133
  %v6135 = vadd.f32 %v6065, %v6066
  %v6136 = vadd.f32 %v6135, %v6067
  %v6137 = vadd.f32 %v6136, %v6068
  %6138 = vadd.xlane.f32.xlu0 %v6137
  %v6139 = vpop.xlane.xlu0 %6138
  %v6140 = vadd.f32 %v6069, %v6070
  %v6141 = vadd.f32 %v6140, %v6071
  %v6142 = vadd.f32 %v6141, %v6072
  %6143 = vadd.xlane.f32.xlu0 %v6142
  %v6144 = vpop.xlane.xlu0 %6143
  %v6145 = vadd.f32 %v6073, %v6074
  %v6146 = vadd.f32 %v6145, %v6075
  %v6147 = vadd.f32 %v6146, %v6076
  %6148 = vadd.xlane.f32.xlu0 %v6147
  %v6149 = vpop.xlane.xlu0 %6148
  %v6150 = vadd.f32 %v6077, %v6078
  %v6151 = vadd.f32 %v6150, %v6079
  %v6152 = vadd.f32 %v6151, %v6080
  %6153 = vadd.xlane.f32.xlu0 %v6152
  %v6154 = vpop.xlane.xlu0 %6153
  %v6155 = vadd.f32 %v6081, %v6082
  %v6156 = vadd.f32 %v6155, %v6083
  %v6157 = vadd.f32 %v6156, %v6084
  %6158 = vadd.xlane.f32.xlu0 %v6157
  %v6159 = vpop.xlane.xlu0 %6158
  %v6160 = vadd.f32 %v6085, %v6086
  %v6161 = vadd.f32 %v6160, %v6087
  %v6162 = vadd.f32 %v6161, %v6088
  %6163 = vadd.xlane.f32.xlu0 %v6162
  %v6164 = vpop.xlane.xlu0 %6163
  %v6165 = vadd.f32 %v6089, %v6090
  %v6166 = vadd.f32 %v6165, %v6091
  %v6167 = vadd.f32 %v6166, %v6092
  %6168 = vadd.xlane.f32.xlu0 %v6167
  %v6169 = vpop.xlane.xlu0 %6168
  %v6170 = vadd.f32 %v6093, %v6094
  %v6171 = vadd.f32 %v6170, %v6095
  %v6172 = vadd.f32 %v6171, %v6096
  %6173 = vadd.xlane.f32.xlu0 %v6172
  %v6174 = vpop.xlane.xlu0 %6173
  %v6175 = vadd.f32 %v6097, %v6098
  %v6176 = vadd.f32 %v6175, %v6099
  %v6177 = vadd.f32 %v6176, %v6100
  %6178 = vadd.xlane.f32.xlu0 %v6177
  %v6179 = vpop.xlane.xlu0 %6178
  %v6180 = vadd.f32 %v6101, %v6102
  %v6181 = vadd.f32 %v6180, %v6103
  %v6182 = vadd.f32 %v6181, %v6104
  %6183 = vadd.xlane.f32.xlu0 %v6182
  %v6184 = vpop.xlane.xlu0 %6183
  %v6185 = vadd.f32 %v3056, %v6109
  %v6186 = vadd.f32 %v3057, %v6114
  %v6187 = vadd.f32 %v3058, %v6119
  %v6188 = vadd.f32 %v3059, %v6124
  %v6189 = vadd.f32 %v3060, %v6129
  %v6190 = vadd.f32 %v3061, %v6134
  %v6191 = vadd.f32 %v3062, %v6139
  %v6192 = vadd.f32 %v3063, %v6144
  %v6193 = vadd.f32 %v3064, %v6149
  %v6194 = vadd.f32 %v3065, %v6154
  %v6195 = vadd.f32 %v3066, %v6159
  %v6196 = vadd.f32 %v3067, %v6164
  %v6197 = vadd.f32 %v3068, %v6169
  %v6198 = vadd.f32 %v3069, %v6174
  %v6199 = vadd.f32 %v3070, %v6179
  %v6200 = vadd.f32 %v3071, %v6184
  %v6201 = vmul.f32 %v6185, 0.0009765625
  %v6202 = vmul.f32 %v6186, 0.0009765625
  %v6203 = vmul.f32 %v6187, 0.0009765625
  %v6204 = vmul.f32 %v6188, 0.0009765625
  %v6205 = vmul.f32 %v6189, 0.0009765625
  %v6206 = vmul.f32 %v6190, 0.0009765625
  %v6207 = vmul.f32 %v6191, 0.0009765625
  %v6208 = vmul.f32 %v6192, 0.0009765625
  %v6209 = vmul.f32 %v6193, 0.0009765625
  %v6210 = vmul.f32 %v6194, 0.0009765625
  %v6211 = vmul.f32 %v6195, 0.0009765625
  %v6212 = vmul.f32 %v6196, 0.0009765625
  %v6213 = vmul.f32 %v6197, 0.0009765625
  %v6214 = vmul.f32 %v6198, 0.0009765625
  %v6215 = vmul.f32 %v6199, 0.0009765625
  %v6216 = vmul.f32 %v6200, 0.0009765625
  %v6217 = vpack.c.bf16 %v6202, %v6201
  %v6218 = vpack.c.bf16 %v6204, %v6203
  %v6219 = vpack.c.bf16 %v6206, %v6205
  %v6220 = vpack.c.bf16 %v6208, %v6207
  %v6221 = vpack.c.bf16 %v6210, %v6209
  %v6222 = vpack.c.bf16 %v6212, %v6211
  %v6223 = vpack.c.bf16 %v6214, %v6213
  %v6224 = vpack.c.bf16 %v6216, %v6215
  %v6225 = vld [vmem:[%s3] sm:$0xf]
  %v6226 = vld [vmem:[%s3 + $0x4] sm:$0xf]
  %v6227 = vld [vmem:[%s4] sm:$0x1]
  %v6229 = vlaneseq
  %v6230 = vshrl.u32 %v6229, 7
  %v6231 = vsub.s32 0, %v6230
  %v6232 = vrot.slane %v6227, %v6231
  %v6242 = vunpack.c.l.b16 %v6217
  %v6243 = vunpack.c.h.b16 %v6217
  %v6244 = vunpack.c.l.b16 %v6218
  %v6245 = vunpack.c.h.b16 %v6218
  %v6246 = vunpack.c.l.b16 %v6219
  %v6247 = vunpack.c.h.b16 %v6219
  %v6248 = vunpack.c.l.b16 %v6220
  %v6249 = vunpack.c.h.b16 %v6220
  %v6250 = vunpack.c.l.b16 %v6221
  %v6251 = vunpack.c.h.b16 %v6221
  %v6252 = vunpack.c.l.b16 %v6222
  %v6253 = vunpack.c.h.b16 %v6222
  %v6254 = vunpack.c.l.b16 %v6223
  %v6255 = vunpack.c.h.b16 %v6223
  %v6256 = vunpack.c.l.b16 %v6224
  %v6257 = vunpack.c.h.b16 %v6224
  %v6258 = vlaneseq
  %v6259 = vand.u32 %v6258, 127
  %v6260 = vlaneseq
  %v6261 = vshrl.u32 %v6260, 7
  %v6262 = vsub.s32 %v6259, %v6261
  %v6263 = vrot.slane %v6242, %v6262
  %v6264 = vadd.s32 %v6259, 4294967288
  %v6265 = vlaneseq
  %v6266 = vshrl.u32 %v6265, 7
  %v6267 = vsub.s32 %v6264, %v6266
  %v6268 = vrot.slane %v6243, %v6267
  %vm6269 = vcmask 130112
  %v6270 = vsel %vm6269, %v6268, %v6263
  %v6271 = vlaneseq
  %v6272 = vshrl.u32 %v6271, 7
  %v6273 = vsub.s32 %v6259, %v6272
  %v6274 = vrot.slane %v6244, %v6273
  %v6275 = vlaneseq
  %v6276 = vshrl.u32 %v6275, 7
  %v6277 = vsub.s32 %v6264, %v6276
  %v6278 = vrot.slane %v6245, %v6277
  %v6279 = vsel %vm6269, %v6278, %v6274
  %v6280 = vlaneseq
  %v6281 = vshrl.u32 %v6280, 7
  %v6282 = vsub.s32 %v6259, %v6281
  %v6283 = vrot.slane %v6246, %v6282
  %v6284 = vlaneseq
  %v6285 = vshrl.u32 %v6284, 7
  %v6286 = vsub.s32 %v6264, %v6285
  %v6287 = vrot.slane %v6247, %v6286
  %v6288 = vsel %vm6269, %v6287, %v6283
  %v6289 = vlaneseq
  %v6290 = vshrl.u32 %v6289, 7
  %v6291 = vsub.s32 %v6259, %v6290
  %v6292 = vrot.slane %v6248, %v6291
  %v6293 = vlaneseq
  %v6294 = vshrl.u32 %v6293, 7
  %v6295 = vsub.s32 %v6264, %v6294
  %v6296 = vrot.slane %v6249, %v6295
  %v6297 = vsel %vm6269, %v6296, %v6292
  %v6298 = vlaneseq
  %v6299 = vshrl.u32 %v6298, 7
  %v6300 = vsub.s32 %v6259, %v6299
  %v6301 = vrot.slane %v6250, %v6300
  %v6302 = vlaneseq
  %v6303 = vshrl.u32 %v6302, 7
  %v6304 = vsub.s32 %v6264, %v6303
  %v6305 = vrot.slane %v6251, %v6304
  %v6306 = vsel %vm6269, %v6305, %v6301
  %v6307 = vlaneseq
  %v6308 = vshrl.u32 %v6307, 7
  %v6309 = vsub.s32 %v6259, %v6308
  %v6310 = vrot.slane %v6252, %v6309
  %v6311 = vlaneseq
  %v6312 = vshrl.u32 %v6311, 7
  %v6313 = vsub.s32 %v6264, %v6312
  %v6314 = vrot.slane %v6253, %v6313
  %v6315 = vsel %vm6269, %v6314, %v6310
  %v6316 = vlaneseq
  %v6317 = vshrl.u32 %v6316, 7
  %v6318 = vsub.s32 %v6259, %v6317
  %v6319 = vrot.slane %v6254, %v6318
  %v6320 = vlaneseq
  %v6321 = vshrl.u32 %v6320, 7
  %v6322 = vsub.s32 %v6264, %v6321
  %v6323 = vrot.slane %v6255, %v6322
  %v6324 = vsel %vm6269, %v6323, %v6319
  %v6325 = vlaneseq
  %v6326 = vshrl.u32 %v6325, 7
  %v6327 = vsub.s32 %v6259, %v6326
  %v6328 = vrot.slane %v6256, %v6327
  %v6329 = vlaneseq
  %v6330 = vshrl.u32 %v6329, 7
  %v6331 = vsub.s32 %v6264, %v6330
  %v6332 = vrot.slane %v6257, %v6331
  %v6333 = vsel %vm6269, %v6332, %v6328
  %vm6334 = vcmask 1041409
  %v6335 = vsel %vm6334, %v6279, %v6270
  %vm6336 = vcmask 1042434
  %v6337 = vsel %vm6336, %v6288, %v6335
  %vm6338 = vcmask 1043459
  %v6339 = vsel %vm6338, %v6297, %v6337
  %vm6340 = vcmask 1044484
  %v6341 = vsel %vm6340, %v6306, %v6339
  %vm6342 = vcmask 1045509
  %v6343 = vsel %vm6342, %v6315, %v6341
  %vm6344 = vcmask 1046534
  %v6345 = vsel %vm6344, %v6324, %v6343
  %vm6346 = vcmask 1047559
  %v6347 = vsel %vm6346, %v6333, %v6345
  %v6348 = vpack.c.b16 %v6347, %v6347
  %v6351 = vunpack.c.l.b16 %v6225
  %v6352 = vunpack.c.l.b16 %v6226
  %v6353 = vpack.c.b16 %v6352, %v6351
  %vm6355 = vcmask 130048
  %v6357 = vsel %vm6355, %v6348, 0
  %6359 = vmatprep.subr.bf16.mxu0 0
  %6360 = vmatpush1.bf16.msra.mxu0 %v6353
  %6361 = vmatprep.subr.bf16.mxu0 0
  %6362 = vmatpush1.bf16.msra.mxu0 0
  %6363 = vmatprep.subr.bf16.mxu0 0
  %6364 = vmatpush1.bf16.msra.mxu0 0
  %6365 = vmatprep.subr.bf16.mxu0 0
  %6366 = vmatpush1.bf16.msra.mxu0 0
  %6367 = vmatprep.subr.bf16.mxu0 0
  %6368 = vmatpush1.bf16.msra.mxu0 0
  %6369 = vmatprep.subr.bf16.mxu0 0
  %6370 = vmatpush1.bf16.msra.mxu0 0
  %6371 = vmatprep.subr.bf16.mxu0 0
  %6372 = vmatpush1.bf16.msra.mxu0 0
  %6373 = vmatprep.subr.bf16.mxu0 0
  %6374 = vmatpush1.bf16.msra.mxu0 0
  %6375 = vmatprep.subr.bf16.mxu0 0
  %6376 = vmatpush1.bf16.msra.mxu0 0
  %6377 = vmatprep.subr.bf16.mxu0 0
  %6378 = vmatpush1.bf16.msra.mxu0 0
  %6379 = vmatprep.subr.bf16.mxu0 0
  %6380 = vmatpush1.bf16.msra.mxu0 0
  %6381 = vmatprep.subr.bf16.mxu0 0
  %6382 = vmatpush1.bf16.msra.mxu0 0
  %6383 = vmatprep.subr.bf16.mxu0 0
  %6384 = vmatpush1.bf16.msra.mxu0 0
  %6385 = vmatprep.subr.bf16.mxu0 0
  %6386 = vmatpush1.bf16.msra.mxu0 0
  %6387 = vmatprep.subr.bf16.mxu0 0
  %6388 = vmatpush1.bf16.msra.mxu0 0
  %6389 = vmatprep.subr.bf16.mxu0 0
  %6390 = vmatpush1.bf16.msra.mxu0 0
  %6391 = vmatprep.mubr.bf16.mxu0 0
  %6392 = vmatmul.mubr.bf16.gmra.mrb[0].mxu0 %v6357
  %v6393 = vpop.f32.mrb[0].mxu0
  %v6394 = vadd.f32 %v6232, %v6393
  %v6395 = vpop.f32.mrb[0].mxu0
  %v6396 = vpop.f32.mrb[0].mxu0
  %v6397 = vpop.f32.mrb[0].mxu0
  %6398 = vdwg.mxu0
  %vm6399 = vcmask 261120
  %6400 = vst.msk [vmem:[%s5] sm:$0xff] %vm6399, %v6394
  // Predicated region
  $region22: #{full_model_forward.2} parent=0 // pred_check
    _
  $region23: #{full_model_forward.2} parent=0 // pred_check_branch
    %6402 = sbr.rel (0) target = $region25
  $region24: #{full_model_forward.2} parent=0 // pred_region
    _
  $region25: #{full_model_forward.2} parent=0 // pred_fallthru
    _
  // Predicated region
  $region26: #{full_model_forward.2} parent=0 // pred_check
    _
  $region27: #{full_model_forward.2} parent=0 // pred_check_branch
    %6404 = sbr.rel (0) target = $region29
  $region28: #{full_model_forward.2} parent=0 // pred_region
    _
  $region29: #{full_model_forward.2} parent=0 // pred_fallthru
    _

</llo_original>
